<compile_context>
chip_gen: v5e
topology: v5e:2x2
jax: 0.10.0
libtpu: 0.0.40
codegen_flags: <defaults>
</compile_context>

<pallas_src>
import functools

import numpy as np

import jax
import jax.numpy as jnp
from jax.experimental import pallas as pl
from jax.experimental.pallas import tpu as pltpu


# ---------------------------------------------------------------------------
# Model configuration (VGG16 structure, channels scaled by 1/16)
# ---------------------------------------------------------------------------
_VGG16_CFG = [64, 64, "M", 128, 128, "M", 256, 256, 256, "M",
              512, 512, 512, "M", 512, 512, 512, "M"]
_CH_SCALE = 16          # channel-width scale-down for the synthetic model
_FC_DIM = 64            # scaled analog of the 4096-wide classifier layers
_NUM_CLASSES = 10
_IN_HW = 32             # 32x32 input -> 1x1 spatial after the 5 pools
_IN_CH = 3


def _cfg_blocks():
    """[[4, 4], [8, 8], [16, 16, 16], [32, 32, 32], [32, 32, 32]]"""
    blocks, cur = [], []
    for v in _VGG16_CFG:
        if v == "M":
            blocks.append(cur)
            cur = []
        else:
            cur.append(max(v // _CH_SCALE, 1))
    return blocks


def _static_block_cfg():
    """Static (hashable) per-block spatial size and layer count."""
    hs, nls = [], []
    hw = _IN_HW
    for chans in _cfg_blocks():
        hs.append(hw)
        nls.append(len(chans))
        hw //= 2
    return tuple(hs), tuple(nls)


# ---------------------------------------------------------------------------
# Fused whole-network Pallas kernel (one image per grid step)
# ---------------------------------------------------------------------------
def _vgg_kernel(*refs, block_hs, block_nls):
    """Fused VGG16 features + classifier.

    Activation value layout per image: rows = padded H positions
    (-1 .. H+2 -> H+4 rows, the outer two pairs are zero), cols = (w, c)
    flattened (W*C lanes; W 'same'-padding is folded into the weights).
    A 3x3 conv is 3 accumulating row-shifted bf16 MXU dots against
    pre-packed block-banded (K, W*Cout) matrices with f32 accumulation.
    """
    nb = len(block_hs)
    n_conv = sum(block_nls)
    i = 0
    x_ref = refs[i]; i += 1
    conv_refs = refs[i:i + 2 * n_conv]; i += 2 * n_conv
    padsel_refs = refs[i:i + nb]; i += nb
    shift_refs = refs[i:i + nb]; i += nb
    rowsel_refs = refs[i:i + nb - 1]; i += nb - 1
    fc_refs = refs[i:i + 6]; i += 6
    o_ref = refs[i]

    v = x_ref[...].astype(jnp.bfloat16)          # (H0+4, W0*C0), single cast

    li_global = 0
    feat = None
    for bi in range(nb):
        h = block_hs[bi]
        nl = block_nls[bi]
        r = h + 2                                # conv output rows (+H halos)
        for li in range(nl):
            w_ref = conv_refs[2 * li_global]     # (3, K, W*Cout) bf16
            b_ref = conv_refs[2 * li_global + 1]  # (1, W*Cout) f32
            li_global += 1
            acc = jnp.dot(v[0:r, :], w_ref[0],
                          preferred_element_type=jnp.float32)
            acc = acc + jnp.dot(v[1:r + 1, :], w_ref[1],
                                preferred_element_type=jnp.float32)
            acc = acc + jnp.dot(v[2:r + 2, :], w_ref[2],
                                preferred_element_type=jnp.float32)
            # bias + ReLU in f32, one cast to bf16 per layer
            y = jnp.maximum(acc + b_ref[...], 0.0).astype(jnp.bfloat16)

            if li < nl - 1:
                # Re-pad for the next conv of the block: keep interior rows
                # 1..h, re-insert zero halo rows (one tiny 0/1 matmul).
                v = jnp.dot(padsel_refs[bi][...], y,
                            preferred_element_type=jnp.float32
                            ).astype(jnp.bfloat16)
            else:
                # Block epilogue: 2x2/2 max pool, fully in-register.
                #  * W-pair max: shift columns by C via a 0/1 matmul, max.
                #  * H-pair max: adjacent-row max of the interior rows.
                #  * Row decimation + zero re-pad: 0/1 selection matmul.
                # The W decimation is folded into the next conv / fc1 weight.
                shifted = jnp.dot(y, shift_refs[bi][...],
                                  preferred_element_type=jnp.float32
                                  ).astype(jnp.bfloat16)
                cmax = jnp.maximum(y, shifted)
                rpair = jnp.maximum(cmax[1:h + 1, :], cmax[2:h + 2, :])
                if bi < nb - 1:
                    v = jnp.dot(rowsel_refs[bi][...], rpair,
                                preferred_element_type=jnp.float32
                                ).astype(jnp.bfloat16)
                else:
                    # 1x1 spatial left: row 0 holds the pooled feature; the
                    # odd-W columns are killed by zero rows in the folded fc1.
                    feat = rpair[0:1, :]         # (1, 2*C_last) bf16

    # Classifier: Dropout -> Linear -> ReLU -> Dropout -> Linear -> ReLU -> Linear
    # TODO(synk): nn.Dropout is stochastic; treated as identity (eval mode).
    w1, b1, w2, b2, w3, b3 = fc_refs
    h1 = jnp.maximum(
        jnp.dot(feat, w1[...], preferred_element_type=jnp.float32) + b1[...],
        0.0).astype(jnp.bfloat16)
    h2 = jnp.maximum(
        jnp.dot(h1, w2[...], preferred_element_type=jnp.float32) + b2[...],
        0.0).astype(jnp.bfloat16)
    o_ref[...] = (jnp.dot(h2, w3[...], preferred_element_type=jnp.float32)
                  + b3[...])


# ---------------------------------------------------------------------------
# Input layout glue (single tiny XLA op chain; NCHW -> row/col packed layout)
# ---------------------------------------------------------------------------
def _to_input_layout(x_nchw):
    """(N, C, H, W) -> (N, H+4, W*C): (w, c)-flattened columns, two zero rows
    above/below each image (H 'same' padding + row-shift halo).  The W
    padding is folded into the banded weights, so lanes stay W*C."""
    n, c, h, w = x_nchw.shape
    x = jnp.transpose(x_nchw, (0, 2, 3, 1)).reshape(n, h, w * c)
    return jnp.pad(x, ((0, 0), (2, 2), (0, 0))).astype(jnp.float32)


# ---------------------------------------------------------------------------
# Parameters: init + one-time packing (hoisted out of the forward pass)
# ---------------------------------------------------------------------------
def init_params(key, in_ch=_IN_CH):
    """Deterministic stand-in for torchvision's pretrained VGG16 weights."""
    params = {"convs": [], "fcs": []}
    c_in = in_ch
    k = key
    for v in _VGG16_CFG:
        if v == "M":
            continue
        c_out = max(v // _CH_SCALE, 1)
        k, kw_, kb_ = jax.random.split(k, 3)
        std = (2.0 / (9 * c_in)) ** 0.5
        w = std * jax.random.normal(kw_, (3, 3, c_in, c_out), jnp.float32)
        b = 0.01 * jax.random.normal(kb_, (c_out,), jnp.float32)
        params["convs"].append((w, b))
        c_in = c_out
    flat = c_in * 1 * 1   # 32x32 input through 5 pools -> 1x1 spatial
    dims = [(flat, _FC_DIM), (_FC_DIM, _FC_DIM), (_FC_DIM, _NUM_CLASSES)]
    for din, dout in dims:
        k, kw_, kb_ = jax.random.split(k, 3)
        std = (1.0 / din) ** 0.5
        w = std * jax.random.normal(kw_, (din, dout), jnp.float32)
        b = 0.01 * jax.random.normal(kb_, (dout,), jnp.float32)
        params["fcs"].append((w, b))
    return params


def _band(out_w, stride, kw):
    """(stride*out_w, out_w) 0/1 matrix: input W position stride*(w_out+kw-1)
    feeds output W position w_out; out-of-range taps dropped == zero pad."""
    m = np.zeros((stride * out_w, out_w), np.float32)
    for wo in range(out_w):
        wi = wo + kw - 1
        if 0 <= wi < out_w:
            m[stride * wi, wo] = 1.0
    return m


def _pack_conv(w_hwio, b, out_w, stride):
    """Pack a (3,3,cin,cout) conv into 3 block-banded bf16 matrices of shape
    (stride*out_w*cin, out_w*cout) (one per kh tap) carrying the kw taps, the
    W zero padding and (stride=2) the previous pool's column decimation; plus
    a (1, out_w*cout) f32 bias row."""
    w = np.asarray(w_hwio, np.float32)
    bv = np.asarray(b, np.float32)
    mats = []
    for kh in range(3):
        m = np.zeros((stride * out_w * w.shape[2], out_w * w.shape[3]),
                     np.float32)
        for kw in range(3):
            m = m + np.kron(_band(out_w, stride, kw), w[kh, kw])
        mats.append(m)
    wbig = jnp.asarray(np.stack(mats, axis=0), dtype=jnp.bfloat16)
    bbig = jnp.asarray(np.kron(np.ones((out_w,), np.float32), bv)[None, :],
                       dtype=jnp.float32)
    return wbig, bbig


def _pad_embed(h):
    """(h+4, h+2) 0/1: keep interior conv rows 1..h, re-insert zero halos."""
    m = np.zeros((h + 4, h + 2), np.float32)
    for i in range(h):
        m[2 + i, 1 + i] = 1.0
    return jnp.asarray(m, jnp.bfloat16)


def _col_shift(w, c):
    """(w*c, w*c) 0/1: column i of the result reads column i+c (W-pair max)."""
    wc = w * c
    m = np.zeros((wc, wc), np.float32)
    for i in range(wc - c):
        m[i + c, i] = 1.0
    return jnp.asarray(m, jnp.bfloat16)


def _pool_rowsel(h):
    """(h//2+4, h) 0/1: pick the even rows of the adjacent-row max (the
    H-pooled rows) and embed them between zero halo rows for the next block."""
    m = np.zeros((h // 2 + 4, h), np.float32)
    for p in range(h // 2):
        m[2 + p, 2 * p] = 1.0
    return jnp.asarray(m, jnp.bfloat16)


def pack_params(params):
    """One-time packing (runs once, outside the jitted forward):
      * block-banded bf16 conv matrices with the W padding folded in; the
        first conv of blocks 2..5 also folds the previous pool's column
        decimation (so its K dim is the previous block's full W*C = 128);
      * (1, W*Cout) f32 bias rows;
      * bf16 0/1 selection matrices (intra-block re-pad, W-pair shift,
        pool row selection + re-pad);
      * bf16 FC weights (fc1 extended with zero rows for the folded last
        pool decimation) and (1, n) f32 biases."""
    blocks = _cfg_blocks()
    convs, padsel, shiftsel, rowsel = [], [], [], []
    ci = 0
    hw = _IN_HW
    for bi, chans in enumerate(blocks):
        for li in range(len(chans)):
            w, b = params["convs"][ci]
            ci += 1
            stride = 2 if (li == 0 and bi > 0) else 1
            convs.append(_pack_conv(w, b, hw, stride))
        padsel.append(_pad_embed(hw))
        shiftsel.append(_col_shift(hw, chans[-1]))
        if bi < len(blocks) - 1:
            rowsel.append(_pool_rowsel(hw))
        hw //= 2

    (w1, b1), (w2, b2), (w3, b3) = params["fcs"]
    w1np = np.asarray(w1, np.float32)        # (C_last, FC_DIM); 1x1 spatial
    w1f = np.concatenate([w1np, np.zeros_like(w1np)], axis=0)  # odd-W cols -> 0

    def _fc(wnp, bnp):
        return (jnp.asarray(wnp, jnp.bfloat16),
                jnp.asarray(np.asarray(bnp, np.float32)[None, :], jnp.float32))

    fcs = [_fc(w1f, b1), _fc(np.asarray(w2, np.float32), b2),
           _fc(np.asarray(w3, np.float32), b3)]
    return {"convs": convs, "padsel": padsel, "shiftsel": shiftsel,
            "rowsel": rowsel, "fcs": fcs}


# ---------------------------------------------------------------------------
# Forward pass (mirrors ModifiedVGG16Model.forward, eval semantics)
# ---------------------------------------------------------------------------
def modified_vgg16_forward(packed, x_nchw):
    n = x_nchw.shape[0]
    block_hs, block_nls = _static_block_cfg()

    x = _to_input_layout(x_nchw)             # (N, H0+4, W0*C0) f32

    def _full(a):
        nd = a.ndim
        return pl.BlockSpec(a.shape, lambda b: (0,) * nd)

    args = [x]
    in_specs = [pl.BlockSpec((None,) + x.shape[1:], lambda b: (b, 0, 0))]
    for w, bb in packed["convs"]:
        args += [w, bb]
        in_specs += [_full(w), _full(bb)]
    for a in (list(packed["padsel"]) + list(packed["shiftsel"])
              + list(packed["rowsel"])):
        args.append(a)
        in_specs.append(_full(a))
    for w, bb in packed["fcs"]:
        args += [w, bb]
        in_specs += [_full(w), _full(bb)]

    out = pl.pallas_call(
        functools.partial(_vgg_kernel, block_hs=block_hs,
                          block_nls=block_nls),
        out_shape=jax.ShapeDtypeStruct((n, 1, _NUM_CLASSES), jnp.float32),
        grid=(n,),                            # one image per grid step
        in_specs=in_specs,
        out_specs=pl.BlockSpec((None, 1, _NUM_CLASSES), lambda b: (b, 0, 0)),
        compiler_params=pltpu.CompilerParams(
            dimension_semantics=("parallel",)),   # v7x: shard batch over TCs
    )(*args)
    return out.reshape(n, _NUM_CLASSES)


if __name__ == "__main__":
    key = jax.random.PRNGKey(0)
    kx, kp = jax.random.split(key)
    # Small-shape analog of a (N, 3, 224, 224) NCHW VGG16 input.
    x = jax.random.normal(kx, (2, _IN_CH, _IN_HW, _IN_HW), jnp.float32)
    params = init_params(kp)
    packed = pack_params(params)              # hoisted: packing runs once

    fwd = jax.jit(modified_vgg16_forward)
    out = jax.block_until_ready(fwd(packed, x))
    assert out.shape == (2, _NUM_CLASSES)
    assert out.dtype == jnp.float32
    assert bool(jnp.all(jnp.isfinite(out)))
    print("KERNEL_OK")
</pallas_src>

<mosaic_0001>
module attributes {stable_mosaic.version = 11 : i64} {
  func.func @_vgg_kernel(%arg0: i32, %arg1: memref<1x36x96xf32, #tpu.memory_space<vmem>>, %arg2: memref<3x96x128xbf16, #tpu.memory_space<vmem>>, %arg3: memref<1x128xf32, #tpu.memory_space<vmem>>, %arg4: memref<3x128x128xbf16, #tpu.memory_space<vmem>>, %arg5: memref<1x128xf32, #tpu.memory_space<vmem>>, %arg6: memref<3x128x128xbf16, #tpu.memory_space<vmem>>, %arg7: memref<1x128xf32, #tpu.memory_space<vmem>>, %arg8: memref<3x128x128xbf16, #tpu.memory_space<vmem>>, %arg9: memref<1x128xf32, #tpu.memory_space<vmem>>, %arg10: memref<3x128x128xbf16, #tpu.memory_space<vmem>>, %arg11: memref<1x128xf32, #tpu.memory_space<vmem>>, %arg12: memref<3x128x128xbf16, #tpu.memory_space<vmem>>, %arg13: memref<1x128xf32, #tpu.memory_space<vmem>>, %arg14: memref<3x128x128xbf16, #tpu.memory_space<vmem>>, %arg15: memref<1x128xf32, #tpu.memory_space<vmem>>, %arg16: memref<3x128x128xbf16, #tpu.memory_space<vmem>>, %arg17: memref<1x128xf32, #tpu.memory_space<vmem>>, %arg18: memref<3x128x128xbf16, #tpu.memory_space<vmem>>, %arg19: memref<1x128xf32, #tpu.memory_space<vmem>>, %arg20: memref<3x128x128xbf16, #tpu.memory_space<vmem>>, %arg21: memref<1x128xf32, #tpu.memory_space<vmem>>, %arg22: memref<3x128x64xbf16, #tpu.memory_space<vmem>>, %arg23: memref<1x64xf32, #tpu.memory_space<vmem>>, %arg24: memref<3x64x64xbf16, #tpu.memory_space<vmem>>, %arg25: memref<1x64xf32, #tpu.memory_space<vmem>>, %arg26: memref<3x64x64xbf16, #tpu.memory_space<vmem>>, %arg27: memref<1x64xf32, #tpu.memory_space<vmem>>, %arg28: memref<36x34xbf16, #tpu.memory_space<vmem>>, %arg29: memref<20x18xbf16, #tpu.memory_space<vmem>>, %arg30: memref<12x10xbf16, #tpu.memory_space<vmem>>, %arg31: memref<8x6xbf16, #tpu.memory_space<vmem>>, %arg32: memref<6x4xbf16, #tpu.memory_space<vmem>>, %arg33: memref<128x128xbf16, #tpu.memory_space<vmem>>, %arg34: memref<128x128xbf16, #tpu.memory_space<vmem>>, %arg35: memref<128x128xbf16, #tpu.memory_space<vmem>>, %arg36: memref<128x128xbf16, #tpu.memory_space<vmem>>, %arg37: memref<64x64xbf16, #tpu.memory_space<vmem>>, %arg38: memref<20x32xbf16, #tpu.memory_space<vmem>>, %arg39: memref<12x16xbf16, #tpu.memory_space<vmem>>, %arg40: memref<8x8xbf16, #tpu.memory_space<vmem>>, %arg41: memref<6x4xbf16, #tpu.memory_space<vmem>>, %arg42: memref<64x64xbf16, #tpu.memory_space<vmem>>, %arg43: memref<1x64xf32, #tpu.memory_space<vmem>>, %arg44: memref<64x64xbf16, #tpu.memory_space<vmem>>, %arg45: memref<1x64xf32, #tpu.memory_space<vmem>>, %arg46: memref<64x10xbf16, #tpu.memory_space<vmem>>, %arg47: memref<1x10xf32, #tpu.memory_space<vmem>>, %arg48: memref<1x1x10xf32, #tpu.memory_space<vmem>>) attributes {dimension_semantics = [#tpu.dimension_semantics<parallel>], iteration_bounds = array<i64: 2>, scalar_prefetch = 0 : i64, scratch_operands = 0 : i64, tpu.core_type = #tpu.core_type<tc>, window_params = [{transform_indices = @transform_0, window_bounds = array<i64: 1, 36, 96>}, {pipeline_mode = #tpu.pipeline_mode<synchronous>, transform_indices = @transform_1, window_bounds = array<i64: 3, 96, 128>}, {pipeline_mode = #tpu.pipeline_mode<synchronous>, transform_indices = @transform_2, window_bounds = array<i64: 1, 128>}, {pipeline_mode = #tpu.pipeline_mode<synchronous>, transform_indices = @transform_3, window_bounds = array<i64: 3, 128, 128>}, {pipeline_mode = #tpu.pipeline_mode<synchronous>, transform_indices = @transform_4, window_bounds = array<i64: 1, 128>}, {pipeline_mode = #tpu.pipeline_mode<synchronous>, transform_indices = @transform_5, window_bounds = array<i64: 3, 128, 128>}, {pipeline_mode = #tpu.pipeline_mode<synchronous>, transform_indices = @transform_6, window_bounds = array<i64: 1, 128>}, {pipeline_mode = #tpu.pipeline_mode<synchronous>, transform_indices = @transform_7, window_bounds = array<i64: 3, 128, 128>}, {pipeline_mode = #tpu.pipeline_mode<synchronous>, transform_indices = @transform_8, window_bounds = array<i64: 1, 128>}, {pipeline_mode = #tpu.pipeline_mode<synchronous>, transform_indices = @transform_9, window_bounds = array<i64: 3, 128, 128>}, {pipeline_mode = #tpu.pipeline_mode<synchronous>, transform_indices = @transform_10, window_bounds = array<i64: 1, 128>}, {pipeline_mode = #tpu.pipeline_mode<synchronous>, transform_indices = @transform_11, window_bounds = array<i64: 3, 128, 128>}, {pipeline_mode = #tpu.pipeline_mode<synchronous>, transform_indices = @transform_12, window_bounds = array<i64: 1, 128>}, {pipeline_mode = #tpu.pipeline_mode<synchronous>, transform_indices = @transform_13, window_bounds = array<i64: 3, 128, 128>}, {pipeline_mode = #tpu.pipeline_mode<synchronous>, transform_indices = @transform_14, window_bounds = array<i64: 1, 128>}, {pipeline_mode = #tpu.pipeline_mode<synchronous>, transform_indices = @transform_15, window_bounds = array<i64: 3, 128, 128>}, {pipeline_mode = #tpu.pipeline_mode<synchronous>, transform_indices = @transform_16, window_bounds = array<i64: 1, 128>}, {pipeline_mode = #tpu.pipeline_mode<synchronous>, transform_indices = @transform_17, window_bounds = array<i64: 3, 128, 128>}, {pipeline_mode = #tpu.pipeline_mode<synchronous>, transform_indices = @transform_18, window_bounds = array<i64: 1, 128>}, {pipeline_mode = #tpu.pipeline_mode<synchronous>, transform_indices = @transform_19, window_bounds = array<i64: 3, 128, 128>}, {pipeline_mode = #tpu.pipeline_mode<synchronous>, transform_indices = @transform_20, window_bounds = array<i64: 1, 128>}, {pipeline_mode = #tpu.pipeline_mode<synchronous>, transform_indices = @transform_21, window_bounds = array<i64: 3, 128, 64>}, {pipeline_mode = #tpu.pipeline_mode<synchronous>, transform_indices = @transform_22, window_bounds = array<i64: 1, 64>}, {pipeline_mode = #tpu.pipeline_mode<synchronous>, transform_indices = @transform_23, window_bounds = array<i64: 3, 64, 64>}, {pipeline_mode = #tpu.pipeline_mode<synchronous>, transform_indices = @transform_24, window_bounds = array<i64: 1, 64>}, {pipeline_mode = #tpu.pipeline_mode<synchronous>, transform_indices = @transform_25, window_bounds = array<i64: 3, 64, 64>}, {pipeline_mode = #tpu.pipeline_mode<synchronous>, transform_indices = @transform_26, window_bounds = array<i64: 1, 64>}, {pipeline_mode = #tpu.pipeline_mode<synchronous>, transform_indices = @transform_27, window_bounds = array<i64: 36, 34>}, {pipeline_mode = #tpu.pipeline_mode<synchronous>, transform_indices = @transform_28, window_bounds = array<i64: 20, 18>}, {pipeline_mode = #tpu.pipeline_mode<synchronous>, transform_indices = @transform_29, window_bounds = array<i64: 12, 10>}, {pipeline_mode = #tpu.pipeline_mode<synchronous>, transform_indices = @transform_30, window_bounds = array<i64: 8, 6>}, {pipeline_mode = #tpu.pipeline_mode<synchronous>, transform_indices = @transform_31, window_bounds = array<i64: 6, 4>}, {pipeline_mode = #tpu.pipeline_mode<synchronous>, transform_indices = @transform_32, window_bounds = array<i64: 128, 128>}, {pipeline_mode = #tpu.pipeline_mode<synchronous>, transform_indices = @transform_33, window_bounds = array<i64: 128, 128>}, {pipeline_mode = #tpu.pipeline_mode<synchronous>, transform_indices = @transform_34, window_bounds = array<i64: 128, 128>}, {pipeline_mode = #tpu.pipeline_mode<synchronous>, transform_indices = @transform_35, window_bounds = array<i64: 128, 128>}, {pipeline_mode = #tpu.pipeline_mode<synchronous>, transform_indices = @transform_36, window_bounds = array<i64: 64, 64>}, {pipeline_mode = #tpu.pipeline_mode<synchronous>, transform_indices = @transform_37, window_bounds = array<i64: 20, 32>}, {pipeline_mode = #tpu.pipeline_mode<synchronous>, transform_indices = @transform_38, window_bounds = array<i64: 12, 16>}, {pipeline_mode = #tpu.pipeline_mode<synchronous>, transform_indices = @transform_39, window_bounds = array<i64: 8, 8>}, {pipeline_mode = #tpu.pipeline_mode<synchronous>, transform_indices = @transform_40, window_bounds = array<i64: 6, 4>}, {pipeline_mode = #tpu.pipeline_mode<synchronous>, transform_indices = @transform_41, window_bounds = array<i64: 64, 64>}, {pipeline_mode = #tpu.pipeline_mode<synchronous>, transform_indices = @transform_42, window_bounds = array<i64: 1, 64>}, {pipeline_mode = #tpu.pipeline_mode<synchronous>, transform_indices = @transform_43, window_bounds = array<i64: 64, 64>}, {pipeline_mode = #tpu.pipeline_mode<synchronous>, transform_indices = @transform_44, window_bounds = array<i64: 1, 64>}, {pipeline_mode = #tpu.pipeline_mode<synchronous>, transform_indices = @transform_45, window_bounds = array<i64: 64, 10>}, {pipeline_mode = #tpu.pipeline_mode<synchronous>, transform_indices = @transform_46, window_bounds = array<i64: 1, 10>}, {transform_indices = @transform_47, window_bounds = array<i64: 1, 1, 10>}]} {
    %c0 = arith.constant 0 : index
    %c0_0 = arith.constant 0 : index
    %c0_1 = arith.constant 0 : index
    %0 = vector.load %arg1[%c0, %c0_0, %c0_1] : memref<1x36x96xf32, #tpu.memory_space<vmem>>, vector<1x36x96xf32>
    %1 = vector.shape_cast %0 : vector<1x36x96xf32> to vector<36x96xf32>
    %2 = arith.truncf %1 : vector<36x96xf32> to vector<36x96xbf16>
    %3 = vector.extract_strided_slice %2 {offsets = [0, 0], sizes = [34, 96], strides = [1, 1]} : vector<36x96xbf16> to vector<34x96xbf16>
    %c0_2 = arith.constant 0 : index
    %c0_3 = arith.constant 0 : index
    %c0_4 = arith.constant 0 : index
    %4 = vector.load %arg2[%c0_2, %c0_3, %c0_4] : memref<3x96x128xbf16, #tpu.memory_space<vmem>>, vector<1x96x128xbf16>
    %5 = vector.shape_cast %4 : vector<1x96x128xbf16> to vector<96x128xbf16>
    %cst = arith.constant dense<0.000000e+00> : vector<34x128xf32>
    %6 = tpu.matmul %3, %5, %cst {dimension_numbers = #tpu.dot_dimension_numbers<[1], [0], [0], [1], [0, 0, 1, 1], [], []>} : vector<34x96xbf16>, vector<96x128xbf16>, vector<34x128xf32> -> vector<34x128xf32>
    %7 = vector.extract_strided_slice %2 {offsets = [1, 0], sizes = [34, 96], strides = [1, 1]} : vector<36x96xbf16> to vector<34x96xbf16>
    %c1 = arith.constant 1 : index
    %c0_5 = arith.constant 0 : index
    %c0_6 = arith.constant 0 : index
    %8 = vector.load %arg2[%c1, %c0_5, %c0_6] : memref<3x96x128xbf16, #tpu.memory_space<vmem>>, vector<1x96x128xbf16>
    %9 = vector.shape_cast %8 : vector<1x96x128xbf16> to vector<96x128xbf16>
    %cst_7 = arith.constant dense<0.000000e+00> : vector<34x128xf32>
    %10 = tpu.matmul %7, %9, %cst_7 {dimension_numbers = #tpu.dot_dimension_numbers<[1], [0], [0], [1], [0, 0, 1, 1], [], []>} : vector<34x96xbf16>, vector<96x128xbf16>, vector<34x128xf32> -> vector<34x128xf32>
    %11 = arith.addf %6, %10 : vector<34x128xf32>
    %12 = vector.extract_strided_slice %2 {offsets = [2, 0], sizes = [34, 96], strides = [1, 1]} : vector<36x96xbf16> to vector<34x96xbf16>
    %c2 = arith.constant 2 : index
    %c0_8 = arith.constant 0 : index
    %c0_9 = arith.constant 0 : index
    %13 = vector.load %arg2[%c2, %c0_8, %c0_9] : memref<3x96x128xbf16, #tpu.memory_space<vmem>>, vector<1x96x128xbf16>
    %14 = vector.shape_cast %13 : vector<1x96x128xbf16> to vector<96x128xbf16>
    %cst_10 = arith.constant dense<0.000000e+00> : vector<34x128xf32>
    %15 = tpu.matmul %12, %14, %cst_10 {dimension_numbers = #tpu.dot_dimension_numbers<[1], [0], [0], [1], [0, 0, 1, 1], [], []>} : vector<34x96xbf16>, vector<96x128xbf16>, vector<34x128xf32> -> vector<34x128xf32>
    %16 = arith.addf %11, %15 : vector<34x128xf32>
    %c0_11 = arith.constant 0 : index
    %c0_12 = arith.constant 0 : index
    %17 = vector.load %arg3[%c0_11, %c0_12] : memref<1x128xf32, #tpu.memory_space<vmem>>, vector<1x128xf32>
    %18 = vector.broadcast %17 : vector<1x128xf32> to vector<34x128xf32>
    %19 = arith.addf %16, %18 : vector<34x128xf32>
    %cst_13 = arith.constant 0.000000e+00 : f32
    %20 = vector.broadcast %cst_13 : f32 to vector<34x128xf32>
    %21 = arith.maximumf %19, %20 : vector<34x128xf32>
    %22 = arith.truncf %21 : vector<34x128xf32> to vector<34x128xbf16>
    %c0_14 = arith.constant 0 : index
    %c0_15 = arith.constant 0 : index
    %23 = vector.load %arg28[%c0_14, %c0_15] : memref<36x34xbf16, #tpu.memory_space<vmem>>, vector<36x34xbf16>
    %cst_16 = arith.constant dense<0.000000e+00> : vector<36x128xf32>
    %24 = tpu.matmul %23, %22, %cst_16 {dimension_numbers = #tpu.dot_dimension_numbers<[1], [0], [0], [1], [0, 0, 1, 1], [], []>} : vector<36x34xbf16>, vector<34x128xbf16>, vector<36x128xf32> -> vector<36x128xf32>
    %25 = arith.truncf %24 : vector<36x128xf32> to vector<36x128xbf16>
    %26 = vector.extract_strided_slice %25 {offsets = [0, 0], sizes = [34, 128], strides = [1, 1]} : vector<36x128xbf16> to vector<34x128xbf16>
    %c0_17 = arith.constant 0 : index
    %c0_18 = arith.constant 0 : index
    %c0_19 = arith.constant 0 : index
    %27 = vector.load %arg4[%c0_17, %c0_18, %c0_19] : memref<3x128x128xbf16, #tpu.memory_space<vmem>>, vector<1x128x128xbf16>
    %28 = vector.shape_cast %27 : vector<1x128x128xbf16> to vector<128x128xbf16>
    %cst_20 = arith.constant dense<0.000000e+00> : vector<34x128xf32>
    %29 = tpu.matmul %26, %28, %cst_20 {dimension_numbers = #tpu.dot_dimension_numbers<[1], [0], [0], [1], [0, 0, 1, 1], [], []>} : vector<34x128xbf16>, vector<128x128xbf16>, vector<34x128xf32> -> vector<34x128xf32>
    %30 = vector.extract_strided_slice %25 {offsets = [1, 0], sizes = [34, 128], strides = [1, 1]} : vector<36x128xbf16> to vector<34x128xbf16>
    %c1_21 = arith.constant 1 : index
    %c0_22 = arith.constant 0 : index
    %c0_23 = arith.constant 0 : index
    %31 = vector.load %arg4[%c1_21, %c0_22, %c0_23] : memref<3x128x128xbf16, #tpu.memory_space<vmem>>, vector<1x128x128xbf16>
    %32 = vector.shape_cast %31 : vector<1x128x128xbf16> to vector<128x128xbf16>
    %cst_24 = arith.constant dense<0.000000e+00> : vector<34x128xf32>
    %33 = tpu.matmul %30, %32, %cst_24 {dimension_numbers = #tpu.dot_dimension_numbers<[1], [0], [0], [1], [0, 0, 1, 1], [], []>} : vector<34x128xbf16>, vector<128x128xbf16>, vector<34x128xf32> -> vector<34x128xf32>
    %34 = arith.addf %29, %33 : vector<34x128xf32>
    %35 = vector.extract_strided_slice %25 {offsets = [2, 0], sizes = [34, 128], strides = [1, 1]} : vector<36x128xbf16> to vector<34x128xbf16>
    %c2_25 = arith.constant 2 : index
    %c0_26 = arith.constant 0 : index
    %c0_27 = arith.constant 0 : index
    %36 = vector.load %arg4[%c2_25, %c0_26, %c0_27] : memref<3x128x128xbf16, #tpu.memory_space<vmem>>, vector<1x128x128xbf16>
    %37 = vector.shape_cast %36 : vector<1x128x128xbf16> to vector<128x128xbf16>
    %cst_28 = arith.constant dense<0.000000e+00> : vector<34x128xf32>
    %38 = tpu.matmul %35, %37, %cst_28 {dimension_numbers = #tpu.dot_dimension_numbers<[1], [0], [0], [1], [0, 0, 1, 1], [], []>} : vector<34x128xbf16>, vector<128x128xbf16>, vector<34x128xf32> -> vector<34x128xf32>
    %39 = arith.addf %34, %38 : vector<34x128xf32>
    %c0_29 = arith.constant 0 : index
    %c0_30 = arith.constant 0 : index
    %40 = vector.load %arg5[%c0_29, %c0_30] : memref<1x128xf32, #tpu.memory_space<vmem>>, vector<1x128xf32>
    %41 = vector.broadcast %40 : vector<1x128xf32> to vector<34x128xf32>
    %42 = arith.addf %39, %41 : vector<34x128xf32>
    %cst_31 = arith.constant 0.000000e+00 : f32
    %43 = vector.broadcast %cst_31 : f32 to vector<34x128xf32>
    %44 = arith.maximumf %42, %43 : vector<34x128xf32>
    %45 = arith.truncf %44 : vector<34x128xf32> to vector<34x128xbf16>
    %c0_32 = arith.constant 0 : index
    %c0_33 = arith.constant 0 : index
    %46 = vector.load %arg33[%c0_32, %c0_33] : memref<128x128xbf16, #tpu.memory_space<vmem>>, vector<128x128xbf16>
    %cst_34 = arith.constant dense<0.000000e+00> : vector<34x128xf32>
    %47 = tpu.matmul %45, %46, %cst_34 {dimension_numbers = #tpu.dot_dimension_numbers<[1], [0], [0], [1], [0, 0, 1, 1], [], []>} : vector<34x128xbf16>, vector<128x128xbf16>, vector<34x128xf32> -> vector<34x128xf32>
    %48 = arith.truncf %47 : vector<34x128xf32> to vector<34x128xbf16>
    %49 = arith.maximumf %45, %48 : vector<34x128xbf16>
    %50 = vector.extract_strided_slice %49 {offsets = [1, 0], sizes = [32, 128], strides = [1, 1]} : vector<34x128xbf16> to vector<32x128xbf16>
    %51 = vector.extract_strided_slice %49 {offsets = [2, 0], sizes = [32, 128], strides = [1, 1]} : vector<34x128xbf16> to vector<32x128xbf16>
    %52 = arith.maximumf %50, %51 : vector<32x128xbf16>
    %c0_35 = arith.constant 0 : index
    %c0_36 = arith.constant 0 : index
    %53 = vector.load %arg38[%c0_35, %c0_36] : memref<20x32xbf16, #tpu.memory_space<vmem>>, vector<20x32xbf16>
    %cst_37 = arith.constant dense<0.000000e+00> : vector<20x128xf32>
    %54 = tpu.matmul %53, %52, %cst_37 {dimension_numbers = #tpu.dot_dimension_numbers<[1], [0], [0], [1], [0, 0, 1, 1], [], []>} : vector<20x32xbf16>, vector<32x128xbf16>, vector<20x128xf32> -> vector<20x128xf32>
    %55 = arith.truncf %54 : vector<20x128xf32> to vector<20x128xbf16>
    %56 = vector.extract_strided_slice %55 {offsets = [0, 0], sizes = [18, 128], strides = [1, 1]} : vector<20x128xbf16> to vector<18x128xbf16>
    %c0_38 = arith.constant 0 : index
    %c0_39 = arith.constant 0 : index
    %c0_40 = arith.constant 0 : index
    %57 = vector.load %arg6[%c0_38, %c0_39, %c0_40] : memref<3x128x128xbf16, #tpu.memory_space<vmem>>, vector<1x128x128xbf16>
    %58 = vector.shape_cast %57 : vector<1x128x128xbf16> to vector<128x128xbf16>
    %cst_41 = arith.constant dense<0.000000e+00> : vector<18x128xf32>
    %59 = tpu.matmul %56, %58, %cst_41 {dimension_numbers = #tpu.dot_dimension_numbers<[1], [0], [0], [1], [0, 0, 1, 1], [], []>} : vector<18x128xbf16>, vector<128x128xbf16>, vector<18x128xf32> -> vector<18x128xf32>
    %60 = vector.extract_strided_slice %55 {offsets = [1, 0], sizes = [18, 128], strides = [1, 1]} : vector<20x128xbf16> to vector<18x128xbf16>
    %c1_42 = arith.constant 1 : index
    %c0_43 = arith.constant 0 : index
    %c0_44 = arith.constant 0 : index
    %61 = vector.load %arg6[%c1_42, %c0_43, %c0_44] : memref<3x128x128xbf16, #tpu.memory_space<vmem>>, vector<1x128x128xbf16>
    %62 = vector.shape_cast %61 : vector<1x128x128xbf16> to vector<128x128xbf16>
    %cst_45 = arith.constant dense<0.000000e+00> : vector<18x128xf32>
    %63 = tpu.matmul %60, %62, %cst_45 {dimension_numbers = #tpu.dot_dimension_numbers<[1], [0], [0], [1], [0, 0, 1, 1], [], []>} : vector<18x128xbf16>, vector<128x128xbf16>, vector<18x128xf32> -> vector<18x128xf32>
    %64 = arith.addf %59, %63 : vector<18x128xf32>
    %65 = vector.extract_strided_slice %55 {offsets = [2, 0], sizes = [18, 128], strides = [1, 1]} : vector<20x128xbf16> to vector<18x128xbf16>
    %c2_46 = arith.constant 2 : index
    %c0_47 = arith.constant 0 : index
    %c0_48 = arith.constant 0 : index
    %66 = vector.load %arg6[%c2_46, %c0_47, %c0_48] : memref<3x128x128xbf16, #tpu.memory_space<vmem>>, vector<1x128x128xbf16>
    %67 = vector.shape_cast %66 : vector<1x128x128xbf16> to vector<128x128xbf16>
    %cst_49 = arith.constant dense<0.000000e+00> : vector<18x128xf32>
    %68 = tpu.matmul %65, %67, %cst_49 {dimension_numbers = #tpu.dot_dimension_numbers<[1], [0], [0], [1], [0, 0, 1, 1], [], []>} : vector<18x128xbf16>, vector<128x128xbf16>, vector<18x128xf32> -> vector<18x128xf32>
    %69 = arith.addf %64, %68 : vector<18x128xf32>
    %c0_50 = arith.constant 0 : index
    %c0_51 = arith.constant 0 : index
    %70 = vector.load %arg7[%c0_50, %c0_51] : memref<1x128xf32, #tpu.memory_space<vmem>>, vector<1x128xf32>
    %71 = vector.broadcast %70 : vector<1x128xf32> to vector<18x128xf32>
    %72 = arith.addf %69, %71 : vector<18x128xf32>
    %cst_52 = arith.constant 0.000000e+00 : f32
    %73 = vector.broadcast %cst_52 : f32 to vector<18x128xf32>
    %74 = arith.maximumf %72, %73 : vector<18x128xf32>
    %75 = arith.truncf %74 : vector<18x128xf32> to vector<18x128xbf16>
    %c0_53 = arith.constant 0 : index
    %c0_54 = arith.constant 0 : index
    %76 = vector.load %arg29[%c0_53, %c0_54] : memref<20x18xbf16, #tpu.memory_space<vmem>>, vector<20x18xbf16>
    %cst_55 = arith.constant dense<0.000000e+00> : vector<20x128xf32>
    %77 = tpu.matmul %76, %75, %cst_55 {dimension_numbers = #tpu.dot_dimension_numbers<[1], [0], [0], [1], [0, 0, 1, 1], [], []>} : vector<20x18xbf16>, vector<18x128xbf16>, vector<20x128xf32> -> vector<20x128xf32>
    %78 = arith.truncf %77 : vector<20x128xf32> to vector<20x128xbf16>
    %79 = vector.extract_strided_slice %78 {offsets = [0, 0], sizes = [18, 128], strides = [1, 1]} : vector<20x128xbf16> to vector<18x128xbf16>
    %c0_56 = arith.constant 0 : index
    %c0_57 = arith.constant 0 : index
    %c0_58 = arith.constant 0 : index
    %80 = vector.load %arg8[%c0_56, %c0_57, %c0_58] : memref<3x128x128xbf16, #tpu.memory_space<vmem>>, vector<1x128x128xbf16>
    %81 = vector.shape_cast %80 : vector<1x128x128xbf16> to vector<128x128xbf16>
    %cst_59 = arith.constant dense<0.000000e+00> : vector<18x128xf32>
    %82 = tpu.matmul %79, %81, %cst_59 {dimension_numbers = #tpu.dot_dimension_numbers<[1], [0], [0], [1], [0, 0, 1, 1], [], []>} : vector<18x128xbf16>, vector<128x128xbf16>, vector<18x128xf32> -> vector<18x128xf32>
    %83 = vector.extract_strided_slice %78 {offsets = [1, 0], sizes = [18, 128], strides = [1, 1]} : vector<20x128xbf16> to vector<18x128xbf16>
    %c1_60 = arith.constant 1 : index
    %c0_61 = arith.constant 0 : index
    %c0_62 = arith.constant 0 : index
    %84 = vector.load %arg8[%c1_60, %c0_61, %c0_62] : memref<3x128x128xbf16, #tpu.memory_space<vmem>>, vector<1x128x128xbf16>
    %85 = vector.shape_cast %84 : vector<1x128x128xbf16> to vector<128x128xbf16>
    %cst_63 = arith.constant dense<0.000000e+00> : vector<18x128xf32>
    %86 = tpu.matmul %83, %85, %cst_63 {dimension_numbers = #tpu.dot_dimension_numbers<[1], [0], [0], [1], [0, 0, 1, 1], [], []>} : vector<18x128xbf16>, vector<128x128xbf16>, vector<18x128xf32> -> vector<18x128xf32>
    %87 = arith.addf %82, %86 : vector<18x128xf32>
    %88 = vector.extract_strided_slice %78 {offsets = [2, 0], sizes = [18, 128], strides = [1, 1]} : vector<20x128xbf16> to vector<18x128xbf16>
    %c2_64 = arith.constant 2 : index
    %c0_65 = arith.constant 0 : index
    %c0_66 = arith.constant 0 : index
    %89 = vector.load %arg8[%c2_64, %c0_65, %c0_66] : memref<3x128x128xbf16, #tpu.memory_space<vmem>>, vector<1x128x128xbf16>
    %90 = vector.shape_cast %89 : vector<1x128x128xbf16> to vector<128x128xbf16>
    %cst_67 = arith.constant dense<0.000000e+00> : vector<18x128xf32>
    %91 = tpu.matmul %88, %90, %cst_67 {dimension_numbers = #tpu.dot_dimension_numbers<[1], [0], [0], [1], [0, 0, 1, 1], [], []>} : vector<18x128xbf16>, vector<128x128xbf16>, vector<18x128xf32> -> vector<18x128xf32>
    %92 = arith.addf %87, %91 : vector<18x128xf32>
    %c0_68 = arith.constant 0 : index
    %c0_69 = arith.constant 0 : index
    %93 = vector.load %arg9[%c0_68, %c0_69] : memref<1x128xf32, #tpu.memory_space<vmem>>, vector<1x128xf32>
    %94 = vector.broadcast %93 : vector<1x128xf32> to vector<18x128xf32>
    %95 = arith.addf %92, %94 : vector<18x128xf32>
    %cst_70 = arith.constant 0.000000e+00 : f32
    %96 = vector.broadcast %cst_70 : f32 to vector<18x128xf32>
    %97 = arith.maximumf %95, %96 : vector<18x128xf32>
    %98 = arith.truncf %97 : vector<18x128xf32> to vector<18x128xbf16>
    %c0_71 = arith.constant 0 : index
    %c0_72 = arith.constant 0 : index
    %99 = vector.load %arg34[%c0_71, %c0_72] : memref<128x128xbf16, #tpu.memory_space<vmem>>, vector<128x128xbf16>
    %cst_73 = arith.constant dense<0.000000e+00> : vector<18x128xf32>
    %100 = tpu.matmul %98, %99, %cst_73 {dimension_numbers = #tpu.dot_dimension_numbers<[1], [0], [0], [1], [0, 0, 1, 1], [], []>} : vector<18x128xbf16>, vector<128x128xbf16>, vector<18x128xf32> -> vector<18x128xf32>
    %101 = arith.truncf %100 : vector<18x128xf32> to vector<18x128xbf16>
    %102 = arith.maximumf %98, %101 : vector<18x128xbf16>
    %103 = vector.extract_strided_slice %102 {offsets = [1, 0], sizes = [16, 128], strides = [1, 1]} : vector<18x128xbf16> to vector<16x128xbf16>
    %104 = vector.extract_strided_slice %102 {offsets = [2, 0], sizes = [16, 128], strides = [1, 1]} : vector<18x128xbf16> to vector<16x128xbf16>
    %105 = arith.maximumf %103, %104 : vector<16x128xbf16>
    %c0_74 = arith.constant 0 : index
    %c0_75 = arith.constant 0 : index
    %106 = vector.load %arg39[%c0_74, %c0_75] : memref<12x16xbf16, #tpu.memory_space<vmem>>, vector<12x16xbf16>
    %cst_76 = arith.constant dense<0.000000e+00> : vector<12x128xf32>
    %107 = tpu.matmul %106, %105, %cst_76 {dimension_numbers = #tpu.dot_dimension_numbers<[1], [0], [0], [1], [0, 0, 1, 1], [], []>} : vector<12x16xbf16>, vector<16x128xbf16>, vector<12x128xf32> -> vector<12x128xf32>
    %108 = arith.truncf %107 : vector<12x128xf32> to vector<12x128xbf16>
    %109 = vector.extract_strided_slice %108 {offsets = [0, 0], sizes = [10, 128], strides = [1, 1]} : vector<12x128xbf16> to vector<10x128xbf16>
    %c0_77 = arith.constant 0 : index
    %c0_78 = arith.constant 0 : index
    %c0_79 = arith.constant 0 : index
    %110 = vector.load %arg10[%c0_77, %c0_78, %c0_79] : memref<3x128x128xbf16, #tpu.memory_space<vmem>>, vector<1x128x128xbf16>
    %111 = vector.shape_cast %110 : vector<1x128x128xbf16> to vector<128x128xbf16>
    %cst_80 = arith.constant dense<0.000000e+00> : vector<10x128xf32>
    %112 = tpu.matmul %109, %111, %cst_80 {dimension_numbers = #tpu.dot_dimension_numbers<[1], [0], [0], [1], [0, 0, 1, 1], [], []>} : vector<10x128xbf16>, vector<128x128xbf16>, vector<10x128xf32> -> vector<10x128xf32>
    %113 = vector.extract_strided_slice %108 {offsets = [1, 0], sizes = [10, 128], strides = [1, 1]} : vector<12x128xbf16> to vector<10x128xbf16>
    %c1_81 = arith.constant 1 : index
    %c0_82 = arith.constant 0 : index
    %c0_83 = arith.constant 0 : index
    %114 = vector.load %arg10[%c1_81, %c0_82, %c0_83] : memref<3x128x128xbf16, #tpu.memory_space<vmem>>, vector<1x128x128xbf16>
    %115 = vector.shape_cast %114 : vector<1x128x128xbf16> to vector<128x128xbf16>
    %cst_84 = arith.constant dense<0.000000e+00> : vector<10x128xf32>
    %116 = tpu.matmul %113, %115, %cst_84 {dimension_numbers = #tpu.dot_dimension_numbers<[1], [0], [0], [1], [0, 0, 1, 1], [], []>} : vector<10x128xbf16>, vector<128x128xbf16>, vector<10x128xf32> -> vector<10x128xf32>
    %117 = arith.addf %112, %116 : vector<10x128xf32>
    %118 = vector.extract_strided_slice %108 {offsets = [2, 0], sizes = [10, 128], strides = [1, 1]} : vector<12x128xbf16> to vector<10x128xbf16>
    %c2_85 = arith.constant 2 : index
    %c0_86 = arith.constant 0 : index
    %c0_87 = arith.constant 0 : index
    %119 = vector.load %arg10[%c2_85, %c0_86, %c0_87] : memref<3x128x128xbf16, #tpu.memory_space<vmem>>, vector<1x128x128xbf16>
    %120 = vector.shape_cast %119 : vector<1x128x128xbf16> to vector<128x128xbf16>
    %cst_88 = arith.constant dense<0.000000e+00> : vector<10x128xf32>
    %121 = tpu.matmul %118, %120, %cst_88 {dimension_numbers = #tpu.dot_dimension_numbers<[1], [0], [0], [1], [0, 0, 1, 1], [], []>} : vector<10x128xbf16>, vector<128x128xbf16>, vector<10x128xf32> -> vector<10x128xf32>
    %122 = arith.addf %117, %121 : vector<10x128xf32>
    %c0_89 = arith.constant 0 : index
    %c0_90 = arith.constant 0 : index
    %123 = vector.load %arg11[%c0_89, %c0_90] : memref<1x128xf32, #tpu.memory_space<vmem>>, vector<1x128xf32>
    %124 = vector.broadcast %123 : vector<1x128xf32> to vector<10x128xf32>
    %125 = arith.addf %122, %124 : vector<10x128xf32>
    %cst_91 = arith.constant 0.000000e+00 : f32
    %126 = vector.broadcast %cst_91 : f32 to vector<10x128xf32>
    %127 = arith.maximumf %125, %126 : vector<10x128xf32>
    %128 = arith.truncf %127 : vector<10x128xf32> to vector<10x128xbf16>
    %c0_92 = arith.constant 0 : index
    %c0_93 = arith.constant 0 : index
    %129 = vector.load %arg30[%c0_92, %c0_93] : memref<12x10xbf16, #tpu.memory_space<vmem>>, vector<12x10xbf16>
    %cst_94 = arith.constant dense<0.000000e+00> : vector<12x128xf32>
    %130 = tpu.matmul %129, %128, %cst_94 {dimension_numbers = #tpu.dot_dimension_numbers<[1], [0], [0], [1], [0, 0, 1, 1], [], []>} : vector<12x10xbf16>, vector<10x128xbf16>, vector<12x128xf32> -> vector<12x128xf32>
    %131 = arith.truncf %130 : vector<12x128xf32> to vector<12x128xbf16>
    %132 = vector.extract_strided_slice %131 {offsets = [0, 0], sizes = [10, 128], strides = [1, 1]} : vector<12x128xbf16> to vector<10x128xbf16>
    %c0_95 = arith.constant 0 : index
    %c0_96 = arith.constant 0 : index
    %c0_97 = arith.constant 0 : index
    %133 = vector.load %arg12[%c0_95, %c0_96, %c0_97] : memref<3x128x128xbf16, #tpu.memory_space<vmem>>, vector<1x128x128xbf16>
    %134 = vector.shape_cast %133 : vector<1x128x128xbf16> to vector<128x128xbf16>
    %cst_98 = arith.constant dense<0.000000e+00> : vector<10x128xf32>
    %135 = tpu.matmul %132, %134, %cst_98 {dimension_numbers = #tpu.dot_dimension_numbers<[1], [0], [0], [1], [0, 0, 1, 1], [], []>} : vector<10x128xbf16>, vector<128x128xbf16>, vector<10x128xf32> -> vector<10x128xf32>
    %136 = vector.extract_strided_slice %131 {offsets = [1, 0], sizes = [10, 128], strides = [1, 1]} : vector<12x128xbf16> to vector<10x128xbf16>
    %c1_99 = arith.constant 1 : index
    %c0_100 = arith.constant 0 : index
    %c0_101 = arith.constant 0 : index
    %137 = vector.load %arg12[%c1_99, %c0_100, %c0_101] : memref<3x128x128xbf16, #tpu.memory_space<vmem>>, vector<1x128x128xbf16>
    %138 = vector.shape_cast %137 : vector<1x128x128xbf16> to vector<128x128xbf16>
    %cst_102 = arith.constant dense<0.000000e+00> : vector<10x128xf32>
    %139 = tpu.matmul %136, %138, %cst_102 {dimension_numbers = #tpu.dot_dimension_numbers<[1], [0], [0], [1], [0, 0, 1, 1], [], []>} : vector<10x128xbf16>, vector<128x128xbf16>, vector<10x128xf32> -> vector<10x128xf32>
    %140 = arith.addf %135, %139 : vector<10x128xf32>
    %141 = vector.extract_strided_slice %131 {offsets = [2, 0], sizes = [10, 128], strides = [1, 1]} : vector<12x128xbf16> to vector<10x128xbf16>
    %c2_103 = arith.constant 2 : index
    %c0_104 = arith.constant 0 : index
    %c0_105 = arith.constant 0 : index
    %142 = vector.load %arg12[%c2_103, %c0_104, %c0_105] : memref<3x128x128xbf16, #tpu.memory_space<vmem>>, vector<1x128x128xbf16>
    %143 = vector.shape_cast %142 : vector<1x128x128xbf16> to vector<128x128xbf16>
    %cst_106 = arith.constant dense<0.000000e+00> : vector<10x128xf32>
    %144 = tpu.matmul %141, %143, %cst_106 {dimension_numbers = #tpu.dot_dimension_numbers<[1], [0], [0], [1], [0, 0, 1, 1], [], []>} : vector<10x128xbf16>, vector<128x128xbf16>, vector<10x128xf32> -> vector<10x128xf32>
    %145 = arith.addf %140, %144 : vector<10x128xf32>
    %c0_107 = arith.constant 0 : index
    %c0_108 = arith.constant 0 : index
    %146 = vector.load %arg13[%c0_107, %c0_108] : memref<1x128xf32, #tpu.memory_space<vmem>>, vector<1x128xf32>
    %147 = vector.broadcast %146 : vector<1x128xf32> to vector<10x128xf32>
    %148 = arith.addf %145, %147 : vector<10x128xf32>
    %cst_109 = arith.constant 0.000000e+00 : f32
    %149 = vector.broadcast %cst_109 : f32 to vector<10x128xf32>
    %150 = arith.maximumf %148, %149 : vector<10x128xf32>
    %151 = arith.truncf %150 : vector<10x128xf32> to vector<10x128xbf16>
    %c0_110 = arith.constant 0 : index
    %c0_111 = arith.constant 0 : index
    %152 = vector.load %arg30[%c0_110, %c0_111] : memref<12x10xbf16, #tpu.memory_space<vmem>>, vector<12x10xbf16>
    %cst_112 = arith.constant dense<0.000000e+00> : vector<12x128xf32>
    %153 = tpu.matmul %152, %151, %cst_112 {dimension_numbers = #tpu.dot_dimension_numbers<[1], [0], [0], [1], [0, 0, 1, 1], [], []>} : vector<12x10xbf16>, vector<10x128xbf16>, vector<12x128xf32> -> vector<12x128xf32>
    %154 = arith.truncf %153 : vector<12x128xf32> to vector<12x128xbf16>
    %155 = vector.extract_strided_slice %154 {offsets = [0, 0], sizes = [10, 128], strides = [1, 1]} : vector<12x128xbf16> to vector<10x128xbf16>
    %c0_113 = arith.constant 0 : index
    %c0_114 = arith.constant 0 : index
    %c0_115 = arith.constant 0 : index
    %156 = vector.load %arg14[%c0_113, %c0_114, %c0_115] : memref<3x128x128xbf16, #tpu.memory_space<vmem>>, vector<1x128x128xbf16>
    %157 = vector.shape_cast %156 : vector<1x128x128xbf16> to vector<128x128xbf16>
    %cst_116 = arith.constant dense<0.000000e+00> : vector<10x128xf32>
    %158 = tpu.matmul %155, %157, %cst_116 {dimension_numbers = #tpu.dot_dimension_numbers<[1], [0], [0], [1], [0, 0, 1, 1], [], []>} : vector<10x128xbf16>, vector<128x128xbf16>, vector<10x128xf32> -> vector<10x128xf32>
    %159 = vector.extract_strided_slice %154 {offsets = [1, 0], sizes = [10, 128], strides = [1, 1]} : vector<12x128xbf16> to vector<10x128xbf16>
    %c1_117 = arith.constant 1 : index
    %c0_118 = arith.constant 0 : index
    %c0_119 = arith.constant 0 : index
    %160 = vector.load %arg14[%c1_117, %c0_118, %c0_119] : memref<3x128x128xbf16, #tpu.memory_space<vmem>>, vector<1x128x128xbf16>
    %161 = vector.shape_cast %160 : vector<1x128x128xbf16> to vector<128x128xbf16>
    %cst_120 = arith.constant dense<0.000000e+00> : vector<10x128xf32>
    %162 = tpu.matmul %159, %161, %cst_120 {dimension_numbers = #tpu.dot_dimension_numbers<[1], [0], [0], [1], [0, 0, 1, 1], [], []>} : vector<10x128xbf16>, vector<128x128xbf16>, vector<10x128xf32> -> vector<10x128xf32>
    %163 = arith.addf %158, %162 : vector<10x128xf32>
    %164 = vector.extract_strided_slice %154 {offsets = [2, 0], sizes = [10, 128], strides = [1, 1]} : vector<12x128xbf16> to vector<10x128xbf16>
    %c2_121 = arith.constant 2 : index
    %c0_122 = arith.constant 0 : index
    %c0_123 = arith.constant 0 : index
    %165 = vector.load %arg14[%c2_121, %c0_122, %c0_123] : memref<3x128x128xbf16, #tpu.memory_space<vmem>>, vector<1x128x128xbf16>
    %166 = vector.shape_cast %165 : vector<1x128x128xbf16> to vector<128x128xbf16>
    %cst_124 = arith.constant dense<0.000000e+00> : vector<10x128xf32>
    %167 = tpu.matmul %164, %166, %cst_124 {dimension_numbers = #tpu.dot_dimension_numbers<[1], [0], [0], [1], [0, 0, 1, 1], [], []>} : vector<10x128xbf16>, vector<128x128xbf16>, vector<10x128xf32> -> vector<10x128xf32>
    %168 = arith.addf %163, %167 : vector<10x128xf32>
    %c0_125 = arith.constant 0 : index
    %c0_126 = arith.constant 0 : index
    %169 = vector.load %arg15[%c0_125, %c0_126] : memref<1x128xf32, #tpu.memory_space<vmem>>, vector<1x128xf32>
    %170 = vector.broadcast %169 : vector<1x128xf32> to vector<10x128xf32>
    %171 = arith.addf %168, %170 : vector<10x128xf32>
    %cst_127 = arith.constant 0.000000e+00 : f32
    %172 = vector.broadcast %cst_127 : f32 to vector<10x128xf32>
    %173 = arith.maximumf %171, %172 : vector<10x128xf32>
    %174 = arith.truncf %173 : vector<10x128xf32> to vector<10x128xbf16>
    %c0_128 = arith.constant 0 : index
    %c0_129 = arith.constant 0 : index
    %175 = vector.load %arg35[%c0_128, %c0_129] : memref<128x128xbf16, #tpu.memory_space<vmem>>, vector<128x128xbf16>
    %cst_130 = arith.constant dense<0.000000e+00> : vector<10x128xf32>
    %176 = tpu.matmul %174, %175, %cst_130 {dimension_numbers = #tpu.dot_dimension_numbers<[1], [0], [0], [1], [0, 0, 1, 1], [], []>} : vector<10x128xbf16>, vector<128x128xbf16>, vector<10x128xf32> -> vector<10x128xf32>
    %177 = arith.truncf %176 : vector<10x128xf32> to vector<10x128xbf16>
    %178 = arith.maximumf %174, %177 : vector<10x128xbf16>
    %179 = vector.extract_strided_slice %178 {offsets = [1, 0], sizes = [8, 128], strides = [1, 1]} : vector<10x128xbf16> to vector<8x128xbf16>
    %180 = vector.extract_strided_slice %178 {offsets = [2, 0], sizes = [8, 128], strides = [1, 1]} : vector<10x128xbf16> to vector<8x128xbf16>
    %181 = arith.maximumf %179, %180 : vector<8x128xbf16>
    %c0_131 = arith.constant 0 : index
    %c0_132 = arith.constant 0 : index
    %182 = vector.load %arg40[%c0_131, %c0_132] : memref<8x8xbf16, #tpu.memory_space<vmem>>, vector<8x8xbf16>
    %cst_133 = arith.constant dense<0.000000e+00> : vector<8x128xf32>
    %183 = tpu.matmul %182, %181, %cst_133 {dimension_numbers = #tpu.dot_dimension_numbers<[1], [0], [0], [1], [0, 0, 1, 1], [], []>} : vector<8x8xbf16>, vector<8x128xbf16>, vector<8x128xf32> -> vector<8x128xf32>
    %184 = arith.truncf %183 : vector<8x128xf32> to vector<8x128xbf16>
    %185 = vector.extract_strided_slice %184 {offsets = [0, 0], sizes = [6, 128], strides = [1, 1]} : vector<8x128xbf16> to vector<6x128xbf16>
    %c0_134 = arith.constant 0 : index
    %c0_135 = arith.constant 0 : index
    %c0_136 = arith.constant 0 : index
    %186 = vector.load %arg16[%c0_134, %c0_135, %c0_136] : memref<3x128x128xbf16, #tpu.memory_space<vmem>>, vector<1x128x128xbf16>
    %187 = vector.shape_cast %186 : vector<1x128x128xbf16> to vector<128x128xbf16>
    %cst_137 = arith.constant dense<0.000000e+00> : vector<6x128xf32>
    %188 = tpu.matmul %185, %187, %cst_137 {dimension_numbers = #tpu.dot_dimension_numbers<[1], [0], [0], [1], [0, 0, 1, 1], [], []>} : vector<6x128xbf16>, vector<128x128xbf16>, vector<6x128xf32> -> vector<6x128xf32>
    %189 = vector.extract_strided_slice %184 {offsets = [1, 0], sizes = [6, 128], strides = [1, 1]} : vector<8x128xbf16> to vector<6x128xbf16>
    %c1_138 = arith.constant 1 : index
    %c0_139 = arith.constant 0 : index
    %c0_140 = arith.constant 0 : index
    %190 = vector.load %arg16[%c1_138, %c0_139, %c0_140] : memref<3x128x128xbf16, #tpu.memory_space<vmem>>, vector<1x128x128xbf16>
    %191 = vector.shape_cast %190 : vector<1x128x128xbf16> to vector<128x128xbf16>
    %cst_141 = arith.constant dense<0.000000e+00> : vector<6x128xf32>
    %192 = tpu.matmul %189, %191, %cst_141 {dimension_numbers = #tpu.dot_dimension_numbers<[1], [0], [0], [1], [0, 0, 1, 1], [], []>} : vector<6x128xbf16>, vector<128x128xbf16>, vector<6x128xf32> -> vector<6x128xf32>
    %193 = arith.addf %188, %192 : vector<6x128xf32>
    %194 = vector.extract_strided_slice %184 {offsets = [2, 0], sizes = [6, 128], strides = [1, 1]} : vector<8x128xbf16> to vector<6x128xbf16>
    %c2_142 = arith.constant 2 : index
    %c0_143 = arith.constant 0 : index
    %c0_144 = arith.constant 0 : index
    %195 = vector.load %arg16[%c2_142, %c0_143, %c0_144] : memref<3x128x128xbf16, #tpu.memory_space<vmem>>, vector<1x128x128xbf16>
    %196 = vector.shape_cast %195 : vector<1x128x128xbf16> to vector<128x128xbf16>
    %cst_145 = arith.constant dense<0.000000e+00> : vector<6x128xf32>
    %197 = tpu.matmul %194, %196, %cst_145 {dimension_numbers = #tpu.dot_dimension_numbers<[1], [0], [0], [1], [0, 0, 1, 1], [], []>} : vector<6x128xbf16>, vector<128x128xbf16>, vector<6x128xf32> -> vector<6x128xf32>
    %198 = arith.addf %193, %197 : vector<6x128xf32>
    %c0_146 = arith.constant 0 : index
    %c0_147 = arith.constant 0 : index
    %199 = vector.load %arg17[%c0_146, %c0_147] : memref<1x128xf32, #tpu.memory_space<vmem>>, vector<1x128xf32>
    %200 = vector.broadcast %199 : vector<1x128xf32> to vector<6x128xf32>
    %201 = arith.addf %198, %200 : vector<6x128xf32>
    %cst_148 = arith.constant 0.000000e+00 : f32
    %202 = vector.broadcast %cst_148 : f32 to vector<6x128xf32>
    %203 = arith.maximumf %201, %202 : vector<6x128xf32>
    %204 = arith.truncf %203 : vector<6x128xf32> to vector<6x128xbf16>
    %c0_149 = arith.constant 0 : index
    %c0_150 = arith.constant 0 : index
    %205 = vector.load %arg31[%c0_149, %c0_150] : memref<8x6xbf16, #tpu.memory_space<vmem>>, vector<8x6xbf16>
    %cst_151 = arith.constant dense<0.000000e+00> : vector<8x128xf32>
    %206 = tpu.matmul %205, %204, %cst_151 {dimension_numbers = #tpu.dot_dimension_numbers<[1], [0], [0], [1], [0, 0, 1, 1], [], []>} : vector<8x6xbf16>, vector<6x128xbf16>, vector<8x128xf32> -> vector<8x128xf32>
    %207 = arith.truncf %206 : vector<8x128xf32> to vector<8x128xbf16>
    %208 = vector.extract_strided_slice %207 {offsets = [0, 0], sizes = [6, 128], strides = [1, 1]} : vector<8x128xbf16> to vector<6x128xbf16>
    %c0_152 = arith.constant 0 : index
    %c0_153 = arith.constant 0 : index
    %c0_154 = arith.constant 0 : index
    %209 = vector.load %arg18[%c0_152, %c0_153, %c0_154] : memref<3x128x128xbf16, #tpu.memory_space<vmem>>, vector<1x128x128xbf16>
    %210 = vector.shape_cast %209 : vector<1x128x128xbf16> to vector<128x128xbf16>
    %cst_155 = arith.constant dense<0.000000e+00> : vector<6x128xf32>
    %211 = tpu.matmul %208, %210, %cst_155 {dimension_numbers = #tpu.dot_dimension_numbers<[1], [0], [0], [1], [0, 0, 1, 1], [], []>} : vector<6x128xbf16>, vector<128x128xbf16>, vector<6x128xf32> -> vector<6x128xf32>
    %212 = vector.extract_strided_slice %207 {offsets = [1, 0], sizes = [6, 128], strides = [1, 1]} : vector<8x128xbf16> to vector<6x128xbf16>
    %c1_156 = arith.constant 1 : index
    %c0_157 = arith.constant 0 : index
    %c0_158 = arith.constant 0 : index
    %213 = vector.load %arg18[%c1_156, %c0_157, %c0_158] : memref<3x128x128xbf16, #tpu.memory_space<vmem>>, vector<1x128x128xbf16>
    %214 = vector.shape_cast %213 : vector<1x128x128xbf16> to vector<128x128xbf16>
    %cst_159 = arith.constant dense<0.000000e+00> : vector<6x128xf32>
    %215 = tpu.matmul %212, %214, %cst_159 {dimension_numbers = #tpu.dot_dimension_numbers<[1], [0], [0], [1], [0, 0, 1, 1], [], []>} : vector<6x128xbf16>, vector<128x128xbf16>, vector<6x128xf32> -> vector<6x128xf32>
    %216 = arith.addf %211, %215 : vector<6x128xf32>
    %217 = vector.extract_strided_slice %207 {offsets = [2, 0], sizes = [6, 128], strides = [1, 1]} : vector<8x128xbf16> to vector<6x128xbf16>
    %c2_160 = arith.constant 2 : index
    %c0_161 = arith.constant 0 : index
    %c0_162 = arith.constant 0 : index
    %218 = vector.load %arg18[%c2_160, %c0_161, %c0_162] : memref<3x128x128xbf16, #tpu.memory_space<vmem>>, vector<1x128x128xbf16>
    %219 = vector.shape_cast %218 : vector<1x128x128xbf16> to vector<128x128xbf16>
    %cst_163 = arith.constant dense<0.000000e+00> : vector<6x128xf32>
    %220 = tpu.matmul %217, %219, %cst_163 {dimension_numbers = #tpu.dot_dimension_numbers<[1], [0], [0], [1], [0, 0, 1, 1], [], []>} : vector<6x128xbf16>, vector<128x128xbf16>, vector<6x128xf32> -> vector<6x128xf32>
    %221 = arith.addf %216, %220 : vector<6x128xf32>
    %c0_164 = arith.constant 0 : index
    %c0_165 = arith.constant 0 : index
    %222 = vector.load %arg19[%c0_164, %c0_165] : memref<1x128xf32, #tpu.memory_space<vmem>>, vector<1x128xf32>
    %223 = vector.broadcast %222 : vector<1x128xf32> to vector<6x128xf32>
    %224 = arith.addf %221, %223 : vector<6x128xf32>
    %cst_166 = arith.constant 0.000000e+00 : f32
    %225 = vector.broadcast %cst_166 : f32 to vector<6x128xf32>
    %226 = arith.maximumf %224, %225 : vector<6x128xf32>
    %227 = arith.truncf %226 : vector<6x128xf32> to vector<6x128xbf16>
    %c0_167 = arith.constant 0 : index
    %c0_168 = arith.constant 0 : index
    %228 = vector.load %arg31[%c0_167, %c0_168] : memref<8x6xbf16, #tpu.memory_space<vmem>>, vector<8x6xbf16>
    %cst_169 = arith.constant dense<0.000000e+00> : vector<8x128xf32>
    %229 = tpu.matmul %228, %227, %cst_169 {dimension_numbers = #tpu.dot_dimension_numbers<[1], [0], [0], [1], [0, 0, 1, 1], [], []>} : vector<8x6xbf16>, vector<6x128xbf16>, vector<8x128xf32> -> vector<8x128xf32>
    %230 = arith.truncf %229 : vector<8x128xf32> to vector<8x128xbf16>
    %231 = vector.extract_strided_slice %230 {offsets = [0, 0], sizes = [6, 128], strides = [1, 1]} : vector<8x128xbf16> to vector<6x128xbf16>
    %c0_170 = arith.constant 0 : index
    %c0_171 = arith.constant 0 : index
    %c0_172 = arith.constant 0 : index
    %232 = vector.load %arg20[%c0_170, %c0_171, %c0_172] : memref<3x128x128xbf16, #tpu.memory_space<vmem>>, vector<1x128x128xbf16>
    %233 = vector.shape_cast %232 : vector<1x128x128xbf16> to vector<128x128xbf16>
    %cst_173 = arith.constant dense<0.000000e+00> : vector<6x128xf32>
    %234 = tpu.matmul %231, %233, %cst_173 {dimension_numbers = #tpu.dot_dimension_numbers<[1], [0], [0], [1], [0, 0, 1, 1], [], []>} : vector<6x128xbf16>, vector<128x128xbf16>, vector<6x128xf32> -> vector<6x128xf32>
    %235 = vector.extract_strided_slice %230 {offsets = [1, 0], sizes = [6, 128], strides = [1, 1]} : vector<8x128xbf16> to vector<6x128xbf16>
    %c1_174 = arith.constant 1 : index
    %c0_175 = arith.constant 0 : index
    %c0_176 = arith.constant 0 : index
    %236 = vector.load %arg20[%c1_174, %c0_175, %c0_176] : memref<3x128x128xbf16, #tpu.memory_space<vmem>>, vector<1x128x128xbf16>
    %237 = vector.shape_cast %236 : vector<1x128x128xbf16> to vector<128x128xbf16>
    %cst_177 = arith.constant dense<0.000000e+00> : vector<6x128xf32>
    %238 = tpu.matmul %235, %237, %cst_177 {dimension_numbers = #tpu.dot_dimension_numbers<[1], [0], [0], [1], [0, 0, 1, 1], [], []>} : vector<6x128xbf16>, vector<128x128xbf16>, vector<6x128xf32> -> vector<6x128xf32>
    %239 = arith.addf %234, %238 : vector<6x128xf32>
    %240 = vector.extract_strided_slice %230 {offsets = [2, 0], sizes = [6, 128], strides = [1, 1]} : vector<8x128xbf16> to vector<6x128xbf16>
    %c2_178 = arith.constant 2 : index
    %c0_179 = arith.constant 0 : index
    %c0_180 = arith.constant 0 : index
    %241 = vector.load %arg20[%c2_178, %c0_179, %c0_180] : memref<3x128x128xbf16, #tpu.memory_space<vmem>>, vector<1x128x128xbf16>
    %242 = vector.shape_cast %241 : vector<1x128x128xbf16> to vector<128x128xbf16>
    %cst_181 = arith.constant dense<0.000000e+00> : vector<6x128xf32>
    %243 = tpu.matmul %240, %242, %cst_181 {dimension_numbers = #tpu.dot_dimension_numbers<[1], [0], [0], [1], [0, 0, 1, 1], [], []>} : vector<6x128xbf16>, vector<128x128xbf16>, vector<6x128xf32> -> vector<6x128xf32>
    %244 = arith.addf %239, %243 : vector<6x128xf32>
    %c0_182 = arith.constant 0 : index
    %c0_183 = arith.constant 0 : index
    %245 = vector.load %arg21[%c0_182, %c0_183] : memref<1x128xf32, #tpu.memory_space<vmem>>, vector<1x128xf32>
    %246 = vector.broadcast %245 : vector<1x128xf32> to vector<6x128xf32>
    %247 = arith.addf %244, %246 : vector<6x128xf32>
    %cst_184 = arith.constant 0.000000e+00 : f32
    %248 = vector.broadcast %cst_184 : f32 to vector<6x128xf32>
    %249 = arith.maximumf %247, %248 : vector<6x128xf32>
    %250 = arith.truncf %249 : vector<6x128xf32> to vector<6x128xbf16>
    %c0_185 = arith.constant 0 : index
    %c0_186 = arith.constant 0 : index
    %251 = vector.load %arg36[%c0_185, %c0_186] : memref<128x128xbf16, #tpu.memory_space<vmem>>, vector<128x128xbf16>
    %cst_187 = arith.constant dense<0.000000e+00> : vector<6x128xf32>
    %252 = tpu.matmul %250, %251, %cst_187 {dimension_numbers = #tpu.dot_dimension_numbers<[1], [0], [0], [1], [0, 0, 1, 1], [], []>} : vector<6x128xbf16>, vector<128x128xbf16>, vector<6x128xf32> -> vector<6x128xf32>
    %253 = arith.truncf %252 : vector<6x128xf32> to vector<6x128xbf16>
    %254 = arith.maximumf %250, %253 : vector<6x128xbf16>
    %255 = vector.extract_strided_slice %254 {offsets = [1, 0], sizes = [4, 128], strides = [1, 1]} : vector<6x128xbf16> to vector<4x128xbf16>
    %256 = vector.extract_strided_slice %254 {offsets = [2, 0], sizes = [4, 128], strides = [1, 1]} : vector<6x128xbf16> to vector<4x128xbf16>
    %257 = arith.maximumf %255, %256 : vector<4x128xbf16>
    %c0_188 = arith.constant 0 : index
    %c0_189 = arith.constant 0 : index
    %258 = vector.load %arg41[%c0_188, %c0_189] : memref<6x4xbf16, #tpu.memory_space<vmem>>, vector<6x4xbf16>
    %cst_190 = arith.constant dense<0.000000e+00> : vector<6x128xf32>
    %259 = tpu.matmul %258, %257, %cst_190 {dimension_numbers = #tpu.dot_dimension_numbers<[1], [0], [0], [1], [0, 0, 1, 1], [], []>} : vector<6x4xbf16>, vector<4x128xbf16>, vector<6x128xf32> -> vector<6x128xf32>
    %260 = arith.truncf %259 : vector<6x128xf32> to vector<6x128xbf16>
    %261 = vector.extract_strided_slice %260 {offsets = [0, 0], sizes = [4, 128], strides = [1, 1]} : vector<6x128xbf16> to vector<4x128xbf16>
    %c0_191 = arith.constant 0 : index
    %c0_192 = arith.constant 0 : index
    %c0_193 = arith.constant 0 : index
    %262 = vector.load %arg22[%c0_191, %c0_192, %c0_193] : memref<3x128x64xbf16, #tpu.memory_space<vmem>>, vector<1x128x64xbf16>
    %263 = vector.shape_cast %262 : vector<1x128x64xbf16> to vector<128x64xbf16>
    %cst_194 = arith.constant dense<0.000000e+00> : vector<4x64xf32>
    %264 = tpu.matmul %261, %263, %cst_194 {dimension_numbers = #tpu.dot_dimension_numbers<[1], [0], [0], [1], [0, 0, 1, 1], [], []>} : vector<4x128xbf16>, vector<128x64xbf16>, vector<4x64xf32> -> vector<4x64xf32>
    %265 = vector.extract_strided_slice %260 {offsets = [1, 0], sizes = [4, 128], strides = [1, 1]} : vector<6x128xbf16> to vector<4x128xbf16>
    %c1_195 = arith.constant 1 : index
    %c0_196 = arith.constant 0 : index
    %c0_197 = arith.constant 0 : index
    %266 = vector.load %arg22[%c1_195, %c0_196, %c0_197] : memref<3x128x64xbf16, #tpu.memory_space<vmem>>, vector<1x128x64xbf16>
    %267 = vector.shape_cast %266 : vector<1x128x64xbf16> to vector<128x64xbf16>
    %cst_198 = arith.constant dense<0.000000e+00> : vector<4x64xf32>
    %268 = tpu.matmul %265, %267, %cst_198 {dimension_numbers = #tpu.dot_dimension_numbers<[1], [0], [0], [1], [0, 0, 1, 1], [], []>} : vector<4x128xbf16>, vector<128x64xbf16>, vector<4x64xf32> -> vector<4x64xf32>
    %269 = arith.addf %264, %268 : vector<4x64xf32>
    %270 = vector.extract_strided_slice %260 {offsets = [2, 0], sizes = [4, 128], strides = [1, 1]} : vector<6x128xbf16> to vector<4x128xbf16>
    %c2_199 = arith.constant 2 : index
    %c0_200 = arith.constant 0 : index
    %c0_201 = arith.constant 0 : index
    %271 = vector.load %arg22[%c2_199, %c0_200, %c0_201] : memref<3x128x64xbf16, #tpu.memory_space<vmem>>, vector<1x128x64xbf16>
    %272 = vector.shape_cast %271 : vector<1x128x64xbf16> to vector<128x64xbf16>
    %cst_202 = arith.constant dense<0.000000e+00> : vector<4x64xf32>
    %273 = tpu.matmul %270, %272, %cst_202 {dimension_numbers = #tpu.dot_dimension_numbers<[1], [0], [0], [1], [0, 0, 1, 1], [], []>} : vector<4x128xbf16>, vector<128x64xbf16>, vector<4x64xf32> -> vector<4x64xf32>
    %274 = arith.addf %269, %273 : vector<4x64xf32>
    %c0_203 = arith.constant 0 : index
    %c0_204 = arith.constant 0 : index
    %275 = vector.load %arg23[%c0_203, %c0_204] : memref<1x64xf32, #tpu.memory_space<vmem>>, vector<1x64xf32>
    %276 = vector.broadcast %275 : vector<1x64xf32> to vector<4x64xf32>
    %277 = arith.addf %274, %276 : vector<4x64xf32>
    %cst_205 = arith.constant 0.000000e+00 : f32
    %278 = vector.broadcast %cst_205 : f32 to vector<4x64xf32>
    %279 = arith.maximumf %277, %278 : vector<4x64xf32>
    %280 = arith.truncf %279 : vector<4x64xf32> to vector<4x64xbf16>
    %c0_206 = arith.constant 0 : index
    %c0_207 = arith.constant 0 : index
    %281 = vector.load %arg32[%c0_206, %c0_207] : memref<6x4xbf16, #tpu.memory_space<vmem>>, vector<6x4xbf16>
    %cst_208 = arith.constant dense<0.000000e+00> : vector<6x64xf32>
    %282 = tpu.matmul %281, %280, %cst_208 {dimension_numbers = #tpu.dot_dimension_numbers<[1], [0], [0], [1], [0, 0, 1, 1], [], []>} : vector<6x4xbf16>, vector<4x64xbf16>, vector<6x64xf32> -> vector<6x64xf32>
    %283 = arith.truncf %282 : vector<6x64xf32> to vector<6x64xbf16>
    %284 = vector.extract_strided_slice %283 {offsets = [0, 0], sizes = [4, 64], strides = [1, 1]} : vector<6x64xbf16> to vector<4x64xbf16>
    %c0_209 = arith.constant 0 : index
    %c0_210 = arith.constant 0 : index
    %c0_211 = arith.constant 0 : index
    %285 = vector.load %arg24[%c0_209, %c0_210, %c0_211] : memref<3x64x64xbf16, #tpu.memory_space<vmem>>, vector<1x64x64xbf16>
    %286 = vector.shape_cast %285 : vector<1x64x64xbf16> to vector<64x64xbf16>
    %cst_212 = arith.constant dense<0.000000e+00> : vector<4x64xf32>
    %287 = tpu.matmul %284, %286, %cst_212 {dimension_numbers = #tpu.dot_dimension_numbers<[1], [0], [0], [1], [0, 0, 1, 1], [], []>} : vector<4x64xbf16>, vector<64x64xbf16>, vector<4x64xf32> -> vector<4x64xf32>
    %288 = vector.extract_strided_slice %283 {offsets = [1, 0], sizes = [4, 64], strides = [1, 1]} : vector<6x64xbf16> to vector<4x64xbf16>
    %c1_213 = arith.constant 1 : index
    %c0_214 = arith.constant 0 : index
    %c0_215 = arith.constant 0 : index
    %289 = vector.load %arg24[%c1_213, %c0_214, %c0_215] : memref<3x64x64xbf16, #tpu.memory_space<vmem>>, vector<1x64x64xbf16>
    %290 = vector.shape_cast %289 : vector<1x64x64xbf16> to vector<64x64xbf16>
    %cst_216 = arith.constant dense<0.000000e+00> : vector<4x64xf32>
    %291 = tpu.matmul %288, %290, %cst_216 {dimension_numbers = #tpu.dot_dimension_numbers<[1], [0], [0], [1], [0, 0, 1, 1], [], []>} : vector<4x64xbf16>, vector<64x64xbf16>, vector<4x64xf32> -> vector<4x64xf32>
    %292 = arith.addf %287, %291 : vector<4x64xf32>
    %293 = vector.extract_strided_slice %283 {offsets = [2, 0], sizes = [4, 64], strides = [1, 1]} : vector<6x64xbf16> to vector<4x64xbf16>
    %c2_217 = arith.constant 2 : index
    %c0_218 = arith.constant 0 : index
    %c0_219 = arith.constant 0 : index
    %294 = vector.load %arg24[%c2_217, %c0_218, %c0_219] : memref<3x64x64xbf16, #tpu.memory_space<vmem>>, vector<1x64x64xbf16>
    %295 = vector.shape_cast %294 : vector<1x64x64xbf16> to vector<64x64xbf16>
    %cst_220 = arith.constant dense<0.000000e+00> : vector<4x64xf32>
    %296 = tpu.matmul %293, %295, %cst_220 {dimension_numbers = #tpu.dot_dimension_numbers<[1], [0], [0], [1], [0, 0, 1, 1], [], []>} : vector<4x64xbf16>, vector<64x64xbf16>, vector<4x64xf32> -> vector<4x64xf32>
    %297 = arith.addf %292, %296 : vector<4x64xf32>
    %c0_221 = arith.constant 0 : index
    %c0_222 = arith.constant 0 : index
    %298 = vector.load %arg25[%c0_221, %c0_222] : memref<1x64xf32, #tpu.memory_space<vmem>>, vector<1x64xf32>
    %299 = vector.broadcast %298 : vector<1x64xf32> to vector<4x64xf32>
    %300 = arith.addf %297, %299 : vector<4x64xf32>
    %cst_223 = arith.constant 0.000000e+00 : f32
    %301 = vector.broadcast %cst_223 : f32 to vector<4x64xf32>
    %302 = arith.maximumf %300, %301 : vector<4x64xf32>
    %303 = arith.truncf %302 : vector<4x64xf32> to vector<4x64xbf16>
    %c0_224 = arith.constant 0 : index
    %c0_225 = arith.constant 0 : index
    %304 = vector.load %arg32[%c0_224, %c0_225] : memref<6x4xbf16, #tpu.memory_space<vmem>>, vector<6x4xbf16>
    %cst_226 = arith.constant dense<0.000000e+00> : vector<6x64xf32>
    %305 = tpu.matmul %304, %303, %cst_226 {dimension_numbers = #tpu.dot_dimension_numbers<[1], [0], [0], [1], [0, 0, 1, 1], [], []>} : vector<6x4xbf16>, vector<4x64xbf16>, vector<6x64xf32> -> vector<6x64xf32>
    %306 = arith.truncf %305 : vector<6x64xf32> to vector<6x64xbf16>
    %307 = vector.extract_strided_slice %306 {offsets = [0, 0], sizes = [4, 64], strides = [1, 1]} : vector<6x64xbf16> to vector<4x64xbf16>
    %c0_227 = arith.constant 0 : index
    %c0_228 = arith.constant 0 : index
    %c0_229 = arith.constant 0 : index
    %308 = vector.load %arg26[%c0_227, %c0_228, %c0_229] : memref<3x64x64xbf16, #tpu.memory_space<vmem>>, vector<1x64x64xbf16>
    %309 = vector.shape_cast %308 : vector<1x64x64xbf16> to vector<64x64xbf16>
    %cst_230 = arith.constant dense<0.000000e+00> : vector<4x64xf32>
    %310 = tpu.matmul %307, %309, %cst_230 {dimension_numbers = #tpu.dot_dimension_numbers<[1], [0], [0], [1], [0, 0, 1, 1], [], []>} : vector<4x64xbf16>, vector<64x64xbf16>, vector<4x64xf32> -> vector<4x64xf32>
    %311 = vector.extract_strided_slice %306 {offsets = [1, 0], sizes = [4, 64], strides = [1, 1]} : vector<6x64xbf16> to vector<4x64xbf16>
    %c1_231 = arith.constant 1 : index
    %c0_232 = arith.constant 0 : index
    %c0_233 = arith.constant 0 : index
    %312 = vector.load %arg26[%c1_231, %c0_232, %c0_233] : memref<3x64x64xbf16, #tpu.memory_space<vmem>>, vector<1x64x64xbf16>
    %313 = vector.shape_cast %312 : vector<1x64x64xbf16> to vector<64x64xbf16>
    %cst_234 = arith.constant dense<0.000000e+00> : vector<4x64xf32>
    %314 = tpu.matmul %311, %313, %cst_234 {dimension_numbers = #tpu.dot_dimension_numbers<[1], [0], [0], [1], [0, 0, 1, 1], [], []>} : vector<4x64xbf16>, vector<64x64xbf16>, vector<4x64xf32> -> vector<4x64xf32>
    %315 = arith.addf %310, %314 : vector<4x64xf32>
    %316 = vector.extract_strided_slice %306 {offsets = [2, 0], sizes = [4, 64], strides = [1, 1]} : vector<6x64xbf16> to vector<4x64xbf16>
    %c2_235 = arith.constant 2 : index
    %c0_236 = arith.constant 0 : index
    %c0_237 = arith.constant 0 : index
    %317 = vector.load %arg26[%c2_235, %c0_236, %c0_237] : memref<3x64x64xbf16, #tpu.memory_space<vmem>>, vector<1x64x64xbf16>
    %318 = vector.shape_cast %317 : vector<1x64x64xbf16> to vector<64x64xbf16>
    %cst_238 = arith.constant dense<0.000000e+00> : vector<4x64xf32>
    %319 = tpu.matmul %316, %318, %cst_238 {dimension_numbers = #tpu.dot_dimension_numbers<[1], [0], [0], [1], [0, 0, 1, 1], [], []>} : vector<4x64xbf16>, vector<64x64xbf16>, vector<4x64xf32> -> vector<4x64xf32>
    %320 = arith.addf %315, %319 : vector<4x64xf32>
    %c0_239 = arith.constant 0 : index
    %c0_240 = arith.constant 0 : index
    %321 = vector.load %arg27[%c0_239, %c0_240] : memref<1x64xf32, #tpu.memory_space<vmem>>, vector<1x64xf32>
    %322 = vector.broadcast %321 : vector<1x64xf32> to vector<4x64xf32>
    %323 = arith.addf %320, %322 : vector<4x64xf32>
    %cst_241 = arith.constant 0.000000e+00 : f32
    %324 = vector.broadcast %cst_241 : f32 to vector<4x64xf32>
    %325 = arith.maximumf %323, %324 : vector<4x64xf32>
    %326 = arith.truncf %325 : vector<4x64xf32> to vector<4x64xbf16>
    %c0_242 = arith.constant 0 : index
    %c0_243 = arith.constant 0 : index
    %327 = vector.load %arg37[%c0_242, %c0_243] : memref<64x64xbf16, #tpu.memory_space<vmem>>, vector<64x64xbf16>
    %cst_244 = arith.constant dense<0.000000e+00> : vector<4x64xf32>
    %328 = tpu.matmul %326, %327, %cst_244 {dimension_numbers = #tpu.dot_dimension_numbers<[1], [0], [0], [1], [0, 0, 1, 1], [], []>} : vector<4x64xbf16>, vector<64x64xbf16>, vector<4x64xf32> -> vector<4x64xf32>
    %329 = arith.truncf %328 : vector<4x64xf32> to vector<4x64xbf16>
    %330 = arith.maximumf %326, %329 : vector<4x64xbf16>
    %331 = vector.extract_strided_slice %330 {offsets = [1, 0], sizes = [2, 64], strides = [1, 1]} : vector<4x64xbf16> to vector<2x64xbf16>
    %332 = vector.extract_strided_slice %330 {offsets = [2, 0], sizes = [2, 64], strides = [1, 1]} : vector<4x64xbf16> to vector<2x64xbf16>
    %333 = arith.maximumf %331, %332 : vector<2x64xbf16>
    %334 = vector.extract_strided_slice %333 {offsets = [0, 0], sizes = [1, 64], strides = [1, 1]} : vector<2x64xbf16> to vector<1x64xbf16>
    %c0_245 = arith.constant 0 : index
    %c0_246 = arith.constant 0 : index
    %335 = vector.load %arg42[%c0_245, %c0_246] : memref<64x64xbf16, #tpu.memory_space<vmem>>, vector<64x64xbf16>
    %cst_247 = arith.constant dense<0.000000e+00> : vector<1x64xf32>
    %336 = tpu.matmul %334, %335, %cst_247 {dimension_numbers = #tpu.dot_dimension_numbers<[1], [0], [0], [1], [0, 0, 1, 1], [], []>} : vector<1x64xbf16>, vector<64x64xbf16>, vector<1x64xf32> -> vector<1x64xf32>
    %c0_248 = arith.constant 0 : index
    %c0_249 = arith.constant 0 : index
    %337 = vector.load %arg43[%c0_248, %c0_249] : memref<1x64xf32, #tpu.memory_space<vmem>>, vector<1x64xf32>
    %338 = arith.addf %336, %337 : vector<1x64xf32>
    %cst_250 = arith.constant 0.000000e+00 : f32
    %339 = vector.broadcast %cst_250 : f32 to vector<1x64xf32>
    %340 = arith.maximumf %338, %339 : vector<1x64xf32>
    %341 = arith.truncf %340 : vector<1x64xf32> to vector<1x64xbf16>
    %c0_251 = arith.constant 0 : index
    %c0_252 = arith.constant 0 : index
    %342 = vector.load %arg44[%c0_251, %c0_252] : memref<64x64xbf16, #tpu.memory_space<vmem>>, vector<64x64xbf16>
    %cst_253 = arith.constant dense<0.000000e+00> : vector<1x64xf32>
    %343 = tpu.matmul %341, %342, %cst_253 {dimension_numbers = #tpu.dot_dimension_numbers<[1], [0], [0], [1], [0, 0, 1, 1], [], []>} : vector<1x64xbf16>, vector<64x64xbf16>, vector<1x64xf32> -> vector<1x64xf32>
    %c0_254 = arith.constant 0 : index
    %c0_255 = arith.constant 0 : index
    %344 = vector.load %arg45[%c0_254, %c0_255] : memref<1x64xf32, #tpu.memory_space<vmem>>, vector<1x64xf32>
    %345 = arith.addf %343, %344 : vector<1x64xf32>
    %cst_256 = arith.constant 0.000000e+00 : f32
    %346 = vector.broadcast %cst_256 : f32 to vector<1x64xf32>
    %347 = arith.maximumf %345, %346 : vector<1x64xf32>
    %348 = arith.truncf %347 : vector<1x64xf32> to vector<1x64xbf16>
    %c0_257 = arith.constant 0 : index
    %c0_258 = arith.constant 0 : index
    %349 = vector.load %arg46[%c0_257, %c0_258] : memref<64x10xbf16, #tpu.memory_space<vmem>>, vector<64x10xbf16>
    %cst_259 = arith.constant dense<0.000000e+00> : vector<1x10xf32>
    %350 = tpu.matmul %348, %349, %cst_259 {dimension_numbers = #tpu.dot_dimension_numbers<[1], [0], [0], [1], [0, 0, 1, 1], [], []>} : vector<1x64xbf16>, vector<64x10xbf16>, vector<1x10xf32> -> vector<1x10xf32>
    %c0_260 = arith.constant 0 : index
    %c0_261 = arith.constant 0 : index
    %351 = vector.load %arg47[%c0_260, %c0_261] : memref<1x10xf32, #tpu.memory_space<vmem>>, vector<1x10xf32>
    %352 = arith.addf %350, %351 : vector<1x10xf32>
    %c0_262 = arith.constant 0 : index
    %c0_263 = arith.constant 0 : index
    %c0_264 = arith.constant 0 : index
    %353 = vector.load %arg48[%c0_262, %c0_263, %c0_264] : memref<1x1x10xf32, #tpu.memory_space<vmem>>, vector<1x1x10xf32>
    %354 = vector.shape_cast %353 : vector<1x1x10xf32> to vector<1x10xf32>
    %355 = vector.shape_cast %352 : vector<1x10xf32> to vector<1x1x10xf32>
    tpu.vector_store %arg48[%c0_262, %c0_263, %c0_264], %355 {strides = array<i32>} : memref<1x1x10xf32, #tpu.memory_space<vmem>>, vector<1x1x10xf32>,
    return
  }
  func.func @transform_0(%arg0: i32) -> (i32, i32, i32) {
    %c0_i32 = arith.constant 0 : i32
    %c0_i32_0 = arith.constant 0 : i32
    %c0_i32_1 = arith.constant 0 : i32
    return %arg0, %c0_i32, %c0_i32_0 : i32, i32, i32
  }
  func.func @transform_1(%arg0: i32) -> (i32, i32, i32) {
    %c0_i32 = arith.constant 0 : i32
    %c0_i32_0 = arith.constant 0 : i32
    %c0_i32_1 = arith.constant 0 : i32
    %c0_i32_2 = arith.constant 0 : i32
    return %c0_i32, %c0_i32_0, %c0_i32_1 : i32, i32, i32
  }
  func.func @transform_2(%arg0: i32) -> (i32, i32) {
    %c0_i32 = arith.constant 0 : i32
    %c0_i32_0 = arith.constant 0 : i32
    %c0_i32_1 = arith.constant 0 : i32
    return %c0_i32, %c0_i32_0 : i32, i32
  }
  func.func @transform_3(%arg0: i32) -> (i32, i32, i32) {
    %c0_i32 = arith.constant 0 : i32
    %c0_i32_0 = arith.constant 0 : i32
    %c0_i32_1 = arith.constant 0 : i32
    %c0_i32_2 = arith.constant 0 : i32
    return %c0_i32, %c0_i32_0, %c0_i32_1 : i32, i32, i32
  }
  func.func @transform_4(%arg0: i32) -> (i32, i32) {
    %c0_i32 = arith.constant 0 : i32
    %c0_i32_0 = arith.constant 0 : i32
    %c0_i32_1 = arith.constant 0 : i32
    return %c0_i32, %c0_i32_0 : i32, i32
  }
  func.func @transform_5(%arg0: i32) -> (i32, i32, i32) {
    %c0_i32 = arith.constant 0 : i32
    %c0_i32_0 = arith.constant 0 : i32
    %c0_i32_1 = arith.constant 0 : i32
    %c0_i32_2 = arith.constant 0 : i32
    return %c0_i32, %c0_i32_0, %c0_i32_1 : i32, i32, i32
  }
  func.func @transform_6(%arg0: i32) -> (i32, i32) {
    %c0_i32 = arith.constant 0 : i32
    %c0_i32_0 = arith.constant 0 : i32
    %c0_i32_1 = arith.constant 0 : i32
    return %c0_i32, %c0_i32_0 : i32, i32
  }
  func.func @transform_7(%arg0: i32) -> (i32, i32, i32) {
    %c0_i32 = arith.constant 0 : i32
    %c0_i32_0 = arith.constant 0 : i32
    %c0_i32_1 = arith.constant 0 : i32
    %c0_i32_2 = arith.constant 0 : i32
    return %c0_i32, %c0_i32_0, %c0_i32_1 : i32, i32, i32
  }
  func.func @transform_8(%arg0: i32) -> (i32, i32) {
    %c0_i32 = arith.constant 0 : i32
    %c0_i32_0 = arith.constant 0 : i32
    %c0_i32_1 = arith.constant 0 : i32
    return %c0_i32, %c0_i32_0 : i32, i32
  }
  func.func @transform_9(%arg0: i32) -> (i32, i32, i32) {
    %c0_i32 = arith.constant 0 : i32
    %c0_i32_0 = arith.constant 0 : i32
    %c0_i32_1 = arith.constant 0 : i32
    %c0_i32_2 = arith.constant 0 : i32
    return %c0_i32, %c0_i32_0, %c0_i32_1 : i32, i32, i32
  }
  func.func @transform_10(%arg0: i32) -> (i32, i32) {
    %c0_i32 = arith.constant 0 : i32
    %c0_i32_0 = arith.constant 0 : i32
    %c0_i32_1 = arith.constant 0 : i32
    return %c0_i32, %c0_i32_0 : i32, i32
  }
  func.func @transform_11(%arg0: i32) -> (i32, i32, i32) {
    %c0_i32 = arith.constant 0 : i32
    %c0_i32_0 = arith.constant 0 : i32
    %c0_i32_1 = arith.constant 0 : i32
    %c0_i32_2 = arith.constant 0 : i32
    return %c0_i32, %c0_i32_0, %c0_i32_1 : i32, i32, i32
  }
  func.func @transform_12(%arg0: i32) -> (i32, i32) {
    %c0_i32 = arith.constant 0 : i32
    %c0_i32_0 = arith.constant 0 : i32
    %c0_i32_1 = arith.constant 0 : i32
    return %c0_i32, %c0_i32_0 : i32, i32
  }
  func.func @transform_13(%arg0: i32) -> (i32, i32, i32) {
    %c0_i32 = arith.constant 0 : i32
    %c0_i32_0 = arith.constant 0 : i32
    %c0_i32_1 = arith.constant 0 : i32
    %c0_i32_2 = arith.constant 0 : i32
    return %c0_i32, %c0_i32_0, %c0_i32_1 : i32, i32, i32
  }
  func.func @transform_14(%arg0: i32) -> (i32, i32) {
    %c0_i32 = arith.constant 0 : i32
    %c0_i32_0 = arith.constant 0 : i32
    %c0_i32_1 = arith.constant 0 : i32
    return %c0_i32, %c0_i32_0 : i32, i32
  }
  func.func @transform_15(%arg0: i32) -> (i32, i32, i32) {
    %c0_i32 = arith.constant 0 : i32
    %c0_i32_0 = arith.constant 0 : i32
    %c0_i32_1 = arith.constant 0 : i32
    %c0_i32_2 = arith.constant 0 : i32
    return %c0_i32, %c0_i32_0, %c0_i32_1 : i32, i32, i32
  }
  func.func @transform_16(%arg0: i32) -> (i32, i32) {
    %c0_i32 = arith.constant 0 : i32
    %c0_i32_0 = arith.constant 0 : i32
    %c0_i32_1 = arith.constant 0 : i32
    return %c0_i32, %c0_i32_0 : i32, i32
  }
  func.func @transform_17(%arg0: i32) -> (i32, i32, i32) {
    %c0_i32 = arith.constant 0 : i32
    %c0_i32_0 = arith.constant 0 : i32
    %c0_i32_1 = arith.constant 0 : i32
    %c0_i32_2 = arith.constant 0 : i32
    return %c0_i32, %c0_i32_0, %c0_i32_1 : i32, i32, i32
  }
  func.func @transform_18(%arg0: i32) -> (i32, i32) {
    %c0_i32 = arith.constant 0 : i32
    %c0_i32_0 = arith.constant 0 : i32
    %c0_i32_1 = arith.constant 0 : i32
    return %c0_i32, %c0_i32_0 : i32, i32
  }
  func.func @transform_19(%arg0: i32) -> (i32, i32, i32) {
    %c0_i32 = arith.constant 0 : i32
    %c0_i32_0 = arith.constant 0 : i32
    %c0_i32_1 = arith.constant 0 : i32
    %c0_i32_2 = arith.constant 0 : i32
    return %c0_i32, %c0_i32_0, %c0_i32_1 : i32, i32, i32
  }
  func.func @transform_20(%arg0: i32) -> (i32, i32) {
    %c0_i32 = arith.constant 0 : i32
    %c0_i32_0 = arith.constant 0 : i32
    %c0_i32_1 = arith.constant 0 : i32
    return %c0_i32, %c0_i32_0 : i32, i32
  }
  func.func @transform_21(%arg0: i32) -> (i32, i32, i32) {
    %c0_i32 = arith.constant 0 : i32
    %c0_i32_0 = arith.constant 0 : i32
    %c0_i32_1 = arith.constant 0 : i32
    %c0_i32_2 = arith.constant 0 : i32
    return %c0_i32, %c0_i32_0, %c0_i32_1 : i32, i32, i32
  }
  func.func @transform_22(%arg0: i32) -> (i32, i32) {
    %c0_i32 = arith.constant 0 : i32
    %c0_i32_0 = arith.constant 0 : i32
    %c0_i32_1 = arith.constant 0 : i32
    return %c0_i32, %c0_i32_0 : i32, i32
  }
  func.func @transform_23(%arg0: i32) -> (i32, i32, i32) {
    %c0_i32 = arith.constant 0 : i32
    %c0_i32_0 = arith.constant 0 : i32
    %c0_i32_1 = arith.constant 0 : i32
    %c0_i32_2 = arith.constant 0 : i32
    return %c0_i32, %c0_i32_0, %c0_i32_1 : i32, i32, i32
  }
  func.func @transform_24(%arg0: i32) -> (i32, i32) {
    %c0_i32 = arith.constant 0 : i32
    %c0_i32_0 = arith.constant 0 : i32
    %c0_i32_1 = arith.constant 0 : i32
    return %c0_i32, %c0_i32_0 : i32, i32
  }
  func.func @transform_25(%arg0: i32) -> (i32, i32, i32) {
    %c0_i32 = arith.constant 0 : i32
    %c0_i32_0 = arith.constant 0 : i32
    %c0_i32_1 = arith.constant 0 : i32
    %c0_i32_2 = arith.constant 0 : i32
    return %c0_i32, %c0_i32_0, %c0_i32_1 : i32, i32, i32
  }
  func.func @transform_26(%arg0: i32) -> (i32, i32) {
    %c0_i32 = arith.constant 0 : i32
    %c0_i32_0 = arith.constant 0 : i32
    %c0_i32_1 = arith.constant 0 : i32
    return %c0_i32, %c0_i32_0 : i32, i32
  }
  func.func @transform_27(%arg0: i32) -> (i32, i32) {
    %c0_i32 = arith.constant 0 : i32
    %c0_i32_0 = arith.constant 0 : i32
    %c0_i32_1 = arith.constant 0 : i32
    return %c0_i32, %c0_i32_0 : i32, i32
  }
  func.func @transform_28(%arg0: i32) -> (i32, i32) {
    %c0_i32 = arith.constant 0 : i32
    %c0_i32_0 = arith.constant 0 : i32
    %c0_i32_1 = arith.constant 0 : i32
    return %c0_i32, %c0_i32_0 : i32, i32
  }
  func.func @transform_29(%arg0: i32) -> (i32, i32) {
    %c0_i32 = arith.constant 0 : i32
    %c0_i32_0 = arith.constant 0 : i32
    %c0_i32_1 = arith.constant 0 : i32
    return %c0_i32, %c0_i32_0 : i32, i32
  }
  func.func @transform_30(%arg0: i32) -> (i32, i32) {
    %c0_i32 = arith.constant 0 : i32
    %c0_i32_0 = arith.constant 0 : i32
    %c0_i32_1 = arith.constant 0 : i32
    return %c0_i32, %c0_i32_0 : i32, i32
  }
  func.func @transform_31(%arg0: i32) -> (i32, i32) {
    %c0_i32 = arith.constant 0 : i32
    %c0_i32_0 = arith.constant 0 : i32
    %c0_i32_1 = arith.constant 0 : i32
    return %c0_i32, %c0_i32_0 : i32, i32
  }
  func.func @transform_32(%arg0: i32) -> (i32, i32) {
    %c0_i32 = arith.constant 0 : i32
    %c0_i32_0 = arith.constant 0 : i32
    %c0_i32_1 = arith.constant 0 : i32
    return %c0_i32, %c0_i32_0 : i32, i32
  }
  func.func @transform_33(%arg0: i32) -> (i32, i32) {
    %c0_i32 = arith.constant 0 : i32
    %c0_i32_0 = arith.constant 0 : i32
    %c0_i32_1 = arith.constant 0 : i32
    return %c0_i32, %c0_i32_0 : i32, i32
  }
  func.func @transform_34(%arg0: i32) -> (i32, i32) {
    %c0_i32 = arith.constant 0 : i32
    %c0_i32_0 = arith.constant 0 : i32
    %c0_i32_1 = arith.constant 0 : i32
    return %c0_i32, %c0_i32_0 : i32, i32
  }
  func.func @transform_35(%arg0: i32) -> (i32, i32) {
    %c0_i32 = arith.constant 0 : i32
    %c0_i32_0 = arith.constant 0 : i32
    %c0_i32_1 = arith.constant 0 : i32
    return %c0_i32, %c0_i32_0 : i32, i32
  }
  func.func @transform_36(%arg0: i32) -> (i32, i32) {
    %c0_i32 = arith.constant 0 : i32
    %c0_i32_0 = arith.constant 0 : i32
    %c0_i32_1 = arith.constant 0 : i32
    return %c0_i32, %c0_i32_0 : i32, i32
  }
  func.func @transform_37(%arg0: i32) -> (i32, i32) {
    %c0_i32 = arith.constant 0 : i32
    %c0_i32_0 = arith.constant 0 : i32
    %c0_i32_1 = arith.constant 0 : i32
    return %c0_i32, %c0_i32_0 : i32, i32
  }
  func.func @transform_38(%arg0: i32) -> (i32, i32) {
    %c0_i32 = arith.constant 0 : i32
    %c0_i32_0 = arith.constant 0 : i32
    %c0_i32_1 = arith.constant 0 : i32
    return %c0_i32, %c0_i32_0 : i32, i32
  }
  func.func @transform_39(%arg0: i32) -> (i32, i32) {
    %c0_i32 = arith.constant 0 : i32
    %c0_i32_0 = arith.constant 0 : i32
    %c0_i32_1 = arith.constant 0 : i32
    return %c0_i32, %c0_i32_0 : i32, i32
  }
  func.func @transform_40(%arg0: i32) -> (i32, i32) {
    %c0_i32 = arith.constant 0 : i32
    %c0_i32_0 = arith.constant 0 : i32
    %c0_i32_1 = arith.constant 0 : i32
    return %c0_i32, %c0_i32_0 : i32, i32
  }
  func.func @transform_41(%arg0: i32) -> (i32, i32) {
    %c0_i32 = arith.constant 0 : i32
    %c0_i32_0 = arith.constant 0 : i32
    %c0_i32_1 = arith.constant 0 : i32
    return %c0_i32, %c0_i32_0 : i32, i32
  }
  func.func @transform_42(%arg0: i32) -> (i32, i32) {
    %c0_i32 = arith.constant 0 : i32
    %c0_i32_0 = arith.constant 0 : i32
    %c0_i32_1 = arith.constant 0 : i32
    return %c0_i32, %c0_i32_0 : i32, i32
  }
  func.func @transform_43(%arg0: i32) -> (i32, i32) {
    %c0_i32 = arith.constant 0 : i32
    %c0_i32_0 = arith.constant 0 : i32
    %c0_i32_1 = arith.constant 0 : i32
    return %c0_i32, %c0_i32_0 : i32, i32
  }
  func.func @transform_44(%arg0: i32) -> (i32, i32) {
    %c0_i32 = arith.constant 0 : i32
    %c0_i32_0 = arith.constant 0 : i32
    %c0_i32_1 = arith.constant 0 : i32
    return %c0_i32, %c0_i32_0 : i32, i32
  }
  func.func @transform_45(%arg0: i32) -> (i32, i32) {
    %c0_i32 = arith.constant 0 : i32
    %c0_i32_0 = arith.constant 0 : i32
    %c0_i32_1 = arith.constant 0 : i32
    return %c0_i32, %c0_i32_0 : i32, i32
  }
  func.func @transform_46(%arg0: i32) -> (i32, i32) {
    %c0_i32 = arith.constant 0 : i32
    %c0_i32_0 = arith.constant 0 : i32
    %c0_i32_1 = arith.constant 0 : i32
    return %c0_i32, %c0_i32_0 : i32, i32
  }
  func.func @transform_47(%arg0: i32) -> (i32, i32, i32) {
    %c0_i32 = arith.constant 0 : i32
    %c0_i32_0 = arith.constant 0 : i32
    %c0_i32_1 = arith.constant 0 : i32
    return %arg0, %c0_i32, %c0_i32_0 : i32, i32, i32
  }
}

</mosaic_0001>

<llo_original>
// kernel: modified_vgg16_forward.1
$region0: #{modified_vgg16_forward.1}
  #allocation0 [shape = 'u32[]', space=smem, size = 0x4, offset = 0x4, fixed_abs, tag = 'smem constant byte address 0x4 - core index']
  #allocation1 [shape = 'u32[72,128]{1,0:T(1,128)}', space=vmem, size = 0x9000, scoped, tag = 'internal scratch']
  %s0 = inlined_call_operand.smem [shape: u32[48], index: -1, kind: input, shape index: {}]
  %s1 = sld [smem:[%s0]]
  %s2 = scalar_lea.smem %s0, 1
  %s3 = sld [smem:[%s2]]
  %s4 = scalar_lea.smem %s0, 2
  %s5 = sld [smem:[%s4]]
  %s6 = scalar_lea.smem %s0, 3
  %s7 = sld [smem:[%s6]]
  %s8 = scalar_lea.smem %s0, 4
  %s9 = sld [smem:[%s8]]
  %s10 = scalar_lea.smem %s0, 5
  %s11 = sld [smem:[%s10]]
  %s12 = scalar_lea.smem %s0, 6
  %s13 = sld [smem:[%s12]]
  %s14 = scalar_lea.smem %s0, 7
  %s15 = sld [smem:[%s14]]
  %s16 = scalar_lea.smem %s0, 8
  %s17 = sld [smem:[%s16]]
  %s18 = scalar_lea.smem %s0, 9
  %s19 = sld [smem:[%s18]]
  %s20 = scalar_lea.smem %s0, 10
  %s21 = sld [smem:[%s20]]
  %s22 = scalar_lea.smem %s0, 11
  %s23 = sld [smem:[%s22]]
  %s24 = scalar_lea.smem %s0, 12
  %s25 = sld [smem:[%s24]]
  %s26 = scalar_lea.smem %s0, 13
  %s27 = sld [smem:[%s26]]
  %s28 = scalar_lea.smem %s0, 14
  %s29 = sld [smem:[%s28]]
  %s30 = scalar_lea.smem %s0, 15
  %s31 = sld [smem:[%s30]]
  %s32 = scalar_lea.smem %s0, 16
  %s33 = sld [smem:[%s32]]
  %s34 = scalar_lea.smem %s0, 17
  %s35 = sld [smem:[%s34]]
  %s36 = scalar_lea.smem %s0, 18
  %s37 = sld [smem:[%s36]]
  %s38 = scalar_lea.smem %s0, 19
  %s39 = sld [smem:[%s38]]
  %s40 = scalar_lea.smem %s0, 20
  %s41 = sld [smem:[%s40]]
  %s42 = scalar_lea.smem %s0, 21
  %s43 = sld [smem:[%s42]]
  %s44 = scalar_lea.smem %s0, 22
  %s45 = sld [smem:[%s44]]
  %s46 = scalar_lea.smem %s0, 23
  %s47 = sld [smem:[%s46]]
  %s48 = scalar_lea.smem %s0, 24
  %s49 = sld [smem:[%s48]]
  %s50 = scalar_lea.smem %s0, 25
  %s51 = sld [smem:[%s50]]
  %s52 = scalar_lea.smem %s0, 26
  %s53 = sld [smem:[%s52]]
  %s54 = scalar_lea.smem %s0, 27
  %s55 = sld [smem:[%s54]]
  %s56 = scalar_lea.smem %s0, 28
  %s57 = sld [smem:[%s56]]
  %s58 = scalar_lea.smem %s0, 29
  %s59 = sld [smem:[%s58]]
  %s60 = scalar_lea.smem %s0, 30
  %s61 = sld [smem:[%s60]]
  %s62 = scalar_lea.smem %s0, 31
  %s63 = sld [smem:[%s62]]
  %s64 = scalar_lea.smem %s0, 32
  %s65 = sld [smem:[%s64]]
  %s66 = scalar_lea.smem %s0, 33
  %s67 = sld [smem:[%s66]]
  %s68 = scalar_lea.smem %s0, 34
  %s69 = sld [smem:[%s68]]
  %s70 = scalar_lea.smem %s0, 35
  %s71 = sld [smem:[%s70]]
  %s72 = scalar_lea.smem %s0, 36
  %s73 = sld [smem:[%s72]]
  %s74 = scalar_lea.smem %s0, 37
  %s75 = sld [smem:[%s74]]
  %s76 = scalar_lea.smem %s0, 38
  %s77 = sld [smem:[%s76]]
  %s78 = scalar_lea.smem %s0, 39
  %s79 = sld [smem:[%s78]]
  %s80 = scalar_lea.smem %s0, 40
  %s81 = sld [smem:[%s80]]
  %s82 = scalar_lea.smem %s0, 41
  %s83 = sld [smem:[%s82]]
  %s84 = scalar_lea.smem %s0, 42
  %s85 = sld [smem:[%s84]]
  %s86 = scalar_lea.smem %s0, 43
  %s87 = sld [smem:[%s86]]
  %s88 = scalar_lea.smem %s0, 44
  %s89 = sld [smem:[%s88]]
  %s90 = scalar_lea.smem %s0, 45
  %s91 = sld [smem:[%s90]]
  %s92 = scalar_lea.smem %s0, 46
  %s93 = sld [smem:[%s92]]
  %s94 = scalar_lea.smem %s0, 47
  %s95 = sld [smem:[%s94]]
  %s96 = sld [smem:[#allocation0]]
  $region317: #{modified_vgg16_forward.1} parent=0
    _
  %s98 = ssub.s32 1, %s96
  %s99 = scalar_select 0, %s98, %s96
  $region1: #{modified_vgg16_forward.1} parent=0
    #allocation2 [shape = 'u8[98304]{0}', space=vmem, size = 0x18000, scoped, tag = 'input window, operand 11, single buffered']
    #allocation3 [shape = 's32[2]{0}', space=sflag, size = 0x8, scoped, tag = 'scoped memory for modified_vgg16_forward.1']
    #allocation4 [shape = 's32[2]{0}', space=sflag, size = 0x8, scoped, tag = 'scoped memory for modified_vgg16_forward.1']
    #allocation5 [shape = 'u8[98304]{0}', space=vmem, size = 0x18000, scoped, tag = 'input window, operand 13, single buffered']
    #allocation6 [shape = 's32[1]{0}', space=sflag, size = 0x4, scoped, tag = 'scoped memory for modified_vgg16_forward.1']
    #allocation7 [shape = 'u8[98304]{0}', space=vmem, size = 0x18000, scoped, tag = 'input window, operand 15, single buffered']
    #allocation8 [shape = 'u8[512]{0}', space=vmem, size = 0x400, scoped, tag = 'input window, operand 16, single buffered']
    #allocation9 [shape = 's32[1]{0}', space=sflag, size = 0x4, scoped, tag = 'scoped memory for modified_vgg16_forward.1']
    #allocation10 [shape = 'u8[98304]{0}', space=vmem, size = 0x18000, scoped, tag = 'input window, operand 17, single buffered']
    #allocation11 [shape = 'u8[512]{0}', space=vmem, size = 0x400, scoped, tag = 'input window, operand 18, single buffered']
    #allocation12 [shape = 's32[1]{0}', space=sflag, size = 0x4, scoped, tag = 'scoped memory for modified_vgg16_forward.1']
    #allocation13 [shape = 'u8[98304]{0}', space=vmem, size = 0x18000, scoped, tag = 'input window, operand 19, single buffered']
    #allocation14 [shape = 'u8[512]{0}', space=vmem, size = 0x400, scoped, tag = 'input window, operand 20, single buffered']
    #allocation15 [shape = 's32[1]{0}', space=sflag, size = 0x4, scoped, tag = 'scoped memory for modified_vgg16_forward.1']
    #allocation16 [shape = 'u8[49152]{0}', space=vmem, size = 0xc000, scoped, tag = 'input window, operand 25, single buffered']
    #allocation17 [shape = 'u8[10240]{0}', space=vmem, size = 0x2800, scoped, tag = 'input window, operand 27, single buffered']
    #allocation18 [shape = 's32[1]{0}', space=sflag, size = 0x4, scoped, tag = 'scoped memory for modified_vgg16_forward.1']
    #allocation19 [shape = 'u8[2048]{0}', space=vmem, size = 0x800, scoped, tag = 'input window, operand 30, single buffered']
    #allocation20 [shape = 'u8[32768]{0}', space=vmem, size = 0x8000, scoped, tag = 'input window, operand 32, single buffered']
    #allocation21 [shape = 's32[1]{0}', space=sflag, size = 0x4, scoped, tag = 'scoped memory for modified_vgg16_forward.1']
    #allocation22 [shape = 'u8[32768]{0}', space=vmem, size = 0x8000, scoped, tag = 'input window, operand 33, single buffered']
    #allocation23 [shape = 'u8[32768]{0}', space=vmem, size = 0x8000, scoped, tag = 'input window, operand 34, single buffered']
    #allocation24 [shape = 's32[1]{0}', space=sflag, size = 0x4, scoped, tag = 'scoped memory for modified_vgg16_forward.1']
    #allocation25 [shape = 'u8[32768]{0}', space=vmem, size = 0x8000, scoped, tag = 'input window, operand 35, single buffered']
    #allocation26 [shape = 'u8[16384]{0}', space=vmem, size = 0x4000, scoped, tag = 'input window, operand 36, single buffered']
    #allocation27 [shape = 's32[1]{0}', space=sflag, size = 0x4, scoped, tag = 'scoped memory for modified_vgg16_forward.1']
    #allocation28 [shape = 'u8[6144]{0}', space=vmem, size = 0x1800, scoped, tag = 'input window, operand 37, single buffered']
    #allocation29 [shape = 'u8[4096]{0}', space=vmem, size = 0x1000, scoped, tag = 'input window, operand 38, single buffered']
    #allocation30 [shape = 's32[1]{0}', space=sflag, size = 0x4, scoped, tag = 'scoped memory for modified_vgg16_forward.1']
    #allocation31 [shape = 'u8[2048]{0}', space=vmem, size = 0x800, scoped, tag = 'input window, operand 39, single buffered']
    #allocation32 [shape = 'u8[16384]{0}', space=vmem, size = 0x4000, scoped, tag = 'input window, operand 41, single buffered']
    #allocation33 [shape = 's32[1]{0}', space=sflag, size = 0x4, scoped, tag = 'scoped memory for modified_vgg16_forward.1']
    #allocation34 [shape = 'u8[512]{0}', space=vmem, size = 0x400, scoped, tag = 'input window, operand 42, single buffered']
    #allocation35 [shape = 'u8[16384]{0}', space=vmem, size = 0x4000, scoped, tag = 'input window, operand 43, single buffered']
    #allocation36 [shape = 's32[1]{0}', space=sflag, size = 0x4, scoped, tag = 'scoped memory for modified_vgg16_forward.1']
    #allocation37 [shape = 'u8[512]{0}', space=vmem, size = 0x400, scoped, tag = 'input window, operand 44, single buffered']
    #allocation38 [shape = 'u8[512]{0}', space=vmem, size = 0x400, scoped, tag = 'input window, operand 46, single buffered']
    #allocation39 [shape = 's32[1]{0}', space=sflag, size = 0x4, scoped, tag = 'scoped memory for modified_vgg16_forward.1']
    #allocation40 [shape = 'u8[1024]{0}', space=vmem, size = 0x400, scoped, tag = 'output window, operand 0']
    %100 = vsyncpa [#allocation3], 0
    %101 = vsyncpa [#allocation6], 0
    %102 = vsyncpa [#allocation9], 0
    %103 = vsyncpa [#allocation12], 0
    %104 = vsyncpa [#allocation15], 0
    %105 = vsyncpa [#allocation18], 0
    %106 = vsyncpa [#allocation21], 0
    %107 = vsyncpa [#allocation24], 0
    %108 = vsyncpa [#allocation27], 0
    %109 = vsyncpa [#allocation30], 0
    %110 = vsyncpa [#allocation33], 0
    %111 = vsyncpa [#allocation36], 0
    %112 = vsyncpa [#allocation39], 0
    %113 = vsyncpa [#allocation4], 0
    %s114 = scalar_lea.sflag [#allocation4], 1
    %115 = vsyncpa %s114, 0
    loop: start=0, step=1, limit=4
    $region2: #{modified_vgg16_forward.1} parent=1 // loop_pre_header
      _
    $region3: #{modified_vgg16_forward.1} parent=1 // loop_header
      %s117 = sphi 0, %s121
      %p118 = scmp.ge.s32.totalorder %s117, 4
      %s127 = sphi 0, %s129
      %s130 = sphi 0, %s127
      %s131 = sphi 0, %s130
      %s147 = sphi 0, %s131
      %s151 = sphi 0, %s151
      %s153 = sphi 0, %s151
      %s154 = sphi 0, %s153
      %s168 = sphi 0, %s154
      %s172 = sphi 0, %s172
      %s174 = sphi 0, %s172
      %s175 = sphi 0, %s174
      %s189 = sphi 0, %s175
      %s193 = sphi 0, %s193
      %s195 = sphi 0, %s193
      %s196 = sphi 0, %s195
      %s210 = sphi 0, %s196
      %s214 = sphi 0, %s214
      %s216 = sphi 0, %s214
      %s217 = sphi 0, %s216
      %s231 = sphi 0, %s217
      %s235 = sphi 0, %s235
      %s237 = sphi 0, %s235
      %s238 = sphi 0, %s237
      %s252 = sphi 0, %s238
      %s256 = sphi 0, %s256
      %s258 = sphi 0, %s256
      %s259 = sphi 0, %s258
      %s273 = sphi 0, %s259
      %s277 = sphi 0, %s277
      %s279 = sphi 0, %s277
      %s280 = sphi 0, %s279
      %s294 = sphi 0, %s280
      %s298 = sphi 0, %s298
      %s300 = sphi 0, %s298
      %s301 = sphi 0, %s300
      %s315 = sphi 0, %s301
      %s319 = sphi 0, %s319
      %s321 = sphi 0, %s319
      %s322 = sphi 0, %s321
      %s336 = sphi 0, %s322
      %s340 = sphi 0, %s340
      %s342 = sphi 0, %s340
      %s343 = sphi 0, %s342
      %s357 = sphi 0, %s343
      %s361 = sphi 0, %s361
      %s363 = sphi 0, %s361
      %s364 = sphi 0, %s363
      %s378 = sphi 0, %s364
      %s382 = sphi 0, %s382
      %s384 = sphi 0, %s382
      %s385 = sphi 0, %s384
      %s399 = sphi 0, %s385
      %s403 = sphi 0, %s403
      %s405 = sphi 0, %s403
      %s406 = sphi 0, %s405
      %s420 = sphi 0, %s406
      %s424 = sphi 0, %s424
      %s426 = sphi 0, %s424
      %s427 = sphi 0, %s426
      %s441 = sphi 0, %s427
      %s445 = sphi 0, %s445
      %s447 = sphi 0, %s445
      %s448 = sphi 0, %s447
      %s462 = sphi 0, %s448
      %s466 = sphi 0, %s466
      %s468 = sphi 0, %s466
      %s469 = sphi 0, %s468
      %s483 = sphi 0, %s469
      %s487 = sphi 0, %s487
      %s489 = sphi 0, %s487
      %s490 = sphi 0, %s489
      %s504 = sphi 0, %s490
      %s508 = sphi 0, %s508
      %s510 = sphi 0, %s508
      %s511 = sphi 0, %s510
      %s525 = sphi 0, %s511
      %s529 = sphi 0, %s529
      %s531 = sphi 0, %s529
      %s532 = sphi 0, %s531
      %s546 = sphi 0, %s532
      %s550 = sphi 0, %s550
      %s552 = sphi 0, %s550
      %s553 = sphi 0, %s552
      %s567 = sphi 0, %s553
      %s571 = sphi 0, %s571
      %s573 = sphi 0, %s571
      %s574 = sphi 0, %s573
      %s588 = sphi 0, %s574
      %s592 = sphi 0, %s592
      %s594 = sphi 0, %s592
      %s595 = sphi 0, %s594
      %s609 = sphi 0, %s595
      %s613 = sphi 0, %s613
      %s615 = sphi 0, %s613
      %s616 = sphi 0, %s615
      %s630 = sphi 0, %s616
      %s634 = sphi 0, %s634
      %s636 = sphi 0, %s634
      %s637 = sphi 0, %s636
      %s651 = sphi 0, %s637
      %s655 = sphi 0, %s655
      %s657 = sphi 0, %s655
      %s658 = sphi 0, %s657
      %s672 = sphi 0, %s658
      %s676 = sphi 0, %s676
      %s678 = sphi 0, %s676
      %s679 = sphi 0, %s678
      %s693 = sphi 0, %s679
      %s697 = sphi 0, %s697
      %s699 = sphi 0, %s697
      %s700 = sphi 0, %s699
      %s714 = sphi 0, %s700
      %s718 = sphi 0, %s718
      %s720 = sphi 0, %s718
      %s721 = sphi 0, %s720
      %s735 = sphi 0, %s721
      %s739 = sphi 0, %s739
      %s741 = sphi 0, %s739
      %s742 = sphi 0, %s741
      %s756 = sphi 0, %s742
      %s760 = sphi 0, %s760
      %s762 = sphi 0, %s760
      %s763 = sphi 0, %s762
      %s777 = sphi 0, %s763
      %s781 = sphi 0, %s781
      %s783 = sphi 0, %s781
      %s784 = sphi 0, %s783
      %s798 = sphi 0, %s784
      %s802 = sphi 0, %s802
      %s804 = sphi 0, %s802
      %s805 = sphi 0, %s804
      %s819 = sphi 0, %s805
      %s823 = sphi 0, %s823
      %s825 = sphi 0, %s823
      %s826 = sphi 0, %s825
      %s840 = sphi 0, %s826
      %s844 = sphi 0, %s844
      %s846 = sphi 0, %s844
      %s847 = sphi 0, %s846
      %s861 = sphi 0, %s847
      %s865 = sphi 0, %s865
      %s867 = sphi 0, %s865
      %s868 = sphi 0, %s867
      %s882 = sphi 0, %s868
      %s886 = sphi 0, %s886
      %s888 = sphi 0, %s886
      %s889 = sphi 0, %s888
      %s903 = sphi 0, %s889
      %s907 = sphi 0, %s907
      %s909 = sphi 0, %s907
      %s910 = sphi 0, %s909
      %s924 = sphi 0, %s910
      %s928 = sphi 0, %s928
      %s930 = sphi 0, %s928
      %s931 = sphi 0, %s930
      %s945 = sphi 0, %s931
      %s949 = sphi 0, %s949
      %s951 = sphi 0, %s949
      %s952 = sphi 0, %s951
      %s966 = sphi 0, %s952
      %s970 = sphi 0, %s970
      %s972 = sphi 0, %s970
      %s973 = sphi 0, %s972
      %s987 = sphi 0, %s973
      %s991 = sphi 0, %s991
      %s993 = sphi 0, %s991
      %s994 = sphi 0, %s993
      %s1008 = sphi 0, %s994
      %s1012 = sphi 0, %s1012
      %s1014 = sphi 0, %s1012
      %s1015 = sphi 0, %s1014
      %s1029 = sphi 0, %s1015
      %s1033 = sphi 0, %s1033
      %s1035 = sphi 0, %s1033
      %s1036 = sphi 0, %s1035
      %s1050 = sphi 0, %s1036
      %s1054 = sphi 0, %s1054
      %s1056 = sphi 0, %s1054
      %s1057 = sphi 0, %s1056
      %s1071 = sphi 0, %s1057
      %s1075 = sphi 0, %s1075
      %s1077 = sphi 0, %s1075
      %s1078 = sphi 0, %s1077
      %s1092 = sphi 0, %s1078
      %s1096 = sphi 0, %s1096
      %s1098 = sphi 0, %s1096
      %s1099 = sphi 0, %s1098
      %s1113 = sphi 0, %s1099
      %s1119 = sphi 0, %s1121
      %s1122 = sphi 0, %s1119
      %s1123 = sphi 0, %s1122
      %s1139 = sphi 0, %s1123
    $region4: #{modified_vgg16_forward.1} parent=1 // loop_header_branch
      %120 = sbr.rel (%p118) target = $region8
    $region5: #{modified_vgg16_forward.1} parent=1 // loop_body
      %s122 = ssub.s32 %s117, 1
      %s123 = ssub.s32 %s117, 2
      %s124 = sadd.s32 %s117, 1
      %s125 = ssub.s32 %s117, %s124
      %p126 = scmp.eq.s32.totalorder %s125, 0
      %s128 = sadd.s32 %s127, 1
      %s129 = scalar_select %p126, %s127, %s128
      %p132 = pneg %p126
      %p133 = scmp.eq.s32.totalorder %s117, 1
      %p134 = por %p132, %p133
      %p135 = scmp.ne.s32.totalorder %s127, %s130
      %p136 = scmp.eq.s32.totalorder %s117, 0
      %p137 = por %p135, %p136
      %p138 = scmp.ne.s32.totalorder %s127, %s130
      %p139 = scmp.eq.s32.totalorder %s122, 1
      %p140 = por %p138, %p139
      %p141 = scmp.ne.s32.totalorder %s130, %s131
      %p142 = scmp.eq.s32.totalorder %s122, 0
      %p143 = por %p141, %p142
      %p144 = scmp.ne.s32.totalorder %s130, %s131
      %p145 = scmp.eq.s32.totalorder %s123, 1
      %p146 = por %p144, %p145
      %p148 = scmp.ne.s32.totalorder %s131, %s147
      %p149 = scmp.eq.s32.totalorder %s123, 0
      %p150 = por %p148, %p149
      %s152 = sadd.s32 %s151, 1
      %p155 = scmp.eq.s32.totalorder %s117, 1
      %p156 = scmp.ne.s32.totalorder %s151, %s153
      %p157 = scmp.eq.s32.totalorder %s117, 0
      %p158 = por %p156, %p157
      %p159 = scmp.ne.s32.totalorder %s151, %s153
      %p160 = scmp.eq.s32.totalorder %s122, 1
      %p161 = por %p159, %p160
      %p162 = scmp.ne.s32.totalorder %s153, %s154
      %p163 = scmp.eq.s32.totalorder %s122, 0
      %p164 = por %p162, %p163
      %p165 = scmp.ne.s32.totalorder %s153, %s154
      %p166 = scmp.eq.s32.totalorder %s123, 1
      %p167 = por %p165, %p166
      %p169 = scmp.ne.s32.totalorder %s154, %s168
      %p170 = scmp.eq.s32.totalorder %s123, 0
      %p171 = por %p169, %p170
      %s173 = sadd.s32 %s172, 1
      %p176 = scmp.eq.s32.totalorder %s117, 1
      %p177 = scmp.ne.s32.totalorder %s172, %s174
      %p178 = scmp.eq.s32.totalorder %s117, 0
      %p179 = por %p177, %p178
      %p180 = scmp.ne.s32.totalorder %s172, %s174
      %p181 = scmp.eq.s32.totalorder %s122, 1
      %p182 = por %p180, %p181
      %p183 = scmp.ne.s32.totalorder %s174, %s175
      %p184 = scmp.eq.s32.totalorder %s122, 0
      %p185 = por %p183, %p184
      %p186 = scmp.ne.s32.totalorder %s174, %s175
      %p187 = scmp.eq.s32.totalorder %s123, 1
      %p188 = por %p186, %p187
      %p190 = scmp.ne.s32.totalorder %s175, %s189
      %p191 = scmp.eq.s32.totalorder %s123, 0
      %p192 = por %p190, %p191
      %s194 = sadd.s32 %s193, 1
      %p197 = scmp.eq.s32.totalorder %s117, 1
      %p198 = scmp.ne.s32.totalorder %s193, %s195
      %p199 = scmp.eq.s32.totalorder %s117, 0
      %p200 = por %p198, %p199
      %p201 = scmp.ne.s32.totalorder %s193, %s195
      %p202 = scmp.eq.s32.totalorder %s122, 1
      %p203 = por %p201, %p202
      %p204 = scmp.ne.s32.totalorder %s195, %s196
      %p205 = scmp.eq.s32.totalorder %s122, 0
      %p206 = por %p204, %p205
      %p207 = scmp.ne.s32.totalorder %s195, %s196
      %p208 = scmp.eq.s32.totalorder %s123, 1
      %p209 = por %p207, %p208
      %p211 = scmp.ne.s32.totalorder %s196, %s210
      %p212 = scmp.eq.s32.totalorder %s123, 0
      %p213 = por %p211, %p212
      %s215 = sadd.s32 %s214, 1
      %p218 = scmp.eq.s32.totalorder %s117, 1
      %p219 = scmp.ne.s32.totalorder %s214, %s216
      %p220 = scmp.eq.s32.totalorder %s117, 0
      %p221 = por %p219, %p220
      %p222 = scmp.ne.s32.totalorder %s214, %s216
      %p223 = scmp.eq.s32.totalorder %s122, 1
      %p224 = por %p222, %p223
      %p225 = scmp.ne.s32.totalorder %s216, %s217
      %p226 = scmp.eq.s32.totalorder %s122, 0
      %p227 = por %p225, %p226
      %p228 = scmp.ne.s32.totalorder %s216, %s217
      %p229 = scmp.eq.s32.totalorder %s123, 1
      %p230 = por %p228, %p229
      %p232 = scmp.ne.s32.totalorder %s217, %s231
      %p233 = scmp.eq.s32.totalorder %s123, 0
      %p234 = por %p232, %p233
      %s236 = sadd.s32 %s235, 1
      %p239 = scmp.eq.s32.totalorder %s117, 1
      %p240 = scmp.ne.s32.totalorder %s235, %s237
      %p241 = scmp.eq.s32.totalorder %s117, 0
      %p242 = por %p240, %p241
      %p243 = scmp.ne.s32.totalorder %s235, %s237
      %p244 = scmp.eq.s32.totalorder %s122, 1
      %p245 = por %p243, %p244
      %p246 = scmp.ne.s32.totalorder %s237, %s238
      %p247 = scmp.eq.s32.totalorder %s122, 0
      %p248 = por %p246, %p247
      %p249 = scmp.ne.s32.totalorder %s237, %s238
      %p250 = scmp.eq.s32.totalorder %s123, 1
      %p251 = por %p249, %p250
      %p253 = scmp.ne.s32.totalorder %s238, %s252
      %p254 = scmp.eq.s32.totalorder %s123, 0
      %p255 = por %p253, %p254
      %s257 = sadd.s32 %s256, 1
      %p260 = scmp.eq.s32.totalorder %s117, 1
      %p261 = scmp.ne.s32.totalorder %s256, %s258
      %p262 = scmp.eq.s32.totalorder %s117, 0
      %p263 = por %p261, %p262
      %p264 = scmp.ne.s32.totalorder %s256, %s258
      %p265 = scmp.eq.s32.totalorder %s122, 1
      %p266 = por %p264, %p265
      %p267 = scmp.ne.s32.totalorder %s258, %s259
      %p268 = scmp.eq.s32.totalorder %s122, 0
      %p269 = por %p267, %p268
      %p270 = scmp.ne.s32.totalorder %s258, %s259
      %p271 = scmp.eq.s32.totalorder %s123, 1
      %p272 = por %p270, %p271
      %p274 = scmp.ne.s32.totalorder %s259, %s273
      %p275 = scmp.eq.s32.totalorder %s123, 0
      %p276 = por %p274, %p275
      %s278 = sadd.s32 %s277, 1
      %p281 = scmp.eq.s32.totalorder %s117, 1
      %p282 = scmp.ne.s32.totalorder %s277, %s279
      %p283 = scmp.eq.s32.totalorder %s117, 0
      %p284 = por %p282, %p283
      %p285 = scmp.ne.s32.totalorder %s277, %s279
      %p286 = scmp.eq.s32.totalorder %s122, 1
      %p287 = por %p285, %p286
      %p288 = scmp.ne.s32.totalorder %s279, %s280
      %p289 = scmp.eq.s32.totalorder %s122, 0
      %p290 = por %p288, %p289
      %p291 = scmp.ne.s32.totalorder %s279, %s280
      %p292 = scmp.eq.s32.totalorder %s123, 1
      %p293 = por %p291, %p292
      %p295 = scmp.ne.s32.totalorder %s280, %s294
      %p296 = scmp.eq.s32.totalorder %s123, 0
      %p297 = por %p295, %p296
      %s299 = sadd.s32 %s298, 1
      %p302 = scmp.eq.s32.totalorder %s117, 1
      %p303 = scmp.ne.s32.totalorder %s298, %s300
      %p304 = scmp.eq.s32.totalorder %s117, 0
      %p305 = por %p303, %p304
      %p306 = scmp.ne.s32.totalorder %s298, %s300
      %p307 = scmp.eq.s32.totalorder %s122, 1
      %p308 = por %p306, %p307
      %p309 = scmp.ne.s32.totalorder %s300, %s301
      %p310 = scmp.eq.s32.totalorder %s122, 0
      %p311 = por %p309, %p310
      %p312 = scmp.ne.s32.totalorder %s300, %s301
      %p313 = scmp.eq.s32.totalorder %s123, 1
      %p314 = por %p312, %p313
      %p316 = scmp.ne.s32.totalorder %s301, %s315
      %p317 = scmp.eq.s32.totalorder %s123, 0
      %p318 = por %p316, %p317
      %s320 = sadd.s32 %s319, 1
      %p323 = scmp.eq.s32.totalorder %s117, 1
      %p324 = scmp.ne.s32.totalorder %s319, %s321
      %p325 = scmp.eq.s32.totalorder %s117, 0
      %p326 = por %p324, %p325
      %p327 = scmp.ne.s32.totalorder %s319, %s321
      %p328 = scmp.eq.s32.totalorder %s122, 1
      %p329 = por %p327, %p328
      %p330 = scmp.ne.s32.totalorder %s321, %s322
      %p331 = scmp.eq.s32.totalorder %s122, 0
      %p332 = por %p330, %p331
      %p333 = scmp.ne.s32.totalorder %s321, %s322
      %p334 = scmp.eq.s32.totalorder %s123, 1
      %p335 = por %p333, %p334
      %p337 = scmp.ne.s32.totalorder %s322, %s336
      %p338 = scmp.eq.s32.totalorder %s123, 0
      %p339 = por %p337, %p338
      %s341 = sadd.s32 %s340, 1
      %p344 = scmp.eq.s32.totalorder %s117, 1
      %p345 = scmp.ne.s32.totalorder %s340, %s342
      %p346 = scmp.eq.s32.totalorder %s117, 0
      %p347 = por %p345, %p346
      %p348 = scmp.ne.s32.totalorder %s340, %s342
      %p349 = scmp.eq.s32.totalorder %s122, 1
      %p350 = por %p348, %p349
      %p351 = scmp.ne.s32.totalorder %s342, %s343
      %p352 = scmp.eq.s32.totalorder %s122, 0
      %p353 = por %p351, %p352
      %p354 = scmp.ne.s32.totalorder %s342, %s343
      %p355 = scmp.eq.s32.totalorder %s123, 1
      %p356 = por %p354, %p355
      %p358 = scmp.ne.s32.totalorder %s343, %s357
      %p359 = scmp.eq.s32.totalorder %s123, 0
      %p360 = por %p358, %p359
      %s362 = sadd.s32 %s361, 1
      %p365 = scmp.eq.s32.totalorder %s117, 1
      %p366 = scmp.ne.s32.totalorder %s361, %s363
      %p367 = scmp.eq.s32.totalorder %s117, 0
      %p368 = por %p366, %p367
      %p369 = scmp.ne.s32.totalorder %s361, %s363
      %p370 = scmp.eq.s32.totalorder %s122, 1
      %p371 = por %p369, %p370
      %p372 = scmp.ne.s32.totalorder %s363, %s364
      %p373 = scmp.eq.s32.totalorder %s122, 0
      %p374 = por %p372, %p373
      %p375 = scmp.ne.s32.totalorder %s363, %s364
      %p376 = scmp.eq.s32.totalorder %s123, 1
      %p377 = por %p375, %p376
      %p379 = scmp.ne.s32.totalorder %s364, %s378
      %p380 = scmp.eq.s32.totalorder %s123, 0
      %p381 = por %p379, %p380
      %s383 = sadd.s32 %s382, 1
      %p386 = scmp.eq.s32.totalorder %s117, 1
      %p387 = scmp.ne.s32.totalorder %s382, %s384
      %p388 = scmp.eq.s32.totalorder %s117, 0
      %p389 = por %p387, %p388
      %p390 = scmp.ne.s32.totalorder %s382, %s384
      %p391 = scmp.eq.s32.totalorder %s122, 1
      %p392 = por %p390, %p391
      %p393 = scmp.ne.s32.totalorder %s384, %s385
      %p394 = scmp.eq.s32.totalorder %s122, 0
      %p395 = por %p393, %p394
      %p396 = scmp.ne.s32.totalorder %s384, %s385
      %p397 = scmp.eq.s32.totalorder %s123, 1
      %p398 = por %p396, %p397
      %p400 = scmp.ne.s32.totalorder %s385, %s399
      %p401 = scmp.eq.s32.totalorder %s123, 0
      %p402 = por %p400, %p401
      %s404 = sadd.s32 %s403, 1
      %p407 = scmp.eq.s32.totalorder %s117, 1
      %p408 = scmp.ne.s32.totalorder %s403, %s405
      %p409 = scmp.eq.s32.totalorder %s117, 0
      %p410 = por %p408, %p409
      %p411 = scmp.ne.s32.totalorder %s403, %s405
      %p412 = scmp.eq.s32.totalorder %s122, 1
      %p413 = por %p411, %p412
      %p414 = scmp.ne.s32.totalorder %s405, %s406
      %p415 = scmp.eq.s32.totalorder %s122, 0
      %p416 = por %p414, %p415
      %p417 = scmp.ne.s32.totalorder %s405, %s406
      %p418 = scmp.eq.s32.totalorder %s123, 1
      %p419 = por %p417, %p418
      %p421 = scmp.ne.s32.totalorder %s406, %s420
      %p422 = scmp.eq.s32.totalorder %s123, 0
      %p423 = por %p421, %p422
      %s425 = sadd.s32 %s424, 1
      %p428 = scmp.eq.s32.totalorder %s117, 1
      %p429 = scmp.ne.s32.totalorder %s424, %s426
      %p430 = scmp.eq.s32.totalorder %s117, 0
      %p431 = por %p429, %p430
      %p432 = scmp.ne.s32.totalorder %s424, %s426
      %p433 = scmp.eq.s32.totalorder %s122, 1
      %p434 = por %p432, %p433
      %p435 = scmp.ne.s32.totalorder %s426, %s427
      %p436 = scmp.eq.s32.totalorder %s122, 0
      %p437 = por %p435, %p436
      %p438 = scmp.ne.s32.totalorder %s426, %s427
      %p439 = scmp.eq.s32.totalorder %s123, 1
      %p440 = por %p438, %p439
      %p442 = scmp.ne.s32.totalorder %s427, %s441
      %p443 = scmp.eq.s32.totalorder %s123, 0
      %p444 = por %p442, %p443
      %s446 = sadd.s32 %s445, 1
      %p449 = scmp.eq.s32.totalorder %s117, 1
      %p450 = scmp.ne.s32.totalorder %s445, %s447
      %p451 = scmp.eq.s32.totalorder %s117, 0
      %p452 = por %p450, %p451
      %p453 = scmp.ne.s32.totalorder %s445, %s447
      %p454 = scmp.eq.s32.totalorder %s122, 1
      %p455 = por %p453, %p454
      %p456 = scmp.ne.s32.totalorder %s447, %s448
      %p457 = scmp.eq.s32.totalorder %s122, 0
      %p458 = por %p456, %p457
      %p459 = scmp.ne.s32.totalorder %s447, %s448
      %p460 = scmp.eq.s32.totalorder %s123, 1
      %p461 = por %p459, %p460
      %p463 = scmp.ne.s32.totalorder %s448, %s462
      %p464 = scmp.eq.s32.totalorder %s123, 0
      %p465 = por %p463, %p464
      %s467 = sadd.s32 %s466, 1
      %p470 = scmp.eq.s32.totalorder %s117, 1
      %p471 = scmp.ne.s32.totalorder %s466, %s468
      %p472 = scmp.eq.s32.totalorder %s117, 0
      %p473 = por %p471, %p472
      %p474 = scmp.ne.s32.totalorder %s466, %s468
      %p475 = scmp.eq.s32.totalorder %s122, 1
      %p476 = por %p474, %p475
      %p477 = scmp.ne.s32.totalorder %s468, %s469
      %p478 = scmp.eq.s32.totalorder %s122, 0
      %p479 = por %p477, %p478
      %p480 = scmp.ne.s32.totalorder %s468, %s469
      %p481 = scmp.eq.s32.totalorder %s123, 1
      %p482 = por %p480, %p481
      %p484 = scmp.ne.s32.totalorder %s469, %s483
      %p485 = scmp.eq.s32.totalorder %s123, 0
      %p486 = por %p484, %p485
      %s488 = sadd.s32 %s487, 1
      %p491 = scmp.eq.s32.totalorder %s117, 1
      %p492 = scmp.ne.s32.totalorder %s487, %s489
      %p493 = scmp.eq.s32.totalorder %s117, 0
      %p494 = por %p492, %p493
      %p495 = scmp.ne.s32.totalorder %s487, %s489
      %p496 = scmp.eq.s32.totalorder %s122, 1
      %p497 = por %p495, %p496
      %p498 = scmp.ne.s32.totalorder %s489, %s490
      %p499 = scmp.eq.s32.totalorder %s122, 0
      %p500 = por %p498, %p499
      %p501 = scmp.ne.s32.totalorder %s489, %s490
      %p502 = scmp.eq.s32.totalorder %s123, 1
      %p503 = por %p501, %p502
      %p505 = scmp.ne.s32.totalorder %s490, %s504
      %p506 = scmp.eq.s32.totalorder %s123, 0
      %p507 = por %p505, %p506
      %s509 = sadd.s32 %s508, 1
      %p512 = scmp.eq.s32.totalorder %s117, 1
      %p513 = scmp.ne.s32.totalorder %s508, %s510
      %p514 = scmp.eq.s32.totalorder %s117, 0
      %p515 = por %p513, %p514
      %p516 = scmp.ne.s32.totalorder %s508, %s510
      %p517 = scmp.eq.s32.totalorder %s122, 1
      %p518 = por %p516, %p517
      %p519 = scmp.ne.s32.totalorder %s510, %s511
      %p520 = scmp.eq.s32.totalorder %s122, 0
      %p521 = por %p519, %p520
      %p522 = scmp.ne.s32.totalorder %s510, %s511
      %p523 = scmp.eq.s32.totalorder %s123, 1
      %p524 = por %p522, %p523
      %p526 = scmp.ne.s32.totalorder %s511, %s525
      %p527 = scmp.eq.s32.totalorder %s123, 0
      %p528 = por %p526, %p527
      %s530 = sadd.s32 %s529, 1
      %p533 = scmp.eq.s32.totalorder %s117, 1
      %p534 = scmp.ne.s32.totalorder %s529, %s531
      %p535 = scmp.eq.s32.totalorder %s117, 0
      %p536 = por %p534, %p535
      %p537 = scmp.ne.s32.totalorder %s529, %s531
      %p538 = scmp.eq.s32.totalorder %s122, 1
      %p539 = por %p537, %p538
      %p540 = scmp.ne.s32.totalorder %s531, %s532
      %p541 = scmp.eq.s32.totalorder %s122, 0
      %p542 = por %p540, %p541
      %p543 = scmp.ne.s32.totalorder %s531, %s532
      %p544 = scmp.eq.s32.totalorder %s123, 1
      %p545 = por %p543, %p544
      %p547 = scmp.ne.s32.totalorder %s532, %s546
      %p548 = scmp.eq.s32.totalorder %s123, 0
      %p549 = por %p547, %p548
      %s551 = sadd.s32 %s550, 1
      %p554 = scmp.eq.s32.totalorder %s117, 1
      %p555 = scmp.ne.s32.totalorder %s550, %s552
      %p556 = scmp.eq.s32.totalorder %s117, 0
      %p557 = por %p555, %p556
      %p558 = scmp.ne.s32.totalorder %s550, %s552
      %p559 = scmp.eq.s32.totalorder %s122, 1
      %p560 = por %p558, %p559
      %p561 = scmp.ne.s32.totalorder %s552, %s553
      %p562 = scmp.eq.s32.totalorder %s122, 0
      %p563 = por %p561, %p562
      %p564 = scmp.ne.s32.totalorder %s552, %s553
      %p565 = scmp.eq.s32.totalorder %s123, 1
      %p566 = por %p564, %p565
      %p568 = scmp.ne.s32.totalorder %s553, %s567
      %p569 = scmp.eq.s32.totalorder %s123, 0
      %p570 = por %p568, %p569
      %s572 = sadd.s32 %s571, 1
      %p575 = scmp.eq.s32.totalorder %s117, 1
      %p576 = scmp.ne.s32.totalorder %s571, %s573
      %p577 = scmp.eq.s32.totalorder %s117, 0
      %p578 = por %p576, %p577
      %p579 = scmp.ne.s32.totalorder %s571, %s573
      %p580 = scmp.eq.s32.totalorder %s122, 1
      %p581 = por %p579, %p580
      %p582 = scmp.ne.s32.totalorder %s573, %s574
      %p583 = scmp.eq.s32.totalorder %s122, 0
      %p584 = por %p582, %p583
      %p585 = scmp.ne.s32.totalorder %s573, %s574
      %p586 = scmp.eq.s32.totalorder %s123, 1
      %p587 = por %p585, %p586
      %p589 = scmp.ne.s32.totalorder %s574, %s588
      %p590 = scmp.eq.s32.totalorder %s123, 0
      %p591 = por %p589, %p590
      %s593 = sadd.s32 %s592, 1
      %p596 = scmp.eq.s32.totalorder %s117, 1
      %p597 = scmp.ne.s32.totalorder %s592, %s594
      %p598 = scmp.eq.s32.totalorder %s117, 0
      %p599 = por %p597, %p598
      %p600 = scmp.ne.s32.totalorder %s592, %s594
      %p601 = scmp.eq.s32.totalorder %s122, 1
      %p602 = por %p600, %p601
      %p603 = scmp.ne.s32.totalorder %s594, %s595
      %p604 = scmp.eq.s32.totalorder %s122, 0
      %p605 = por %p603, %p604
      %p606 = scmp.ne.s32.totalorder %s594, %s595
      %p607 = scmp.eq.s32.totalorder %s123, 1
      %p608 = por %p606, %p607
      %p610 = scmp.ne.s32.totalorder %s595, %s609
      %p611 = scmp.eq.s32.totalorder %s123, 0
      %p612 = por %p610, %p611
      %s614 = sadd.s32 %s613, 1
      %p617 = scmp.eq.s32.totalorder %s117, 1
      %p618 = scmp.ne.s32.totalorder %s613, %s615
      %p619 = scmp.eq.s32.totalorder %s117, 0
      %p620 = por %p618, %p619
      %p621 = scmp.ne.s32.totalorder %s613, %s615
      %p622 = scmp.eq.s32.totalorder %s122, 1
      %p623 = por %p621, %p622
      %p624 = scmp.ne.s32.totalorder %s615, %s616
      %p625 = scmp.eq.s32.totalorder %s122, 0
      %p626 = por %p624, %p625
      %p627 = scmp.ne.s32.totalorder %s615, %s616
      %p628 = scmp.eq.s32.totalorder %s123, 1
      %p629 = por %p627, %p628
      %p631 = scmp.ne.s32.totalorder %s616, %s630
      %p632 = scmp.eq.s32.totalorder %s123, 0
      %p633 = por %p631, %p632
      %s635 = sadd.s32 %s634, 1
      %p638 = scmp.eq.s32.totalorder %s117, 1
      %p639 = scmp.ne.s32.totalorder %s634, %s636
      %p640 = scmp.eq.s32.totalorder %s117, 0
      %p641 = por %p639, %p640
      %p642 = scmp.ne.s32.totalorder %s634, %s636
      %p643 = scmp.eq.s32.totalorder %s122, 1
      %p644 = por %p642, %p643
      %p645 = scmp.ne.s32.totalorder %s636, %s637
      %p646 = scmp.eq.s32.totalorder %s122, 0
      %p647 = por %p645, %p646
      %p648 = scmp.ne.s32.totalorder %s636, %s637
      %p649 = scmp.eq.s32.totalorder %s123, 1
      %p650 = por %p648, %p649
      %p652 = scmp.ne.s32.totalorder %s637, %s651
      %p653 = scmp.eq.s32.totalorder %s123, 0
      %p654 = por %p652, %p653
      %s656 = sadd.s32 %s655, 1
      %p659 = scmp.eq.s32.totalorder %s117, 1
      %p660 = scmp.ne.s32.totalorder %s655, %s657
      %p661 = scmp.eq.s32.totalorder %s117, 0
      %p662 = por %p660, %p661
      %p663 = scmp.ne.s32.totalorder %s655, %s657
      %p664 = scmp.eq.s32.totalorder %s122, 1
      %p665 = por %p663, %p664
      %p666 = scmp.ne.s32.totalorder %s657, %s658
      %p667 = scmp.eq.s32.totalorder %s122, 0
      %p668 = por %p666, %p667
      %p669 = scmp.ne.s32.totalorder %s657, %s658
      %p670 = scmp.eq.s32.totalorder %s123, 1
      %p671 = por %p669, %p670
      %p673 = scmp.ne.s32.totalorder %s658, %s672
      %p674 = scmp.eq.s32.totalorder %s123, 0
      %p675 = por %p673, %p674
      %s677 = sadd.s32 %s676, 1
      %p680 = scmp.eq.s32.totalorder %s117, 1
      %p681 = scmp.ne.s32.totalorder %s676, %s678
      %p682 = scmp.eq.s32.totalorder %s117, 0
      %p683 = por %p681, %p682
      %p684 = scmp.ne.s32.totalorder %s676, %s678
      %p685 = scmp.eq.s32.totalorder %s122, 1
      %p686 = por %p684, %p685
      %p687 = scmp.ne.s32.totalorder %s678, %s679
      %p688 = scmp.eq.s32.totalorder %s122, 0
      %p689 = por %p687, %p688
      %p690 = scmp.ne.s32.totalorder %s678, %s679
      %p691 = scmp.eq.s32.totalorder %s123, 1
      %p692 = por %p690, %p691
      %p694 = scmp.ne.s32.totalorder %s679, %s693
      %p695 = scmp.eq.s32.totalorder %s123, 0
      %p696 = por %p694, %p695
      %s698 = sadd.s32 %s697, 1
      %p701 = scmp.eq.s32.totalorder %s117, 1
      %p702 = scmp.ne.s32.totalorder %s697, %s699
      %p703 = scmp.eq.s32.totalorder %s117, 0
      %p704 = por %p702, %p703
      %p705 = scmp.ne.s32.totalorder %s697, %s699
      %p706 = scmp.eq.s32.totalorder %s122, 1
      %p707 = por %p705, %p706
      %p708 = scmp.ne.s32.totalorder %s699, %s700
      %p709 = scmp.eq.s32.totalorder %s122, 0
      %p710 = por %p708, %p709
      %p711 = scmp.ne.s32.totalorder %s699, %s700
      %p712 = scmp.eq.s32.totalorder %s123, 1
      %p713 = por %p711, %p712
      %p715 = scmp.ne.s32.totalorder %s700, %s714
      %p716 = scmp.eq.s32.totalorder %s123, 0
      %p717 = por %p715, %p716
      %s719 = sadd.s32 %s718, 1
      %p722 = scmp.eq.s32.totalorder %s117, 1
      %p723 = scmp.ne.s32.totalorder %s718, %s720
      %p724 = scmp.eq.s32.totalorder %s117, 0
      %p725 = por %p723, %p724
      %p726 = scmp.ne.s32.totalorder %s718, %s720
      %p727 = scmp.eq.s32.totalorder %s122, 1
      %p728 = por %p726, %p727
      %p729 = scmp.ne.s32.totalorder %s720, %s721
      %p730 = scmp.eq.s32.totalorder %s122, 0
      %p731 = por %p729, %p730
      %p732 = scmp.ne.s32.totalorder %s720, %s721
      %p733 = scmp.eq.s32.totalorder %s123, 1
      %p734 = por %p732, %p733
      %p736 = scmp.ne.s32.totalorder %s721, %s735
      %p737 = scmp.eq.s32.totalorder %s123, 0
      %p738 = por %p736, %p737
      %s740 = sadd.s32 %s739, 1
      %p743 = scmp.eq.s32.totalorder %s117, 1
      %p744 = scmp.ne.s32.totalorder %s739, %s741
      %p745 = scmp.eq.s32.totalorder %s117, 0
      %p746 = por %p744, %p745
      %p747 = scmp.ne.s32.totalorder %s739, %s741
      %p748 = scmp.eq.s32.totalorder %s122, 1
      %p749 = por %p747, %p748
      %p750 = scmp.ne.s32.totalorder %s741, %s742
      %p751 = scmp.eq.s32.totalorder %s122, 0
      %p752 = por %p750, %p751
      %p753 = scmp.ne.s32.totalorder %s741, %s742
      %p754 = scmp.eq.s32.totalorder %s123, 1
      %p755 = por %p753, %p754
      %p757 = scmp.ne.s32.totalorder %s742, %s756
      %p758 = scmp.eq.s32.totalorder %s123, 0
      %p759 = por %p757, %p758
      %s761 = sadd.s32 %s760, 1
      %p764 = scmp.eq.s32.totalorder %s117, 1
      %p765 = scmp.ne.s32.totalorder %s760, %s762
      %p766 = scmp.eq.s32.totalorder %s117, 0
      %p767 = por %p765, %p766
      %p768 = scmp.ne.s32.totalorder %s760, %s762
      %p769 = scmp.eq.s32.totalorder %s122, 1
      %p770 = por %p768, %p769
      %p771 = scmp.ne.s32.totalorder %s762, %s763
      %p772 = scmp.eq.s32.totalorder %s122, 0
      %p773 = por %p771, %p772
      %p774 = scmp.ne.s32.totalorder %s762, %s763
      %p775 = scmp.eq.s32.totalorder %s123, 1
      %p776 = por %p774, %p775
      %p778 = scmp.ne.s32.totalorder %s763, %s777
      %p779 = scmp.eq.s32.totalorder %s123, 0
      %p780 = por %p778, %p779
      %s782 = sadd.s32 %s781, 1
      %p785 = scmp.eq.s32.totalorder %s117, 1
      %p786 = scmp.ne.s32.totalorder %s781, %s783
      %p787 = scmp.eq.s32.totalorder %s117, 0
      %p788 = por %p786, %p787
      %p789 = scmp.ne.s32.totalorder %s781, %s783
      %p790 = scmp.eq.s32.totalorder %s122, 1
      %p791 = por %p789, %p790
      %p792 = scmp.ne.s32.totalorder %s783, %s784
      %p793 = scmp.eq.s32.totalorder %s122, 0
      %p794 = por %p792, %p793
      %p795 = scmp.ne.s32.totalorder %s783, %s784
      %p796 = scmp.eq.s32.totalorder %s123, 1
      %p797 = por %p795, %p796
      %p799 = scmp.ne.s32.totalorder %s784, %s798
      %p800 = scmp.eq.s32.totalorder %s123, 0
      %p801 = por %p799, %p800
      %s803 = sadd.s32 %s802, 1
      %p806 = scmp.eq.s32.totalorder %s117, 1
      %p807 = scmp.ne.s32.totalorder %s802, %s804
      %p808 = scmp.eq.s32.totalorder %s117, 0
      %p809 = por %p807, %p808
      %p810 = scmp.ne.s32.totalorder %s802, %s804
      %p811 = scmp.eq.s32.totalorder %s122, 1
      %p812 = por %p810, %p811
      %p813 = scmp.ne.s32.totalorder %s804, %s805
      %p814 = scmp.eq.s32.totalorder %s122, 0
      %p815 = por %p813, %p814
      %p816 = scmp.ne.s32.totalorder %s804, %s805
      %p817 = scmp.eq.s32.totalorder %s123, 1
      %p818 = por %p816, %p817
      %p820 = scmp.ne.s32.totalorder %s805, %s819
      %p821 = scmp.eq.s32.totalorder %s123, 0
      %p822 = por %p820, %p821
      %s824 = sadd.s32 %s823, 1
      %p827 = scmp.eq.s32.totalorder %s117, 1
      %p828 = scmp.ne.s32.totalorder %s823, %s825
      %p829 = scmp.eq.s32.totalorder %s117, 0
      %p830 = por %p828, %p829
      %p831 = scmp.ne.s32.totalorder %s823, %s825
      %p832 = scmp.eq.s32.totalorder %s122, 1
      %p833 = por %p831, %p832
      %p834 = scmp.ne.s32.totalorder %s825, %s826
      %p835 = scmp.eq.s32.totalorder %s122, 0
      %p836 = por %p834, %p835
      %p837 = scmp.ne.s32.totalorder %s825, %s826
      %p838 = scmp.eq.s32.totalorder %s123, 1
      %p839 = por %p837, %p838
      %p841 = scmp.ne.s32.totalorder %s826, %s840
      %p842 = scmp.eq.s32.totalorder %s123, 0
      %p843 = por %p841, %p842
      %s845 = sadd.s32 %s844, 1
      %p848 = scmp.eq.s32.totalorder %s117, 1
      %p849 = scmp.ne.s32.totalorder %s844, %s846
      %p850 = scmp.eq.s32.totalorder %s117, 0
      %p851 = por %p849, %p850
      %p852 = scmp.ne.s32.totalorder %s844, %s846
      %p853 = scmp.eq.s32.totalorder %s122, 1
      %p854 = por %p852, %p853
      %p855 = scmp.ne.s32.totalorder %s846, %s847
      %p856 = scmp.eq.s32.totalorder %s122, 0
      %p857 = por %p855, %p856
      %p858 = scmp.ne.s32.totalorder %s846, %s847
      %p859 = scmp.eq.s32.totalorder %s123, 1
      %p860 = por %p858, %p859
      %p862 = scmp.ne.s32.totalorder %s847, %s861
      %p863 = scmp.eq.s32.totalorder %s123, 0
      %p864 = por %p862, %p863
      %s866 = sadd.s32 %s865, 1
      %p869 = scmp.eq.s32.totalorder %s117, 1
      %p870 = scmp.ne.s32.totalorder %s865, %s867
      %p871 = scmp.eq.s32.totalorder %s117, 0
      %p872 = por %p870, %p871
      %p873 = scmp.ne.s32.totalorder %s865, %s867
      %p874 = scmp.eq.s32.totalorder %s122, 1
      %p875 = por %p873, %p874
      %p876 = scmp.ne.s32.totalorder %s867, %s868
      %p877 = scmp.eq.s32.totalorder %s122, 0
      %p878 = por %p876, %p877
      %p879 = scmp.ne.s32.totalorder %s867, %s868
      %p880 = scmp.eq.s32.totalorder %s123, 1
      %p881 = por %p879, %p880
      %p883 = scmp.ne.s32.totalorder %s868, %s882
      %p884 = scmp.eq.s32.totalorder %s123, 0
      %p885 = por %p883, %p884
      %s887 = sadd.s32 %s886, 1
      %p890 = scmp.eq.s32.totalorder %s117, 1
      %p891 = scmp.ne.s32.totalorder %s886, %s888
      %p892 = scmp.eq.s32.totalorder %s117, 0
      %p893 = por %p891, %p892
      %p894 = scmp.ne.s32.totalorder %s886, %s888
      %p895 = scmp.eq.s32.totalorder %s122, 1
      %p896 = por %p894, %p895
      %p897 = scmp.ne.s32.totalorder %s888, %s889
      %p898 = scmp.eq.s32.totalorder %s122, 0
      %p899 = por %p897, %p898
      %p900 = scmp.ne.s32.totalorder %s888, %s889
      %p901 = scmp.eq.s32.totalorder %s123, 1
      %p902 = por %p900, %p901
      %p904 = scmp.ne.s32.totalorder %s889, %s903
      %p905 = scmp.eq.s32.totalorder %s123, 0
      %p906 = por %p904, %p905
      %s908 = sadd.s32 %s907, 1
      %p911 = scmp.eq.s32.totalorder %s117, 1
      %p912 = scmp.ne.s32.totalorder %s907, %s909
      %p913 = scmp.eq.s32.totalorder %s117, 0
      %p914 = por %p912, %p913
      %p915 = scmp.ne.s32.totalorder %s907, %s909
      %p916 = scmp.eq.s32.totalorder %s122, 1
      %p917 = por %p915, %p916
      %p918 = scmp.ne.s32.totalorder %s909, %s910
      %p919 = scmp.eq.s32.totalorder %s122, 0
      %p920 = por %p918, %p919
      %p921 = scmp.ne.s32.totalorder %s909, %s910
      %p922 = scmp.eq.s32.totalorder %s123, 1
      %p923 = por %p921, %p922
      %p925 = scmp.ne.s32.totalorder %s910, %s924
      %p926 = scmp.eq.s32.totalorder %s123, 0
      %p927 = por %p925, %p926
      %s929 = sadd.s32 %s928, 1
      %p932 = scmp.eq.s32.totalorder %s117, 1
      %p933 = scmp.ne.s32.totalorder %s928, %s930
      %p934 = scmp.eq.s32.totalorder %s117, 0
      %p935 = por %p933, %p934
      %p936 = scmp.ne.s32.totalorder %s928, %s930
      %p937 = scmp.eq.s32.totalorder %s122, 1
      %p938 = por %p936, %p937
      %p939 = scmp.ne.s32.totalorder %s930, %s931
      %p940 = scmp.eq.s32.totalorder %s122, 0
      %p941 = por %p939, %p940
      %p942 = scmp.ne.s32.totalorder %s930, %s931
      %p943 = scmp.eq.s32.totalorder %s123, 1
      %p944 = por %p942, %p943
      %p946 = scmp.ne.s32.totalorder %s931, %s945
      %p947 = scmp.eq.s32.totalorder %s123, 0
      %p948 = por %p946, %p947
      %s950 = sadd.s32 %s949, 1
      %p953 = scmp.eq.s32.totalorder %s117, 1
      %p954 = scmp.ne.s32.totalorder %s949, %s951
      %p955 = scmp.eq.s32.totalorder %s117, 0
      %p956 = por %p954, %p955
      %p957 = scmp.ne.s32.totalorder %s949, %s951
      %p958 = scmp.eq.s32.totalorder %s122, 1
      %p959 = por %p957, %p958
      %p960 = scmp.ne.s32.totalorder %s951, %s952
      %p961 = scmp.eq.s32.totalorder %s122, 0
      %p962 = por %p960, %p961
      %p963 = scmp.ne.s32.totalorder %s951, %s952
      %p964 = scmp.eq.s32.totalorder %s123, 1
      %p965 = por %p963, %p964
      %p967 = scmp.ne.s32.totalorder %s952, %s966
      %p968 = scmp.eq.s32.totalorder %s123, 0
      %p969 = por %p967, %p968
      %s971 = sadd.s32 %s970, 1
      %p974 = scmp.eq.s32.totalorder %s117, 1
      %p975 = scmp.ne.s32.totalorder %s970, %s972
      %p976 = scmp.eq.s32.totalorder %s117, 0
      %p977 = por %p975, %p976
      %p978 = scmp.ne.s32.totalorder %s970, %s972
      %p979 = scmp.eq.s32.totalorder %s122, 1
      %p980 = por %p978, %p979
      %p981 = scmp.ne.s32.totalorder %s972, %s973
      %p982 = scmp.eq.s32.totalorder %s122, 0
      %p983 = por %p981, %p982
      %p984 = scmp.ne.s32.totalorder %s972, %s973
      %p985 = scmp.eq.s32.totalorder %s123, 1
      %p986 = por %p984, %p985
      %p988 = scmp.ne.s32.totalorder %s973, %s987
      %p989 = scmp.eq.s32.totalorder %s123, 0
      %p990 = por %p988, %p989
      %s992 = sadd.s32 %s991, 1
      %p995 = scmp.eq.s32.totalorder %s117, 1
      %p996 = scmp.ne.s32.totalorder %s991, %s993
      %p997 = scmp.eq.s32.totalorder %s117, 0
      %p998 = por %p996, %p997
      %p999 = scmp.ne.s32.totalorder %s991, %s993
      %p1000 = scmp.eq.s32.totalorder %s122, 1
      %p1001 = por %p999, %p1000
      %p1002 = scmp.ne.s32.totalorder %s993, %s994
      %p1003 = scmp.eq.s32.totalorder %s122, 0
      %p1004 = por %p1002, %p1003
      %p1005 = scmp.ne.s32.totalorder %s993, %s994
      %p1006 = scmp.eq.s32.totalorder %s123, 1
      %p1007 = por %p1005, %p1006
      %p1009 = scmp.ne.s32.totalorder %s994, %s1008
      %p1010 = scmp.eq.s32.totalorder %s123, 0
      %p1011 = por %p1009, %p1010
      %s1013 = sadd.s32 %s1012, 1
      %p1016 = scmp.eq.s32.totalorder %s117, 1
      %p1017 = scmp.ne.s32.totalorder %s1012, %s1014
      %p1018 = scmp.eq.s32.totalorder %s117, 0
      %p1019 = por %p1017, %p1018
      %p1020 = scmp.ne.s32.totalorder %s1012, %s1014
      %p1021 = scmp.eq.s32.totalorder %s122, 1
      %p1022 = por %p1020, %p1021
      %p1023 = scmp.ne.s32.totalorder %s1014, %s1015
      %p1024 = scmp.eq.s32.totalorder %s122, 0
      %p1025 = por %p1023, %p1024
      %p1026 = scmp.ne.s32.totalorder %s1014, %s1015
      %p1027 = scmp.eq.s32.totalorder %s123, 1
      %p1028 = por %p1026, %p1027
      %p1030 = scmp.ne.s32.totalorder %s1015, %s1029
      %p1031 = scmp.eq.s32.totalorder %s123, 0
      %p1032 = por %p1030, %p1031
      %s1034 = sadd.s32 %s1033, 1
      %p1037 = scmp.eq.s32.totalorder %s117, 1
      %p1038 = scmp.ne.s32.totalorder %s1033, %s1035
      %p1039 = scmp.eq.s32.totalorder %s117, 0
      %p1040 = por %p1038, %p1039
      %p1041 = scmp.ne.s32.totalorder %s1033, %s1035
      %p1042 = scmp.eq.s32.totalorder %s122, 1
      %p1043 = por %p1041, %p1042
      %p1044 = scmp.ne.s32.totalorder %s1035, %s1036
      %p1045 = scmp.eq.s32.totalorder %s122, 0
      %p1046 = por %p1044, %p1045
      %p1047 = scmp.ne.s32.totalorder %s1035, %s1036
      %p1048 = scmp.eq.s32.totalorder %s123, 1
      %p1049 = por %p1047, %p1048
      %p1051 = scmp.ne.s32.totalorder %s1036, %s1050
      %p1052 = scmp.eq.s32.totalorder %s123, 0
      %p1053 = por %p1051, %p1052
      %s1055 = sadd.s32 %s1054, 1
      %p1058 = scmp.eq.s32.totalorder %s117, 1
      %p1059 = scmp.ne.s32.totalorder %s1054, %s1056
      %p1060 = scmp.eq.s32.totalorder %s117, 0
      %p1061 = por %p1059, %p1060
      %p1062 = scmp.ne.s32.totalorder %s1054, %s1056
      %p1063 = scmp.eq.s32.totalorder %s122, 1
      %p1064 = por %p1062, %p1063
      %p1065 = scmp.ne.s32.totalorder %s1056, %s1057
      %p1066 = scmp.eq.s32.totalorder %s122, 0
      %p1067 = por %p1065, %p1066
      %p1068 = scmp.ne.s32.totalorder %s1056, %s1057
      %p1069 = scmp.eq.s32.totalorder %s123, 1
      %p1070 = por %p1068, %p1069
      %p1072 = scmp.ne.s32.totalorder %s1057, %s1071
      %p1073 = scmp.eq.s32.totalorder %s123, 0
      %p1074 = por %p1072, %p1073
      %s1076 = sadd.s32 %s1075, 1
      %p1079 = scmp.eq.s32.totalorder %s117, 1
      %p1080 = scmp.ne.s32.totalorder %s1075, %s1077
      %p1081 = scmp.eq.s32.totalorder %s117, 0
      %p1082 = por %p1080, %p1081
      %p1083 = scmp.ne.s32.totalorder %s1075, %s1077
      %p1084 = scmp.eq.s32.totalorder %s122, 1
      %p1085 = por %p1083, %p1084
      %p1086 = scmp.ne.s32.totalorder %s1077, %s1078
      %p1087 = scmp.eq.s32.totalorder %s122, 0
      %p1088 = por %p1086, %p1087
      %p1089 = scmp.ne.s32.totalorder %s1077, %s1078
      %p1090 = scmp.eq.s32.totalorder %s123, 1
      %p1091 = por %p1089, %p1090
      %p1093 = scmp.ne.s32.totalorder %s1078, %s1092
      %p1094 = scmp.eq.s32.totalorder %s123, 0
      %p1095 = por %p1093, %p1094
      %s1097 = sadd.s32 %s1096, 1
      %p1100 = scmp.eq.s32.totalorder %s117, 1
      %p1101 = scmp.ne.s32.totalorder %s1096, %s1098
      %p1102 = scmp.eq.s32.totalorder %s117, 0
      %p1103 = por %p1101, %p1102
      %p1104 = scmp.ne.s32.totalorder %s1096, %s1098
      %p1105 = scmp.eq.s32.totalorder %s122, 1
      %p1106 = por %p1104, %p1105
      %p1107 = scmp.ne.s32.totalorder %s1098, %s1099
      %p1108 = scmp.eq.s32.totalorder %s122, 0
      %p1109 = por %p1107, %p1108
      %p1110 = scmp.ne.s32.totalorder %s1098, %s1099
      %p1111 = scmp.eq.s32.totalorder %s123, 1
      %p1112 = por %p1110, %p1111
      %p1114 = scmp.ne.s32.totalorder %s1099, %s1113
      %p1115 = scmp.eq.s32.totalorder %s123, 0
      %p1116 = por %p1114, %p1115
      %s1117 = ssub.s32 %s117, %s124
      %p1118 = scmp.eq.s32.totalorder %s1117, 0
      %s1120 = sadd.s32 %s1119, 1
      %s1121 = scalar_select %p1118, %s1119, %s1120
      %p1124 = pneg %p1118
      %p1125 = scmp.eq.s32.totalorder %s117, 1
      %p1126 = por %p1124, %p1125
      %p1127 = scmp.ne.s32.totalorder %s1119, %s1122
      %p1128 = scmp.eq.s32.totalorder %s117, 0
      %p1129 = por %p1127, %p1128
      %p1130 = scmp.ne.s32.totalorder %s1119, %s1122
      %p1131 = scmp.eq.s32.totalorder %s122, 1
      %p1132 = por %p1130, %p1131
      %p1133 = scmp.ne.s32.totalorder %s1122, %s1123
      %p1134 = scmp.eq.s32.totalorder %s122, 0
      %p1135 = por %p1133, %p1134
      %p1136 = scmp.ne.s32.totalorder %s1122, %s1123
      %p1137 = scmp.eq.s32.totalorder %s123, 1
      %p1138 = por %p1136, %p1137
      %p1140 = scmp.ne.s32.totalorder %s1123, %s1139
      %p1141 = scmp.eq.s32.totalorder %s123, 0
      %p1142 = por %p1140, %p1141
      %p1143 = scmp.le.s32.totalorder 1, %s117
      %p1144 = scmp.lt.s32.totalorder %s117, 3
      %p1145 = pnand %p1143, %p1144
      %p1146 = pneg %p1145
      // Predicated region
      $region9: #{modified_vgg16_forward.1} parent=5 // pred_check
        _
      $region10: #{modified_vgg16_forward.1} parent=5 // pred_check_branch
        %1148 = sbr.rel (%p1145) target = $region12
      $region11: #{modified_vgg16_forward.1} parent=5 // pred_region
        %s1149 = ssub.s32 %s117, 1
        // Predicated region
        $region13: #{modified_vgg16_forward.1} parent=11 // pred_check
          %p1150 = pneg %p164
        $region14: #{modified_vgg16_forward.1} parent=11 // pred_check_branch
          %1152 = sbr.rel (%p1150) target = $region16
        $region15: #{modified_vgg16_forward.1} parent=11 // pred_region
          _
        $region16: #{modified_vgg16_forward.1} parent=11 // pred_fallthru
          _
        // Predicated region
        $region17: #{modified_vgg16_forward.1} parent=11 // pred_check
          %p1153 = pneg %p185
        $region18: #{modified_vgg16_forward.1} parent=11 // pred_check_branch
          %1155 = sbr.rel (%p1153) target = $region20
        $region19: #{modified_vgg16_forward.1} parent=11 // pred_region
          _
        $region20: #{modified_vgg16_forward.1} parent=11 // pred_fallthru
          _
        // Predicated region
        $region21: #{modified_vgg16_forward.1} parent=11 // pred_check
          %p1156 = pneg %p206
        $region22: #{modified_vgg16_forward.1} parent=11 // pred_check_branch
          %1158 = sbr.rel (%p1156) target = $region24
        $region23: #{modified_vgg16_forward.1} parent=11 // pred_region
          _
        $region24: #{modified_vgg16_forward.1} parent=11 // pred_fallthru
          _
        // Predicated region
        $region25: #{modified_vgg16_forward.1} parent=11 // pred_check
          %p1159 = pneg %p227
        $region26: #{modified_vgg16_forward.1} parent=11 // pred_check_branch
          %1161 = sbr.rel (%p1159) target = $region28
        $region27: #{modified_vgg16_forward.1} parent=11 // pred_region
          _
        $region28: #{modified_vgg16_forward.1} parent=11 // pred_fallthru
          _
        // Predicated region
        $region29: #{modified_vgg16_forward.1} parent=11 // pred_check
          %p1162 = pneg %p248
        $region30: #{modified_vgg16_forward.1} parent=11 // pred_check_branch
          %1164 = sbr.rel (%p1162) target = $region32
        $region31: #{modified_vgg16_forward.1} parent=11 // pred_region
          _
        $region32: #{modified_vgg16_forward.1} parent=11 // pred_fallthru
          _
        // Predicated region
        $region33: #{modified_vgg16_forward.1} parent=11 // pred_check
          %p1165 = pneg %p269
        $region34: #{modified_vgg16_forward.1} parent=11 // pred_check_branch
          %1167 = sbr.rel (%p1165) target = $region36
        $region35: #{modified_vgg16_forward.1} parent=11 // pred_region
          _
        $region36: #{modified_vgg16_forward.1} parent=11 // pred_fallthru
          _
        // Predicated region
        $region37: #{modified_vgg16_forward.1} parent=11 // pred_check
          %p1168 = pneg %p290
        $region38: #{modified_vgg16_forward.1} parent=11 // pred_check_branch
          %1170 = sbr.rel (%p1168) target = $region40
        $region39: #{modified_vgg16_forward.1} parent=11 // pred_region
          _
        $region40: #{modified_vgg16_forward.1} parent=11 // pred_fallthru
          _
        // Predicated region
        $region41: #{modified_vgg16_forward.1} parent=11 // pred_check
          %p1171 = pneg %p311
        $region42: #{modified_vgg16_forward.1} parent=11 // pred_check_branch
          %1173 = sbr.rel (%p1171) target = $region44
        $region43: #{modified_vgg16_forward.1} parent=11 // pred_region
          _
        $region44: #{modified_vgg16_forward.1} parent=11 // pred_fallthru
          _
        // Predicated region
        $region45: #{modified_vgg16_forward.1} parent=11 // pred_check
          %p1174 = pneg %p332
        $region46: #{modified_vgg16_forward.1} parent=11 // pred_check_branch
          %1176 = sbr.rel (%p1174) target = $region48
        $region47: #{modified_vgg16_forward.1} parent=11 // pred_region
          _
        $region48: #{modified_vgg16_forward.1} parent=11 // pred_fallthru
          _
        // Predicated region
        $region49: #{modified_vgg16_forward.1} parent=11 // pred_check
          %p1177 = pneg %p353
        $region50: #{modified_vgg16_forward.1} parent=11 // pred_check_branch
          %1179 = sbr.rel (%p1177) target = $region52
        $region51: #{modified_vgg16_forward.1} parent=11 // pred_region
          _
        $region52: #{modified_vgg16_forward.1} parent=11 // pred_fallthru
          _
        // Predicated region
        $region53: #{modified_vgg16_forward.1} parent=11 // pred_check
          %p1180 = pneg %p374
        $region54: #{modified_vgg16_forward.1} parent=11 // pred_check_branch
          %1182 = sbr.rel (%p1180) target = $region56
        $region55: #{modified_vgg16_forward.1} parent=11 // pred_region
          %1184 = vsyncadd [#allocation3], 0
          %s1185 = sshll.u32 %s23, 4
          %s1186 = int_to_ptr.hbm [resolvable:$true] %s1185
          %s1187 = sshll.u32 [#allocation2], 4
          %s1188 = int_to_ptr.vmem [resolvable:$true] %s1187
          %1193 = dma.hbm_to_vmem [thread:$0]  %s1186, 3072, %s1188, [#allocation3], 64, 64, 4
        $region56: #{modified_vgg16_forward.1} parent=11 // pred_fallthru
          _
        // Predicated region
        $region57: #{modified_vgg16_forward.1} parent=11 // pred_check
          %p1194 = pneg %p395
        $region58: #{modified_vgg16_forward.1} parent=11 // pred_check_branch
          %1196 = sbr.rel (%p1194) target = $region60
        $region59: #{modified_vgg16_forward.1} parent=11 // pred_region
          _
        $region60: #{modified_vgg16_forward.1} parent=11 // pred_fallthru
          _
        // Predicated region
        $region61: #{modified_vgg16_forward.1} parent=11 // pred_check
          %p1197 = pneg %p416
        $region62: #{modified_vgg16_forward.1} parent=11 // pred_check_branch
          %1199 = sbr.rel (%p1197) target = $region64
        $region63: #{modified_vgg16_forward.1} parent=11 // pred_region
          %1201 = vsyncadd [#allocation6], 0
          %s1202 = sshll.u32 %s27, 4
          %s1203 = int_to_ptr.hbm [resolvable:$true] %s1202
          %s1204 = sshll.u32 [#allocation5], 4
          %s1205 = int_to_ptr.vmem [resolvable:$true] %s1204
          %1210 = dma.hbm_to_vmem [thread:$0]  %s1203, 3072, %s1205, [#allocation6], 64, 64, 4
        $region64: #{modified_vgg16_forward.1} parent=11 // pred_fallthru
          _
        // Predicated region
        $region65: #{modified_vgg16_forward.1} parent=11 // pred_check
          %p1211 = pneg %p437
        $region66: #{modified_vgg16_forward.1} parent=11 // pred_check_branch
          %1213 = sbr.rel (%p1211) target = $region68
        $region67: #{modified_vgg16_forward.1} parent=11 // pred_region
          _
        $region68: #{modified_vgg16_forward.1} parent=11 // pred_fallthru
          _
        // Predicated region
        $region69: #{modified_vgg16_forward.1} parent=11 // pred_check
          %p1214 = pneg %p458
        $region70: #{modified_vgg16_forward.1} parent=11 // pred_check_branch
          %1216 = sbr.rel (%p1214) target = $region72
        $region71: #{modified_vgg16_forward.1} parent=11 // pred_region
          %1218 = vsyncadd [#allocation6], 0
          %s1219 = sshll.u32 %s31, 4
          %s1220 = int_to_ptr.hbm [resolvable:$true] %s1219
          %s1221 = sshll.u32 [#allocation7], 4
          %s1222 = int_to_ptr.vmem [resolvable:$true] %s1221
          %1227 = dma.hbm_to_vmem [thread:$0]  %s1220, 3072, %s1222, [#allocation6], 64, 64, 4
        $region72: #{modified_vgg16_forward.1} parent=11 // pred_fallthru
          _
        // Predicated region
        $region73: #{modified_vgg16_forward.1} parent=11 // pred_check
          %p1228 = pneg %p479
        $region74: #{modified_vgg16_forward.1} parent=11 // pred_check_branch
          %1230 = sbr.rel (%p1228) target = $region76
        $region75: #{modified_vgg16_forward.1} parent=11 // pred_region
          %1232 = vsyncadd [#allocation9], 0
          %s1234 = sshll.u32 %s33, 4
          %s1235 = int_to_ptr.hbm [resolvable:$true] %s1234
          %s1236 = sshll.u32 [#allocation8], 4
          %s1237 = int_to_ptr.vmem [resolvable:$true] %s1236
          %1239 = dma.hbm_to_vmem [thread:$0]  %s1235, 16, %s1237, [#allocation9]
        $region76: #{modified_vgg16_forward.1} parent=11 // pred_fallthru
          _
        // Predicated region
        $region77: #{modified_vgg16_forward.1} parent=11 // pred_check
          %p1240 = pneg %p500
        $region78: #{modified_vgg16_forward.1} parent=11 // pred_check_branch
          %1242 = sbr.rel (%p1240) target = $region80
        $region79: #{modified_vgg16_forward.1} parent=11 // pred_region
          %1244 = vsyncadd [#allocation9], 0
          %s1245 = sshll.u32 %s35, 4
          %s1246 = int_to_ptr.hbm [resolvable:$true] %s1245
          %s1247 = sshll.u32 [#allocation10], 4
          %s1248 = int_to_ptr.vmem [resolvable:$true] %s1247
          %1253 = dma.hbm_to_vmem [thread:$0]  %s1246, 3072, %s1248, [#allocation9], 64, 64, 4
        $region80: #{modified_vgg16_forward.1} parent=11 // pred_fallthru
          _
        // Predicated region
        $region81: #{modified_vgg16_forward.1} parent=11 // pred_check
          %p1254 = pneg %p521
        $region82: #{modified_vgg16_forward.1} parent=11 // pred_check_branch
          %1256 = sbr.rel (%p1254) target = $region84
        $region83: #{modified_vgg16_forward.1} parent=11 // pred_region
          %1258 = vsyncadd [#allocation12], 0
          %s1260 = sshll.u32 %s37, 4
          %s1261 = int_to_ptr.hbm [resolvable:$true] %s1260
          %s1262 = sshll.u32 [#allocation11], 4
          %s1263 = int_to_ptr.vmem [resolvable:$true] %s1262
          %1265 = dma.hbm_to_vmem [thread:$0]  %s1261, 16, %s1263, [#allocation12]
        $region84: #{modified_vgg16_forward.1} parent=11 // pred_fallthru
          _
        // Predicated region
        $region85: #{modified_vgg16_forward.1} parent=11 // pred_check
          %p1266 = pneg %p542
        $region86: #{modified_vgg16_forward.1} parent=11 // pred_check_branch
          %1268 = sbr.rel (%p1266) target = $region88
        $region87: #{modified_vgg16_forward.1} parent=11 // pred_region
          %1270 = vsyncadd [#allocation12], 0
          %s1271 = sshll.u32 %s39, 4
          %s1272 = int_to_ptr.hbm [resolvable:$true] %s1271
          %s1273 = sshll.u32 [#allocation13], 4
          %s1274 = int_to_ptr.vmem [resolvable:$true] %s1273
          %1279 = dma.hbm_to_vmem [thread:$0]  %s1272, 3072, %s1274, [#allocation12], 64, 64, 4
        $region88: #{modified_vgg16_forward.1} parent=11 // pred_fallthru
          _
        // Predicated region
        $region89: #{modified_vgg16_forward.1} parent=11 // pred_check
          %p1280 = pneg %p563
        $region90: #{modified_vgg16_forward.1} parent=11 // pred_check_branch
          %1282 = sbr.rel (%p1280) target = $region92
        $region91: #{modified_vgg16_forward.1} parent=11 // pred_region
          %1284 = vsyncadd [#allocation15], 0
          %s1286 = sshll.u32 %s41, 4
          %s1287 = int_to_ptr.hbm [resolvable:$true] %s1286
          %s1288 = sshll.u32 [#allocation14], 4
          %s1289 = int_to_ptr.vmem [resolvable:$true] %s1288
          %1291 = dma.hbm_to_vmem [thread:$0]  %s1287, 16, %s1289, [#allocation15]
        $region92: #{modified_vgg16_forward.1} parent=11 // pred_fallthru
          _
        // Predicated region
        $region93: #{modified_vgg16_forward.1} parent=11 // pred_check
          %p1292 = pneg %p584
        $region94: #{modified_vgg16_forward.1} parent=11 // pred_check_branch
          %1294 = sbr.rel (%p1292) target = $region96
        $region95: #{modified_vgg16_forward.1} parent=11 // pred_region
          _
        $region96: #{modified_vgg16_forward.1} parent=11 // pred_fallthru
          _
        // Predicated region
        $region97: #{modified_vgg16_forward.1} parent=11 // pred_check
          %p1295 = pneg %p605
        $region98: #{modified_vgg16_forward.1} parent=11 // pred_check_branch
          %1297 = sbr.rel (%p1295) target = $region100
        $region99: #{modified_vgg16_forward.1} parent=11 // pred_region
          _
        $region100: #{modified_vgg16_forward.1} parent=11 // pred_fallthru
          _
        // Predicated region
        $region101: #{modified_vgg16_forward.1} parent=11 // pred_check
          %p1298 = pneg %p626
        $region102: #{modified_vgg16_forward.1} parent=11 // pred_check_branch
          %1300 = sbr.rel (%p1298) target = $region104
        $region103: #{modified_vgg16_forward.1} parent=11 // pred_region
          _
        $region104: #{modified_vgg16_forward.1} parent=11 // pred_fallthru
          _
        // Predicated region
        $region105: #{modified_vgg16_forward.1} parent=11 // pred_check
          %p1301 = pneg %p647
        $region106: #{modified_vgg16_forward.1} parent=11 // pred_check_branch
          %1303 = sbr.rel (%p1301) target = $region108
        $region107: #{modified_vgg16_forward.1} parent=11 // pred_region
          _
        $region108: #{modified_vgg16_forward.1} parent=11 // pred_fallthru
          _
        // Predicated region
        $region109: #{modified_vgg16_forward.1} parent=11 // pred_check
          %p1304 = pneg %p668
        $region110: #{modified_vgg16_forward.1} parent=11 // pred_check_branch
          %1306 = sbr.rel (%p1304) target = $region112
        $region111: #{modified_vgg16_forward.1} parent=11 // pred_region
          %1308 = vsyncadd [#allocation15], 0
          %s1309 = sshll.u32 %s51, 4
          %s1310 = int_to_ptr.hbm [resolvable:$true] %s1309
          %s1311 = sshll.u32 [#allocation16], 4
          %s1312 = int_to_ptr.vmem [resolvable:$true] %s1311
          %1317 = dma.hbm_to_vmem [thread:$0]  %s1310, 1536, %s1312, [#allocation15], 64, 64, 4
        $region112: #{modified_vgg16_forward.1} parent=11 // pred_fallthru
          _
        // Predicated region
        $region113: #{modified_vgg16_forward.1} parent=11 // pred_check
          %p1318 = pneg %p689
        $region114: #{modified_vgg16_forward.1} parent=11 // pred_check_branch
          %1320 = sbr.rel (%p1318) target = $region116
        $region115: #{modified_vgg16_forward.1} parent=11 // pred_region
          _
        $region116: #{modified_vgg16_forward.1} parent=11 // pred_fallthru
          _
        // Predicated region
        $region117: #{modified_vgg16_forward.1} parent=11 // pred_check
          %p1321 = pneg %p710
        $region118: #{modified_vgg16_forward.1} parent=11 // pred_check_branch
          %1323 = sbr.rel (%p1321) target = $region120
        $region119: #{modified_vgg16_forward.1} parent=11 // pred_region
          %1325 = vsyncadd [#allocation18], 0
          %s1326 = sshll.u32 %s55, 4
          %s1327 = int_to_ptr.hbm [resolvable:$true] %s1326
          %s1328 = sshll.u32 [#allocation17], 4
          %s1329 = int_to_ptr.vmem [resolvable:$true] %s1328
          %1334 = dma.hbm_to_vmem [thread:$0]  %s1327, 320, %s1329, [#allocation18], 64, 64, 4
        $region120: #{modified_vgg16_forward.1} parent=11 // pred_fallthru
          _
        // Predicated region
        $region121: #{modified_vgg16_forward.1} parent=11 // pred_check
          %p1335 = pneg %p731
        $region122: #{modified_vgg16_forward.1} parent=11 // pred_check_branch
          %1337 = sbr.rel (%p1335) target = $region124
        $region123: #{modified_vgg16_forward.1} parent=11 // pred_region
          _
        $region124: #{modified_vgg16_forward.1} parent=11 // pred_fallthru
          _
        // Predicated region
        $region125: #{modified_vgg16_forward.1} parent=11 // pred_check
          %p1338 = pneg %p752
        $region126: #{modified_vgg16_forward.1} parent=11 // pred_check_branch
          %1340 = sbr.rel (%p1338) target = $region128
        $region127: #{modified_vgg16_forward.1} parent=11 // pred_region
          _
        $region128: #{modified_vgg16_forward.1} parent=11 // pred_fallthru
          _
        // Predicated region
        $region129: #{modified_vgg16_forward.1} parent=11 // pred_check
          %p1341 = pneg %p773
        $region130: #{modified_vgg16_forward.1} parent=11 // pred_check_branch
          %1343 = sbr.rel (%p1341) target = $region132
        $region131: #{modified_vgg16_forward.1} parent=11 // pred_region
          %1345 = vsyncadd [#allocation18], 0
          %s1347 = sshll.u32 %s61, 4
          %s1348 = int_to_ptr.hbm [resolvable:$true] %s1347
          %s1349 = sshll.u32 [#allocation19], 4
          %s1350 = int_to_ptr.vmem [resolvable:$true] %s1349
          %1352 = dma.hbm_to_vmem [thread:$0]  %s1348, 64, %s1350, [#allocation18]
        $region132: #{modified_vgg16_forward.1} parent=11 // pred_fallthru
          _
        // Predicated region
        $region133: #{modified_vgg16_forward.1} parent=11 // pred_check
          %p1353 = pneg %p794
        $region134: #{modified_vgg16_forward.1} parent=11 // pred_check_branch
          %1355 = sbr.rel (%p1353) target = $region136
        $region135: #{modified_vgg16_forward.1} parent=11 // pred_region
          _
        $region136: #{modified_vgg16_forward.1} parent=11 // pred_fallthru
          _
        // Predicated region
        $region137: #{modified_vgg16_forward.1} parent=11 // pred_check
          %p1356 = pneg %p815
        $region138: #{modified_vgg16_forward.1} parent=11 // pred_check_branch
          %1358 = sbr.rel (%p1356) target = $region140
        $region139: #{modified_vgg16_forward.1} parent=11 // pred_region
          %1360 = vsyncadd [#allocation21], 0
          %s1361 = sshll.u32 %s65, 4
          %s1362 = int_to_ptr.hbm [resolvable:$true] %s1361
          %s1363 = sshll.u32 [#allocation20], 4
          %s1364 = int_to_ptr.vmem [resolvable:$true] %s1363
          %1369 = dma.hbm_to_vmem [thread:$0]  %s1362, 1024, %s1364, [#allocation21], 64, 64, 4
        $region140: #{modified_vgg16_forward.1} parent=11 // pred_fallthru
          _
        // Predicated region
        $region141: #{modified_vgg16_forward.1} parent=11 // pred_check
          %p1370 = pneg %p836
        $region142: #{modified_vgg16_forward.1} parent=11 // pred_check_branch
          %1372 = sbr.rel (%p1370) target = $region144
        $region143: #{modified_vgg16_forward.1} parent=11 // pred_region
          %1374 = vsyncadd [#allocation21], 0
          %s1375 = sshll.u32 %s67, 4
          %s1376 = int_to_ptr.hbm [resolvable:$true] %s1375
          %s1377 = sshll.u32 [#allocation22], 4
          %s1378 = int_to_ptr.vmem [resolvable:$true] %s1377
          %1383 = dma.hbm_to_vmem [thread:$0]  %s1376, 1024, %s1378, [#allocation21], 64, 64, 4
        $region144: #{modified_vgg16_forward.1} parent=11 // pred_fallthru
          _
        // Predicated region
        $region145: #{modified_vgg16_forward.1} parent=11 // pred_check
          %p1384 = pneg %p857
        $region146: #{modified_vgg16_forward.1} parent=11 // pred_check_branch
          %1386 = sbr.rel (%p1384) target = $region148
        $region147: #{modified_vgg16_forward.1} parent=11 // pred_region
          %1388 = vsyncadd [#allocation24], 0
          %s1389 = sshll.u32 %s69, 4
          %s1390 = int_to_ptr.hbm [resolvable:$true] %s1389
          %s1391 = sshll.u32 [#allocation23], 4
          %s1392 = int_to_ptr.vmem [resolvable:$true] %s1391
          %1397 = dma.hbm_to_vmem [thread:$0]  %s1390, 1024, %s1392, [#allocation24], 64, 64, 4
        $region148: #{modified_vgg16_forward.1} parent=11 // pred_fallthru
          _
        // Predicated region
        $region149: #{modified_vgg16_forward.1} parent=11 // pred_check
          %p1398 = pneg %p878
        $region150: #{modified_vgg16_forward.1} parent=11 // pred_check_branch
          %1400 = sbr.rel (%p1398) target = $region152
        $region151: #{modified_vgg16_forward.1} parent=11 // pred_region
          %1402 = vsyncadd [#allocation24], 0
          %s1403 = sshll.u32 %s71, 4
          %s1404 = int_to_ptr.hbm [resolvable:$true] %s1403
          %s1405 = sshll.u32 [#allocation25], 4
          %s1406 = int_to_ptr.vmem [resolvable:$true] %s1405
          %1411 = dma.hbm_to_vmem [thread:$0]  %s1404, 1024, %s1406, [#allocation24], 64, 64, 4
        $region152: #{modified_vgg16_forward.1} parent=11 // pred_fallthru
          _
        // Predicated region
        $region153: #{modified_vgg16_forward.1} parent=11 // pred_check
          %p1412 = pneg %p899
        $region154: #{modified_vgg16_forward.1} parent=11 // pred_check_branch
          %1414 = sbr.rel (%p1412) target = $region156
        $region155: #{modified_vgg16_forward.1} parent=11 // pred_region
          %1416 = vsyncadd [#allocation27], 0
          %s1417 = sshll.u32 %s73, 4
          %s1418 = int_to_ptr.hbm [resolvable:$true] %s1417
          %s1419 = sshll.u32 [#allocation26], 4
          %s1420 = int_to_ptr.vmem [resolvable:$true] %s1419
          %1425 = dma.hbm_to_vmem [thread:$0]  %s1418, 512, %s1420, [#allocation27], 64, 64, 4
        $region156: #{modified_vgg16_forward.1} parent=11 // pred_fallthru
          _
        // Predicated region
        $region157: #{modified_vgg16_forward.1} parent=11 // pred_check
          %p1426 = pneg %p920
        $region158: #{modified_vgg16_forward.1} parent=11 // pred_check_branch
          %1428 = sbr.rel (%p1426) target = $region160
        $region159: #{modified_vgg16_forward.1} parent=11 // pred_region
          %1430 = vsyncadd [#allocation27], 0
          %s1431 = sshll.u32 %s75, 4
          %s1432 = int_to_ptr.hbm [resolvable:$true] %s1431
          %s1433 = sshll.u32 [#allocation28], 4
          %s1434 = int_to_ptr.vmem [resolvable:$true] %s1433
          %1439 = dma.hbm_to_vmem [thread:$0]  %s1432, 192, %s1434, [#allocation27], 64, 64, 4
        $region160: #{modified_vgg16_forward.1} parent=11 // pred_fallthru
          _
        // Predicated region
        $region161: #{modified_vgg16_forward.1} parent=11 // pred_check
          %p1440 = pneg %p941
        $region162: #{modified_vgg16_forward.1} parent=11 // pred_check_branch
          %1442 = sbr.rel (%p1440) target = $region164
        $region163: #{modified_vgg16_forward.1} parent=11 // pred_region
          %1444 = vsyncadd [#allocation30], 0
          %s1445 = sshll.u32 %s77, 4
          %s1446 = int_to_ptr.hbm [resolvable:$true] %s1445
          %s1447 = sshll.u32 [#allocation29], 4
          %s1448 = int_to_ptr.vmem [resolvable:$true] %s1447
          %1453 = dma.hbm_to_vmem [thread:$0]  %s1446, 128, %s1448, [#allocation30], 64, 64, 4
        $region164: #{modified_vgg16_forward.1} parent=11 // pred_fallthru
          _
        // Predicated region
        $region165: #{modified_vgg16_forward.1} parent=11 // pred_check
          %p1454 = pneg %p962
        $region166: #{modified_vgg16_forward.1} parent=11 // pred_check_branch
          %1456 = sbr.rel (%p1454) target = $region168
        $region167: #{modified_vgg16_forward.1} parent=11 // pred_region
          %1458 = vsyncadd [#allocation30], 0
          %s1460 = sshll.u32 %s79, 4
          %s1461 = int_to_ptr.hbm [resolvable:$true] %s1460
          %s1462 = sshll.u32 [#allocation31], 4
          %s1463 = int_to_ptr.vmem [resolvable:$true] %s1462
          %1465 = dma.hbm_to_vmem [thread:$0]  %s1461, 64, %s1463, [#allocation30]
        $region168: #{modified_vgg16_forward.1} parent=11 // pred_fallthru
          _
        // Predicated region
        $region169: #{modified_vgg16_forward.1} parent=11 // pred_check
          %p1466 = pneg %p983
        $region170: #{modified_vgg16_forward.1} parent=11 // pred_check_branch
          %1468 = sbr.rel (%p1466) target = $region172
        $region171: #{modified_vgg16_forward.1} parent=11 // pred_region
          _
        $region172: #{modified_vgg16_forward.1} parent=11 // pred_fallthru
          _
        // Predicated region
        $region173: #{modified_vgg16_forward.1} parent=11 // pred_check
          %p1469 = pneg %p1004
        $region174: #{modified_vgg16_forward.1} parent=11 // pred_check_branch
          %1471 = sbr.rel (%p1469) target = $region176
        $region175: #{modified_vgg16_forward.1} parent=11 // pred_region
          %1473 = vsyncadd [#allocation33], 0
          %s1474 = sshll.u32 %s83, 4
          %s1475 = int_to_ptr.hbm [resolvable:$true] %s1474
          %s1476 = sshll.u32 [#allocation32], 4
          %s1477 = int_to_ptr.vmem [resolvable:$true] %s1476
          %1482 = dma.hbm_to_vmem [thread:$0]  %s1475, 512, %s1477, [#allocation33], 64, 64, 4
        $region176: #{modified_vgg16_forward.1} parent=11 // pred_fallthru
          _
        // Predicated region
        $region177: #{modified_vgg16_forward.1} parent=11 // pred_check
          %p1483 = pneg %p1025
        $region178: #{modified_vgg16_forward.1} parent=11 // pred_check_branch
          %1485 = sbr.rel (%p1483) target = $region180
        $region179: #{modified_vgg16_forward.1} parent=11 // pred_region
          %1487 = vsyncadd [#allocation33], 0
          %s1489 = sshll.u32 %s85, 4
          %s1490 = int_to_ptr.hbm [resolvable:$true] %s1489
          %s1491 = sshll.u32 [#allocation34], 4
          %s1492 = int_to_ptr.vmem [resolvable:$true] %s1491
          %1494 = dma.hbm_to_vmem [thread:$0]  %s1490, 16, %s1492, [#allocation33]
        $region180: #{modified_vgg16_forward.1} parent=11 // pred_fallthru
          _
        // Predicated region
        $region181: #{modified_vgg16_forward.1} parent=11 // pred_check
          %p1495 = pneg %p1046
        $region182: #{modified_vgg16_forward.1} parent=11 // pred_check_branch
          %1497 = sbr.rel (%p1495) target = $region184
        $region183: #{modified_vgg16_forward.1} parent=11 // pred_region
          %1499 = vsyncadd [#allocation36], 0
          %s1500 = sshll.u32 %s87, 4
          %s1501 = int_to_ptr.hbm [resolvable:$true] %s1500
          %s1502 = sshll.u32 [#allocation35], 4
          %s1503 = int_to_ptr.vmem [resolvable:$true] %s1502
          %1508 = dma.hbm_to_vmem [thread:$0]  %s1501, 512, %s1503, [#allocation36], 64, 64, 4
        $region184: #{modified_vgg16_forward.1} parent=11 // pred_fallthru
          _
        // Predicated region
        $region185: #{modified_vgg16_forward.1} parent=11 // pred_check
          %p1509 = pneg %p1067
        $region186: #{modified_vgg16_forward.1} parent=11 // pred_check_branch
          %1511 = sbr.rel (%p1509) target = $region188
        $region187: #{modified_vgg16_forward.1} parent=11 // pred_region
          %1513 = vsyncadd [#allocation36], 0
          %s1515 = sshll.u32 %s89, 4
          %s1516 = int_to_ptr.hbm [resolvable:$true] %s1515
          %s1517 = sshll.u32 [#allocation37], 4
          %s1518 = int_to_ptr.vmem [resolvable:$true] %s1517
          %1520 = dma.hbm_to_vmem [thread:$0]  %s1516, 16, %s1518, [#allocation36]
        $region188: #{modified_vgg16_forward.1} parent=11 // pred_fallthru
          _
        // Predicated region
        $region189: #{modified_vgg16_forward.1} parent=11 // pred_check
          %p1521 = pneg %p1088
        $region190: #{modified_vgg16_forward.1} parent=11 // pred_check_branch
          %1523 = sbr.rel (%p1521) target = $region192
        $region191: #{modified_vgg16_forward.1} parent=11 // pred_region
          _
        $region192: #{modified_vgg16_forward.1} parent=11 // pred_fallthru
          _
        // Predicated region
        $region193: #{modified_vgg16_forward.1} parent=11 // pred_check
          %p1524 = pneg %p1109
        $region194: #{modified_vgg16_forward.1} parent=11 // pred_check_branch
          %1526 = sbr.rel (%p1524) target = $region196
        $region195: #{modified_vgg16_forward.1} parent=11 // pred_region
          %1528 = vsyncadd [#allocation39], 0
          %s1530 = sshll.u32 %s93, 4
          %s1531 = int_to_ptr.hbm [resolvable:$true] %s1530
          %s1532 = sshll.u32 [#allocation38], 4
          %s1533 = int_to_ptr.vmem [resolvable:$true] %s1532
          %1535 = dma.hbm_to_vmem [thread:$0]  %s1531, 16, %s1533, [#allocation39]
        $region196: #{modified_vgg16_forward.1} parent=11 // pred_fallthru
          _
      $region12: #{modified_vgg16_forward.1} parent=5 // pred_fallthru
        _
      %p1536 = scmp.lt.s32.totalorder %s117, 2
      // Predicated region
      $region197: #{modified_vgg16_forward.1} parent=5 // pred_check
        %p1537 = pneg %p1536
      $region198: #{modified_vgg16_forward.1} parent=5 // pred_check_branch
        %1539 = sbr.rel (%p1537) target = $region200
      $region199: #{modified_vgg16_forward.1} parent=5 // pred_region
        // Predicated region
        $region201: #{modified_vgg16_forward.1} parent=199 // pred_check
          %p1540 = pneg %p137
        $region202: #{modified_vgg16_forward.1} parent=199 // pred_check_branch
          %1542 = sbr.rel (%p1540) target = $region204
        $region203: #{modified_vgg16_forward.1} parent=199 // pred_region
          %p1543 = scmp.lt.s32.totalorder %s117, 1
          %s1544 = scalar_select %p1543, %s117, 1
          %s1545 = smul.addr %s1544, 5
          %s1546 = smul.addr %s1545, 8
          %s1547 = scalar_lea.vmem %s1, %s1546
        $region204: #{modified_vgg16_forward.1} parent=199 // pred_fallthru
          _
      $region200: #{modified_vgg16_forward.1} parent=5 // pred_fallthru
        _
      %p1548 = scmp.le.s32.totalorder 1, %s117
      %p1549 = scmp.lt.s32.totalorder %s117, 3
      %p1550 = pnand %p1548, %p1549
      %p1551 = pneg %p1550
      // Predicated region
      $region205: #{modified_vgg16_forward.1} parent=5 // pred_check
        _
      $region206: #{modified_vgg16_forward.1} parent=5 // pred_check_branch
        %1553 = sbr.rel (%p1550) target = $region208
      $region207: #{modified_vgg16_forward.1} parent=5 // pred_region
        %s1554 = ssub.s32 %s117, 1
        // Predicated region
        $region209: #{modified_vgg16_forward.1} parent=207 // pred_check
          %p1555 = pneg %p374
        $region210: #{modified_vgg16_forward.1} parent=207 // pred_check_branch
          %1557 = sbr.rel (%p1555) target = $region212
        $region211: #{modified_vgg16_forward.1} parent=207 // pred_region
          %1559 = dma.done [#allocation3], 3072
        $region212: #{modified_vgg16_forward.1} parent=207 // pred_fallthru
          _
        // Predicated region
        $region213: #{modified_vgg16_forward.1} parent=207 // pred_check
          %p1560 = pneg %p416
        $region214: #{modified_vgg16_forward.1} parent=207 // pred_check_branch
          %1562 = sbr.rel (%p1560) target = $region216
        $region215: #{modified_vgg16_forward.1} parent=207 // pred_region
          %1564 = dma.done [#allocation6], 3072
        $region216: #{modified_vgg16_forward.1} parent=207 // pred_fallthru
          _
        // Predicated region
        $region217: #{modified_vgg16_forward.1} parent=207 // pred_check
          %p1565 = pneg %p458
        $region218: #{modified_vgg16_forward.1} parent=207 // pred_check_branch
          %1567 = sbr.rel (%p1565) target = $region220
        $region219: #{modified_vgg16_forward.1} parent=207 // pred_region
          %1569 = dma.done [#allocation6], 3072
        $region220: #{modified_vgg16_forward.1} parent=207 // pred_fallthru
          _
        // Predicated region
        $region221: #{modified_vgg16_forward.1} parent=207 // pred_check
          %p1570 = pneg %p479
        $region222: #{modified_vgg16_forward.1} parent=207 // pred_check_branch
          %1572 = sbr.rel (%p1570) target = $region224
        $region223: #{modified_vgg16_forward.1} parent=207 // pred_region
          %1574 = dma.done [#allocation9], 16
        $region224: #{modified_vgg16_forward.1} parent=207 // pred_fallthru
          _
        // Predicated region
        $region225: #{modified_vgg16_forward.1} parent=207 // pred_check
          %p1575 = pneg %p500
        $region226: #{modified_vgg16_forward.1} parent=207 // pred_check_branch
          %1577 = sbr.rel (%p1575) target = $region228
        $region227: #{modified_vgg16_forward.1} parent=207 // pred_region
          %1579 = dma.done [#allocation9], 3072
        $region228: #{modified_vgg16_forward.1} parent=207 // pred_fallthru
          _
        // Predicated region
        $region229: #{modified_vgg16_forward.1} parent=207 // pred_check
          %p1580 = pneg %p521
        $region230: #{modified_vgg16_forward.1} parent=207 // pred_check_branch
          %1582 = sbr.rel (%p1580) target = $region232
        $region231: #{modified_vgg16_forward.1} parent=207 // pred_region
          %1584 = dma.done [#allocation12], 16
        $region232: #{modified_vgg16_forward.1} parent=207 // pred_fallthru
          _
        // Predicated region
        $region233: #{modified_vgg16_forward.1} parent=207 // pred_check
          %p1585 = pneg %p542
        $region234: #{modified_vgg16_forward.1} parent=207 // pred_check_branch
          %1587 = sbr.rel (%p1585) target = $region236
        $region235: #{modified_vgg16_forward.1} parent=207 // pred_region
          %1589 = dma.done [#allocation12], 3072
        $region236: #{modified_vgg16_forward.1} parent=207 // pred_fallthru
          _
        // Predicated region
        $region237: #{modified_vgg16_forward.1} parent=207 // pred_check
          %p1590 = pneg %p563
        $region238: #{modified_vgg16_forward.1} parent=207 // pred_check_branch
          %1592 = sbr.rel (%p1590) target = $region240
        $region239: #{modified_vgg16_forward.1} parent=207 // pred_region
          %1594 = dma.done [#allocation15], 16
        $region240: #{modified_vgg16_forward.1} parent=207 // pred_fallthru
          _
        // Predicated region
        $region241: #{modified_vgg16_forward.1} parent=207 // pred_check
          %p1595 = pneg %p668
        $region242: #{modified_vgg16_forward.1} parent=207 // pred_check_branch
          %1597 = sbr.rel (%p1595) target = $region244
        $region243: #{modified_vgg16_forward.1} parent=207 // pred_region
          %1599 = dma.done [#allocation15], 1536
        $region244: #{modified_vgg16_forward.1} parent=207 // pred_fallthru
          _
        // Predicated region
        $region245: #{modified_vgg16_forward.1} parent=207 // pred_check
          %p1600 = pneg %p710
        $region246: #{modified_vgg16_forward.1} parent=207 // pred_check_branch
          %1602 = sbr.rel (%p1600) target = $region248
        $region247: #{modified_vgg16_forward.1} parent=207 // pred_region
          %1604 = dma.done [#allocation18], 320
        $region248: #{modified_vgg16_forward.1} parent=207 // pred_fallthru
          _
        // Predicated region
        $region249: #{modified_vgg16_forward.1} parent=207 // pred_check
          %p1605 = pneg %p773
        $region250: #{modified_vgg16_forward.1} parent=207 // pred_check_branch
          %1607 = sbr.rel (%p1605) target = $region252
        $region251: #{modified_vgg16_forward.1} parent=207 // pred_region
          %1609 = dma.done [#allocation18], 64
        $region252: #{modified_vgg16_forward.1} parent=207 // pred_fallthru
          _
        // Predicated region
        $region253: #{modified_vgg16_forward.1} parent=207 // pred_check
          %p1610 = pneg %p815
        $region254: #{modified_vgg16_forward.1} parent=207 // pred_check_branch
          %1612 = sbr.rel (%p1610) target = $region256
        $region255: #{modified_vgg16_forward.1} parent=207 // pred_region
          %1614 = dma.done [#allocation21], 1024
        $region256: #{modified_vgg16_forward.1} parent=207 // pred_fallthru
          _
        // Predicated region
        $region257: #{modified_vgg16_forward.1} parent=207 // pred_check
          %p1615 = pneg %p836
        $region258: #{modified_vgg16_forward.1} parent=207 // pred_check_branch
          %1617 = sbr.rel (%p1615) target = $region260
        $region259: #{modified_vgg16_forward.1} parent=207 // pred_region
          %1619 = dma.done [#allocation21], 1024
        $region260: #{modified_vgg16_forward.1} parent=207 // pred_fallthru
          _
        // Predicated region
        $region261: #{modified_vgg16_forward.1} parent=207 // pred_check
          %p1620 = pneg %p857
        $region262: #{modified_vgg16_forward.1} parent=207 // pred_check_branch
          %1622 = sbr.rel (%p1620) target = $region264
        $region263: #{modified_vgg16_forward.1} parent=207 // pred_region
          %1624 = dma.done [#allocation24], 1024
        $region264: #{modified_vgg16_forward.1} parent=207 // pred_fallthru
          _
        // Predicated region
        $region265: #{modified_vgg16_forward.1} parent=207 // pred_check
          %p1625 = pneg %p878
        $region266: #{modified_vgg16_forward.1} parent=207 // pred_check_branch
          %1627 = sbr.rel (%p1625) target = $region268
        $region267: #{modified_vgg16_forward.1} parent=207 // pred_region
          %1629 = dma.done [#allocation24], 1024
        $region268: #{modified_vgg16_forward.1} parent=207 // pred_fallthru
          _
        // Predicated region
        $region269: #{modified_vgg16_forward.1} parent=207 // pred_check
          %p1630 = pneg %p899
        $region270: #{modified_vgg16_forward.1} parent=207 // pred_check_branch
          %1632 = sbr.rel (%p1630) target = $region272
        $region271: #{modified_vgg16_forward.1} parent=207 // pred_region
          %1634 = dma.done [#allocation27], 512
        $region272: #{modified_vgg16_forward.1} parent=207 // pred_fallthru
          _
        // Predicated region
        $region273: #{modified_vgg16_forward.1} parent=207 // pred_check
          %p1635 = pneg %p920
        $region274: #{modified_vgg16_forward.1} parent=207 // pred_check_branch
          %1637 = sbr.rel (%p1635) target = $region276
        $region275: #{modified_vgg16_forward.1} parent=207 // pred_region
          %1639 = dma.done [#allocation27], 192
        $region276: #{modified_vgg16_forward.1} parent=207 // pred_fallthru
          _
        // Predicated region
        $region277: #{modified_vgg16_forward.1} parent=207 // pred_check
          %p1640 = pneg %p941
        $region278: #{modified_vgg16_forward.1} parent=207 // pred_check_branch
          %1642 = sbr.rel (%p1640) target = $region280
        $region279: #{modified_vgg16_forward.1} parent=207 // pred_region
          %1644 = dma.done [#allocation30], 128
        $region280: #{modified_vgg16_forward.1} parent=207 // pred_fallthru
          _
        // Predicated region
        $region281: #{modified_vgg16_forward.1} parent=207 // pred_check
          %p1645 = pneg %p962
        $region282: #{modified_vgg16_forward.1} parent=207 // pred_check_branch
          %1647 = sbr.rel (%p1645) target = $region284
        $region283: #{modified_vgg16_forward.1} parent=207 // pred_region
          %1649 = dma.done [#allocation30], 64
        $region284: #{modified_vgg16_forward.1} parent=207 // pred_fallthru
          _
        // Predicated region
        $region285: #{modified_vgg16_forward.1} parent=207 // pred_check
          %p1650 = pneg %p1004
        $region286: #{modified_vgg16_forward.1} parent=207 // pred_check_branch
          %1652 = sbr.rel (%p1650) target = $region288
        $region287: #{modified_vgg16_forward.1} parent=207 // pred_region
          %1654 = dma.done [#allocation33], 512
        $region288: #{modified_vgg16_forward.1} parent=207 // pred_fallthru
          _
        // Predicated region
        $region289: #{modified_vgg16_forward.1} parent=207 // pred_check
          %p1655 = pneg %p1025
        $region290: #{modified_vgg16_forward.1} parent=207 // pred_check_branch
          %1657 = sbr.rel (%p1655) target = $region292
        $region291: #{modified_vgg16_forward.1} parent=207 // pred_region
          %1659 = dma.done [#allocation33], 16
        $region292: #{modified_vgg16_forward.1} parent=207 // pred_fallthru
          _
        // Predicated region
        $region293: #{modified_vgg16_forward.1} parent=207 // pred_check
          %p1660 = pneg %p1046
        $region294: #{modified_vgg16_forward.1} parent=207 // pred_check_branch
          %1662 = sbr.rel (%p1660) target = $region296
        $region295: #{modified_vgg16_forward.1} parent=207 // pred_region
          %1664 = dma.done [#allocation36], 512
        $region296: #{modified_vgg16_forward.1} parent=207 // pred_fallthru
          _
        // Predicated region
        $region297: #{modified_vgg16_forward.1} parent=207 // pred_check
          %p1665 = pneg %p1067
        $region298: #{modified_vgg16_forward.1} parent=207 // pred_check_branch
          %1667 = sbr.rel (%p1665) target = $region300
        $region299: #{modified_vgg16_forward.1} parent=207 // pred_region
          %1669 = dma.done [#allocation36], 16
        $region300: #{modified_vgg16_forward.1} parent=207 // pred_fallthru
          _
        // Predicated region
        $region301: #{modified_vgg16_forward.1} parent=207 // pred_check
          %p1670 = pneg %p1109
        $region302: #{modified_vgg16_forward.1} parent=207 // pred_check_branch
          %1672 = sbr.rel (%p1670) target = $region304
        $region303: #{modified_vgg16_forward.1} parent=207 // pred_region
          %1674 = dma.done [#allocation39], 16
        $region304: #{modified_vgg16_forward.1} parent=207 // pred_fallthru
          _
        %p1675 = scmp.lt.s32.totalorder %s122, 1
        %s1676 = scalar_select %p1675, %s122, 1
        %s1677 = smul.addr %s1676, 5
        %s1678 = smul.addr %s1677, 8
        %s1679 = scalar_lea.vmem %s1, %s1678
        %p1680 = pneg %p143
        %p1681 = pneg %p140
        %p1682 = pneg %p164
        %p1683 = pneg %p161
        %p1684 = pneg %p185
        %p1685 = pneg %p182
        %p1686 = pneg %p206
        %p1687 = pneg %p203
        %p1688 = pneg %p227
        %p1689 = pneg %p224
        %p1690 = pneg %p248
        %p1691 = pneg %p245
        %p1692 = pneg %p269
        %p1693 = pneg %p266
        %p1694 = pneg %p290
        %p1695 = pneg %p287
        %p1696 = pneg %p311
        %p1697 = pneg %p308
        %p1698 = pneg %p332
        %p1699 = pneg %p329
        %p1700 = pneg %p353
        %p1701 = pneg %p350
        %p1702 = pneg %p374
        %p1703 = pneg %p371
        %p1704 = pneg %p395
        %p1705 = pneg %p392
        %p1706 = pneg %p416
        %p1707 = pneg %p413
        %p1708 = pneg %p437
        %p1709 = pneg %p434
        %p1710 = pneg %p458
        %p1711 = pneg %p455
        %p1712 = pneg %p479
        %p1713 = pneg %p476
        %p1714 = pneg %p500
        %p1715 = pneg %p497
        %p1716 = pneg %p521
        %p1717 = pneg %p518
        %p1718 = pneg %p542
        %p1719 = pneg %p539
        %p1720 = pneg %p563
        %p1721 = pneg %p560
        %p1722 = pneg %p584
        %p1723 = pneg %p581
        %p1724 = pneg %p605
        %p1725 = pneg %p602
        %p1726 = pneg %p626
        %p1727 = pneg %p623
        %p1728 = pneg %p647
        %p1729 = pneg %p644
        %p1730 = pneg %p668
        %p1731 = pneg %p665
        %p1732 = pneg %p689
        %p1733 = pneg %p686
        %p1734 = pneg %p710
        %p1735 = pneg %p707
        %p1736 = pneg %p731
        %p1737 = pneg %p728
        %p1738 = pneg %p752
        %p1739 = pneg %p749
        %p1740 = pneg %p773
        %p1741 = pneg %p770
        %p1742 = pneg %p794
        %p1743 = pneg %p791
        %p1744 = pneg %p815
        %p1745 = pneg %p812
        %p1746 = pneg %p836
        %p1747 = pneg %p833
        %p1748 = pneg %p857
        %p1749 = pneg %p854
        %p1750 = pneg %p878
        %p1751 = pneg %p875
        %p1752 = pneg %p899
        %p1753 = pneg %p896
        %p1754 = pneg %p920
        %p1755 = pneg %p917
        %p1756 = pneg %p941
        %p1757 = pneg %p938
        %p1758 = pneg %p962
        %p1759 = pneg %p959
        %p1760 = pneg %p983
        %p1761 = pneg %p980
        %p1762 = pneg %p1004
        %p1763 = pneg %p1001
        %p1764 = pneg %p1025
        %p1765 = pneg %p1022
        %p1766 = pneg %p1046
        %p1767 = pneg %p1043
        %p1768 = pneg %p1067
        %p1769 = pneg %p1064
        %p1770 = pneg %p1088
        %p1771 = pneg %p1085
        %p1772 = pneg %p1109
        %p1773 = pneg %p1106
        %p1774 = pneg %p1135
        %p1775 = pneg %p1132
        %s1776 = sand.u32 %s1122, 1
        %s1777 = scalar_lea.sflag [#allocation4], %s1776
        %s1778 = sand.u32 %s1122, 1
        %s1779 = scalar_lea.vmem [#allocation40], %s1778
        %p1780 = scmp.lt.s32.totalorder %s122, 1
        %s1781 = scalar_select %p1780, %s122, 1
        %s1782 = smul.addr %s1781, 5
        %s1783 = smul.addr %s1782, 8
        %s1784 = scalar_lea.vmem %s1, %s1783
        %v1786 = vld [vmem:[%s1784] sm:$0xff]
        %v1787 = vld [vmem:[%s1784 + $0x8] sm:$0xff]
        %v1788 = vld [vmem:[%s1784 + $0x10] sm:$0xff]
        %v1789 = vld [vmem:[%s1784 + $0x18] sm:$0xff]
        %v1790 = vld [vmem:[%s1784 + $0x20] sm:$0xf]
        %v1791 = vpack.c.bf16 %v1786, %v1786
        %v1792 = vpack.c.bf16 %v1787, %v1787
        %v1793 = vpack.c.bf16 %v1788, %v1788
        %v1794 = vpack.c.bf16 %v1789, %v1789
        %v1795 = vpack.c.bf16 %v1790, %v1790
        %v1796 = vld [vmem:[%s3] sm:$0xf]
        %v1797 = vld [vmem:[%s3 + $0x4] sm:$0xf]
        %v1798 = vld [vmem:[%s3 + $0x8] sm:$0xf]
        %v1799 = vld [vmem:[%s3 + $0xc] sm:$0xf]
        %v1800 = vld [vmem:[%s3 + $0x10] sm:$0xf]
        %v1801 = vld [vmem:[%s3 + $0x14] sm:$0xf]
        %v1802 = vld [vmem:[%s3 + $0x18] sm:$0xf]
        %v1803 = vld [vmem:[%s3 + $0x1c] sm:$0xf]
        %v1804 = vld [vmem:[%s3 + $0x20] sm:$0xf]
        %v1805 = vld [vmem:[%s3 + $0x24] sm:$0xf]
        %v1806 = vld [vmem:[%s3 + $0x28] sm:$0xf]
        %v1807 = vld [vmem:[%s3 + $0x2c] sm:$0xf]
        %s1808 = scalar_lea.vmem %s3, 48
        %v1809 = vld [vmem:[%s1808] sm:$0xf]
        %v1810 = vld [vmem:[%s1808 + $0x4] sm:$0xf]
        %v1811 = vld [vmem:[%s1808 + $0x8] sm:$0xf]
        %v1812 = vld [vmem:[%s1808 + $0xc] sm:$0xf]
        %v1813 = vld [vmem:[%s1808 + $0x10] sm:$0xf]
        %v1814 = vld [vmem:[%s1808 + $0x14] sm:$0xf]
        %v1815 = vld [vmem:[%s1808 + $0x18] sm:$0xf]
        %v1816 = vld [vmem:[%s1808 + $0x1c] sm:$0xf]
        %v1817 = vld [vmem:[%s1808 + $0x20] sm:$0xf]
        %v1818 = vld [vmem:[%s1808 + $0x24] sm:$0xf]
        %v1819 = vld [vmem:[%s1808 + $0x28] sm:$0xf]
        %v1820 = vld [vmem:[%s1808 + $0x2c] sm:$0xf]
        %v1826 = vunpack.c.l.b16 %v1791
        %v1827 = vunpack.c.l.b16 %v1792
        %v1828 = vunpack.c.l.b16 %v1793
        %v1829 = vunpack.c.l.b16 %v1794
        %v1830 = vunpack.c.l.b16 %v1795
        %v1831 = vpack.c.b16 %v1827, %v1826
        %v1832 = vpack.c.b16 %v1829, %v1828
        %v1833 = vpack.c.b16 %v1830, %v1830
        %vm1834 = vsmask.f32 7424
        %v1836 = vshrl.u32 %v1831, 16
        %v1838 = vshll.u32 %v1831, 16
        %v1840 = vrot.slane %v1838, 1
        %v1841 = vor.u32 %v1836, %v1840
        %v1843 = vshll.u32 %v1832, 16
        %v1845 = vrot.slane %v1843, 1
        %v1846 = vsel %vm1834, %v1841, %v1845
        %v1847 = vshrl.u32 %v1832, 16
        %v1849 = vor.u32 %v1847, %v1845
        %v1851 = vshll.u32 %v1833, 16
        %v1853 = vrot.slane %v1851, 1
        %v1854 = vsel %vm1834, %v1849, %v1853
        %v1855 = vshrl.u32 %v1833, 16
        %v1857 = vor.u32 %v1855, %v1853
        %v1870 = vunpack.c.l.b16 %v1809
        %v1871 = vunpack.c.l.b16 %v1810
        %v1872 = vunpack.c.l.b16 %v1811
        %v1873 = vunpack.c.l.b16 %v1812
        %v1874 = vunpack.c.l.b16 %v1813
        %v1875 = vunpack.c.l.b16 %v1814
        %v1876 = vunpack.c.l.b16 %v1815
        %v1877 = vunpack.c.l.b16 %v1816
        %v1878 = vunpack.c.l.b16 %v1817
        %v1879 = vunpack.c.l.b16 %v1818
        %v1880 = vunpack.c.l.b16 %v1819
        %v1881 = vunpack.c.l.b16 %v1820
        %v1882 = vpack.c.b16 %v1871, %v1870
        %v1883 = vpack.c.b16 %v1873, %v1872
        %v1884 = vpack.c.b16 %v1875, %v1874
        %v1885 = vpack.c.b16 %v1877, %v1876
        %v1886 = vpack.c.b16 %v1879, %v1878
        %v1887 = vpack.c.b16 %v1881, %v1880
        %vm1894 = vcmask 785408
        %v1896 = vsel %vm1894, %v1846, 0
        %v1899 = vsel %vm1894, %v1854, 0
        %v1902 = vsel %vm1894, %v1857, 0
        %1904 = vmatpush.bf16.msra.mxu0 0
        %1905 = vmatpush.bf16.msra.mxu0 0
        %1906 = vmatpush.bf16.msra.mxu0 %v1887
        %1907 = vmatpush.bf16.msra.mxu0 %v1886
        %1908 = vmatpush.bf16.msra.mxu0 %v1885
        %1909 = vmatpush.bf16.msra.mxu0 %v1884
        %1910 = vmatpush.bf16.msra.mxu0 %v1883
        %1911 = vmatpush.bf16.msra.mxu0 %v1882
        %1912 = vmatmul.bf16.gmra.mxu0 %v1896
        %v1913 = vpop.f32.mrf.mxu0
        %v1914 = vadd.f32 0.0, %v1913
        %v1915 = vpop.f32.mrf.mxu0
        %v1916 = vadd.f32 0.0, %v1915
        %1917 = vmatmul.bf16.gmra.mxu0 %v1899
        %v1918 = vpop.f32.mrf.mxu0
        %v1919 = vadd.f32 0.0, %v1918
        %v1920 = vpop.f32.mrf.mxu0
        %v1921 = vadd.f32 0.0, %v1920
        %1922 = vmatmul.bf16.gmra.mxu0 %v1902
        %v1923 = vpop.f32.mrf.mxu0
        %v1924 = vadd.f32 0.0, %v1923
        %v1925 = vpop.f32.mrf.mxu0
        %1926 = vdwg.mxu0
        %v1939 = vunpack.c.l.b16 %v1796
        %v1940 = vunpack.c.l.b16 %v1797
        %v1941 = vunpack.c.l.b16 %v1798
        %v1942 = vunpack.c.l.b16 %v1799
        %v1943 = vunpack.c.l.b16 %v1800
        %v1944 = vunpack.c.l.b16 %v1801
        %v1945 = vunpack.c.l.b16 %v1802
        %v1946 = vunpack.c.l.b16 %v1803
        %v1947 = vunpack.c.l.b16 %v1804
        %v1948 = vunpack.c.l.b16 %v1805
        %v1949 = vunpack.c.l.b16 %v1806
        %v1950 = vunpack.c.l.b16 %v1807
        %v1951 = vpack.c.b16 %v1940, %v1939
        %v1952 = vpack.c.b16 %v1942, %v1941
        %v1953 = vpack.c.b16 %v1944, %v1943
        %v1954 = vpack.c.b16 %v1946, %v1945
        %v1955 = vpack.c.b16 %v1948, %v1947
        %v1956 = vpack.c.b16 %v1950, %v1949
        %v1963 = vsel %vm1894, %v1831, 0
        %v1965 = vsel %vm1894, %v1832, 0
        %v1967 = vsel %vm1894, %v1833, 0
        %1969 = vmatpush.bf16.msra.mxu0 0
        %1970 = vmatpush.bf16.msra.mxu0 0
        %1971 = vmatpush.bf16.msra.mxu0 %v1956
        %1972 = vmatpush.bf16.msra.mxu0 %v1955
        %1973 = vmatpush.bf16.msra.mxu0 %v1954
        %1974 = vmatpush.bf16.msra.mxu0 %v1953
        %1975 = vmatpush.bf16.msra.mxu0 %v1952
        %1976 = vmatpush.bf16.msra.mxu0 %v1951
        %1977 = vmatmul.bf16.gmra.mxu0 %v1963
        %v1978 = vpop.f32.mrf.mxu0
        %v1979 = vadd.f32 %v1914, %v1978
        %v1980 = vpop.f32.mrf.mxu0
        %v1981 = vadd.f32 %v1916, %v1980
        %1982 = vmatmul.bf16.gmra.mxu0 %v1965
        %v1983 = vpop.f32.mrf.mxu0
        %v1984 = vadd.f32 %v1919, %v1983
        %v1985 = vpop.f32.mrf.mxu0
        %v1986 = vadd.f32 %v1921, %v1985
        %1987 = vmatmul.bf16.gmra.mxu0 %v1967
        %v1988 = vpop.f32.mrf.mxu0
        %v1989 = vadd.f32 %v1924, %v1988
        %v1990 = vpop.f32.mrf.mxu0
        %1991 = vdwg.mxu0
        %s1992 = scalar_lea.vmem %s3, 96
        %v1993 = vld [vmem:[%s1992] sm:$0xf]
        %v1994 = vld [vmem:[%s1992 + $0x4] sm:$0xf]
        %v1995 = vld [vmem:[%s1992 + $0x8] sm:$0xf]
        %v1996 = vld [vmem:[%s1992 + $0xc] sm:$0xf]
        %v1997 = vld [vmem:[%s1992 + $0x10] sm:$0xf]
        %v1998 = vld [vmem:[%s1992 + $0x14] sm:$0xf]
        %v1999 = vld [vmem:[%s1992 + $0x18] sm:$0xf]
        %v2000 = vld [vmem:[%s1992 + $0x1c] sm:$0xf]
        %v2001 = vld [vmem:[%s1992 + $0x20] sm:$0xf]
        %v2002 = vld [vmem:[%s1992 + $0x24] sm:$0xf]
        %v2003 = vld [vmem:[%s1992 + $0x28] sm:$0xf]
        %v2004 = vld [vmem:[%s1992 + $0x2c] sm:$0xf]
        %vm2005 = vcmask 1046528
        %v2006 = vrot.slane %v1831, 1
        %v2007 = vrot.slane %v1832, 1
        %v2008 = vsel %vm2005, %v2006, %v2007
        %v2009 = vrot.slane %v1833, 1
        %v2010 = vsel %vm2005, %v2007, %v2009
        %v2023 = vunpack.c.l.b16 %v1993
        %v2024 = vunpack.c.l.b16 %v1994
        %v2025 = vunpack.c.l.b16 %v1995
        %v2026 = vunpack.c.l.b16 %v1996
        %v2027 = vunpack.c.l.b16 %v1997
        %v2028 = vunpack.c.l.b16 %v1998
        %v2029 = vunpack.c.l.b16 %v1999
        %v2030 = vunpack.c.l.b16 %v2000
        %v2031 = vunpack.c.l.b16 %v2001
        %v2032 = vunpack.c.l.b16 %v2002
        %v2033 = vunpack.c.l.b16 %v2003
        %v2034 = vunpack.c.l.b16 %v2004
        %v2035 = vpack.c.b16 %v2024, %v2023
        %v2036 = vpack.c.b16 %v2026, %v2025
        %v2037 = vpack.c.b16 %v2028, %v2027
        %v2038 = vpack.c.b16 %v2030, %v2029
        %v2039 = vpack.c.b16 %v2032, %v2031
        %v2040 = vpack.c.b16 %v2034, %v2033
        %v2048 = vsel %vm1894, %v2008, 0
        %v2051 = vsel %vm1894, %v2010, 0
        %v2054 = vsel %vm1894, %v2009, 0
        %2056 = vmatpush.bf16.msra.mxu0 0
        %2057 = vmatpush.bf16.msra.mxu0 0
        %2058 = vmatpush.bf16.msra.mxu0 %v2040
        %2059 = vmatpush.bf16.msra.mxu0 %v2039
        %2060 = vmatpush.bf16.msra.mxu0 %v2038
        %2061 = vmatpush.bf16.msra.mxu0 %v2037
        %2062 = vmatpush.bf16.msra.mxu0 %v2036
        %2063 = vmatpush.bf16.msra.mxu0 %v2035
        %2064 = vmatmul.bf16.gmra.mxu0 %v2048
        %v2065 = vpop.f32.mrf.mxu0
        %v2066 = vadd.f32 0.0, %v2065
        %v2067 = vpop.f32.mrf.mxu0
        %v2068 = vadd.f32 0.0, %v2067
        %2069 = vmatmul.bf16.gmra.mxu0 %v2051
        %v2070 = vpop.f32.mrf.mxu0
        %v2071 = vadd.f32 0.0, %v2070
        %v2072 = vpop.f32.mrf.mxu0
        %v2073 = vadd.f32 0.0, %v2072
        %2074 = vmatmul.bf16.gmra.mxu0 %v2054
        %v2075 = vpop.f32.mrf.mxu0
        %v2076 = vadd.f32 0.0, %v2075
        %v2077 = vpop.f32.mrf.mxu0
        %2078 = vdwg.mxu0
        %v2079 = vadd.f32 %v1979, %v2066
        %v2080 = vadd.f32 %v1981, %v2068
        %v2081 = vadd.f32 %v1984, %v2071
        %v2082 = vadd.f32 %v1986, %v2073
        %v2083 = vadd.f32 %v1989, %v2076
        %v2084 = vld [vmem:[%s5] sm:$0x1]
        %v2086 = vperm.slane %v2084, 0
        %v2088 = vadd.f32 %v2079, %v2086
        %v2089 = vadd.f32 %v2080, %v2086
        %v2090 = vadd.f32 %v2081, %v2086
        %v2091 = vadd.f32 %v2082, %v2086
        %v2092 = vadd.f32 %v2083, %v2086
        %v2093 = vmax.f32 %v2088, 0.0
        %v2094 = vmax.f32 %v2089, 0.0
        %v2095 = vmax.f32 %v2090, 0.0
        %v2096 = vmax.f32 %v2091, 0.0
        %v2097 = vmax.f32 %v2092, 0.0
        %v2098 = vpack.c.bf16 %v2094, %v2093
        %v2099 = vpack.c.bf16 %v2096, %v2095
        %v2100 = vpack.c.bf16 %v2097, %v2097
        %v2101 = vld [vmem:[#allocation17] sm:$0xf]
        %v2102 = vld [vmem:[#allocation17 + $0x4] sm:$0xf]
        %v2103 = vld [vmem:[#allocation17 + $0x8] sm:$0xf]
        %v2104 = vld [vmem:[#allocation17 + $0xc] sm:$0xf]
        %v2105 = vld [vmem:[#allocation17 + $0x10] sm:$0x3]
        %v2111 = vunpack.c.l.b16 %v2101
        %v2112 = vunpack.c.l.b16 %v2102
        %v2113 = vunpack.c.l.b16 %v2103
        %v2114 = vunpack.c.l.b16 %v2104
        %v2115 = vunpack.c.l.b16 %v2105
        %v2116 = vpack.c.b16 %v2112, %v2111
        %v2117 = vpack.c.b16 %v2114, %v2113
        %v2118 = vpack.c.b16 %v2115, %v2115
        %vm2119 = vcmask 277504
        %v2121 = vsel %vm2119, %v2116, 0
        %v2124 = vsel %vm2119, %v2117, 0
        %v2127 = vsel %vm2119, %v2118, 0
        %vm2129 = vcmask 1040384
        %v2131 = vsel %vm2129, %v2100, 0
        %2133 = vmatpush.bf16.msra.mxu0 0
        %2134 = vmatpush.bf16.msra.mxu0 0
        %2135 = vmatpush.bf16.msra.mxu0 0
        %2136 = vmatpush.bf16.msra.mxu0 0
        %2137 = vmatpush.bf16.msra.mxu0 0
        %2138 = vmatpush.bf16.msra.mxu0 %v2131
        %2139 = vmatpush.bf16.msra.mxu0 %v2099
        %2140 = vmatpush.bf16.msra.mxu0 %v2098
        %2141 = vmatmul.bf16.gmra.mxu0 %v2121
        %v2142 = vpop.f32.mrf.mxu0
        %v2143 = vadd.f32 0.0, %v2142
        %v2144 = vpop.f32.mrf.mxu0
        %v2145 = vadd.f32 0.0, %v2144
        %2146 = vmatmul.bf16.gmra.mxu0 %v2124
        %v2147 = vpop.f32.mrf.mxu0
        %v2148 = vadd.f32 0.0, %v2147
        %v2149 = vpop.f32.mrf.mxu0
        %v2150 = vadd.f32 0.0, %v2149
        %2151 = vmatmul.bf16.gmra.mxu0 %v2127
        %v2152 = vpop.f32.mrf.mxu0
        %v2153 = vadd.f32 0.0, %v2152
        %v2154 = vpop.f32.mrf.mxu0
        %2155 = vdwg.mxu0
        %v2156 = vpack.c.bf16 %v2143, %v2143
        %v2157 = vpack.c.bf16 %v2145, %v2145
        %v2158 = vpack.c.bf16 %v2148, %v2148
        %v2159 = vpack.c.bf16 %v2150, %v2150
        %v2160 = vpack.c.bf16 %v2153, %v2153
        %v2161 = vld [vmem:[%s7] sm:$0xf]
        %v2162 = vld [vmem:[%s7 + $0x4] sm:$0xf]
        %v2163 = vld [vmem:[%s7 + $0x8] sm:$0xf]
        %v2164 = vld [vmem:[%s7 + $0xc] sm:$0xf]
        %v2165 = vld [vmem:[%s7 + $0x10] sm:$0xf]
        %v2166 = vld [vmem:[%s7 + $0x14] sm:$0xf]
        %v2167 = vld [vmem:[%s7 + $0x18] sm:$0xf]
        %v2168 = vld [vmem:[%s7 + $0x1c] sm:$0xf]
        %v2169 = vld [vmem:[%s7 + $0x20] sm:$0xf]
        %v2170 = vld [vmem:[%s7 + $0x24] sm:$0xf]
        %v2171 = vld [vmem:[%s7 + $0x28] sm:$0xf]
        %v2172 = vld [vmem:[%s7 + $0x2c] sm:$0xf]
        %v2173 = vld [vmem:[%s7 + $0x30] sm:$0xf]
        %v2174 = vld [vmem:[%s7 + $0x34] sm:$0xf]
        %v2175 = vld [vmem:[%s7 + $0x38] sm:$0xf]
        %v2176 = vld [vmem:[%s7 + $0x3c] sm:$0xf]
        %s2177 = scalar_lea.vmem %s7, 64
        %v2178 = vld [vmem:[%s2177] sm:$0xf]
        %v2179 = vld [vmem:[%s2177 + $0x4] sm:$0xf]
        %v2180 = vld [vmem:[%s2177 + $0x8] sm:$0xf]
        %v2181 = vld [vmem:[%s2177 + $0xc] sm:$0xf]
        %v2182 = vld [vmem:[%s2177 + $0x10] sm:$0xf]
        %v2183 = vld [vmem:[%s2177 + $0x14] sm:$0xf]
        %v2184 = vld [vmem:[%s2177 + $0x18] sm:$0xf]
        %v2185 = vld [vmem:[%s2177 + $0x1c] sm:$0xf]
        %v2186 = vld [vmem:[%s2177 + $0x20] sm:$0xf]
        %v2187 = vld [vmem:[%s2177 + $0x24] sm:$0xf]
        %v2188 = vld [vmem:[%s2177 + $0x28] sm:$0xf]
        %v2189 = vld [vmem:[%s2177 + $0x2c] sm:$0xf]
        %v2190 = vld [vmem:[%s2177 + $0x30] sm:$0xf]
        %v2191 = vld [vmem:[%s2177 + $0x34] sm:$0xf]
        %v2192 = vld [vmem:[%s2177 + $0x38] sm:$0xf]
        %v2193 = vld [vmem:[%s2177 + $0x3c] sm:$0xf]
        %v2199 = vunpack.c.l.b16 %v2156
        %v2200 = vunpack.c.l.b16 %v2157
        %v2201 = vunpack.c.l.b16 %v2158
        %v2202 = vunpack.c.l.b16 %v2159
        %v2203 = vunpack.c.l.b16 %v2160
        %v2204 = vpack.c.b16 %v2200, %v2199
        %v2205 = vpack.c.b16 %v2202, %v2201
        %v2206 = vpack.c.b16 %v2203, %v2203
        %v2208 = vshrl.u32 %v2204, 16
        %v2210 = vshll.u32 %v2204, 16
        %v2212 = vrot.slane %v2210, 1
        %v2213 = vor.u32 %v2208, %v2212
        %v2215 = vshll.u32 %v2205, 16
        %v2217 = vrot.slane %v2215, 1
        %v2218 = vsel %vm1834, %v2213, %v2217
        %v2219 = vshrl.u32 %v2205, 16
        %v2221 = vor.u32 %v2219, %v2217
        %v2223 = vshll.u32 %v2206, 16
        %v2225 = vrot.slane %v2223, 1
        %v2226 = vsel %vm1834, %v2221, %v2225
        %v2227 = vshrl.u32 %v2206, 16
        %v2229 = vor.u32 %v2227, %v2225
        %v2249 = vunpack.c.l.b16 %v2178
        %v2250 = vunpack.c.l.b16 %v2179
        %v2251 = vunpack.c.l.b16 %v2180
        %v2252 = vunpack.c.l.b16 %v2181
        %v2253 = vunpack.c.l.b16 %v2182
        %v2254 = vunpack.c.l.b16 %v2183
        %v2255 = vunpack.c.l.b16 %v2184
        %v2256 = vunpack.c.l.b16 %v2185
        %v2257 = vunpack.c.l.b16 %v2186
        %v2258 = vunpack.c.l.b16 %v2187
        %v2259 = vunpack.c.l.b16 %v2188
        %v2260 = vunpack.c.l.b16 %v2189
        %v2261 = vunpack.c.l.b16 %v2190
        %v2262 = vunpack.c.l.b16 %v2191
        %v2263 = vunpack.c.l.b16 %v2192
        %v2264 = vunpack.c.l.b16 %v2193
        %v2265 = vpack.c.b16 %v2250, %v2249
        %v2266 = vpack.c.b16 %v2252, %v2251
        %v2267 = vpack.c.b16 %v2254, %v2253
        %v2268 = vpack.c.b16 %v2256, %v2255
        %v2269 = vpack.c.b16 %v2258, %v2257
        %v2270 = vpack.c.b16 %v2260, %v2259
        %v2271 = vpack.c.b16 %v2262, %v2261
        %v2272 = vpack.c.b16 %v2264, %v2263
        %2281 = vmatpush.bf16.msra.mxu0 %v2272
        %2282 = vmatpush.bf16.msra.mxu0 %v2271
        %2283 = vmatpush.bf16.msra.mxu0 %v2270
        %2284 = vmatpush.bf16.msra.mxu0 %v2269
        %2285 = vmatpush.bf16.msra.mxu0 %v2268
        %2286 = vmatpush.bf16.msra.mxu0 %v2267
        %2287 = vmatpush.bf16.msra.mxu0 %v2266
        %2288 = vmatpush.bf16.msra.mxu0 %v2265
        %2289 = vmatmul.bf16.gmra.mxu0 %v2218
        %v2290 = vpop.f32.mrf.mxu0
        %v2291 = vadd.f32 0.0, %v2290
        %v2292 = vpop.f32.mrf.mxu0
        %v2293 = vadd.f32 0.0, %v2292
        %2294 = vmatmul.bf16.gmra.mxu0 %v2226
        %v2295 = vpop.f32.mrf.mxu0
        %v2296 = vadd.f32 0.0, %v2295
        %v2297 = vpop.f32.mrf.mxu0
        %v2298 = vadd.f32 0.0, %v2297
        %2299 = vmatmul.bf16.gmra.mxu0 %v2229
        %v2300 = vpop.f32.mrf.mxu0
        %v2301 = vadd.f32 0.0, %v2300
        %v2302 = vpop.f32.mrf.mxu0
        %2303 = vdwg.mxu0
        %v2323 = vunpack.c.l.b16 %v2161
        %v2324 = vunpack.c.l.b16 %v2162
        %v2325 = vunpack.c.l.b16 %v2163
        %v2326 = vunpack.c.l.b16 %v2164
        %v2327 = vunpack.c.l.b16 %v2165
        %v2328 = vunpack.c.l.b16 %v2166
        %v2329 = vunpack.c.l.b16 %v2167
        %v2330 = vunpack.c.l.b16 %v2168
        %v2331 = vunpack.c.l.b16 %v2169
        %v2332 = vunpack.c.l.b16 %v2170
        %v2333 = vunpack.c.l.b16 %v2171
        %v2334 = vunpack.c.l.b16 %v2172
        %v2335 = vunpack.c.l.b16 %v2173
        %v2336 = vunpack.c.l.b16 %v2174
        %v2337 = vunpack.c.l.b16 %v2175
        %v2338 = vunpack.c.l.b16 %v2176
        %v2339 = vpack.c.b16 %v2324, %v2323
        %v2340 = vpack.c.b16 %v2326, %v2325
        %v2341 = vpack.c.b16 %v2328, %v2327
        %v2342 = vpack.c.b16 %v2330, %v2329
        %v2343 = vpack.c.b16 %v2332, %v2331
        %v2344 = vpack.c.b16 %v2334, %v2333
        %v2345 = vpack.c.b16 %v2336, %v2335
        %v2346 = vpack.c.b16 %v2338, %v2337
        %2355 = vmatpush.bf16.msra.mxu0 %v2346
        %2356 = vmatpush.bf16.msra.mxu0 %v2345
        %2357 = vmatpush.bf16.msra.mxu0 %v2344
        %2358 = vmatpush.bf16.msra.mxu0 %v2343
        %2359 = vmatpush.bf16.msra.mxu0 %v2342
        %2360 = vmatpush.bf16.msra.mxu0 %v2341
        %2361 = vmatpush.bf16.msra.mxu0 %v2340
        %2362 = vmatpush.bf16.msra.mxu0 %v2339
        %2363 = vmatmul.bf16.gmra.mxu0 %v2204
        %v2364 = vpop.f32.mrf.mxu0
        %v2365 = vadd.f32 %v2291, %v2364
        %v2366 = vpop.f32.mrf.mxu0
        %v2367 = vadd.f32 %v2293, %v2366
        %2368 = vmatmul.bf16.gmra.mxu0 %v2205
        %v2369 = vpop.f32.mrf.mxu0
        %v2370 = vadd.f32 %v2296, %v2369
        %v2371 = vpop.f32.mrf.mxu0
        %v2372 = vadd.f32 %v2298, %v2371
        %2373 = vmatmul.bf16.gmra.mxu0 %v2206
        %v2374 = vpop.f32.mrf.mxu0
        %v2375 = vadd.f32 %v2301, %v2374
        %v2376 = vpop.f32.mrf.mxu0
        %2377 = vdwg.mxu0
        %s2378 = scalar_lea.vmem %s7, 128
        %v2379 = vld [vmem:[%s2378] sm:$0xf]
        %v2380 = vld [vmem:[%s2378 + $0x4] sm:$0xf]
        %v2381 = vld [vmem:[%s2378 + $0x8] sm:$0xf]
        %v2382 = vld [vmem:[%s2378 + $0xc] sm:$0xf]
        %v2383 = vld [vmem:[%s2378 + $0x10] sm:$0xf]
        %v2384 = vld [vmem:[%s2378 + $0x14] sm:$0xf]
        %v2385 = vld [vmem:[%s2378 + $0x18] sm:$0xf]
        %v2386 = vld [vmem:[%s2378 + $0x1c] sm:$0xf]
        %v2387 = vld [vmem:[%s2378 + $0x20] sm:$0xf]
        %v2388 = vld [vmem:[%s2378 + $0x24] sm:$0xf]
        %v2389 = vld [vmem:[%s2378 + $0x28] sm:$0xf]
        %v2390 = vld [vmem:[%s2378 + $0x2c] sm:$0xf]
        %v2391 = vld [vmem:[%s2378 + $0x30] sm:$0xf]
        %v2392 = vld [vmem:[%s2378 + $0x34] sm:$0xf]
        %v2393 = vld [vmem:[%s2378 + $0x38] sm:$0xf]
        %v2394 = vld [vmem:[%s2378 + $0x3c] sm:$0xf]
        %v2395 = vrot.slane %v2204, 1
        %v2396 = vrot.slane %v2205, 1
        %v2397 = vsel %vm2005, %v2395, %v2396
        %v2398 = vrot.slane %v2206, 1
        %v2399 = vsel %vm2005, %v2396, %v2398
        %v2419 = vunpack.c.l.b16 %v2379
        %v2420 = vunpack.c.l.b16 %v2380
        %v2421 = vunpack.c.l.b16 %v2381
        %v2422 = vunpack.c.l.b16 %v2382
        %v2423 = vunpack.c.l.b16 %v2383
        %v2424 = vunpack.c.l.b16 %v2384
        %v2425 = vunpack.c.l.b16 %v2385
        %v2426 = vunpack.c.l.b16 %v2386
        %v2427 = vunpack.c.l.b16 %v2387
        %v2428 = vunpack.c.l.b16 %v2388
        %v2429 = vunpack.c.l.b16 %v2389
        %v2430 = vunpack.c.l.b16 %v2390
        %v2431 = vunpack.c.l.b16 %v2391
        %v2432 = vunpack.c.l.b16 %v2392
        %v2433 = vunpack.c.l.b16 %v2393
        %v2434 = vunpack.c.l.b16 %v2394
        %v2435 = vpack.c.b16 %v2420, %v2419
        %v2436 = vpack.c.b16 %v2422, %v2421
        %v2437 = vpack.c.b16 %v2424, %v2423
        %v2438 = vpack.c.b16 %v2426, %v2425
        %v2439 = vpack.c.b16 %v2428, %v2427
        %v2440 = vpack.c.b16 %v2430, %v2429
        %v2441 = vpack.c.b16 %v2432, %v2431
        %v2442 = vpack.c.b16 %v2434, %v2433
        %2451 = vmatpush.bf16.msra.mxu0 %v2442
        %2452 = vmatpush.bf16.msra.mxu0 %v2441
        %2453 = vmatpush.bf16.msra.mxu0 %v2440
        %2454 = vmatpush.bf16.msra.mxu0 %v2439
        %2455 = vmatpush.bf16.msra.mxu0 %v2438
        %2456 = vmatpush.bf16.msra.mxu0 %v2437
        %2457 = vmatpush.bf16.msra.mxu0 %v2436
        %2458 = vmatpush.bf16.msra.mxu0 %v2435
        %2459 = vmatmul.bf16.gmra.mxu0 %v2397
        %v2460 = vpop.f32.mrf.mxu0
        %v2461 = vadd.f32 0.0, %v2460
        %v2462 = vpop.f32.mrf.mxu0
        %v2463 = vadd.f32 0.0, %v2462
        %2464 = vmatmul.bf16.gmra.mxu0 %v2399
        %v2465 = vpop.f32.mrf.mxu0
        %v2466 = vadd.f32 0.0, %v2465
        %v2467 = vpop.f32.mrf.mxu0
        %v2468 = vadd.f32 0.0, %v2467
        %2469 = vmatmul.bf16.gmra.mxu0 %v2398
        %v2470 = vpop.f32.mrf.mxu0
        %v2471 = vadd.f32 0.0, %v2470
        %v2472 = vpop.f32.mrf.mxu0
        %2473 = vdwg.mxu0
        %v2474 = vadd.f32 %v2365, %v2461
        %v2475 = vadd.f32 %v2367, %v2463
        %v2476 = vadd.f32 %v2370, %v2466
        %v2477 = vadd.f32 %v2372, %v2468
        %v2478 = vadd.f32 %v2375, %v2471
        %v2479 = vld [vmem:[%s9] sm:$0x1]
        %v2481 = vperm.slane %v2479, 0
        %v2483 = vadd.f32 %v2474, %v2481
        %v2484 = vadd.f32 %v2475, %v2481
        %v2485 = vadd.f32 %v2476, %v2481
        %v2486 = vadd.f32 %v2477, %v2481
        %v2487 = vadd.f32 %v2478, %v2481
        %v2488 = vmax.f32 %v2483, 0.0
        %v2489 = vmax.f32 %v2484, 0.0
        %v2490 = vmax.f32 %v2485, 0.0
        %v2491 = vmax.f32 %v2486, 0.0
        %v2492 = vmax.f32 %v2487, 0.0
        %v2493 = vpack.c.bf16 %v2488, %v2488
        %v2494 = vpack.c.bf16 %v2489, %v2489
        %v2495 = vpack.c.bf16 %v2490, %v2490
        %v2496 = vpack.c.bf16 %v2491, %v2491
        %v2497 = vpack.c.bf16 %v2492, %v2492
        %v2498 = vld [vmem:[#allocation20] sm:$0xf]
        %v2499 = vld [vmem:[#allocation20 + $0x4] sm:$0xf]
        %v2500 = vld [vmem:[#allocation20 + $0x8] sm:$0xf]
        %v2501 = vld [vmem:[#allocation20 + $0xc] sm:$0xf]
        %v2502 = vld [vmem:[#allocation20 + $0x10] sm:$0xf]
        %v2503 = vld [vmem:[#allocation20 + $0x14] sm:$0xf]
        %v2504 = vld [vmem:[#allocation20 + $0x18] sm:$0xf]
        %v2505 = vld [vmem:[#allocation20 + $0x1c] sm:$0xf]
        %v2506 = vld [vmem:[#allocation20 + $0x20] sm:$0xf]
        %v2507 = vld [vmem:[#allocation20 + $0x24] sm:$0xf]
        %v2508 = vld [vmem:[#allocation20 + $0x28] sm:$0xf]
        %v2509 = vld [vmem:[#allocation20 + $0x2c] sm:$0xf]
        %v2510 = vld [vmem:[#allocation20 + $0x30] sm:$0xf]
        %v2511 = vld [vmem:[#allocation20 + $0x34] sm:$0xf]
        %v2512 = vld [vmem:[#allocation20 + $0x38] sm:$0xf]
        %v2513 = vld [vmem:[#allocation20 + $0x3c] sm:$0xf]
        %v2519 = vunpack.c.l.b16 %v2493
        %v2520 = vunpack.c.l.b16 %v2494
        %v2521 = vunpack.c.l.b16 %v2495
        %v2522 = vunpack.c.l.b16 %v2496
        %v2523 = vunpack.c.l.b16 %v2497
        %v2524 = vpack.c.b16 %v2520, %v2519
        %v2525 = vpack.c.b16 %v2522, %v2521
        %v2526 = vpack.c.b16 %v2523, %v2523
        %v2546 = vunpack.c.l.b16 %v2498
        %v2547 = vunpack.c.l.b16 %v2499
        %v2548 = vunpack.c.l.b16 %v2500
        %v2549 = vunpack.c.l.b16 %v2501
        %v2550 = vunpack.c.l.b16 %v2502
        %v2551 = vunpack.c.l.b16 %v2503
        %v2552 = vunpack.c.l.b16 %v2504
        %v2553 = vunpack.c.l.b16 %v2505
        %v2554 = vunpack.c.l.b16 %v2506
        %v2555 = vunpack.c.l.b16 %v2507
        %v2556 = vunpack.c.l.b16 %v2508
        %v2557 = vunpack.c.l.b16 %v2509
        %v2558 = vunpack.c.l.b16 %v2510
        %v2559 = vunpack.c.l.b16 %v2511
        %v2560 = vunpack.c.l.b16 %v2512
        %v2561 = vunpack.c.l.b16 %v2513
        %v2562 = vpack.c.b16 %v2547, %v2546
        %v2563 = vpack.c.b16 %v2549, %v2548
        %v2564 = vpack.c.b16 %v2551, %v2550
        %v2565 = vpack.c.b16 %v2553, %v2552
        %v2566 = vpack.c.b16 %v2555, %v2554
        %v2567 = vpack.c.b16 %v2557, %v2556
        %v2568 = vpack.c.b16 %v2559, %v2558
        %v2569 = vpack.c.b16 %v2561, %v2560
        %2578 = vmatpush.bf16.msra.mxu0 %v2569
        %2579 = vmatpush.bf16.msra.mxu0 %v2568
        %2580 = vmatpush.bf16.msra.mxu0 %v2567
        %2581 = vmatpush.bf16.msra.mxu0 %v2566
        %2582 = vmatpush.bf16.msra.mxu0 %v2565
        %2583 = vmatpush.bf16.msra.mxu0 %v2564
        %2584 = vmatpush.bf16.msra.mxu0 %v2563
        %2585 = vmatpush.bf16.msra.mxu0 %v2562
        %2586 = vmatmul.bf16.gmra.mxu0 %v2524
        %v2587 = vpop.f32.mrf.mxu0
        %v2588 = vadd.f32 0.0, %v2587
        %v2589 = vpop.f32.mrf.mxu0
        %v2590 = vadd.f32 0.0, %v2589
        %2591 = vmatmul.bf16.gmra.mxu0 %v2525
        %v2592 = vpop.f32.mrf.mxu0
        %v2593 = vadd.f32 0.0, %v2592
        %v2594 = vpop.f32.mrf.mxu0
        %v2595 = vadd.f32 0.0, %v2594
        %2596 = vmatmul.bf16.gmra.mxu0 %v2526
        %v2597 = vpop.f32.mrf.mxu0
        %v2598 = vadd.f32 0.0, %v2597
        %v2599 = vpop.f32.mrf.mxu0
        %2600 = vdwg.mxu0
        %v2601 = vpack.c.bf16 %v2588, %v2588
        %v2602 = vpack.c.bf16 %v2590, %v2590
        %v2603 = vpack.c.bf16 %v2593, %v2593
        %v2604 = vpack.c.bf16 %v2595, %v2595
        %v2605 = vpack.c.bf16 %v2598, %v2598
        %v2606 = vunpack.c.l.bf16 %v2493
        %v2607 = vunpack.c.l.bf16 %v2494
        %v2608 = vunpack.c.l.bf16 %v2495
        %v2609 = vunpack.c.l.bf16 %v2496
        %v2610 = vunpack.c.l.bf16 %v2497
        %v2611 = vunpack.c.l.bf16 %v2601
        %v2612 = vunpack.c.l.bf16 %v2602
        %v2613 = vunpack.c.l.bf16 %v2603
        %v2614 = vunpack.c.l.bf16 %v2604
        %v2615 = vunpack.c.l.bf16 %v2605
        %v2616 = vmax.f32 %v2606, %v2611
        %v2617 = vmax.f32 %v2607, %v2612
        %v2618 = vmax.f32 %v2608, %v2613
        %v2619 = vmax.f32 %v2609, %v2614
        %v2620 = vmax.f32 %v2610, %v2615
        %v2621 = vpack.c.bf16 %v2616, %v2616
        %v2622 = vpack.c.bf16 %v2617, %v2617
        %v2623 = vpack.c.bf16 %v2618, %v2618
        %v2624 = vpack.c.bf16 %v2619, %v2619
        %v2625 = vpack.c.bf16 %v2620, %v2620
        %v2626 = vunpack.c.l.bf16 %v2621
        %v2627 = vunpack.c.l.bf16 %v2622
        %v2628 = vunpack.c.l.bf16 %v2623
        %v2629 = vunpack.c.l.bf16 %v2624
        %v2630 = vunpack.c.l.bf16 %v2625
        %vm2636 = vcmask 1046528
        %v2637 = vrot.slane %v2626, 1
        %v2638 = vrot.slane %v2627, 1
        %v2639 = vsel %vm2636, %v2637, %v2638
        %v2640 = vrot.slane %v2628, 1
        %v2641 = vsel %vm2636, %v2638, %v2640
        %v2642 = vrot.slane %v2629, 1
        %v2643 = vsel %vm2636, %v2640, %v2642
        %v2644 = vrot.slane %v2630, 1
        %v2645 = vsel %vm2636, %v2642, %v2644
        %v2651 = vmax.f32 %v2626, %v2639
        %v2652 = vmax.f32 %v2627, %v2641
        %v2653 = vmax.f32 %v2628, %v2643
        %v2654 = vmax.f32 %v2629, %v2645
        %v2655 = vmax.f32 %v2630, %v2644
        %v2656 = vpack.c.bf16 %v2652, %v2651
        %v2657 = vpack.c.bf16 %v2654, %v2653
        %v2658 = vpack.c.bf16 %v2655, %v2655
        %v2659 = vld [vmem:[#allocation28] sm:$0xf]
        %v2660 = vld [vmem:[#allocation28 + $0x4] sm:$0xf]
        %v2661 = vld [vmem:[#allocation28 + $0x8] sm:$0x3]
        %v2665 = vunpack.c.l.b16 %v2659
        %v2666 = vunpack.c.l.b16 %v2660
        %v2667 = vunpack.c.l.b16 %v2661
        %v2668 = vpack.c.b16 %v2666, %v2665
        %v2669 = vpack.c.b16 %v2667, %v2667
        %v2671 = vshrl.u32 %v2656, 16
        %v2673 = vshll.u32 %v2656, 16
        %v2675 = vrot.slane %v2673, 1
        %v2676 = vor.u32 %v2671, %v2675
        %v2678 = vshll.u32 %v2657, 16
        %v2680 = vrot.slane %v2678, 1
        %v2681 = vsel %vm1834, %v2676, %v2680
        %v2682 = vshrl.u32 %v2657, 16
        %v2684 = vor.u32 %v2682, %v2680
        %v2686 = vshll.u32 %v2658, 16
        %v2688 = vrot.slane %v2686, 1
        %v2689 = vsel %vm1834, %v2684, %v2688
        %vm2692 = vcmask 261120
        %v2694 = vsel %vm2692, %v2668, 0
        %v2697 = vsel %vm2692, %v2669, 0
        %2699 = vmatpush.bf16.msra.mxu0 0
        %2700 = vmatpush.bf16.msra.mxu0 0
        %2701 = vmatpush.bf16.msra.mxu0 0
        %2702 = vmatpush.bf16.msra.mxu0 0
        %2703 = vmatpush.bf16.msra.mxu0 0
        %2704 = vmatpush.bf16.msra.mxu0 0
        %2705 = vmatpush.bf16.msra.mxu0 %v2689
        %2706 = vmatpush.bf16.msra.mxu0 %v2681
        %2707 = vmatmul.bf16.gmra.mxu0 %v2694
        %v2708 = vpop.f32.mrf.mxu0
        %v2709 = vadd.f32 0.0, %v2708
        %v2710 = vpop.f32.mrf.mxu0
        %v2711 = vadd.f32 0.0, %v2710
        %2712 = vmatmul.bf16.gmra.mxu0 %v2697
        %v2713 = vpop.f32.mrf.mxu0
        %v2714 = vadd.f32 0.0, %v2713
        %v2715 = vpop.f32.mrf.mxu0
        %2716 = vdwg.mxu0
        %v2717 = vpack.c.bf16 %v2709, %v2709
        %v2718 = vpack.c.bf16 %v2711, %v2711
        %v2719 = vpack.c.bf16 %v2714, %v2714
        %v2720 = vld [vmem:[%s11] sm:$0xf]
        %v2721 = vld [vmem:[%s11 + $0x4] sm:$0xf]
        %v2722 = vld [vmem:[%s11 + $0x8] sm:$0xf]
        %v2723 = vld [vmem:[%s11 + $0xc] sm:$0xf]
        %v2724 = vld [vmem:[%s11 + $0x10] sm:$0xf]
        %v2725 = vld [vmem:[%s11 + $0x14] sm:$0xf]
        %v2726 = vld [vmem:[%s11 + $0x18] sm:$0xf]
        %v2727 = vld [vmem:[%s11 + $0x1c] sm:$0xf]
        %v2728 = vld [vmem:[%s11 + $0x20] sm:$0xf]
        %v2729 = vld [vmem:[%s11 + $0x24] sm:$0xf]
        %v2730 = vld [vmem:[%s11 + $0x28] sm:$0xf]
        %v2731 = vld [vmem:[%s11 + $0x2c] sm:$0xf]
        %v2732 = vld [vmem:[%s11 + $0x30] sm:$0xf]
        %v2733 = vld [vmem:[%s11 + $0x34] sm:$0xf]
        %v2734 = vld [vmem:[%s11 + $0x38] sm:$0xf]
        %v2735 = vld [vmem:[%s11 + $0x3c] sm:$0xf]
        %s2736 = scalar_lea.vmem %s11, 64
        %v2737 = vld [vmem:[%s2736] sm:$0xf]
        %v2738 = vld [vmem:[%s2736 + $0x4] sm:$0xf]
        %v2739 = vld [vmem:[%s2736 + $0x8] sm:$0xf]
        %v2740 = vld [vmem:[%s2736 + $0xc] sm:$0xf]
        %v2741 = vld [vmem:[%s2736 + $0x10] sm:$0xf]
        %v2742 = vld [vmem:[%s2736 + $0x14] sm:$0xf]
        %v2743 = vld [vmem:[%s2736 + $0x18] sm:$0xf]
        %v2744 = vld [vmem:[%s2736 + $0x1c] sm:$0xf]
        %v2745 = vld [vmem:[%s2736 + $0x20] sm:$0xf]
        %v2746 = vld [vmem:[%s2736 + $0x24] sm:$0xf]
        %v2747 = vld [vmem:[%s2736 + $0x28] sm:$0xf]
        %v2748 = vld [vmem:[%s2736 + $0x2c] sm:$0xf]
        %v2749 = vld [vmem:[%s2736 + $0x30] sm:$0xf]
        %v2750 = vld [vmem:[%s2736 + $0x34] sm:$0xf]
        %v2751 = vld [vmem:[%s2736 + $0x38] sm:$0xf]
        %v2752 = vld [vmem:[%s2736 + $0x3c] sm:$0xf]
        %v2756 = vunpack.c.l.b16 %v2717
        %v2757 = vunpack.c.l.b16 %v2718
        %v2758 = vunpack.c.l.b16 %v2719
        %v2759 = vpack.c.b16 %v2757, %v2756
        %v2760 = vpack.c.b16 %v2758, %v2758
        %v2762 = vshrl.u32 %v2759, 16
        %v2764 = vshll.u32 %v2759, 16
        %v2766 = vrot.slane %v2764, 1
        %v2767 = vor.u32 %v2762, %v2766
        %v2769 = vshll.u32 %v2760, 16
        %v2771 = vrot.slane %v2769, 1
        %v2772 = vsel %vm1834, %v2767, %v2771
        %v2773 = vshrl.u32 %v2760, 16
        %v2775 = vor.u32 %v2773, %v2771
        %v2794 = vunpack.c.l.b16 %v2737
        %v2795 = vunpack.c.l.b16 %v2738
        %v2796 = vunpack.c.l.b16 %v2739
        %v2797 = vunpack.c.l.b16 %v2740
        %v2798 = vunpack.c.l.b16 %v2741
        %v2799 = vunpack.c.l.b16 %v2742
        %v2800 = vunpack.c.l.b16 %v2743
        %v2801 = vunpack.c.l.b16 %v2744
        %v2802 = vunpack.c.l.b16 %v2745
        %v2803 = vunpack.c.l.b16 %v2746
        %v2804 = vunpack.c.l.b16 %v2747
        %v2805 = vunpack.c.l.b16 %v2748
        %v2806 = vunpack.c.l.b16 %v2749
        %v2807 = vunpack.c.l.b16 %v2750
        %v2808 = vunpack.c.l.b16 %v2751
        %v2809 = vunpack.c.l.b16 %v2752
        %v2810 = vpack.c.b16 %v2795, %v2794
        %v2811 = vpack.c.b16 %v2797, %v2796
        %v2812 = vpack.c.b16 %v2799, %v2798
        %v2813 = vpack.c.b16 %v2801, %v2800
        %v2814 = vpack.c.b16 %v2803, %v2802
        %v2815 = vpack.c.b16 %v2805, %v2804
        %v2816 = vpack.c.b16 %v2807, %v2806
        %v2817 = vpack.c.b16 %v2809, %v2808
        %2826 = vmatpush.bf16.msra.mxu0 %v2817
        %2827 = vmatpush.bf16.msra.mxu0 %v2816
        %2828 = vmatpush.bf16.msra.mxu0 %v2815
        %2829 = vmatpush.bf16.msra.mxu0 %v2814
        %2830 = vmatpush.bf16.msra.mxu0 %v2813
        %2831 = vmatpush.bf16.msra.mxu0 %v2812
        %2832 = vmatpush.bf16.msra.mxu0 %v2811
        %2833 = vmatpush.bf16.msra.mxu0 %v2810
        %2834 = vmatmul.bf16.gmra.mxu0 %v2772
        %v2835 = vpop.f32.mrf.mxu0
        %v2836 = vadd.f32 0.0, %v2835
        %v2837 = vpop.f32.mrf.mxu0
        %v2838 = vadd.f32 0.0, %v2837
        %2839 = vmatmul.bf16.gmra.mxu0 %v2775
        %v2840 = vpop.f32.mrf.mxu0
        %v2841 = vadd.f32 0.0, %v2840
        %v2842 = vpop.f32.mrf.mxu0
        %2843 = vdwg.mxu0
        %v2862 = vunpack.c.l.b16 %v2720
        %v2863 = vunpack.c.l.b16 %v2721
        %v2864 = vunpack.c.l.b16 %v2722
        %v2865 = vunpack.c.l.b16 %v2723
        %v2866 = vunpack.c.l.b16 %v2724
        %v2867 = vunpack.c.l.b16 %v2725
        %v2868 = vunpack.c.l.b16 %v2726
        %v2869 = vunpack.c.l.b16 %v2727
        %v2870 = vunpack.c.l.b16 %v2728
        %v2871 = vunpack.c.l.b16 %v2729
        %v2872 = vunpack.c.l.b16 %v2730
        %v2873 = vunpack.c.l.b16 %v2731
        %v2874 = vunpack.c.l.b16 %v2732
        %v2875 = vunpack.c.l.b16 %v2733
        %v2876 = vunpack.c.l.b16 %v2734
        %v2877 = vunpack.c.l.b16 %v2735
        %v2878 = vpack.c.b16 %v2863, %v2862
        %v2879 = vpack.c.b16 %v2865, %v2864
        %v2880 = vpack.c.b16 %v2867, %v2866
        %v2881 = vpack.c.b16 %v2869, %v2868
        %v2882 = vpack.c.b16 %v2871, %v2870
        %v2883 = vpack.c.b16 %v2873, %v2872
        %v2884 = vpack.c.b16 %v2875, %v2874
        %v2885 = vpack.c.b16 %v2877, %v2876
        %2894 = vmatpush.bf16.msra.mxu0 %v2885
        %2895 = vmatpush.bf16.msra.mxu0 %v2884
        %2896 = vmatpush.bf16.msra.mxu0 %v2883
        %2897 = vmatpush.bf16.msra.mxu0 %v2882
        %2898 = vmatpush.bf16.msra.mxu0 %v2881
        %2899 = vmatpush.bf16.msra.mxu0 %v2880
        %2900 = vmatpush.bf16.msra.mxu0 %v2879
        %2901 = vmatpush.bf16.msra.mxu0 %v2878
        %2902 = vmatmul.bf16.gmra.mxu0 %v2759
        %v2903 = vpop.f32.mrf.mxu0
        %v2904 = vadd.f32 %v2836, %v2903
        %v2905 = vpop.f32.mrf.mxu0
        %v2906 = vadd.f32 %v2838, %v2905
        %2907 = vmatmul.bf16.gmra.mxu0 %v2760
        %v2908 = vpop.f32.mrf.mxu0
        %v2909 = vadd.f32 %v2841, %v2908
        %v2910 = vpop.f32.mrf.mxu0
        %2911 = vdwg.mxu0
        %s2912 = scalar_lea.vmem %s11, 128
        %v2913 = vld [vmem:[%s2912] sm:$0xf]
        %v2914 = vld [vmem:[%s2912 + $0x4] sm:$0xf]
        %v2915 = vld [vmem:[%s2912 + $0x8] sm:$0xf]
        %v2916 = vld [vmem:[%s2912 + $0xc] sm:$0xf]
        %v2917 = vld [vmem:[%s2912 + $0x10] sm:$0xf]
        %v2918 = vld [vmem:[%s2912 + $0x14] sm:$0xf]
        %v2919 = vld [vmem:[%s2912 + $0x18] sm:$0xf]
        %v2920 = vld [vmem:[%s2912 + $0x1c] sm:$0xf]
        %v2921 = vld [vmem:[%s2912 + $0x20] sm:$0xf]
        %v2922 = vld [vmem:[%s2912 + $0x24] sm:$0xf]
        %v2923 = vld [vmem:[%s2912 + $0x28] sm:$0xf]
        %v2924 = vld [vmem:[%s2912 + $0x2c] sm:$0xf]
        %v2925 = vld [vmem:[%s2912 + $0x30] sm:$0xf]
        %v2926 = vld [vmem:[%s2912 + $0x34] sm:$0xf]
        %v2927 = vld [vmem:[%s2912 + $0x38] sm:$0xf]
        %v2928 = vld [vmem:[%s2912 + $0x3c] sm:$0xf]
        %v2929 = vrot.slane %v2759, 1
        %v2930 = vrot.slane %v2760, 1
        %v2931 = vsel %vm2005, %v2929, %v2930
        %v2950 = vunpack.c.l.b16 %v2913
        %v2951 = vunpack.c.l.b16 %v2914
        %v2952 = vunpack.c.l.b16 %v2915
        %v2953 = vunpack.c.l.b16 %v2916
        %v2954 = vunpack.c.l.b16 %v2917
        %v2955 = vunpack.c.l.b16 %v2918
        %v2956 = vunpack.c.l.b16 %v2919
        %v2957 = vunpack.c.l.b16 %v2920
        %v2958 = vunpack.c.l.b16 %v2921
        %v2959 = vunpack.c.l.b16 %v2922
        %v2960 = vunpack.c.l.b16 %v2923
        %v2961 = vunpack.c.l.b16 %v2924
        %v2962 = vunpack.c.l.b16 %v2925
        %v2963 = vunpack.c.l.b16 %v2926
        %v2964 = vunpack.c.l.b16 %v2927
        %v2965 = vunpack.c.l.b16 %v2928
        %v2966 = vpack.c.b16 %v2951, %v2950
        %v2967 = vpack.c.b16 %v2953, %v2952
        %v2968 = vpack.c.b16 %v2955, %v2954
        %v2969 = vpack.c.b16 %v2957, %v2956
        %v2970 = vpack.c.b16 %v2959, %v2958
        %v2971 = vpack.c.b16 %v2961, %v2960
        %v2972 = vpack.c.b16 %v2963, %v2962
        %v2973 = vpack.c.b16 %v2965, %v2964
        %2982 = vmatpush.bf16.msra.mxu0 %v2973
        %2983 = vmatpush.bf16.msra.mxu0 %v2972
        %2984 = vmatpush.bf16.msra.mxu0 %v2971
        %2985 = vmatpush.bf16.msra.mxu0 %v2970
        %2986 = vmatpush.bf16.msra.mxu0 %v2969
        %2987 = vmatpush.bf16.msra.mxu0 %v2968
        %2988 = vmatpush.bf16.msra.mxu0 %v2967
        %2989 = vmatpush.bf16.msra.mxu0 %v2966
        %2990 = vmatmul.bf16.gmra.mxu0 %v2931
        %v2991 = vpop.f32.mrf.mxu0
        %v2992 = vadd.f32 0.0, %v2991
        %v2993 = vpop.f32.mrf.mxu0
        %v2994 = vadd.f32 0.0, %v2993
        %2995 = vmatmul.bf16.gmra.mxu0 %v2930
        %v2996 = vpop.f32.mrf.mxu0
        %v2997 = vadd.f32 0.0, %v2996
        %v2998 = vpop.f32.mrf.mxu0
        %2999 = vdwg.mxu0
        %v3000 = vadd.f32 %v2904, %v2992
        %v3001 = vadd.f32 %v2906, %v2994
        %v3002 = vadd.f32 %v2909, %v2997
        %v3003 = vld [vmem:[%s13] sm:$0x1]
        %v3005 = vperm.slane %v3003, 0
        %v3007 = vadd.f32 %v3000, %v3005
        %v3008 = vadd.f32 %v3001, %v3005
        %v3009 = vadd.f32 %v3002, %v3005
        %v3010 = vmax.f32 %v3007, 0.0
        %v3011 = vmax.f32 %v3008, 0.0
        %v3012 = vmax.f32 %v3009, 0.0
        %v3013 = vpack.c.bf16 %v3011, %v3010
        %v3014 = vpack.c.bf16 %v3012, %v3012
        %v3015 = vld [vmem:[%s57] sm:$0xf]
        %v3016 = vld [vmem:[%s57 + $0x4] sm:$0xf]
        %v3017 = vld [vmem:[%s57 + $0x8] sm:$0x3]
        %v3021 = vunpack.c.l.b16 %v3015
        %v3022 = vunpack.c.l.b16 %v3016
        %v3023 = vunpack.c.l.b16 %v3017
        %v3024 = vpack.c.b16 %v3022, %v3021
        %v3025 = vpack.c.b16 %v3023, %v3023
        %vm3026 = vcmask 146432
        %v3028 = vsel %vm3026, %v3024, 0
        %v3031 = vsel %vm3026, %v3025, 0
        %v3034 = vsel %vm2129, %v3014, 0
        %3036 = vmatpush.bf16.msra.mxu0 0
        %3037 = vmatpush.bf16.msra.mxu0 0
        %3038 = vmatpush.bf16.msra.mxu0 0
        %3039 = vmatpush.bf16.msra.mxu0 0
        %3040 = vmatpush.bf16.msra.mxu0 0
        %3041 = vmatpush.bf16.msra.mxu0 0
        %3042 = vmatpush.bf16.msra.mxu0 %v3034
        %3043 = vmatpush.bf16.msra.mxu0 %v3013
        %3044 = vmatmul.bf16.gmra.mxu0 %v3028
        %v3045 = vpop.f32.mrf.mxu0
        %v3046 = vadd.f32 0.0, %v3045
        %v3047 = vpop.f32.mrf.mxu0
        %v3048 = vadd.f32 0.0, %v3047
        %3049 = vmatmul.bf16.gmra.mxu0 %v3031
        %v3050 = vpop.f32.mrf.mxu0
        %v3051 = vadd.f32 0.0, %v3050
        %v3052 = vpop.f32.mrf.mxu0
        %3053 = vdwg.mxu0
        %v3054 = vpack.c.bf16 %v3046, %v3046
        %v3055 = vpack.c.bf16 %v3048, %v3048
        %v3056 = vpack.c.bf16 %v3051, %v3051
        %v3057 = vld [vmem:[%s15] sm:$0xf]
        %v3058 = vld [vmem:[%s15 + $0x4] sm:$0xf]
        %v3059 = vld [vmem:[%s15 + $0x8] sm:$0xf]
        %v3060 = vld [vmem:[%s15 + $0xc] sm:$0xf]
        %v3061 = vld [vmem:[%s15 + $0x10] sm:$0xf]
        %v3062 = vld [vmem:[%s15 + $0x14] sm:$0xf]
        %v3063 = vld [vmem:[%s15 + $0x18] sm:$0xf]
        %v3064 = vld [vmem:[%s15 + $0x1c] sm:$0xf]
        %v3065 = vld [vmem:[%s15 + $0x20] sm:$0xf]
        %v3066 = vld [vmem:[%s15 + $0x24] sm:$0xf]
        %v3067 = vld [vmem:[%s15 + $0x28] sm:$0xf]
        %v3068 = vld [vmem:[%s15 + $0x2c] sm:$0xf]
        %v3069 = vld [vmem:[%s15 + $0x30] sm:$0xf]
        %v3070 = vld [vmem:[%s15 + $0x34] sm:$0xf]
        %v3071 = vld [vmem:[%s15 + $0x38] sm:$0xf]
        %v3072 = vld [vmem:[%s15 + $0x3c] sm:$0xf]
        %s3073 = scalar_lea.vmem %s15, 64
        %v3074 = vld [vmem:[%s3073] sm:$0xf]
        %v3075 = vld [vmem:[%s3073 + $0x4] sm:$0xf]
        %v3076 = vld [vmem:[%s3073 + $0x8] sm:$0xf]
        %v3077 = vld [vmem:[%s3073 + $0xc] sm:$0xf]
        %v3078 = vld [vmem:[%s3073 + $0x10] sm:$0xf]
        %v3079 = vld [vmem:[%s3073 + $0x14] sm:$0xf]
        %v3080 = vld [vmem:[%s3073 + $0x18] sm:$0xf]
        %v3081 = vld [vmem:[%s3073 + $0x1c] sm:$0xf]
        %v3082 = vld [vmem:[%s3073 + $0x20] sm:$0xf]
        %v3083 = vld [vmem:[%s3073 + $0x24] sm:$0xf]
        %v3084 = vld [vmem:[%s3073 + $0x28] sm:$0xf]
        %v3085 = vld [vmem:[%s3073 + $0x2c] sm:$0xf]
        %v3086 = vld [vmem:[%s3073 + $0x30] sm:$0xf]
        %v3087 = vld [vmem:[%s3073 + $0x34] sm:$0xf]
        %v3088 = vld [vmem:[%s3073 + $0x38] sm:$0xf]
        %v3089 = vld [vmem:[%s3073 + $0x3c] sm:$0xf]
        %v3093 = vunpack.c.l.b16 %v3054
        %v3094 = vunpack.c.l.b16 %v3055
        %v3095 = vunpack.c.l.b16 %v3056
        %v3096 = vpack.c.b16 %v3094, %v3093
        %v3097 = vpack.c.b16 %v3095, %v3095
        %v3099 = vshrl.u32 %v3096, 16
        %v3101 = vshll.u32 %v3096, 16
        %v3103 = vrot.slane %v3101, 1
        %v3104 = vor.u32 %v3099, %v3103
        %v3106 = vshll.u32 %v3097, 16
        %v3108 = vrot.slane %v3106, 1
        %v3109 = vsel %vm1834, %v3104, %v3108
        %v3110 = vshrl.u32 %v3097, 16
        %v3112 = vor.u32 %v3110, %v3108
        %v3131 = vunpack.c.l.b16 %v3074
        %v3132 = vunpack.c.l.b16 %v3075
        %v3133 = vunpack.c.l.b16 %v3076
        %v3134 = vunpack.c.l.b16 %v3077
        %v3135 = vunpack.c.l.b16 %v3078
        %v3136 = vunpack.c.l.b16 %v3079
        %v3137 = vunpack.c.l.b16 %v3080
        %v3138 = vunpack.c.l.b16 %v3081
        %v3139 = vunpack.c.l.b16 %v3082
        %v3140 = vunpack.c.l.b16 %v3083
        %v3141 = vunpack.c.l.b16 %v3084
        %v3142 = vunpack.c.l.b16 %v3085
        %v3143 = vunpack.c.l.b16 %v3086
        %v3144 = vunpack.c.l.b16 %v3087
        %v3145 = vunpack.c.l.b16 %v3088
        %v3146 = vunpack.c.l.b16 %v3089
        %v3147 = vpack.c.b16 %v3132, %v3131
        %v3148 = vpack.c.b16 %v3134, %v3133
        %v3149 = vpack.c.b16 %v3136, %v3135
        %v3150 = vpack.c.b16 %v3138, %v3137
        %v3151 = vpack.c.b16 %v3140, %v3139
        %v3152 = vpack.c.b16 %v3142, %v3141
        %v3153 = vpack.c.b16 %v3144, %v3143
        %v3154 = vpack.c.b16 %v3146, %v3145
        %3163 = vmatpush.bf16.msra.mxu0 %v3154
        %3164 = vmatpush.bf16.msra.mxu0 %v3153
        %3165 = vmatpush.bf16.msra.mxu0 %v3152
        %3166 = vmatpush.bf16.msra.mxu0 %v3151
        %3167 = vmatpush.bf16.msra.mxu0 %v3150
        %3168 = vmatpush.bf16.msra.mxu0 %v3149
        %3169 = vmatpush.bf16.msra.mxu0 %v3148
        %3170 = vmatpush.bf16.msra.mxu0 %v3147
        %3171 = vmatmul.bf16.gmra.mxu0 %v3109
        %v3172 = vpop.f32.mrf.mxu0
        %v3173 = vadd.f32 0.0, %v3172
        %v3174 = vpop.f32.mrf.mxu0
        %v3175 = vadd.f32 0.0, %v3174
        %3176 = vmatmul.bf16.gmra.mxu0 %v3112
        %v3177 = vpop.f32.mrf.mxu0
        %v3178 = vadd.f32 0.0, %v3177
        %v3179 = vpop.f32.mrf.mxu0
        %3180 = vdwg.mxu0
        %v3199 = vunpack.c.l.b16 %v3057
        %v3200 = vunpack.c.l.b16 %v3058
        %v3201 = vunpack.c.l.b16 %v3059
        %v3202 = vunpack.c.l.b16 %v3060
        %v3203 = vunpack.c.l.b16 %v3061
        %v3204 = vunpack.c.l.b16 %v3062
        %v3205 = vunpack.c.l.b16 %v3063
        %v3206 = vunpack.c.l.b16 %v3064
        %v3207 = vunpack.c.l.b16 %v3065
        %v3208 = vunpack.c.l.b16 %v3066
        %v3209 = vunpack.c.l.b16 %v3067
        %v3210 = vunpack.c.l.b16 %v3068
        %v3211 = vunpack.c.l.b16 %v3069
        %v3212 = vunpack.c.l.b16 %v3070
        %v3213 = vunpack.c.l.b16 %v3071
        %v3214 = vunpack.c.l.b16 %v3072
        %v3215 = vpack.c.b16 %v3200, %v3199
        %v3216 = vpack.c.b16 %v3202, %v3201
        %v3217 = vpack.c.b16 %v3204, %v3203
        %v3218 = vpack.c.b16 %v3206, %v3205
        %v3219 = vpack.c.b16 %v3208, %v3207
        %v3220 = vpack.c.b16 %v3210, %v3209
        %v3221 = vpack.c.b16 %v3212, %v3211
        %v3222 = vpack.c.b16 %v3214, %v3213
        %3231 = vmatpush.bf16.msra.mxu0 %v3222
        %3232 = vmatpush.bf16.msra.mxu0 %v3221
        %3233 = vmatpush.bf16.msra.mxu0 %v3220
        %3234 = vmatpush.bf16.msra.mxu0 %v3219
        %3235 = vmatpush.bf16.msra.mxu0 %v3218
        %3236 = vmatpush.bf16.msra.mxu0 %v3217
        %3237 = vmatpush.bf16.msra.mxu0 %v3216
        %3238 = vmatpush.bf16.msra.mxu0 %v3215
        %3239 = vmatmul.bf16.gmra.mxu0 %v3096
        %v3240 = vpop.f32.mrf.mxu0
        %v3241 = vadd.f32 %v3173, %v3240
        %v3242 = vpop.f32.mrf.mxu0
        %v3243 = vadd.f32 %v3175, %v3242
        %3244 = vmatmul.bf16.gmra.mxu0 %v3097
        %v3245 = vpop.f32.mrf.mxu0
        %v3246 = vadd.f32 %v3178, %v3245
        %v3247 = vpop.f32.mrf.mxu0
        %3248 = vdwg.mxu0
        %s3249 = scalar_lea.vmem %s15, 128
        %v3250 = vld [vmem:[%s3249] sm:$0xf]
        %v3251 = vld [vmem:[%s3249 + $0x4] sm:$0xf]
        %v3252 = vld [vmem:[%s3249 + $0x8] sm:$0xf]
        %v3253 = vld [vmem:[%s3249 + $0xc] sm:$0xf]
        %v3254 = vld [vmem:[%s3249 + $0x10] sm:$0xf]
        %v3255 = vld [vmem:[%s3249 + $0x14] sm:$0xf]
        %v3256 = vld [vmem:[%s3249 + $0x18] sm:$0xf]
        %v3257 = vld [vmem:[%s3249 + $0x1c] sm:$0xf]
        %v3258 = vld [vmem:[%s3249 + $0x20] sm:$0xf]
        %v3259 = vld [vmem:[%s3249 + $0x24] sm:$0xf]
        %v3260 = vld [vmem:[%s3249 + $0x28] sm:$0xf]
        %v3261 = vld [vmem:[%s3249 + $0x2c] sm:$0xf]
        %v3262 = vld [vmem:[%s3249 + $0x30] sm:$0xf]
        %v3263 = vld [vmem:[%s3249 + $0x34] sm:$0xf]
        %v3264 = vld [vmem:[%s3249 + $0x38] sm:$0xf]
        %v3265 = vld [vmem:[%s3249 + $0x3c] sm:$0xf]
        %v3266 = vrot.slane %v3096, 1
        %v3267 = vrot.slane %v3097, 1
        %v3268 = vsel %vm2005, %v3266, %v3267
        %v3287 = vunpack.c.l.b16 %v3250
        %v3288 = vunpack.c.l.b16 %v3251
        %v3289 = vunpack.c.l.b16 %v3252
        %v3290 = vunpack.c.l.b16 %v3253
        %v3291 = vunpack.c.l.b16 %v3254
        %v3292 = vunpack.c.l.b16 %v3255
        %v3293 = vunpack.c.l.b16 %v3256
        %v3294 = vunpack.c.l.b16 %v3257
        %v3295 = vunpack.c.l.b16 %v3258
        %v3296 = vunpack.c.l.b16 %v3259
        %v3297 = vunpack.c.l.b16 %v3260
        %v3298 = vunpack.c.l.b16 %v3261
        %v3299 = vunpack.c.l.b16 %v3262
        %v3300 = vunpack.c.l.b16 %v3263
        %v3301 = vunpack.c.l.b16 %v3264
        %v3302 = vunpack.c.l.b16 %v3265
        %v3303 = vpack.c.b16 %v3288, %v3287
        %v3304 = vpack.c.b16 %v3290, %v3289
        %v3305 = vpack.c.b16 %v3292, %v3291
        %v3306 = vpack.c.b16 %v3294, %v3293
        %v3307 = vpack.c.b16 %v3296, %v3295
        %v3308 = vpack.c.b16 %v3298, %v3297
        %v3309 = vpack.c.b16 %v3300, %v3299
        %v3310 = vpack.c.b16 %v3302, %v3301
        %3319 = vmatpush.bf16.msra.mxu0 %v3310
        %3320 = vmatpush.bf16.msra.mxu0 %v3309
        %3321 = vmatpush.bf16.msra.mxu0 %v3308
        %3322 = vmatpush.bf16.msra.mxu0 %v3307
        %3323 = vmatpush.bf16.msra.mxu0 %v3306
        %3324 = vmatpush.bf16.msra.mxu0 %v3305
        %3325 = vmatpush.bf16.msra.mxu0 %v3304
        %3326 = vmatpush.bf16.msra.mxu0 %v3303
        %3327 = vmatmul.bf16.gmra.mxu0 %v3268
        %v3328 = vpop.f32.mrf.mxu0
        %v3329 = vadd.f32 0.0, %v3328
        %v3330 = vpop.f32.mrf.mxu0
        %v3331 = vadd.f32 0.0, %v3330
        %3332 = vmatmul.bf16.gmra.mxu0 %v3267
        %v3333 = vpop.f32.mrf.mxu0
        %v3334 = vadd.f32 0.0, %v3333
        %v3335 = vpop.f32.mrf.mxu0
        %3336 = vdwg.mxu0
        %v3337 = vadd.f32 %v3241, %v3329
        %v3338 = vadd.f32 %v3243, %v3331
        %v3339 = vadd.f32 %v3246, %v3334
        %v3340 = vld [vmem:[%s17] sm:$0x1]
        %v3342 = vperm.slane %v3340, 0
        %v3344 = vadd.f32 %v3337, %v3342
        %v3345 = vadd.f32 %v3338, %v3342
        %v3346 = vadd.f32 %v3339, %v3342
        %v3347 = vmax.f32 %v3344, 0.0
        %v3348 = vmax.f32 %v3345, 0.0
        %v3349 = vmax.f32 %v3346, 0.0
        %v3350 = vpack.c.bf16 %v3347, %v3347
        %v3351 = vpack.c.bf16 %v3348, %v3348
        %v3352 = vpack.c.bf16 %v3349, %v3349
        %v3353 = vld [vmem:[#allocation22] sm:$0xf]
        %v3354 = vld [vmem:[#allocation22 + $0x4] sm:$0xf]
        %v3355 = vld [vmem:[#allocation22 + $0x8] sm:$0xf]
        %v3356 = vld [vmem:[#allocation22 + $0xc] sm:$0xf]
        %v3357 = vld [vmem:[#allocation22 + $0x10] sm:$0xf]
        %v3358 = vld [vmem:[#allocation22 + $0x14] sm:$0xf]
        %v3359 = vld [vmem:[#allocation22 + $0x18] sm:$0xf]
        %v3360 = vld [vmem:[#allocation22 + $0x1c] sm:$0xf]
        %v3361 = vld [vmem:[#allocation22 + $0x20] sm:$0xf]
        %v3362 = vld [vmem:[#allocation22 + $0x24] sm:$0xf]
        %v3363 = vld [vmem:[#allocation22 + $0x28] sm:$0xf]
        %v3364 = vld [vmem:[#allocation22 + $0x2c] sm:$0xf]
        %v3365 = vld [vmem:[#allocation22 + $0x30] sm:$0xf]
        %v3366 = vld [vmem:[#allocation22 + $0x34] sm:$0xf]
        %v3367 = vld [vmem:[#allocation22 + $0x38] sm:$0xf]
        %v3368 = vld [vmem:[#allocation22 + $0x3c] sm:$0xf]
        %v3372 = vunpack.c.l.b16 %v3350
        %v3373 = vunpack.c.l.b16 %v3351
        %v3374 = vunpack.c.l.b16 %v3352
        %v3375 = vpack.c.b16 %v3373, %v3372
        %v3376 = vpack.c.b16 %v3374, %v3374
        %v3395 = vunpack.c.l.b16 %v3353
        %v3396 = vunpack.c.l.b16 %v3354
        %v3397 = vunpack.c.l.b16 %v3355
        %v3398 = vunpack.c.l.b16 %v3356
        %v3399 = vunpack.c.l.b16 %v3357
        %v3400 = vunpack.c.l.b16 %v3358
        %v3401 = vunpack.c.l.b16 %v3359
        %v3402 = vunpack.c.l.b16 %v3360
        %v3403 = vunpack.c.l.b16 %v3361
        %v3404 = vunpack.c.l.b16 %v3362
        %v3405 = vunpack.c.l.b16 %v3363
        %v3406 = vunpack.c.l.b16 %v3364
        %v3407 = vunpack.c.l.b16 %v3365
        %v3408 = vunpack.c.l.b16 %v3366
        %v3409 = vunpack.c.l.b16 %v3367
        %v3410 = vunpack.c.l.b16 %v3368
        %v3411 = vpack.c.b16 %v3396, %v3395
        %v3412 = vpack.c.b16 %v3398, %v3397
        %v3413 = vpack.c.b16 %v3400, %v3399
        %v3414 = vpack.c.b16 %v3402, %v3401
        %v3415 = vpack.c.b16 %v3404, %v3403
        %v3416 = vpack.c.b16 %v3406, %v3405
        %v3417 = vpack.c.b16 %v3408, %v3407
        %v3418 = vpack.c.b16 %v3410, %v3409
        %3427 = vmatpush.bf16.msra.mxu0 %v3418
        %3428 = vmatpush.bf16.msra.mxu0 %v3417
        %3429 = vmatpush.bf16.msra.mxu0 %v3416
        %3430 = vmatpush.bf16.msra.mxu0 %v3415
        %3431 = vmatpush.bf16.msra.mxu0 %v3414
        %3432 = vmatpush.bf16.msra.mxu0 %v3413
        %3433 = vmatpush.bf16.msra.mxu0 %v3412
        %3434 = vmatpush.bf16.msra.mxu0 %v3411
        %3435 = vmatmul.bf16.gmra.mxu0 %v3375
        %v3436 = vpop.f32.mrf.mxu0
        %v3437 = vadd.f32 0.0, %v3436
        %v3438 = vpop.f32.mrf.mxu0
        %v3439 = vadd.f32 0.0, %v3438
        %3440 = vmatmul.bf16.gmra.mxu0 %v3376
        %v3441 = vpop.f32.mrf.mxu0
        %v3442 = vadd.f32 0.0, %v3441
        %v3443 = vpop.f32.mrf.mxu0
        %3444 = vdwg.mxu0
        %v3445 = vpack.c.bf16 %v3437, %v3437
        %v3446 = vpack.c.bf16 %v3439, %v3439
        %v3447 = vpack.c.bf16 %v3442, %v3442
        %v3448 = vunpack.c.l.bf16 %v3350
        %v3449 = vunpack.c.l.bf16 %v3351
        %v3450 = vunpack.c.l.bf16 %v3352
        %v3451 = vunpack.c.l.bf16 %v3445
        %v3452 = vunpack.c.l.bf16 %v3446
        %v3453 = vunpack.c.l.bf16 %v3447
        %v3454 = vmax.f32 %v3448, %v3451
        %v3455 = vmax.f32 %v3449, %v3452
        %v3456 = vmax.f32 %v3450, %v3453
        %v3457 = vpack.c.bf16 %v3454, %v3454
        %v3458 = vpack.c.bf16 %v3455, %v3455
        %v3459 = vpack.c.bf16 %v3456, %v3456
        %v3460 = vunpack.c.l.bf16 %v3457
        %v3461 = vunpack.c.l.bf16 %v3458
        %v3462 = vunpack.c.l.bf16 %v3459
        %v3466 = vrot.slane %v3460, 1
        %v3467 = vrot.slane %v3461, 1
        %v3468 = vsel %vm2636, %v3466, %v3467
        %v3469 = vrot.slane %v3462, 1
        %v3470 = vsel %vm2636, %v3467, %v3469
        %v3474 = vmax.f32 %v3460, %v3468
        %v3475 = vmax.f32 %v3461, %v3470
        %v3476 = vmax.f32 %v3462, %v3469
        %v3477 = vpack.c.bf16 %v3475, %v3474
        %v3478 = vpack.c.bf16 %v3476, %v3476
        %v3479 = vld [vmem:[#allocation29] sm:$0xf]
        %v3480 = vld [vmem:[#allocation29 + $0x4] sm:$0x3]
        %v3483 = vunpack.c.l.b16 %v3479
        %v3484 = vunpack.c.l.b16 %v3480
        %v3485 = vpack.c.b16 %v3484, %v3483
        %v3487 = vshrl.u32 %v3477, 16
        %v3489 = vshll.u32 %v3477, 16
        %v3491 = vrot.slane %v3489, 1
        %v3492 = vor.u32 %v3487, %v3491
        %v3494 = vshll.u32 %v3478, 16
        %v3496 = vrot.slane %v3494, 1
        %v3497 = vsel %vm1834, %v3492, %v3496
        %vm3499 = vcmask 130048
        %v3501 = vsel %vm3499, %v3485, 0
        %3503 = vmatpush.bf16.msra.mxu0 0
        %3504 = vmatpush.bf16.msra.mxu0 0
        %3505 = vmatpush.bf16.msra.mxu0 0
        %3506 = vmatpush.bf16.msra.mxu0 0
        %3507 = vmatpush.bf16.msra.mxu0 0
        %3508 = vmatpush.bf16.msra.mxu0 0
        %3509 = vmatpush.bf16.msra.mxu0 0
        %3510 = vmatpush.bf16.msra.mxu0 %v3497
        %3511 = vmatmul.bf16.gmra.mxu0 %v3501
        %v3512 = vpop.f32.mrf.mxu0
        %v3513 = vadd.f32 0.0, %v3512
        %v3514 = vpop.f32.mrf.mxu0
        %v3515 = vadd.f32 0.0, %v3514
        %3516 = vdwg.mxu0
        %v3517 = vpack.c.bf16 %v3513, %v3513
        %v3518 = vpack.c.bf16 %v3515, %v3515
        %v3519 = vld [vmem:[%s19] sm:$0xf]
        %v3520 = vld [vmem:[%s19 + $0x4] sm:$0xf]
        %v3521 = vld [vmem:[%s19 + $0x8] sm:$0xf]
        %v3522 = vld [vmem:[%s19 + $0xc] sm:$0xf]
        %v3523 = vld [vmem:[%s19 + $0x10] sm:$0xf]
        %v3524 = vld [vmem:[%s19 + $0x14] sm:$0xf]
        %v3525 = vld [vmem:[%s19 + $0x18] sm:$0xf]
        %v3526 = vld [vmem:[%s19 + $0x1c] sm:$0xf]
        %v3527 = vld [vmem:[%s19 + $0x20] sm:$0xf]
        %v3528 = vld [vmem:[%s19 + $0x24] sm:$0xf]
        %v3529 = vld [vmem:[%s19 + $0x28] sm:$0xf]
        %v3530 = vld [vmem:[%s19 + $0x2c] sm:$0xf]
        %v3531 = vld [vmem:[%s19 + $0x30] sm:$0xf]
        %v3532 = vld [vmem:[%s19 + $0x34] sm:$0xf]
        %v3533 = vld [vmem:[%s19 + $0x38] sm:$0xf]
        %v3534 = vld [vmem:[%s19 + $0x3c] sm:$0xf]
        %s3535 = scalar_lea.vmem %s19, 64
        %v3536 = vld [vmem:[%s3535] sm:$0xf]
        %v3537 = vld [vmem:[%s3535 + $0x4] sm:$0xf]
        %v3538 = vld [vmem:[%s3535 + $0x8] sm:$0xf]
        %v3539 = vld [vmem:[%s3535 + $0xc] sm:$0xf]
        %v3540 = vld [vmem:[%s3535 + $0x10] sm:$0xf]
        %v3541 = vld [vmem:[%s3535 + $0x14] sm:$0xf]
        %v3542 = vld [vmem:[%s3535 + $0x18] sm:$0xf]
        %v3543 = vld [vmem:[%s3535 + $0x1c] sm:$0xf]
        %v3544 = vld [vmem:[%s3535 + $0x20] sm:$0xf]
        %v3545 = vld [vmem:[%s3535 + $0x24] sm:$0xf]
        %v3546 = vld [vmem:[%s3535 + $0x28] sm:$0xf]
        %v3547 = vld [vmem:[%s3535 + $0x2c] sm:$0xf]
        %v3548 = vld [vmem:[%s3535 + $0x30] sm:$0xf]
        %v3549 = vld [vmem:[%s3535 + $0x34] sm:$0xf]
        %v3550 = vld [vmem:[%s3535 + $0x38] sm:$0xf]
        %v3551 = vld [vmem:[%s3535 + $0x3c] sm:$0xf]
        %v3554 = vunpack.c.l.b16 %v3517
        %v3555 = vunpack.c.l.b16 %v3518
        %v3556 = vpack.c.b16 %v3555, %v3554
        %v3558 = vshrl.u32 %v3556, 16
        %v3560 = vshll.u32 %v3556, 16
        %v3562 = vrot.slane %v3560, 1
        %v3563 = vor.u32 %v3558, %v3562
        %v3581 = vunpack.c.l.b16 %v3536
        %v3582 = vunpack.c.l.b16 %v3537
        %v3583 = vunpack.c.l.b16 %v3538
        %v3584 = vunpack.c.l.b16 %v3539
        %v3585 = vunpack.c.l.b16 %v3540
        %v3586 = vunpack.c.l.b16 %v3541
        %v3587 = vunpack.c.l.b16 %v3542
        %v3588 = vunpack.c.l.b16 %v3543
        %v3589 = vunpack.c.l.b16 %v3544
        %v3590 = vunpack.c.l.b16 %v3545
        %v3591 = vunpack.c.l.b16 %v3546
        %v3592 = vunpack.c.l.b16 %v3547
        %v3593 = vunpack.c.l.b16 %v3548
        %v3594 = vunpack.c.l.b16 %v3549
        %v3595 = vunpack.c.l.b16 %v3550
        %v3596 = vunpack.c.l.b16 %v3551
        %v3597 = vpack.c.b16 %v3582, %v3581
        %v3598 = vpack.c.b16 %v3584, %v3583
        %v3599 = vpack.c.b16 %v3586, %v3585
        %v3600 = vpack.c.b16 %v3588, %v3587
        %v3601 = vpack.c.b16 %v3590, %v3589
        %v3602 = vpack.c.b16 %v3592, %v3591
        %v3603 = vpack.c.b16 %v3594, %v3593
        %v3604 = vpack.c.b16 %v3596, %v3595
        %3613 = vmatpush.bf16.msra.mxu0 %v3604
        %3614 = vmatpush.bf16.msra.mxu0 %v3603
        %3615 = vmatpush.bf16.msra.mxu0 %v3602
        %3616 = vmatpush.bf16.msra.mxu0 %v3601
        %3617 = vmatpush.bf16.msra.mxu0 %v3600
        %3618 = vmatpush.bf16.msra.mxu0 %v3599
        %3619 = vmatpush.bf16.msra.mxu0 %v3598
        %3620 = vmatpush.bf16.msra.mxu0 %v3597
        %3621 = vmatmul.bf16.gmra.mxu0 %v3563
        %v3622 = vpop.f32.mrf.mxu0
        %v3623 = vadd.f32 0.0, %v3622
        %v3624 = vpop.f32.mrf.mxu0
        %v3625 = vadd.f32 0.0, %v3624
        %3626 = vdwg.mxu0
        %v3644 = vunpack.c.l.b16 %v3519
        %v3645 = vunpack.c.l.b16 %v3520
        %v3646 = vunpack.c.l.b16 %v3521
        %v3647 = vunpack.c.l.b16 %v3522
        %v3648 = vunpack.c.l.b16 %v3523
        %v3649 = vunpack.c.l.b16 %v3524
        %v3650 = vunpack.c.l.b16 %v3525
        %v3651 = vunpack.c.l.b16 %v3526
        %v3652 = vunpack.c.l.b16 %v3527
        %v3653 = vunpack.c.l.b16 %v3528
        %v3654 = vunpack.c.l.b16 %v3529
        %v3655 = vunpack.c.l.b16 %v3530
        %v3656 = vunpack.c.l.b16 %v3531
        %v3657 = vunpack.c.l.b16 %v3532
        %v3658 = vunpack.c.l.b16 %v3533
        %v3659 = vunpack.c.l.b16 %v3534
        %v3660 = vpack.c.b16 %v3645, %v3644
        %v3661 = vpack.c.b16 %v3647, %v3646
        %v3662 = vpack.c.b16 %v3649, %v3648
        %v3663 = vpack.c.b16 %v3651, %v3650
        %v3664 = vpack.c.b16 %v3653, %v3652
        %v3665 = vpack.c.b16 %v3655, %v3654
        %v3666 = vpack.c.b16 %v3657, %v3656
        %v3667 = vpack.c.b16 %v3659, %v3658
        %3676 = vmatpush.bf16.msra.mxu0 %v3667
        %3677 = vmatpush.bf16.msra.mxu0 %v3666
        %3678 = vmatpush.bf16.msra.mxu0 %v3665
        %3679 = vmatpush.bf16.msra.mxu0 %v3664
        %3680 = vmatpush.bf16.msra.mxu0 %v3663
        %3681 = vmatpush.bf16.msra.mxu0 %v3662
        %3682 = vmatpush.bf16.msra.mxu0 %v3661
        %3683 = vmatpush.bf16.msra.mxu0 %v3660
        %3684 = vmatmul.bf16.gmra.mxu0 %v3556
        %v3685 = vpop.f32.mrf.mxu0
        %v3686 = vadd.f32 %v3623, %v3685
        %v3687 = vpop.f32.mrf.mxu0
        %v3688 = vadd.f32 %v3625, %v3687
        %3689 = vdwg.mxu0
        %s3690 = scalar_lea.vmem %s19, 128
        %v3691 = vld [vmem:[%s3690] sm:$0xf]
        %v3692 = vld [vmem:[%s3690 + $0x4] sm:$0xf]
        %v3693 = vld [vmem:[%s3690 + $0x8] sm:$0xf]
        %v3694 = vld [vmem:[%s3690 + $0xc] sm:$0xf]
        %v3695 = vld [vmem:[%s3690 + $0x10] sm:$0xf]
        %v3696 = vld [vmem:[%s3690 + $0x14] sm:$0xf]
        %v3697 = vld [vmem:[%s3690 + $0x18] sm:$0xf]
        %v3698 = vld [vmem:[%s3690 + $0x1c] sm:$0xf]
        %v3699 = vld [vmem:[%s3690 + $0x20] sm:$0xf]
        %v3700 = vld [vmem:[%s3690 + $0x24] sm:$0xf]
        %v3701 = vld [vmem:[%s3690 + $0x28] sm:$0xf]
        %v3702 = vld [vmem:[%s3690 + $0x2c] sm:$0xf]
        %v3703 = vld [vmem:[%s3690 + $0x30] sm:$0xf]
        %v3704 = vld [vmem:[%s3690 + $0x34] sm:$0xf]
        %v3705 = vld [vmem:[%s3690 + $0x38] sm:$0xf]
        %v3706 = vld [vmem:[%s3690 + $0x3c] sm:$0xf]
        %v3707 = vrot.slane %v3556, 1
        %v3725 = vunpack.c.l.b16 %v3691
        %v3726 = vunpack.c.l.b16 %v3692
        %v3727 = vunpack.c.l.b16 %v3693
        %v3728 = vunpack.c.l.b16 %v3694
        %v3729 = vunpack.c.l.b16 %v3695
        %v3730 = vunpack.c.l.b16 %v3696
        %v3731 = vunpack.c.l.b16 %v3697
        %v3732 = vunpack.c.l.b16 %v3698
        %v3733 = vunpack.c.l.b16 %v3699
        %v3734 = vunpack.c.l.b16 %v3700
        %v3735 = vunpack.c.l.b16 %v3701
        %v3736 = vunpack.c.l.b16 %v3702
        %v3737 = vunpack.c.l.b16 %v3703
        %v3738 = vunpack.c.l.b16 %v3704
        %v3739 = vunpack.c.l.b16 %v3705
        %v3740 = vunpack.c.l.b16 %v3706
        %v3741 = vpack.c.b16 %v3726, %v3725
        %v3742 = vpack.c.b16 %v3728, %v3727
        %v3743 = vpack.c.b16 %v3730, %v3729
        %v3744 = vpack.c.b16 %v3732, %v3731
        %v3745 = vpack.c.b16 %v3734, %v3733
        %v3746 = vpack.c.b16 %v3736, %v3735
        %v3747 = vpack.c.b16 %v3738, %v3737
        %v3748 = vpack.c.b16 %v3740, %v3739
        %3757 = vmatpush.bf16.msra.mxu0 %v3748
        %3758 = vmatpush.bf16.msra.mxu0 %v3747
        %3759 = vmatpush.bf16.msra.mxu0 %v3746
        %3760 = vmatpush.bf16.msra.mxu0 %v3745
        %3761 = vmatpush.bf16.msra.mxu0 %v3744
        %3762 = vmatpush.bf16.msra.mxu0 %v3743
        %3763 = vmatpush.bf16.msra.mxu0 %v3742
        %3764 = vmatpush.bf16.msra.mxu0 %v3741
        %3765 = vmatmul.bf16.gmra.mxu0 %v3707
        %v3766 = vpop.f32.mrf.mxu0
        %v3767 = vadd.f32 0.0, %v3766
        %v3768 = vpop.f32.mrf.mxu0
        %v3769 = vadd.f32 0.0, %v3768
        %3770 = vdwg.mxu0
        %v3771 = vadd.f32 %v3686, %v3767
        %v3772 = vadd.f32 %v3688, %v3769
        %v3773 = vld [vmem:[%s21] sm:$0x1]
        %v3775 = vperm.slane %v3773, 0
        %v3777 = vadd.f32 %v3771, %v3775
        %v3778 = vadd.f32 %v3772, %v3775
        %v3779 = vmax.f32 %v3777, 0.0
        %v3780 = vmax.f32 %v3778, 0.0
        %v3781 = vpack.c.bf16 %v3780, %v3779
        %v3782 = vld [vmem:[%s59] sm:$0xf]
        %v3783 = vld [vmem:[%s59 + $0x4] sm:$0x3]
        %v3786 = vunpack.c.l.b16 %v3782
        %v3787 = vunpack.c.l.b16 %v3783
        %v3788 = vpack.c.b16 %v3787, %v3786
        %vm3789 = vcmask 80896
        %v3791 = vsel %vm3789, %v3788, 0
        %vm3793 = vcmask 1044480
        %v3795 = vsel %vm3793, %v3781, 0
        %3797 = vmatpush.bf16.msra.mxu0 0
        %3798 = vmatpush.bf16.msra.mxu0 0
        %3799 = vmatpush.bf16.msra.mxu0 0
        %3800 = vmatpush.bf16.msra.mxu0 0
        %3801 = vmatpush.bf16.msra.mxu0 0
        %3802 = vmatpush.bf16.msra.mxu0 0
        %3803 = vmatpush.bf16.msra.mxu0 0
        %3804 = vmatpush.bf16.msra.mxu0 %v3795
        %3805 = vmatmul.bf16.gmra.mxu0 %v3791
        %v3806 = vpop.f32.mrf.mxu0
        %v3807 = vadd.f32 0.0, %v3806
        %v3808 = vpop.f32.mrf.mxu0
        %v3809 = vadd.f32 0.0, %v3808
        %3810 = vdwg.mxu0
        %v3811 = vpack.c.bf16 %v3807, %v3807
        %v3812 = vpack.c.bf16 %v3809, %v3809
        %v3813 = vld [vmem:[#allocation2] sm:$0xf]
        %v3814 = vld [vmem:[#allocation2 + $0x4] sm:$0xf]
        %v3815 = vld [vmem:[#allocation2 + $0x8] sm:$0xf]
        %v3816 = vld [vmem:[#allocation2 + $0xc] sm:$0xf]
        %v3817 = vld [vmem:[#allocation2 + $0x10] sm:$0xf]
        %v3818 = vld [vmem:[#allocation2 + $0x14] sm:$0xf]
        %v3819 = vld [vmem:[#allocation2 + $0x18] sm:$0xf]
        %v3820 = vld [vmem:[#allocation2 + $0x1c] sm:$0xf]
        %v3821 = vld [vmem:[#allocation2 + $0x20] sm:$0xf]
        %v3822 = vld [vmem:[#allocation2 + $0x24] sm:$0xf]
        %v3823 = vld [vmem:[#allocation2 + $0x28] sm:$0xf]
        %v3824 = vld [vmem:[#allocation2 + $0x2c] sm:$0xf]
        %v3825 = vld [vmem:[#allocation2 + $0x30] sm:$0xf]
        %v3826 = vld [vmem:[#allocation2 + $0x34] sm:$0xf]
        %v3827 = vld [vmem:[#allocation2 + $0x38] sm:$0xf]
        %v3828 = vld [vmem:[#allocation2 + $0x3c] sm:$0xf]
        %s3829 = scalar_lea.vmem [#allocation2], 64
        %v3830 = vld [vmem:[%s3829] sm:$0xf]
        %v3831 = vld [vmem:[%s3829 + $0x4] sm:$0xf]
        %v3832 = vld [vmem:[%s3829 + $0x8] sm:$0xf]
        %v3833 = vld [vmem:[%s3829 + $0xc] sm:$0xf]
        %v3834 = vld [vmem:[%s3829 + $0x10] sm:$0xf]
        %v3835 = vld [vmem:[%s3829 + $0x14] sm:$0xf]
        %v3836 = vld [vmem:[%s3829 + $0x18] sm:$0xf]
        %v3837 = vld [vmem:[%s3829 + $0x1c] sm:$0xf]
        %v3838 = vld [vmem:[%s3829 + $0x20] sm:$0xf]
        %v3839 = vld [vmem:[%s3829 + $0x24] sm:$0xf]
        %v3840 = vld [vmem:[%s3829 + $0x28] sm:$0xf]
        %v3841 = vld [vmem:[%s3829 + $0x2c] sm:$0xf]
        %v3842 = vld [vmem:[%s3829 + $0x30] sm:$0xf]
        %v3843 = vld [vmem:[%s3829 + $0x34] sm:$0xf]
        %v3844 = vld [vmem:[%s3829 + $0x38] sm:$0xf]
        %v3845 = vld [vmem:[%s3829 + $0x3c] sm:$0xf]
        %v3848 = vunpack.c.l.b16 %v3811
        %v3849 = vunpack.c.l.b16 %v3812
        %v3850 = vpack.c.b16 %v3849, %v3848
        %v3852 = vshrl.u32 %v3850, 16
        %v3854 = vshll.u32 %v3850, 16
        %v3856 = vrot.slane %v3854, 1
        %v3857 = vor.u32 %v3852, %v3856
        %v3875 = vunpack.c.l.b16 %v3830
        %v3876 = vunpack.c.l.b16 %v3831
        %v3877 = vunpack.c.l.b16 %v3832
        %v3878 = vunpack.c.l.b16 %v3833
        %v3879 = vunpack.c.l.b16 %v3834
        %v3880 = vunpack.c.l.b16 %v3835
        %v3881 = vunpack.c.l.b16 %v3836
        %v3882 = vunpack.c.l.b16 %v3837
        %v3883 = vunpack.c.l.b16 %v3838
        %v3884 = vunpack.c.l.b16 %v3839
        %v3885 = vunpack.c.l.b16 %v3840
        %v3886 = vunpack.c.l.b16 %v3841
        %v3887 = vunpack.c.l.b16 %v3842
        %v3888 = vunpack.c.l.b16 %v3843
        %v3889 = vunpack.c.l.b16 %v3844
        %v3890 = vunpack.c.l.b16 %v3845
        %v3891 = vpack.c.b16 %v3876, %v3875
        %v3892 = vpack.c.b16 %v3878, %v3877
        %v3893 = vpack.c.b16 %v3880, %v3879
        %v3894 = vpack.c.b16 %v3882, %v3881
        %v3895 = vpack.c.b16 %v3884, %v3883
        %v3896 = vpack.c.b16 %v3886, %v3885
        %v3897 = vpack.c.b16 %v3888, %v3887
        %v3898 = vpack.c.b16 %v3890, %v3889
        %3907 = vmatpush.bf16.msra.mxu0 %v3898
        %3908 = vmatpush.bf16.msra.mxu0 %v3897
        %3909 = vmatpush.bf16.msra.mxu0 %v3896
        %3910 = vmatpush.bf16.msra.mxu0 %v3895
        %3911 = vmatpush.bf16.msra.mxu0 %v3894
        %3912 = vmatpush.bf16.msra.mxu0 %v3893
        %3913 = vmatpush.bf16.msra.mxu0 %v3892
        %3914 = vmatpush.bf16.msra.mxu0 %v3891
        %3915 = vmatmul.bf16.gmra.mxu0 %v3857
        %v3916 = vpop.f32.mrf.mxu0
        %v3917 = vadd.f32 0.0, %v3916
        %v3918 = vpop.f32.mrf.mxu0
        %v3919 = vadd.f32 0.0, %v3918
        %3920 = vdwg.mxu0
        %v3938 = vunpack.c.l.b16 %v3813
        %v3939 = vunpack.c.l.b16 %v3814
        %v3940 = vunpack.c.l.b16 %v3815
        %v3941 = vunpack.c.l.b16 %v3816
        %v3942 = vunpack.c.l.b16 %v3817
        %v3943 = vunpack.c.l.b16 %v3818
        %v3944 = vunpack.c.l.b16 %v3819
        %v3945 = vunpack.c.l.b16 %v3820
        %v3946 = vunpack.c.l.b16 %v3821
        %v3947 = vunpack.c.l.b16 %v3822
        %v3948 = vunpack.c.l.b16 %v3823
        %v3949 = vunpack.c.l.b16 %v3824
        %v3950 = vunpack.c.l.b16 %v3825
        %v3951 = vunpack.c.l.b16 %v3826
        %v3952 = vunpack.c.l.b16 %v3827
        %v3953 = vunpack.c.l.b16 %v3828
        %v3954 = vpack.c.b16 %v3939, %v3938
        %v3955 = vpack.c.b16 %v3941, %v3940
        %v3956 = vpack.c.b16 %v3943, %v3942
        %v3957 = vpack.c.b16 %v3945, %v3944
        %v3958 = vpack.c.b16 %v3947, %v3946
        %v3959 = vpack.c.b16 %v3949, %v3948
        %v3960 = vpack.c.b16 %v3951, %v3950
        %v3961 = vpack.c.b16 %v3953, %v3952
        %3970 = vmatpush.bf16.msra.mxu0 %v3961
        %3971 = vmatpush.bf16.msra.mxu0 %v3960
        %3972 = vmatpush.bf16.msra.mxu0 %v3959
        %3973 = vmatpush.bf16.msra.mxu0 %v3958
        %3974 = vmatpush.bf16.msra.mxu0 %v3957
        %3975 = vmatpush.bf16.msra.mxu0 %v3956
        %3976 = vmatpush.bf16.msra.mxu0 %v3955
        %3977 = vmatpush.bf16.msra.mxu0 %v3954
        %3978 = vmatmul.bf16.gmra.mxu0 %v3850
        %v3979 = vpop.f32.mrf.mxu0
        %v3980 = vadd.f32 %v3917, %v3979
        %v3981 = vpop.f32.mrf.mxu0
        %v3982 = vadd.f32 %v3919, %v3981
        %3983 = vdwg.mxu0
        %s3984 = scalar_lea.vmem [#allocation2], 128
        %v3985 = vld [vmem:[%s3984] sm:$0xf]
        %v3986 = vld [vmem:[%s3984 + $0x4] sm:$0xf]
        %v3987 = vld [vmem:[%s3984 + $0x8] sm:$0xf]
        %v3988 = vld [vmem:[%s3984 + $0xc] sm:$0xf]
        %v3989 = vld [vmem:[%s3984 + $0x10] sm:$0xf]
        %v3990 = vld [vmem:[%s3984 + $0x14] sm:$0xf]
        %v3991 = vld [vmem:[%s3984 + $0x18] sm:$0xf]
        %v3992 = vld [vmem:[%s3984 + $0x1c] sm:$0xf]
        %v3993 = vld [vmem:[%s3984 + $0x20] sm:$0xf]
        %v3994 = vld [vmem:[%s3984 + $0x24] sm:$0xf]
        %v3995 = vld [vmem:[%s3984 + $0x28] sm:$0xf]
        %v3996 = vld [vmem:[%s3984 + $0x2c] sm:$0xf]
        %v3997 = vld [vmem:[%s3984 + $0x30] sm:$0xf]
        %v3998 = vld [vmem:[%s3984 + $0x34] sm:$0xf]
        %v3999 = vld [vmem:[%s3984 + $0x38] sm:$0xf]
        %v4000 = vld [vmem:[%s3984 + $0x3c] sm:$0xf]
        %v4001 = vrot.slane %v3850, 1
        %v4019 = vunpack.c.l.b16 %v3985
        %v4020 = vunpack.c.l.b16 %v3986
        %v4021 = vunpack.c.l.b16 %v3987
        %v4022 = vunpack.c.l.b16 %v3988
        %v4023 = vunpack.c.l.b16 %v3989
        %v4024 = vunpack.c.l.b16 %v3990
        %v4025 = vunpack.c.l.b16 %v3991
        %v4026 = vunpack.c.l.b16 %v3992
        %v4027 = vunpack.c.l.b16 %v3993
        %v4028 = vunpack.c.l.b16 %v3994
        %v4029 = vunpack.c.l.b16 %v3995
        %v4030 = vunpack.c.l.b16 %v3996
        %v4031 = vunpack.c.l.b16 %v3997
        %v4032 = vunpack.c.l.b16 %v3998
        %v4033 = vunpack.c.l.b16 %v3999
        %v4034 = vunpack.c.l.b16 %v4000
        %v4035 = vpack.c.b16 %v4020, %v4019
        %v4036 = vpack.c.b16 %v4022, %v4021
        %v4037 = vpack.c.b16 %v4024, %v4023
        %v4038 = vpack.c.b16 %v4026, %v4025
        %v4039 = vpack.c.b16 %v4028, %v4027
        %v4040 = vpack.c.b16 %v4030, %v4029
        %v4041 = vpack.c.b16 %v4032, %v4031
        %v4042 = vpack.c.b16 %v4034, %v4033
        %4051 = vmatpush.bf16.msra.mxu0 %v4042
        %4052 = vmatpush.bf16.msra.mxu0 %v4041
        %4053 = vmatpush.bf16.msra.mxu0 %v4040
        %4054 = vmatpush.bf16.msra.mxu0 %v4039
        %4055 = vmatpush.bf16.msra.mxu0 %v4038
        %4056 = vmatpush.bf16.msra.mxu0 %v4037
        %4057 = vmatpush.bf16.msra.mxu0 %v4036
        %4058 = vmatpush.bf16.msra.mxu0 %v4035
        %4059 = vmatmul.bf16.gmra.mxu0 %v4001
        %v4060 = vpop.f32.mrf.mxu0
        %v4061 = vadd.f32 0.0, %v4060
        %v4062 = vpop.f32.mrf.mxu0
        %v4063 = vadd.f32 0.0, %v4062
        %4064 = vdwg.mxu0
        %v4065 = vadd.f32 %v3980, %v4061
        %v4066 = vadd.f32 %v3982, %v4063
        %v4067 = vld [vmem:[%s25] sm:$0x1]
        %v4069 = vperm.slane %v4067, 0
        %v4071 = vadd.f32 %v4065, %v4069
        %v4072 = vadd.f32 %v4066, %v4069
        %v4073 = vmax.f32 %v4071, 0.0
        %v4074 = vmax.f32 %v4072, 0.0
        %v4075 = vpack.c.bf16 %v4074, %v4073
        %v4077 = vsel %vm3793, %v4075, 0
        %4079 = vmatpush.bf16.msra.mxu0 0
        %4080 = vmatpush.bf16.msra.mxu0 0
        %4081 = vmatpush.bf16.msra.mxu0 0
        %4082 = vmatpush.bf16.msra.mxu0 0
        %4083 = vmatpush.bf16.msra.mxu0 0
        %4084 = vmatpush.bf16.msra.mxu0 0
        %4085 = vmatpush.bf16.msra.mxu0 0
        %4086 = vmatpush.bf16.msra.mxu0 %v4077
        %4087 = vmatmul.bf16.gmra.mxu0 %v3791
        %v4088 = vpop.f32.mrf.mxu0
        %v4089 = vadd.f32 0.0, %v4088
        %v4090 = vpop.f32.mrf.mxu0
        %v4091 = vadd.f32 0.0, %v4090
        %4092 = vdwg.mxu0
        %v4093 = vpack.c.bf16 %v4089, %v4089
        %v4094 = vpack.c.bf16 %v4091, %v4091
        %v4095 = vld [vmem:[#allocation5] sm:$0xf]
        %v4096 = vld [vmem:[#allocation5 + $0x4] sm:$0xf]
        %v4097 = vld [vmem:[#allocation5 + $0x8] sm:$0xf]
        %v4098 = vld [vmem:[#allocation5 + $0xc] sm:$0xf]
        %v4099 = vld [vmem:[#allocation5 + $0x10] sm:$0xf]
        %v4100 = vld [vmem:[#allocation5 + $0x14] sm:$0xf]
        %v4101 = vld [vmem:[#allocation5 + $0x18] sm:$0xf]
        %v4102 = vld [vmem:[#allocation5 + $0x1c] sm:$0xf]
        %v4103 = vld [vmem:[#allocation5 + $0x20] sm:$0xf]
        %v4104 = vld [vmem:[#allocation5 + $0x24] sm:$0xf]
        %v4105 = vld [vmem:[#allocation5 + $0x28] sm:$0xf]
        %v4106 = vld [vmem:[#allocation5 + $0x2c] sm:$0xf]
        %v4107 = vld [vmem:[#allocation5 + $0x30] sm:$0xf]
        %v4108 = vld [vmem:[#allocation5 + $0x34] sm:$0xf]
        %v4109 = vld [vmem:[#allocation5 + $0x38] sm:$0xf]
        %v4110 = vld [vmem:[#allocation5 + $0x3c] sm:$0xf]
        %s4111 = scalar_lea.vmem [#allocation5], 64
        %v4112 = vld [vmem:[%s4111] sm:$0xf]
        %v4113 = vld [vmem:[%s4111 + $0x4] sm:$0xf]
        %v4114 = vld [vmem:[%s4111 + $0x8] sm:$0xf]
        %v4115 = vld [vmem:[%s4111 + $0xc] sm:$0xf]
        %v4116 = vld [vmem:[%s4111 + $0x10] sm:$0xf]
        %v4117 = vld [vmem:[%s4111 + $0x14] sm:$0xf]
        %v4118 = vld [vmem:[%s4111 + $0x18] sm:$0xf]
        %v4119 = vld [vmem:[%s4111 + $0x1c] sm:$0xf]
        %v4120 = vld [vmem:[%s4111 + $0x20] sm:$0xf]
        %v4121 = vld [vmem:[%s4111 + $0x24] sm:$0xf]
        %v4122 = vld [vmem:[%s4111 + $0x28] sm:$0xf]
        %v4123 = vld [vmem:[%s4111 + $0x2c] sm:$0xf]
        %v4124 = vld [vmem:[%s4111 + $0x30] sm:$0xf]
        %v4125 = vld [vmem:[%s4111 + $0x34] sm:$0xf]
        %v4126 = vld [vmem:[%s4111 + $0x38] sm:$0xf]
        %v4127 = vld [vmem:[%s4111 + $0x3c] sm:$0xf]
        %v4130 = vunpack.c.l.b16 %v4093
        %v4131 = vunpack.c.l.b16 %v4094
        %v4132 = vpack.c.b16 %v4131, %v4130
        %v4134 = vshrl.u32 %v4132, 16
        %v4136 = vshll.u32 %v4132, 16
        %v4138 = vrot.slane %v4136, 1
        %v4139 = vor.u32 %v4134, %v4138
        %v4157 = vunpack.c.l.b16 %v4112
        %v4158 = vunpack.c.l.b16 %v4113
        %v4159 = vunpack.c.l.b16 %v4114
        %v4160 = vunpack.c.l.b16 %v4115
        %v4161 = vunpack.c.l.b16 %v4116
        %v4162 = vunpack.c.l.b16 %v4117
        %v4163 = vunpack.c.l.b16 %v4118
        %v4164 = vunpack.c.l.b16 %v4119
        %v4165 = vunpack.c.l.b16 %v4120
        %v4166 = vunpack.c.l.b16 %v4121
        %v4167 = vunpack.c.l.b16 %v4122
        %v4168 = vunpack.c.l.b16 %v4123
        %v4169 = vunpack.c.l.b16 %v4124
        %v4170 = vunpack.c.l.b16 %v4125
        %v4171 = vunpack.c.l.b16 %v4126
        %v4172 = vunpack.c.l.b16 %v4127
        %v4173 = vpack.c.b16 %v4158, %v4157
        %v4174 = vpack.c.b16 %v4160, %v4159
        %v4175 = vpack.c.b16 %v4162, %v4161
        %v4176 = vpack.c.b16 %v4164, %v4163
        %v4177 = vpack.c.b16 %v4166, %v4165
        %v4178 = vpack.c.b16 %v4168, %v4167
        %v4179 = vpack.c.b16 %v4170, %v4169
        %v4180 = vpack.c.b16 %v4172, %v4171
        %4189 = vmatpush.bf16.msra.mxu0 %v4180
        %4190 = vmatpush.bf16.msra.mxu0 %v4179
        %4191 = vmatpush.bf16.msra.mxu0 %v4178
        %4192 = vmatpush.bf16.msra.mxu0 %v4177
        %4193 = vmatpush.bf16.msra.mxu0 %v4176
        %4194 = vmatpush.bf16.msra.mxu0 %v4175
        %4195 = vmatpush.bf16.msra.mxu0 %v4174
        %4196 = vmatpush.bf16.msra.mxu0 %v4173
        %4197 = vmatmul.bf16.gmra.mxu0 %v4139
        %v4198 = vpop.f32.mrf.mxu0
        %v4199 = vadd.f32 0.0, %v4198
        %v4200 = vpop.f32.mrf.mxu0
        %v4201 = vadd.f32 0.0, %v4200
        %4202 = vdwg.mxu0
        %v4220 = vunpack.c.l.b16 %v4095
        %v4221 = vunpack.c.l.b16 %v4096
        %v4222 = vunpack.c.l.b16 %v4097
        %v4223 = vunpack.c.l.b16 %v4098
        %v4224 = vunpack.c.l.b16 %v4099
        %v4225 = vunpack.c.l.b16 %v4100
        %v4226 = vunpack.c.l.b16 %v4101
        %v4227 = vunpack.c.l.b16 %v4102
        %v4228 = vunpack.c.l.b16 %v4103
        %v4229 = vunpack.c.l.b16 %v4104
        %v4230 = vunpack.c.l.b16 %v4105
        %v4231 = vunpack.c.l.b16 %v4106
        %v4232 = vunpack.c.l.b16 %v4107
        %v4233 = vunpack.c.l.b16 %v4108
        %v4234 = vunpack.c.l.b16 %v4109
        %v4235 = vunpack.c.l.b16 %v4110
        %v4236 = vpack.c.b16 %v4221, %v4220
        %v4237 = vpack.c.b16 %v4223, %v4222
        %v4238 = vpack.c.b16 %v4225, %v4224
        %v4239 = vpack.c.b16 %v4227, %v4226
        %v4240 = vpack.c.b16 %v4229, %v4228
        %v4241 = vpack.c.b16 %v4231, %v4230
        %v4242 = vpack.c.b16 %v4233, %v4232
        %v4243 = vpack.c.b16 %v4235, %v4234
        %4252 = vmatpush.bf16.msra.mxu0 %v4243
        %4253 = vmatpush.bf16.msra.mxu0 %v4242
        %4254 = vmatpush.bf16.msra.mxu0 %v4241
        %4255 = vmatpush.bf16.msra.mxu0 %v4240
        %4256 = vmatpush.bf16.msra.mxu0 %v4239
        %4257 = vmatpush.bf16.msra.mxu0 %v4238
        %4258 = vmatpush.bf16.msra.mxu0 %v4237
        %4259 = vmatpush.bf16.msra.mxu0 %v4236
        %4260 = vmatmul.bf16.gmra.mxu0 %v4132
        %v4261 = vpop.f32.mrf.mxu0
        %v4262 = vadd.f32 %v4199, %v4261
        %v4263 = vpop.f32.mrf.mxu0
        %v4264 = vadd.f32 %v4201, %v4263
        %4265 = vdwg.mxu0
        %s4266 = scalar_lea.vmem [#allocation5], 128
        %v4267 = vld [vmem:[%s4266] sm:$0xf]
        %v4268 = vld [vmem:[%s4266 + $0x4] sm:$0xf]
        %v4269 = vld [vmem:[%s4266 + $0x8] sm:$0xf]
        %v4270 = vld [vmem:[%s4266 + $0xc] sm:$0xf]
        %v4271 = vld [vmem:[%s4266 + $0x10] sm:$0xf]
        %v4272 = vld [vmem:[%s4266 + $0x14] sm:$0xf]
        %v4273 = vld [vmem:[%s4266 + $0x18] sm:$0xf]
        %v4274 = vld [vmem:[%s4266 + $0x1c] sm:$0xf]
        %v4275 = vld [vmem:[%s4266 + $0x20] sm:$0xf]
        %v4276 = vld [vmem:[%s4266 + $0x24] sm:$0xf]
        %v4277 = vld [vmem:[%s4266 + $0x28] sm:$0xf]
        %v4278 = vld [vmem:[%s4266 + $0x2c] sm:$0xf]
        %v4279 = vld [vmem:[%s4266 + $0x30] sm:$0xf]
        %v4280 = vld [vmem:[%s4266 + $0x34] sm:$0xf]
        %v4281 = vld [vmem:[%s4266 + $0x38] sm:$0xf]
        %v4282 = vld [vmem:[%s4266 + $0x3c] sm:$0xf]
        %v4283 = vrot.slane %v4132, 1
        %v4301 = vunpack.c.l.b16 %v4267
        %v4302 = vunpack.c.l.b16 %v4268
        %v4303 = vunpack.c.l.b16 %v4269
        %v4304 = vunpack.c.l.b16 %v4270
        %v4305 = vunpack.c.l.b16 %v4271
        %v4306 = vunpack.c.l.b16 %v4272
        %v4307 = vunpack.c.l.b16 %v4273
        %v4308 = vunpack.c.l.b16 %v4274
        %v4309 = vunpack.c.l.b16 %v4275
        %v4310 = vunpack.c.l.b16 %v4276
        %v4311 = vunpack.c.l.b16 %v4277
        %v4312 = vunpack.c.l.b16 %v4278
        %v4313 = vunpack.c.l.b16 %v4279
        %v4314 = vunpack.c.l.b16 %v4280
        %v4315 = vunpack.c.l.b16 %v4281
        %v4316 = vunpack.c.l.b16 %v4282
        %v4317 = vpack.c.b16 %v4302, %v4301
        %v4318 = vpack.c.b16 %v4304, %v4303
        %v4319 = vpack.c.b16 %v4306, %v4305
        %v4320 = vpack.c.b16 %v4308, %v4307
        %v4321 = vpack.c.b16 %v4310, %v4309
        %v4322 = vpack.c.b16 %v4312, %v4311
        %v4323 = vpack.c.b16 %v4314, %v4313
        %v4324 = vpack.c.b16 %v4316, %v4315
        %4333 = vmatpush.bf16.msra.mxu0 %v4324
        %4334 = vmatpush.bf16.msra.mxu0 %v4323
        %4335 = vmatpush.bf16.msra.mxu0 %v4322
        %4336 = vmatpush.bf16.msra.mxu0 %v4321
        %4337 = vmatpush.bf16.msra.mxu0 %v4320
        %4338 = vmatpush.bf16.msra.mxu0 %v4319
        %4339 = vmatpush.bf16.msra.mxu0 %v4318
        %4340 = vmatpush.bf16.msra.mxu0 %v4317
        %4341 = vmatmul.bf16.gmra.mxu0 %v4283
        %v4342 = vpop.f32.mrf.mxu0
        %v4343 = vadd.f32 0.0, %v4342
        %v4344 = vpop.f32.mrf.mxu0
        %v4345 = vadd.f32 0.0, %v4344
        %4346 = vdwg.mxu0
        %v4347 = vadd.f32 %v4262, %v4343
        %v4348 = vadd.f32 %v4264, %v4345
        %v4349 = vld [vmem:[%s29] sm:$0x1]
        %v4351 = vperm.slane %v4349, 0
        %v4353 = vadd.f32 %v4347, %v4351
        %v4354 = vadd.f32 %v4348, %v4351
        %v4355 = vmax.f32 %v4353, 0.0
        %v4356 = vmax.f32 %v4354, 0.0
        %v4357 = vpack.c.bf16 %v4355, %v4355
        %v4358 = vpack.c.bf16 %v4356, %v4356
        %v4359 = vld [vmem:[#allocation23] sm:$0xf]
        %v4360 = vld [vmem:[#allocation23 + $0x4] sm:$0xf]
        %v4361 = vld [vmem:[#allocation23 + $0x8] sm:$0xf]
        %v4362 = vld [vmem:[#allocation23 + $0xc] sm:$0xf]
        %v4363 = vld [vmem:[#allocation23 + $0x10] sm:$0xf]
        %v4364 = vld [vmem:[#allocation23 + $0x14] sm:$0xf]
        %v4365 = vld [vmem:[#allocation23 + $0x18] sm:$0xf]
        %v4366 = vld [vmem:[#allocation23 + $0x1c] sm:$0xf]
        %v4367 = vld [vmem:[#allocation23 + $0x20] sm:$0xf]
        %v4368 = vld [vmem:[#allocation23 + $0x24] sm:$0xf]
        %v4369 = vld [vmem:[#allocation23 + $0x28] sm:$0xf]
        %v4370 = vld [vmem:[#allocation23 + $0x2c] sm:$0xf]
        %v4371 = vld [vmem:[#allocation23 + $0x30] sm:$0xf]
        %v4372 = vld [vmem:[#allocation23 + $0x34] sm:$0xf]
        %v4373 = vld [vmem:[#allocation23 + $0x38] sm:$0xf]
        %v4374 = vld [vmem:[#allocation23 + $0x3c] sm:$0xf]
        %v4377 = vunpack.c.l.b16 %v4357
        %v4378 = vunpack.c.l.b16 %v4358
        %v4379 = vpack.c.b16 %v4378, %v4377
        %v4397 = vunpack.c.l.b16 %v4359
        %v4398 = vunpack.c.l.b16 %v4360
        %v4399 = vunpack.c.l.b16 %v4361
        %v4400 = vunpack.c.l.b16 %v4362
        %v4401 = vunpack.c.l.b16 %v4363
        %v4402 = vunpack.c.l.b16 %v4364
        %v4403 = vunpack.c.l.b16 %v4365
        %v4404 = vunpack.c.l.b16 %v4366
        %v4405 = vunpack.c.l.b16 %v4367
        %v4406 = vunpack.c.l.b16 %v4368
        %v4407 = vunpack.c.l.b16 %v4369
        %v4408 = vunpack.c.l.b16 %v4370
        %v4409 = vunpack.c.l.b16 %v4371
        %v4410 = vunpack.c.l.b16 %v4372
        %v4411 = vunpack.c.l.b16 %v4373
        %v4412 = vunpack.c.l.b16 %v4374
        %v4413 = vpack.c.b16 %v4398, %v4397
        %v4414 = vpack.c.b16 %v4400, %v4399
        %v4415 = vpack.c.b16 %v4402, %v4401
        %v4416 = vpack.c.b16 %v4404, %v4403
        %v4417 = vpack.c.b16 %v4406, %v4405
        %v4418 = vpack.c.b16 %v4408, %v4407
        %v4419 = vpack.c.b16 %v4410, %v4409
        %v4420 = vpack.c.b16 %v4412, %v4411
        %4429 = vmatpush.bf16.msra.mxu0 %v4420
        %4430 = vmatpush.bf16.msra.mxu0 %v4419
        %4431 = vmatpush.bf16.msra.mxu0 %v4418
        %4432 = vmatpush.bf16.msra.mxu0 %v4417
        %4433 = vmatpush.bf16.msra.mxu0 %v4416
        %4434 = vmatpush.bf16.msra.mxu0 %v4415
        %4435 = vmatpush.bf16.msra.mxu0 %v4414
        %4436 = vmatpush.bf16.msra.mxu0 %v4413
        %4437 = vmatmul.bf16.gmra.mxu0 %v4379
        %v4438 = vpop.f32.mrf.mxu0
        %v4439 = vadd.f32 0.0, %v4438
        %v4440 = vpop.f32.mrf.mxu0
        %v4441 = vadd.f32 0.0, %v4440
        %4442 = vdwg.mxu0
        %v4443 = vpack.c.bf16 %v4439, %v4439
        %v4444 = vpack.c.bf16 %v4441, %v4441
        %v4445 = vunpack.c.l.bf16 %v4357
        %v4446 = vunpack.c.l.bf16 %v4358
        %v4447 = vunpack.c.l.bf16 %v4443
        %v4448 = vunpack.c.l.bf16 %v4444
        %v4449 = vmax.f32 %v4445, %v4447
        %v4450 = vmax.f32 %v4446, %v4448
        %v4451 = vpack.c.bf16 %v4449, %v4449
        %v4452 = vpack.c.bf16 %v4450, %v4450
        %v4453 = vunpack.c.l.bf16 %v4451
        %v4454 = vunpack.c.l.bf16 %v4452
        %v4457 = vrot.slane %v4453, 1
        %v4458 = vrot.slane %v4454, 1
        %v4459 = vsel %vm2636, %v4457, %v4458
        %v4462 = vmax.f32 %v4453, %v4459
        %v4463 = vmax.f32 %v4454, %v4458
        %v4464 = vpack.c.bf16 %v4463, %v4462
        %v4465 = vld [vmem:[#allocation31] sm:$0xf]
        %v4467 = vshrl.u32 %v4464, 16
        %v4469 = vshll.u32 %v4464, 16
        %v4471 = vrot.slane %v4469, 1
        %v4472 = vor.u32 %v4467, %v4471
        %vm4473 = vcmask 64512
        %v4475 = vsel %vm4473, %v4465, 0
        %vm4477 = vcmask 1043456
        %v4479 = vsel %vm4477, %v4472, 0
        %4481 = vmatpush.bf16.msra.mxu0 0
        %4482 = vmatpush.bf16.msra.mxu0 0
        %4483 = vmatpush.bf16.msra.mxu0 0
        %4484 = vmatpush.bf16.msra.mxu0 0
        %4485 = vmatpush.bf16.msra.mxu0 0
        %4486 = vmatpush.bf16.msra.mxu0 0
        %4487 = vmatpush.bf16.msra.mxu0 0
        %4488 = vmatpush.bf16.msra.mxu0 %v4479
        %4489 = vmatmul.bf16.gmra.mxu0 %v4475
        %v4490 = vpop.f32.mrf.mxu0
        %v4491 = vadd.f32 0.0, %v4490
        %v4492 = vpop.f32.mrf.mxu0
        %4493 = vdwg.mxu0
        %v4494 = vpack.c.bf16 %v4491, %v4491
        %v4495 = vld [vmem:[#allocation7] sm:$0xf]
        %v4496 = vld [vmem:[#allocation7 + $0x4] sm:$0xf]
        %v4497 = vld [vmem:[#allocation7 + $0x8] sm:$0xf]
        %v4498 = vld [vmem:[#allocation7 + $0xc] sm:$0xf]
        %v4499 = vld [vmem:[#allocation7 + $0x10] sm:$0xf]
        %v4500 = vld [vmem:[#allocation7 + $0x14] sm:$0xf]
        %v4501 = vld [vmem:[#allocation7 + $0x18] sm:$0xf]
        %v4502 = vld [vmem:[#allocation7 + $0x1c] sm:$0xf]
        %v4503 = vld [vmem:[#allocation7 + $0x20] sm:$0xf]
        %v4504 = vld [vmem:[#allocation7 + $0x24] sm:$0xf]
        %v4505 = vld [vmem:[#allocation7 + $0x28] sm:$0xf]
        %v4506 = vld [vmem:[#allocation7 + $0x2c] sm:$0xf]
        %v4507 = vld [vmem:[#allocation7 + $0x30] sm:$0xf]
        %v4508 = vld [vmem:[#allocation7 + $0x34] sm:$0xf]
        %v4509 = vld [vmem:[#allocation7 + $0x38] sm:$0xf]
        %v4510 = vld [vmem:[#allocation7 + $0x3c] sm:$0xf]
        %s4511 = scalar_lea.vmem [#allocation7], 64
        %v4512 = vld [vmem:[%s4511] sm:$0xf]
        %v4513 = vld [vmem:[%s4511 + $0x4] sm:$0xf]
        %v4514 = vld [vmem:[%s4511 + $0x8] sm:$0xf]
        %v4515 = vld [vmem:[%s4511 + $0xc] sm:$0xf]
        %v4516 = vld [vmem:[%s4511 + $0x10] sm:$0xf]
        %v4517 = vld [vmem:[%s4511 + $0x14] sm:$0xf]
        %v4518 = vld [vmem:[%s4511 + $0x18] sm:$0xf]
        %v4519 = vld [vmem:[%s4511 + $0x1c] sm:$0xf]
        %v4520 = vld [vmem:[%s4511 + $0x20] sm:$0xf]
        %v4521 = vld [vmem:[%s4511 + $0x24] sm:$0xf]
        %v4522 = vld [vmem:[%s4511 + $0x28] sm:$0xf]
        %v4523 = vld [vmem:[%s4511 + $0x2c] sm:$0xf]
        %v4524 = vld [vmem:[%s4511 + $0x30] sm:$0xf]
        %v4525 = vld [vmem:[%s4511 + $0x34] sm:$0xf]
        %v4526 = vld [vmem:[%s4511 + $0x38] sm:$0xf]
        %v4527 = vld [vmem:[%s4511 + $0x3c] sm:$0xf]
        %v4529 = vunpack.c.l.b16 %v4494
        %v4530 = vpack.c.b16 %v4529, %v4529
        %v4532 = vshrl.u32 %v4530, 16
        %v4534 = vshll.u32 %v4530, 16
        %v4536 = vrot.slane %v4534, 1
        %v4537 = vor.u32 %v4532, %v4536
        %v4555 = vunpack.c.l.b16 %v4512
        %v4556 = vunpack.c.l.b16 %v4513
        %v4557 = vunpack.c.l.b16 %v4514
        %v4558 = vunpack.c.l.b16 %v4515
        %v4559 = vunpack.c.l.b16 %v4516
        %v4560 = vunpack.c.l.b16 %v4517
        %v4561 = vunpack.c.l.b16 %v4518
        %v4562 = vunpack.c.l.b16 %v4519
        %v4563 = vunpack.c.l.b16 %v4520
        %v4564 = vunpack.c.l.b16 %v4521
        %v4565 = vunpack.c.l.b16 %v4522
        %v4566 = vunpack.c.l.b16 %v4523
        %v4567 = vunpack.c.l.b16 %v4524
        %v4568 = vunpack.c.l.b16 %v4525
        %v4569 = vunpack.c.l.b16 %v4526
        %v4570 = vunpack.c.l.b16 %v4527
        %v4571 = vpack.c.b16 %v4556, %v4555
        %v4572 = vpack.c.b16 %v4558, %v4557
        %v4573 = vpack.c.b16 %v4560, %v4559
        %v4574 = vpack.c.b16 %v4562, %v4561
        %v4575 = vpack.c.b16 %v4564, %v4563
        %v4576 = vpack.c.b16 %v4566, %v4565
        %v4577 = vpack.c.b16 %v4568, %v4567
        %v4578 = vpack.c.b16 %v4570, %v4569
        %4587 = vmatpush.bf16.msra.mxu0 %v4578
        %4588 = vmatpush.bf16.msra.mxu0 %v4577
        %4589 = vmatpush.bf16.msra.mxu0 %v4576
        %4590 = vmatpush.bf16.msra.mxu0 %v4575
        %4591 = vmatpush.bf16.msra.mxu0 %v4574
        %4592 = vmatpush.bf16.msra.mxu0 %v4573
        %4593 = vmatpush.bf16.msra.mxu0 %v4572
        %4594 = vmatpush.bf16.msra.mxu0 %v4571
        %4595 = vmatmul.bf16.gmra.mxu0 %v4537
        %v4596 = vpop.f32.mrf.mxu0
        %v4597 = vadd.f32 0.0, %v4596
        %v4598 = vpop.f32.mrf.mxu0
        %4599 = vdwg.mxu0
        %v4616 = vunpack.c.l.b16 %v4495
        %v4617 = vunpack.c.l.b16 %v4496
        %v4618 = vunpack.c.l.b16 %v4497
        %v4619 = vunpack.c.l.b16 %v4498
        %v4620 = vunpack.c.l.b16 %v4499
        %v4621 = vunpack.c.l.b16 %v4500
        %v4622 = vunpack.c.l.b16 %v4501
        %v4623 = vunpack.c.l.b16 %v4502
        %v4624 = vunpack.c.l.b16 %v4503
        %v4625 = vunpack.c.l.b16 %v4504
        %v4626 = vunpack.c.l.b16 %v4505
        %v4627 = vunpack.c.l.b16 %v4506
        %v4628 = vunpack.c.l.b16 %v4507
        %v4629 = vunpack.c.l.b16 %v4508
        %v4630 = vunpack.c.l.b16 %v4509
        %v4631 = vunpack.c.l.b16 %v4510
        %v4632 = vpack.c.b16 %v4617, %v4616
        %v4633 = vpack.c.b16 %v4619, %v4618
        %v4634 = vpack.c.b16 %v4621, %v4620
        %v4635 = vpack.c.b16 %v4623, %v4622
        %v4636 = vpack.c.b16 %v4625, %v4624
        %v4637 = vpack.c.b16 %v4627, %v4626
        %v4638 = vpack.c.b16 %v4629, %v4628
        %v4639 = vpack.c.b16 %v4631, %v4630
        %4648 = vmatpush.bf16.msra.mxu0 %v4639
        %4649 = vmatpush.bf16.msra.mxu0 %v4638
        %4650 = vmatpush.bf16.msra.mxu0 %v4637
        %4651 = vmatpush.bf16.msra.mxu0 %v4636
        %4652 = vmatpush.bf16.msra.mxu0 %v4635
        %4653 = vmatpush.bf16.msra.mxu0 %v4634
        %4654 = vmatpush.bf16.msra.mxu0 %v4633
        %4655 = vmatpush.bf16.msra.mxu0 %v4632
        %4656 = vmatmul.bf16.gmra.mxu0 %v4494
        %v4657 = vpop.f32.mrf.mxu0
        %v4658 = vadd.f32 %v4597, %v4657
        %v4659 = vpop.f32.mrf.mxu0
        %4660 = vdwg.mxu0
        %s4661 = scalar_lea.vmem [#allocation7], 128
        %v4662 = vld [vmem:[%s4661] sm:$0xf]
        %v4663 = vld [vmem:[%s4661 + $0x4] sm:$0xf]
        %v4664 = vld [vmem:[%s4661 + $0x8] sm:$0xf]
        %v4665 = vld [vmem:[%s4661 + $0xc] sm:$0xf]
        %v4666 = vld [vmem:[%s4661 + $0x10] sm:$0xf]
        %v4667 = vld [vmem:[%s4661 + $0x14] sm:$0xf]
        %v4668 = vld [vmem:[%s4661 + $0x18] sm:$0xf]
        %v4669 = vld [vmem:[%s4661 + $0x1c] sm:$0xf]
        %v4670 = vld [vmem:[%s4661 + $0x20] sm:$0xf]
        %v4671 = vld [vmem:[%s4661 + $0x24] sm:$0xf]
        %v4672 = vld [vmem:[%s4661 + $0x28] sm:$0xf]
        %v4673 = vld [vmem:[%s4661 + $0x2c] sm:$0xf]
        %v4674 = vld [vmem:[%s4661 + $0x30] sm:$0xf]
        %v4675 = vld [vmem:[%s4661 + $0x34] sm:$0xf]
        %v4676 = vld [vmem:[%s4661 + $0x38] sm:$0xf]
        %v4677 = vld [vmem:[%s4661 + $0x3c] sm:$0xf]
        %v4678 = vrot.slane %v4530, 1
        %v4696 = vunpack.c.l.b16 %v4662
        %v4697 = vunpack.c.l.b16 %v4663
        %v4698 = vunpack.c.l.b16 %v4664
        %v4699 = vunpack.c.l.b16 %v4665
        %v4700 = vunpack.c.l.b16 %v4666
        %v4701 = vunpack.c.l.b16 %v4667
        %v4702 = vunpack.c.l.b16 %v4668
        %v4703 = vunpack.c.l.b16 %v4669
        %v4704 = vunpack.c.l.b16 %v4670
        %v4705 = vunpack.c.l.b16 %v4671
        %v4706 = vunpack.c.l.b16 %v4672
        %v4707 = vunpack.c.l.b16 %v4673
        %v4708 = vunpack.c.l.b16 %v4674
        %v4709 = vunpack.c.l.b16 %v4675
        %v4710 = vunpack.c.l.b16 %v4676
        %v4711 = vunpack.c.l.b16 %v4677
        %v4712 = vpack.c.b16 %v4697, %v4696
        %v4713 = vpack.c.b16 %v4699, %v4698
        %v4714 = vpack.c.b16 %v4701, %v4700
        %v4715 = vpack.c.b16 %v4703, %v4702
        %v4716 = vpack.c.b16 %v4705, %v4704
        %v4717 = vpack.c.b16 %v4707, %v4706
        %v4718 = vpack.c.b16 %v4709, %v4708
        %v4719 = vpack.c.b16 %v4711, %v4710
        %4728 = vmatpush.bf16.msra.mxu0 %v4719
        %4729 = vmatpush.bf16.msra.mxu0 %v4718
        %4730 = vmatpush.bf16.msra.mxu0 %v4717
        %4731 = vmatpush.bf16.msra.mxu0 %v4716
        %4732 = vmatpush.bf16.msra.mxu0 %v4715
        %4733 = vmatpush.bf16.msra.mxu0 %v4714
        %4734 = vmatpush.bf16.msra.mxu0 %v4713
        %4735 = vmatpush.bf16.msra.mxu0 %v4712
        %4736 = vmatmul.bf16.gmra.mxu0 %v4678
        %v4737 = vpop.f32.mrf.mxu0
        %v4738 = vadd.f32 0.0, %v4737
        %v4739 = vpop.f32.mrf.mxu0
        %4740 = vdwg.mxu0
        %v4741 = vadd.f32 %v4658, %v4738
        %v4742 = vld [vmem:[#allocation8] sm:$0x1]
        %v4744 = vperm.slane %v4742, 0
        %v4746 = vadd.f32 %v4741, %v4744
        %v4747 = vmax.f32 %v4746, 0.0
        %v4748 = vpack.c.bf16 %v4747, %v4747
        %v4749 = vld [vmem:[#allocation19] sm:$0xf]
        %vm4750 = vcmask 48128
        %v4752 = vsel %vm4750, %v4749, 0
        %vm4754 = vcmask 1042432
        %v4756 = vsel %vm4754, %v4748, 0
        %4758 = vmatpush.bf16.msra.mxu0 0
        %4759 = vmatpush.bf16.msra.mxu0 0
        %4760 = vmatpush.bf16.msra.mxu0 0
        %4761 = vmatpush.bf16.msra.mxu0 0
        %4762 = vmatpush.bf16.msra.mxu0 0
        %4763 = vmatpush.bf16.msra.mxu0 0
        %4764 = vmatpush.bf16.msra.mxu0 0
        %4765 = vmatpush.bf16.msra.mxu0 %v4756
        %4766 = vmatmul.bf16.gmra.mxu0 %v4752
        %v4767 = vpop.f32.mrf.mxu0
        %v4768 = vadd.f32 0.0, %v4767
        %v4769 = vpop.f32.mrf.mxu0
        %4770 = vdwg.mxu0
        %v4771 = vpack.c.bf16 %v4768, %v4768
        %v4772 = vld [vmem:[#allocation10] sm:$0xf]
        %v4773 = vld [vmem:[#allocation10 + $0x4] sm:$0xf]
        %v4774 = vld [vmem:[#allocation10 + $0x8] sm:$0xf]
        %v4775 = vld [vmem:[#allocation10 + $0xc] sm:$0xf]
        %v4776 = vld [vmem:[#allocation10 + $0x10] sm:$0xf]
        %v4777 = vld [vmem:[#allocation10 + $0x14] sm:$0xf]
        %v4778 = vld [vmem:[#allocation10 + $0x18] sm:$0xf]
        %v4779 = vld [vmem:[#allocation10 + $0x1c] sm:$0xf]
        %v4780 = vld [vmem:[#allocation10 + $0x20] sm:$0xf]
        %v4781 = vld [vmem:[#allocation10 + $0x24] sm:$0xf]
        %v4782 = vld [vmem:[#allocation10 + $0x28] sm:$0xf]
        %v4783 = vld [vmem:[#allocation10 + $0x2c] sm:$0xf]
        %v4784 = vld [vmem:[#allocation10 + $0x30] sm:$0xf]
        %v4785 = vld [vmem:[#allocation10 + $0x34] sm:$0xf]
        %v4786 = vld [vmem:[#allocation10 + $0x38] sm:$0xf]
        %v4787 = vld [vmem:[#allocation10 + $0x3c] sm:$0xf]
        %s4788 = scalar_lea.vmem [#allocation10], 64
        %v4789 = vld [vmem:[%s4788] sm:$0xf]
        %v4790 = vld [vmem:[%s4788 + $0x4] sm:$0xf]
        %v4791 = vld [vmem:[%s4788 + $0x8] sm:$0xf]
        %v4792 = vld [vmem:[%s4788 + $0xc] sm:$0xf]
        %v4793 = vld [vmem:[%s4788 + $0x10] sm:$0xf]
        %v4794 = vld [vmem:[%s4788 + $0x14] sm:$0xf]
        %v4795 = vld [vmem:[%s4788 + $0x18] sm:$0xf]
        %v4796 = vld [vmem:[%s4788 + $0x1c] sm:$0xf]
        %v4797 = vld [vmem:[%s4788 + $0x20] sm:$0xf]
        %v4798 = vld [vmem:[%s4788 + $0x24] sm:$0xf]
        %v4799 = vld [vmem:[%s4788 + $0x28] sm:$0xf]
        %v4800 = vld [vmem:[%s4788 + $0x2c] sm:$0xf]
        %v4801 = vld [vmem:[%s4788 + $0x30] sm:$0xf]
        %v4802 = vld [vmem:[%s4788 + $0x34] sm:$0xf]
        %v4803 = vld [vmem:[%s4788 + $0x38] sm:$0xf]
        %v4804 = vld [vmem:[%s4788 + $0x3c] sm:$0xf]
        %v4806 = vunpack.c.l.b16 %v4771
        %v4807 = vpack.c.b16 %v4806, %v4806
        %v4809 = vshrl.u32 %v4807, 16
        %v4811 = vshll.u32 %v4807, 16
        %v4813 = vrot.slane %v4811, 1
        %v4814 = vor.u32 %v4809, %v4813
        %v4832 = vunpack.c.l.b16 %v4789
        %v4833 = vunpack.c.l.b16 %v4790
        %v4834 = vunpack.c.l.b16 %v4791
        %v4835 = vunpack.c.l.b16 %v4792
        %v4836 = vunpack.c.l.b16 %v4793
        %v4837 = vunpack.c.l.b16 %v4794
        %v4838 = vunpack.c.l.b16 %v4795
        %v4839 = vunpack.c.l.b16 %v4796
        %v4840 = vunpack.c.l.b16 %v4797
        %v4841 = vunpack.c.l.b16 %v4798
        %v4842 = vunpack.c.l.b16 %v4799
        %v4843 = vunpack.c.l.b16 %v4800
        %v4844 = vunpack.c.l.b16 %v4801
        %v4845 = vunpack.c.l.b16 %v4802
        %v4846 = vunpack.c.l.b16 %v4803
        %v4847 = vunpack.c.l.b16 %v4804
        %v4848 = vpack.c.b16 %v4833, %v4832
        %v4849 = vpack.c.b16 %v4835, %v4834
        %v4850 = vpack.c.b16 %v4837, %v4836
        %v4851 = vpack.c.b16 %v4839, %v4838
        %v4852 = vpack.c.b16 %v4841, %v4840
        %v4853 = vpack.c.b16 %v4843, %v4842
        %v4854 = vpack.c.b16 %v4845, %v4844
        %v4855 = vpack.c.b16 %v4847, %v4846
        %4864 = vmatpush.bf16.msra.mxu0 %v4855
        %4865 = vmatpush.bf16.msra.mxu0 %v4854
        %4866 = vmatpush.bf16.msra.mxu0 %v4853
        %4867 = vmatpush.bf16.msra.mxu0 %v4852
        %4868 = vmatpush.bf16.msra.mxu0 %v4851
        %4869 = vmatpush.bf16.msra.mxu0 %v4850
        %4870 = vmatpush.bf16.msra.mxu0 %v4849
        %4871 = vmatpush.bf16.msra.mxu0 %v4848
        %4872 = vmatmul.bf16.gmra.mxu0 %v4814
        %v4873 = vpop.f32.mrf.mxu0
        %v4874 = vadd.f32 0.0, %v4873
        %v4875 = vpop.f32.mrf.mxu0
        %4876 = vdwg.mxu0
        %v4893 = vunpack.c.l.b16 %v4772
        %v4894 = vunpack.c.l.b16 %v4773
        %v4895 = vunpack.c.l.b16 %v4774
        %v4896 = vunpack.c.l.b16 %v4775
        %v4897 = vunpack.c.l.b16 %v4776
        %v4898 = vunpack.c.l.b16 %v4777
        %v4899 = vunpack.c.l.b16 %v4778
        %v4900 = vunpack.c.l.b16 %v4779
        %v4901 = vunpack.c.l.b16 %v4780
        %v4902 = vunpack.c.l.b16 %v4781
        %v4903 = vunpack.c.l.b16 %v4782
        %v4904 = vunpack.c.l.b16 %v4783
        %v4905 = vunpack.c.l.b16 %v4784
        %v4906 = vunpack.c.l.b16 %v4785
        %v4907 = vunpack.c.l.b16 %v4786
        %v4908 = vunpack.c.l.b16 %v4787
        %v4909 = vpack.c.b16 %v4894, %v4893
        %v4910 = vpack.c.b16 %v4896, %v4895
        %v4911 = vpack.c.b16 %v4898, %v4897
        %v4912 = vpack.c.b16 %v4900, %v4899
        %v4913 = vpack.c.b16 %v4902, %v4901
        %v4914 = vpack.c.b16 %v4904, %v4903
        %v4915 = vpack.c.b16 %v4906, %v4905
        %v4916 = vpack.c.b16 %v4908, %v4907
        %4925 = vmatpush.bf16.msra.mxu0 %v4916
        %4926 = vmatpush.bf16.msra.mxu0 %v4915
        %4927 = vmatpush.bf16.msra.mxu0 %v4914
        %4928 = vmatpush.bf16.msra.mxu0 %v4913
        %4929 = vmatpush.bf16.msra.mxu0 %v4912
        %4930 = vmatpush.bf16.msra.mxu0 %v4911
        %4931 = vmatpush.bf16.msra.mxu0 %v4910
        %4932 = vmatpush.bf16.msra.mxu0 %v4909
        %4933 = vmatmul.bf16.gmra.mxu0 %v4771
        %v4934 = vpop.f32.mrf.mxu0
        %v4935 = vadd.f32 %v4874, %v4934
        %v4936 = vpop.f32.mrf.mxu0
        %4937 = vdwg.mxu0
        %s4938 = scalar_lea.vmem [#allocation10], 128
        %v4939 = vld [vmem:[%s4938] sm:$0xf]
        %v4940 = vld [vmem:[%s4938 + $0x4] sm:$0xf]
        %v4941 = vld [vmem:[%s4938 + $0x8] sm:$0xf]
        %v4942 = vld [vmem:[%s4938 + $0xc] sm:$0xf]
        %v4943 = vld [vmem:[%s4938 + $0x10] sm:$0xf]
        %v4944 = vld [vmem:[%s4938 + $0x14] sm:$0xf]
        %v4945 = vld [vmem:[%s4938 + $0x18] sm:$0xf]
        %v4946 = vld [vmem:[%s4938 + $0x1c] sm:$0xf]
        %v4947 = vld [vmem:[%s4938 + $0x20] sm:$0xf]
        %v4948 = vld [vmem:[%s4938 + $0x24] sm:$0xf]
        %v4949 = vld [vmem:[%s4938 + $0x28] sm:$0xf]
        %v4950 = vld [vmem:[%s4938 + $0x2c] sm:$0xf]
        %v4951 = vld [vmem:[%s4938 + $0x30] sm:$0xf]
        %v4952 = vld [vmem:[%s4938 + $0x34] sm:$0xf]
        %v4953 = vld [vmem:[%s4938 + $0x38] sm:$0xf]
        %v4954 = vld [vmem:[%s4938 + $0x3c] sm:$0xf]
        %v4955 = vrot.slane %v4807, 1
        %v4973 = vunpack.c.l.b16 %v4939
        %v4974 = vunpack.c.l.b16 %v4940
        %v4975 = vunpack.c.l.b16 %v4941
        %v4976 = vunpack.c.l.b16 %v4942
        %v4977 = vunpack.c.l.b16 %v4943
        %v4978 = vunpack.c.l.b16 %v4944
        %v4979 = vunpack.c.l.b16 %v4945
        %v4980 = vunpack.c.l.b16 %v4946
        %v4981 = vunpack.c.l.b16 %v4947
        %v4982 = vunpack.c.l.b16 %v4948
        %v4983 = vunpack.c.l.b16 %v4949
        %v4984 = vunpack.c.l.b16 %v4950
        %v4985 = vunpack.c.l.b16 %v4951
        %v4986 = vunpack.c.l.b16 %v4952
        %v4987 = vunpack.c.l.b16 %v4953
        %v4988 = vunpack.c.l.b16 %v4954
        %v4989 = vpack.c.b16 %v4974, %v4973
        %v4990 = vpack.c.b16 %v4976, %v4975
        %v4991 = vpack.c.b16 %v4978, %v4977
        %v4992 = vpack.c.b16 %v4980, %v4979
        %v4993 = vpack.c.b16 %v4982, %v4981
        %v4994 = vpack.c.b16 %v4984, %v4983
        %v4995 = vpack.c.b16 %v4986, %v4985
        %v4996 = vpack.c.b16 %v4988, %v4987
        %5005 = vmatpush.bf16.msra.mxu0 %v4996
        %5006 = vmatpush.bf16.msra.mxu0 %v4995
        %5007 = vmatpush.bf16.msra.mxu0 %v4994
        %5008 = vmatpush.bf16.msra.mxu0 %v4993
        %5009 = vmatpush.bf16.msra.mxu0 %v4992
        %5010 = vmatpush.bf16.msra.mxu0 %v4991
        %5011 = vmatpush.bf16.msra.mxu0 %v4990
        %5012 = vmatpush.bf16.msra.mxu0 %v4989
        %5013 = vmatmul.bf16.gmra.mxu0 %v4955
        %v5014 = vpop.f32.mrf.mxu0
        %v5015 = vadd.f32 0.0, %v5014
        %v5016 = vpop.f32.mrf.mxu0
        %5017 = vdwg.mxu0
        %v5018 = vadd.f32 %v4935, %v5015
        %v5019 = vld [vmem:[#allocation11] sm:$0x1]
        %v5021 = vperm.slane %v5019, 0
        %v5023 = vadd.f32 %v5018, %v5021
        %v5024 = vmax.f32 %v5023, 0.0
        %v5025 = vpack.c.bf16 %v5024, %v5024
        %v5027 = vsel %vm4754, %v5025, 0
        %5029 = vmatpush.bf16.msra.mxu0 0
        %5030 = vmatpush.bf16.msra.mxu0 0
        %5031 = vmatpush.bf16.msra.mxu0 0
        %5032 = vmatpush.bf16.msra.mxu0 0
        %5033 = vmatpush.bf16.msra.mxu0 0
        %5034 = vmatpush.bf16.msra.mxu0 0
        %5035 = vmatpush.bf16.msra.mxu0 0
        %5036 = vmatpush.bf16.msra.mxu0 %v5027
        %5037 = vmatmul.bf16.gmra.mxu0 %v4752
        %v5038 = vpop.f32.mrf.mxu0
        %v5039 = vadd.f32 0.0, %v5038
        %v5040 = vpop.f32.mrf.mxu0
        %5041 = vdwg.mxu0
        %v5042 = vpack.c.bf16 %v5039, %v5039
        %v5043 = vld [vmem:[#allocation13] sm:$0xf]
        %v5044 = vld [vmem:[#allocation13 + $0x4] sm:$0xf]
        %v5045 = vld [vmem:[#allocation13 + $0x8] sm:$0xf]
        %v5046 = vld [vmem:[#allocation13 + $0xc] sm:$0xf]
        %v5047 = vld [vmem:[#allocation13 + $0x10] sm:$0xf]
        %v5048 = vld [vmem:[#allocation13 + $0x14] sm:$0xf]
        %v5049 = vld [vmem:[#allocation13 + $0x18] sm:$0xf]
        %v5050 = vld [vmem:[#allocation13 + $0x1c] sm:$0xf]
        %v5051 = vld [vmem:[#allocation13 + $0x20] sm:$0xf]
        %v5052 = vld [vmem:[#allocation13 + $0x24] sm:$0xf]
        %v5053 = vld [vmem:[#allocation13 + $0x28] sm:$0xf]
        %v5054 = vld [vmem:[#allocation13 + $0x2c] sm:$0xf]
        %v5055 = vld [vmem:[#allocation13 + $0x30] sm:$0xf]
        %v5056 = vld [vmem:[#allocation13 + $0x34] sm:$0xf]
        %v5057 = vld [vmem:[#allocation13 + $0x38] sm:$0xf]
        %v5058 = vld [vmem:[#allocation13 + $0x3c] sm:$0xf]
        %s5059 = scalar_lea.vmem [#allocation13], 64
        %v5060 = vld [vmem:[%s5059] sm:$0xf]
        %v5061 = vld [vmem:[%s5059 + $0x4] sm:$0xf]
        %v5062 = vld [vmem:[%s5059 + $0x8] sm:$0xf]
        %v5063 = vld [vmem:[%s5059 + $0xc] sm:$0xf]
        %v5064 = vld [vmem:[%s5059 + $0x10] sm:$0xf]
        %v5065 = vld [vmem:[%s5059 + $0x14] sm:$0xf]
        %v5066 = vld [vmem:[%s5059 + $0x18] sm:$0xf]
        %v5067 = vld [vmem:[%s5059 + $0x1c] sm:$0xf]
        %v5068 = vld [vmem:[%s5059 + $0x20] sm:$0xf]
        %v5069 = vld [vmem:[%s5059 + $0x24] sm:$0xf]
        %v5070 = vld [vmem:[%s5059 + $0x28] sm:$0xf]
        %v5071 = vld [vmem:[%s5059 + $0x2c] sm:$0xf]
        %v5072 = vld [vmem:[%s5059 + $0x30] sm:$0xf]
        %v5073 = vld [vmem:[%s5059 + $0x34] sm:$0xf]
        %v5074 = vld [vmem:[%s5059 + $0x38] sm:$0xf]
        %v5075 = vld [vmem:[%s5059 + $0x3c] sm:$0xf]
        %v5077 = vunpack.c.l.b16 %v5042
        %v5078 = vpack.c.b16 %v5077, %v5077
        %v5080 = vshrl.u32 %v5078, 16
        %v5082 = vshll.u32 %v5078, 16
        %v5084 = vrot.slane %v5082, 1
        %v5085 = vor.u32 %v5080, %v5084
        %v5103 = vunpack.c.l.b16 %v5060
        %v5104 = vunpack.c.l.b16 %v5061
        %v5105 = vunpack.c.l.b16 %v5062
        %v5106 = vunpack.c.l.b16 %v5063
        %v5107 = vunpack.c.l.b16 %v5064
        %v5108 = vunpack.c.l.b16 %v5065
        %v5109 = vunpack.c.l.b16 %v5066
        %v5110 = vunpack.c.l.b16 %v5067
        %v5111 = vunpack.c.l.b16 %v5068
        %v5112 = vunpack.c.l.b16 %v5069
        %v5113 = vunpack.c.l.b16 %v5070
        %v5114 = vunpack.c.l.b16 %v5071
        %v5115 = vunpack.c.l.b16 %v5072
        %v5116 = vunpack.c.l.b16 %v5073
        %v5117 = vunpack.c.l.b16 %v5074
        %v5118 = vunpack.c.l.b16 %v5075
        %v5119 = vpack.c.b16 %v5104, %v5103
        %v5120 = vpack.c.b16 %v5106, %v5105
        %v5121 = vpack.c.b16 %v5108, %v5107
        %v5122 = vpack.c.b16 %v5110, %v5109
        %v5123 = vpack.c.b16 %v5112, %v5111
        %v5124 = vpack.c.b16 %v5114, %v5113
        %v5125 = vpack.c.b16 %v5116, %v5115
        %v5126 = vpack.c.b16 %v5118, %v5117
        %5135 = vmatpush.bf16.msra.mxu0 %v5126
        %5136 = vmatpush.bf16.msra.mxu0 %v5125
        %5137 = vmatpush.bf16.msra.mxu0 %v5124
        %5138 = vmatpush.bf16.msra.mxu0 %v5123
        %5139 = vmatpush.bf16.msra.mxu0 %v5122
        %5140 = vmatpush.bf16.msra.mxu0 %v5121
        %5141 = vmatpush.bf16.msra.mxu0 %v5120
        %5142 = vmatpush.bf16.msra.mxu0 %v5119
        %5143 = vmatmul.bf16.gmra.mxu0 %v5085
        %v5144 = vpop.f32.mrf.mxu0
        %v5145 = vadd.f32 0.0, %v5144
        %v5146 = vpop.f32.mrf.mxu0
        %5147 = vdwg.mxu0
        %v5164 = vunpack.c.l.b16 %v5043
        %v5165 = vunpack.c.l.b16 %v5044
        %v5166 = vunpack.c.l.b16 %v5045
        %v5167 = vunpack.c.l.b16 %v5046
        %v5168 = vunpack.c.l.b16 %v5047
        %v5169 = vunpack.c.l.b16 %v5048
        %v5170 = vunpack.c.l.b16 %v5049
        %v5171 = vunpack.c.l.b16 %v5050
        %v5172 = vunpack.c.l.b16 %v5051
        %v5173 = vunpack.c.l.b16 %v5052
        %v5174 = vunpack.c.l.b16 %v5053
        %v5175 = vunpack.c.l.b16 %v5054
        %v5176 = vunpack.c.l.b16 %v5055
        %v5177 = vunpack.c.l.b16 %v5056
        %v5178 = vunpack.c.l.b16 %v5057
        %v5179 = vunpack.c.l.b16 %v5058
        %v5180 = vpack.c.b16 %v5165, %v5164
        %v5181 = vpack.c.b16 %v5167, %v5166
        %v5182 = vpack.c.b16 %v5169, %v5168
        %v5183 = vpack.c.b16 %v5171, %v5170
        %v5184 = vpack.c.b16 %v5173, %v5172
        %v5185 = vpack.c.b16 %v5175, %v5174
        %v5186 = vpack.c.b16 %v5177, %v5176
        %v5187 = vpack.c.b16 %v5179, %v5178
        %5196 = vmatpush.bf16.msra.mxu0 %v5187
        %5197 = vmatpush.bf16.msra.mxu0 %v5186
        %5198 = vmatpush.bf16.msra.mxu0 %v5185
        %5199 = vmatpush.bf16.msra.mxu0 %v5184
        %5200 = vmatpush.bf16.msra.mxu0 %v5183
        %5201 = vmatpush.bf16.msra.mxu0 %v5182
        %5202 = vmatpush.bf16.msra.mxu0 %v5181
        %5203 = vmatpush.bf16.msra.mxu0 %v5180
        %5204 = vmatmul.bf16.gmra.mxu0 %v5042
        %v5205 = vpop.f32.mrf.mxu0
        %v5206 = vadd.f32 %v5145, %v5205
        %v5207 = vpop.f32.mrf.mxu0
        %5208 = vdwg.mxu0
        %s5209 = scalar_lea.vmem [#allocation13], 128
        %v5210 = vld [vmem:[%s5209] sm:$0xf]
        %v5211 = vld [vmem:[%s5209 + $0x4] sm:$0xf]
        %v5212 = vld [vmem:[%s5209 + $0x8] sm:$0xf]
        %v5213 = vld [vmem:[%s5209 + $0xc] sm:$0xf]
        %v5214 = vld [vmem:[%s5209 + $0x10] sm:$0xf]
        %v5215 = vld [vmem:[%s5209 + $0x14] sm:$0xf]
        %v5216 = vld [vmem:[%s5209 + $0x18] sm:$0xf]
        %v5217 = vld [vmem:[%s5209 + $0x1c] sm:$0xf]
        %v5218 = vld [vmem:[%s5209 + $0x20] sm:$0xf]
        %v5219 = vld [vmem:[%s5209 + $0x24] sm:$0xf]
        %v5220 = vld [vmem:[%s5209 + $0x28] sm:$0xf]
        %v5221 = vld [vmem:[%s5209 + $0x2c] sm:$0xf]
        %v5222 = vld [vmem:[%s5209 + $0x30] sm:$0xf]
        %v5223 = vld [vmem:[%s5209 + $0x34] sm:$0xf]
        %v5224 = vld [vmem:[%s5209 + $0x38] sm:$0xf]
        %v5225 = vld [vmem:[%s5209 + $0x3c] sm:$0xf]
        %v5226 = vrot.slane %v5078, 1
        %v5244 = vunpack.c.l.b16 %v5210
        %v5245 = vunpack.c.l.b16 %v5211
        %v5246 = vunpack.c.l.b16 %v5212
        %v5247 = vunpack.c.l.b16 %v5213
        %v5248 = vunpack.c.l.b16 %v5214
        %v5249 = vunpack.c.l.b16 %v5215
        %v5250 = vunpack.c.l.b16 %v5216
        %v5251 = vunpack.c.l.b16 %v5217
        %v5252 = vunpack.c.l.b16 %v5218
        %v5253 = vunpack.c.l.b16 %v5219
        %v5254 = vunpack.c.l.b16 %v5220
        %v5255 = vunpack.c.l.b16 %v5221
        %v5256 = vunpack.c.l.b16 %v5222
        %v5257 = vunpack.c.l.b16 %v5223
        %v5258 = vunpack.c.l.b16 %v5224
        %v5259 = vunpack.c.l.b16 %v5225
        %v5260 = vpack.c.b16 %v5245, %v5244
        %v5261 = vpack.c.b16 %v5247, %v5246
        %v5262 = vpack.c.b16 %v5249, %v5248
        %v5263 = vpack.c.b16 %v5251, %v5250
        %v5264 = vpack.c.b16 %v5253, %v5252
        %v5265 = vpack.c.b16 %v5255, %v5254
        %v5266 = vpack.c.b16 %v5257, %v5256
        %v5267 = vpack.c.b16 %v5259, %v5258
        %5276 = vmatpush.bf16.msra.mxu0 %v5267
        %5277 = vmatpush.bf16.msra.mxu0 %v5266
        %5278 = vmatpush.bf16.msra.mxu0 %v5265
        %5279 = vmatpush.bf16.msra.mxu0 %v5264
        %5280 = vmatpush.bf16.msra.mxu0 %v5263
        %5281 = vmatpush.bf16.msra.mxu0 %v5262
        %5282 = vmatpush.bf16.msra.mxu0 %v5261
        %5283 = vmatpush.bf16.msra.mxu0 %v5260
        %5284 = vmatmul.bf16.gmra.mxu0 %v5226
        %v5285 = vpop.f32.mrf.mxu0
        %v5286 = vadd.f32 0.0, %v5285
        %v5287 = vpop.f32.mrf.mxu0
        %5288 = vdwg.mxu0
        %v5289 = vadd.f32 %v5206, %v5286
        %v5290 = vld [vmem:[#allocation14] sm:$0x1]
        %v5292 = vperm.slane %v5290, 0
        %v5294 = vadd.f32 %v5289, %v5292
        %v5295 = vmax.f32 %v5294, 0.0
        %v5296 = vpack.c.bf16 %v5295, %v5295
        %v5297 = vld [vmem:[#allocation25] sm:$0xf]
        %v5298 = vld [vmem:[#allocation25 + $0x4] sm:$0xf]
        %v5299 = vld [vmem:[#allocation25 + $0x8] sm:$0xf]
        %v5300 = vld [vmem:[#allocation25 + $0xc] sm:$0xf]
        %v5301 = vld [vmem:[#allocation25 + $0x10] sm:$0xf]
        %v5302 = vld [vmem:[#allocation25 + $0x14] sm:$0xf]
        %v5303 = vld [vmem:[#allocation25 + $0x18] sm:$0xf]
        %v5304 = vld [vmem:[#allocation25 + $0x1c] sm:$0xf]
        %v5305 = vld [vmem:[#allocation25 + $0x20] sm:$0xf]
        %v5306 = vld [vmem:[#allocation25 + $0x24] sm:$0xf]
        %v5307 = vld [vmem:[#allocation25 + $0x28] sm:$0xf]
        %v5308 = vld [vmem:[#allocation25 + $0x2c] sm:$0xf]
        %v5309 = vld [vmem:[#allocation25 + $0x30] sm:$0xf]
        %v5310 = vld [vmem:[#allocation25 + $0x34] sm:$0xf]
        %v5311 = vld [vmem:[#allocation25 + $0x38] sm:$0xf]
        %v5312 = vld [vmem:[#allocation25 + $0x3c] sm:$0xf]
        %v5329 = vunpack.c.l.b16 %v5297
        %v5330 = vunpack.c.l.b16 %v5298
        %v5331 = vunpack.c.l.b16 %v5299
        %v5332 = vunpack.c.l.b16 %v5300
        %v5333 = vunpack.c.l.b16 %v5301
        %v5334 = vunpack.c.l.b16 %v5302
        %v5335 = vunpack.c.l.b16 %v5303
        %v5336 = vunpack.c.l.b16 %v5304
        %v5337 = vunpack.c.l.b16 %v5305
        %v5338 = vunpack.c.l.b16 %v5306
        %v5339 = vunpack.c.l.b16 %v5307
        %v5340 = vunpack.c.l.b16 %v5308
        %v5341 = vunpack.c.l.b16 %v5309
        %v5342 = vunpack.c.l.b16 %v5310
        %v5343 = vunpack.c.l.b16 %v5311
        %v5344 = vunpack.c.l.b16 %v5312
        %v5345 = vpack.c.b16 %v5330, %v5329
        %v5346 = vpack.c.b16 %v5332, %v5331
        %v5347 = vpack.c.b16 %v5334, %v5333
        %v5348 = vpack.c.b16 %v5336, %v5335
        %v5349 = vpack.c.b16 %v5338, %v5337
        %v5350 = vpack.c.b16 %v5340, %v5339
        %v5351 = vpack.c.b16 %v5342, %v5341
        %v5352 = vpack.c.b16 %v5344, %v5343
        %5361 = vmatpush.bf16.msra.mxu0 %v5352
        %5362 = vmatpush.bf16.msra.mxu0 %v5351
        %5363 = vmatpush.bf16.msra.mxu0 %v5350
        %5364 = vmatpush.bf16.msra.mxu0 %v5349
        %5365 = vmatpush.bf16.msra.mxu0 %v5348
        %5366 = vmatpush.bf16.msra.mxu0 %v5347
        %5367 = vmatpush.bf16.msra.mxu0 %v5346
        %5368 = vmatpush.bf16.msra.mxu0 %v5345
        %5369 = vmatmul.bf16.gmra.mxu0 %v5296
        %v5370 = vpop.f32.mrf.mxu0
        %v5371 = vadd.f32 0.0, %v5370
        %v5372 = vpop.f32.mrf.mxu0
        %5373 = vdwg.mxu0
        %v5374 = vpack.c.bf16 %v5371, %v5371
        %v5375 = vunpack.c.l.bf16 %v5296
        %v5376 = vunpack.c.l.bf16 %v5374
        %v5377 = vmax.f32 %v5375, %v5376
        %v5378 = vpack.c.bf16 %v5377, %v5377
        %v5379 = vunpack.c.l.bf16 %v5378
        %v5381 = vrot.slane %v5379, 1
        %v5383 = vmax.f32 %v5379, %v5381
        %v5384 = vpack.c.bf16 %v5383, %v5383
        %v5385 = vld [vmem:[%s81] sm:$0x7]
        %v5387 = vshrl.u32 %v5384, 16
        %v5389 = vshll.u32 %v5384, 16
        %v5391 = vrot.slane %v5389, 1
        %v5392 = vor.u32 %v5387, %v5391
        %vm5393 = vcmask 31744
        %v5395 = vsel %vm5393, %v5385, 0
        %vm5397 = vcmask 1041408
        %v5399 = vsel %vm5397, %v5392, 0
        %5401 = vmatpush.bf16.msra.mxu0 0
        %5402 = vmatpush.bf16.msra.mxu0 0
        %5403 = vmatpush.bf16.msra.mxu0 0
        %5404 = vmatpush.bf16.msra.mxu0 0
        %5405 = vmatpush.bf16.msra.mxu0 0
        %5406 = vmatpush.bf16.msra.mxu0 0
        %5407 = vmatpush.bf16.msra.mxu0 0
        %5408 = vmatpush.bf16.msra.mxu0 %v5399
        %5409 = vmatmul.bf16.gmra.mxu0 %v5395
        %v5410 = vpop.f32.mrf.mxu0
        %v5411 = vadd.f32 0.0, %v5410
        %v5412 = vpop.f32.mrf.mxu0
        %5413 = vdwg.mxu0
        %v5414 = vpack.c.bf16 %v5411, %v5411
        %v5415 = vld [vmem:[%s43] sm:$0xf]
        %v5416 = vld [vmem:[%s43 + $0x4] sm:$0xf]
        %v5417 = vld [vmem:[%s43 + $0x8] sm:$0xf]
        %v5418 = vld [vmem:[%s43 + $0xc] sm:$0xf]
        %v5419 = vld [vmem:[%s43 + $0x10] sm:$0xf]
        %v5420 = vld [vmem:[%s43 + $0x14] sm:$0xf]
        %v5421 = vld [vmem:[%s43 + $0x18] sm:$0xf]
        %v5422 = vld [vmem:[%s43 + $0x1c] sm:$0xf]
        %v5423 = vld [vmem:[%s43 + $0x20] sm:$0xf]
        %v5424 = vld [vmem:[%s43 + $0x24] sm:$0xf]
        %v5425 = vld [vmem:[%s43 + $0x28] sm:$0xf]
        %v5426 = vld [vmem:[%s43 + $0x2c] sm:$0xf]
        %v5427 = vld [vmem:[%s43 + $0x30] sm:$0xf]
        %v5428 = vld [vmem:[%s43 + $0x34] sm:$0xf]
        %v5429 = vld [vmem:[%s43 + $0x38] sm:$0xf]
        %v5430 = vld [vmem:[%s43 + $0x3c] sm:$0xf]
        %s5431 = scalar_lea.vmem %s43, 64
        %v5432 = vld [vmem:[%s5431] sm:$0xf]
        %v5433 = vld [vmem:[%s5431 + $0x4] sm:$0xf]
        %v5434 = vld [vmem:[%s5431 + $0x8] sm:$0xf]
        %v5435 = vld [vmem:[%s5431 + $0xc] sm:$0xf]
        %v5436 = vld [vmem:[%s5431 + $0x10] sm:$0xf]
        %v5437 = vld [vmem:[%s5431 + $0x14] sm:$0xf]
        %v5438 = vld [vmem:[%s5431 + $0x18] sm:$0xf]
        %v5439 = vld [vmem:[%s5431 + $0x1c] sm:$0xf]
        %v5440 = vld [vmem:[%s5431 + $0x20] sm:$0xf]
        %v5441 = vld [vmem:[%s5431 + $0x24] sm:$0xf]
        %v5442 = vld [vmem:[%s5431 + $0x28] sm:$0xf]
        %v5443 = vld [vmem:[%s5431 + $0x2c] sm:$0xf]
        %v5444 = vld [vmem:[%s5431 + $0x30] sm:$0xf]
        %v5445 = vld [vmem:[%s5431 + $0x34] sm:$0xf]
        %v5446 = vld [vmem:[%s5431 + $0x38] sm:$0xf]
        %v5447 = vld [vmem:[%s5431 + $0x3c] sm:$0xf]
        %v5449 = vunpack.c.l.b16 %v5414
        %v5450 = vpack.c.b16 %v5449, %v5449
        %v5452 = vshrl.u32 %v5450, 16
        %v5454 = vshll.u32 %v5450, 16
        %v5456 = vrot.slane %v5454, 1
        %v5457 = vor.u32 %v5452, %v5456
        %v5475 = vunpack.c.l.b16 %v5432
        %v5476 = vunpack.c.l.b16 %v5433
        %v5477 = vunpack.c.l.b16 %v5434
        %v5478 = vunpack.c.l.b16 %v5435
        %v5479 = vunpack.c.l.b16 %v5436
        %v5480 = vunpack.c.l.b16 %v5437
        %v5481 = vunpack.c.l.b16 %v5438
        %v5482 = vunpack.c.l.b16 %v5439
        %v5483 = vunpack.c.l.b16 %v5440
        %v5484 = vunpack.c.l.b16 %v5441
        %v5485 = vunpack.c.l.b16 %v5442
        %v5486 = vunpack.c.l.b16 %v5443
        %v5487 = vunpack.c.l.b16 %v5444
        %v5488 = vunpack.c.l.b16 %v5445
        %v5489 = vunpack.c.l.b16 %v5446
        %v5490 = vunpack.c.l.b16 %v5447
        %v5491 = vpack.c.b16 %v5476, %v5475
        %v5492 = vpack.c.b16 %v5478, %v5477
        %v5493 = vpack.c.b16 %v5480, %v5479
        %v5494 = vpack.c.b16 %v5482, %v5481
        %v5495 = vpack.c.b16 %v5484, %v5483
        %v5496 = vpack.c.b16 %v5486, %v5485
        %v5497 = vpack.c.b16 %v5488, %v5487
        %v5498 = vpack.c.b16 %v5490, %v5489
        %5507 = vmatpush.bf16.msra.mxu0 %v5498
        %5508 = vmatpush.bf16.msra.mxu0 %v5497
        %5509 = vmatpush.bf16.msra.mxu0 %v5496
        %5510 = vmatpush.bf16.msra.mxu0 %v5495
        %5511 = vmatpush.bf16.msra.mxu0 %v5494
        %5512 = vmatpush.bf16.msra.mxu0 %v5493
        %5513 = vmatpush.bf16.msra.mxu0 %v5492
        %5514 = vmatpush.bf16.msra.mxu0 %v5491
        %5515 = vmatmul.bf16.gmra.mxu0 %v5457
        %v5516 = vpop.f32.mrf.mxu0
        %v5517 = vadd.f32 0.0, %v5516
        %v5518 = vpop.f32.mrf.mxu0
        %5519 = vdwg.mxu0
        %v5536 = vunpack.c.l.b16 %v5415
        %v5537 = vunpack.c.l.b16 %v5416
        %v5538 = vunpack.c.l.b16 %v5417
        %v5539 = vunpack.c.l.b16 %v5418
        %v5540 = vunpack.c.l.b16 %v5419
        %v5541 = vunpack.c.l.b16 %v5420
        %v5542 = vunpack.c.l.b16 %v5421
        %v5543 = vunpack.c.l.b16 %v5422
        %v5544 = vunpack.c.l.b16 %v5423
        %v5545 = vunpack.c.l.b16 %v5424
        %v5546 = vunpack.c.l.b16 %v5425
        %v5547 = vunpack.c.l.b16 %v5426
        %v5548 = vunpack.c.l.b16 %v5427
        %v5549 = vunpack.c.l.b16 %v5428
        %v5550 = vunpack.c.l.b16 %v5429
        %v5551 = vunpack.c.l.b16 %v5430
        %v5552 = vpack.c.b16 %v5537, %v5536
        %v5553 = vpack.c.b16 %v5539, %v5538
        %v5554 = vpack.c.b16 %v5541, %v5540
        %v5555 = vpack.c.b16 %v5543, %v5542
        %v5556 = vpack.c.b16 %v5545, %v5544
        %v5557 = vpack.c.b16 %v5547, %v5546
        %v5558 = vpack.c.b16 %v5549, %v5548
        %v5559 = vpack.c.b16 %v5551, %v5550
        %5568 = vmatpush.bf16.msra.mxu0 %v5559
        %5569 = vmatpush.bf16.msra.mxu0 %v5558
        %5570 = vmatpush.bf16.msra.mxu0 %v5557
        %5571 = vmatpush.bf16.msra.mxu0 %v5556
        %5572 = vmatpush.bf16.msra.mxu0 %v5555
        %5573 = vmatpush.bf16.msra.mxu0 %v5554
        %5574 = vmatpush.bf16.msra.mxu0 %v5553
        %5575 = vmatpush.bf16.msra.mxu0 %v5552
        %5576 = vmatmul.bf16.gmra.mxu0 %v5414
        %v5577 = vpop.f32.mrf.mxu0
        %v5578 = vadd.f32 %v5517, %v5577
        %v5579 = vpop.f32.mrf.mxu0
        %5580 = vdwg.mxu0
        %s5581 = scalar_lea.vmem %s43, 128
        %v5582 = vld [vmem:[%s5581] sm:$0xf]
        %v5583 = vld [vmem:[%s5581 + $0x4] sm:$0xf]
        %v5584 = vld [vmem:[%s5581 + $0x8] sm:$0xf]
        %v5585 = vld [vmem:[%s5581 + $0xc] sm:$0xf]
        %v5586 = vld [vmem:[%s5581 + $0x10] sm:$0xf]
        %v5587 = vld [vmem:[%s5581 + $0x14] sm:$0xf]
        %v5588 = vld [vmem:[%s5581 + $0x18] sm:$0xf]
        %v5589 = vld [vmem:[%s5581 + $0x1c] sm:$0xf]
        %v5590 = vld [vmem:[%s5581 + $0x20] sm:$0xf]
        %v5591 = vld [vmem:[%s5581 + $0x24] sm:$0xf]
        %v5592 = vld [vmem:[%s5581 + $0x28] sm:$0xf]
        %v5593 = vld [vmem:[%s5581 + $0x2c] sm:$0xf]
        %v5594 = vld [vmem:[%s5581 + $0x30] sm:$0xf]
        %v5595 = vld [vmem:[%s5581 + $0x34] sm:$0xf]
        %v5596 = vld [vmem:[%s5581 + $0x38] sm:$0xf]
        %v5597 = vld [vmem:[%s5581 + $0x3c] sm:$0xf]
        %v5598 = vrot.slane %v5450, 1
        %v5616 = vunpack.c.l.b16 %v5582
        %v5617 = vunpack.c.l.b16 %v5583
        %v5618 = vunpack.c.l.b16 %v5584
        %v5619 = vunpack.c.l.b16 %v5585
        %v5620 = vunpack.c.l.b16 %v5586
        %v5621 = vunpack.c.l.b16 %v5587
        %v5622 = vunpack.c.l.b16 %v5588
        %v5623 = vunpack.c.l.b16 %v5589
        %v5624 = vunpack.c.l.b16 %v5590
        %v5625 = vunpack.c.l.b16 %v5591
        %v5626 = vunpack.c.l.b16 %v5592
        %v5627 = vunpack.c.l.b16 %v5593
        %v5628 = vunpack.c.l.b16 %v5594
        %v5629 = vunpack.c.l.b16 %v5595
        %v5630 = vunpack.c.l.b16 %v5596
        %v5631 = vunpack.c.l.b16 %v5597
        %v5632 = vpack.c.b16 %v5617, %v5616
        %v5633 = vpack.c.b16 %v5619, %v5618
        %v5634 = vpack.c.b16 %v5621, %v5620
        %v5635 = vpack.c.b16 %v5623, %v5622
        %v5636 = vpack.c.b16 %v5625, %v5624
        %v5637 = vpack.c.b16 %v5627, %v5626
        %v5638 = vpack.c.b16 %v5629, %v5628
        %v5639 = vpack.c.b16 %v5631, %v5630
        %5648 = vmatpush.bf16.msra.mxu0 %v5639
        %5649 = vmatpush.bf16.msra.mxu0 %v5638
        %5650 = vmatpush.bf16.msra.mxu0 %v5637
        %5651 = vmatpush.bf16.msra.mxu0 %v5636
        %5652 = vmatpush.bf16.msra.mxu0 %v5635
        %5653 = vmatpush.bf16.msra.mxu0 %v5634
        %5654 = vmatpush.bf16.msra.mxu0 %v5633
        %5655 = vmatpush.bf16.msra.mxu0 %v5632
        %5656 = vmatmul.bf16.gmra.mxu0 %v5598
        %v5657 = vpop.f32.mrf.mxu0
        %v5658 = vadd.f32 0.0, %v5657
        %v5659 = vpop.f32.mrf.mxu0
        %5660 = vdwg.mxu0
        %v5661 = vadd.f32 %v5578, %v5658
        %v5662 = vld [vmem:[%s45] sm:$0x1]
        %v5664 = vperm.slane %v5662, 0
        %v5666 = vadd.f32 %v5661, %v5664
        %v5667 = vmax.f32 %v5666, 0.0
        %v5668 = vpack.c.bf16 %v5667, %v5667
        %v5669 = vld [vmem:[%s63] sm:$0x7]
        %v5671 = vsel %vm5393, %v5669, 0
        %v5674 = vsel %vm5397, %v5668, 0
        %5676 = vmatpush.bf16.msra.mxu0 0
        %5677 = vmatpush.bf16.msra.mxu0 0
        %5678 = vmatpush.bf16.msra.mxu0 0
        %5679 = vmatpush.bf16.msra.mxu0 0
        %5680 = vmatpush.bf16.msra.mxu0 0
        %5681 = vmatpush.bf16.msra.mxu0 0
        %5682 = vmatpush.bf16.msra.mxu0 0
        %5683 = vmatpush.bf16.msra.mxu0 %v5674
        %5684 = vmatmul.bf16.gmra.mxu0 %v5671
        %v5685 = vpop.f32.mrf.mxu0
        %v5686 = vadd.f32 0.0, %v5685
        %v5687 = vpop.f32.mrf.mxu0
        %5688 = vdwg.mxu0
        %v5689 = vpack.c.bf16 %v5686, %v5686
        %v5690 = vld [vmem:[%s47] sm:$0xf]
        %v5691 = vld [vmem:[%s47 + $0x4] sm:$0xf]
        %v5692 = vld [vmem:[%s47 + $0x8] sm:$0xf]
        %v5693 = vld [vmem:[%s47 + $0xc] sm:$0xf]
        %v5694 = vld [vmem:[%s47 + $0x10] sm:$0xf]
        %v5695 = vld [vmem:[%s47 + $0x14] sm:$0xf]
        %v5696 = vld [vmem:[%s47 + $0x18] sm:$0xf]
        %v5697 = vld [vmem:[%s47 + $0x1c] sm:$0xf]
        %s5698 = scalar_lea.vmem %s47, 32
        %v5699 = vld [vmem:[%s5698] sm:$0xf]
        %v5700 = vld [vmem:[%s5698 + $0x4] sm:$0xf]
        %v5701 = vld [vmem:[%s5698 + $0x8] sm:$0xf]
        %v5702 = vld [vmem:[%s5698 + $0xc] sm:$0xf]
        %v5703 = vld [vmem:[%s5698 + $0x10] sm:$0xf]
        %v5704 = vld [vmem:[%s5698 + $0x14] sm:$0xf]
        %v5705 = vld [vmem:[%s5698 + $0x18] sm:$0xf]
        %v5706 = vld [vmem:[%s5698 + $0x1c] sm:$0xf]
        %v5708 = vunpack.c.l.b16 %v5689
        %v5709 = vpack.c.b16 %v5708, %v5708
        %v5711 = vshrl.u32 %v5709, 16
        %v5713 = vshll.u32 %v5709, 16
        %v5715 = vrot.slane %v5713, 1
        %v5716 = vor.u32 %v5711, %v5715
        %v5725 = vunpack.c.l.b16 %v5699
        %v5726 = vunpack.c.l.b16 %v5700
        %v5727 = vunpack.c.l.b16 %v5701
        %v5728 = vunpack.c.l.b16 %v5702
        %v5729 = vunpack.c.l.b16 %v5703
        %v5730 = vunpack.c.l.b16 %v5704
        %v5731 = vunpack.c.l.b16 %v5705
        %v5732 = vunpack.c.l.b16 %v5706
        %v5733 = vpack.c.b16 %v5726, %v5725
        %v5734 = vpack.c.b16 %v5728, %v5727
        %v5735 = vpack.c.b16 %v5730, %v5729
        %v5736 = vpack.c.b16 %v5732, %v5731
        %vm5741 = vcmask 523264
        %v5743 = vsel %vm5741, %v5716, 0
        %5745 = vmatpush.bf16.msra.mxu0 0
        %5746 = vmatpush.bf16.msra.mxu0 0
        %5747 = vmatpush.bf16.msra.mxu0 0
        %5748 = vmatpush.bf16.msra.mxu0 0
        %5749 = vmatpush.bf16.msra.mxu0 %v5736
        %5750 = vmatpush.bf16.msra.mxu0 %v5735
        %5751 = vmatpush.bf16.msra.mxu0 %v5734
        %5752 = vmatpush.bf16.msra.mxu0 %v5733
        %5753 = vmatmul.bf16.gmra.mxu0 %v5743
        %v5754 = vpop.f32.mrf.mxu0
        %v5755 = vadd.f32 0.0, %v5754
        %v5756 = vpop.f32.mrf.mxu0
        %5757 = vdwg.mxu0
        %v5766 = vunpack.c.l.b16 %v5690
        %v5767 = vunpack.c.l.b16 %v5691
        %v5768 = vunpack.c.l.b16 %v5692
        %v5769 = vunpack.c.l.b16 %v5693
        %v5770 = vunpack.c.l.b16 %v5694
        %v5771 = vunpack.c.l.b16 %v5695
        %v5772 = vunpack.c.l.b16 %v5696
        %v5773 = vunpack.c.l.b16 %v5697
        %v5774 = vpack.c.b16 %v5767, %v5766
        %v5775 = vpack.c.b16 %v5769, %v5768
        %v5776 = vpack.c.b16 %v5771, %v5770
        %v5777 = vpack.c.b16 %v5773, %v5772
        %v5783 = vsel %vm5741, %v5689, 0
        %5785 = vmatpush.bf16.msra.mxu0 0
        %5786 = vmatpush.bf16.msra.mxu0 0
        %5787 = vmatpush.bf16.msra.mxu0 0
        %5788 = vmatpush.bf16.msra.mxu0 0
        %5789 = vmatpush.bf16.msra.mxu0 %v5777
        %5790 = vmatpush.bf16.msra.mxu0 %v5776
        %5791 = vmatpush.bf16.msra.mxu0 %v5775
        %5792 = vmatpush.bf16.msra.mxu0 %v5774
        %5793 = vmatmul.bf16.gmra.mxu0 %v5783
        %v5794 = vpop.f32.mrf.mxu0
        %v5795 = vadd.f32 %v5755, %v5794
        %v5796 = vpop.f32.mrf.mxu0
        %5797 = vdwg.mxu0
        %s5798 = scalar_lea.vmem %s47, 64
        %v5799 = vld [vmem:[%s5798] sm:$0xf]
        %v5800 = vld [vmem:[%s5798 + $0x4] sm:$0xf]
        %v5801 = vld [vmem:[%s5798 + $0x8] sm:$0xf]
        %v5802 = vld [vmem:[%s5798 + $0xc] sm:$0xf]
        %v5803 = vld [vmem:[%s5798 + $0x10] sm:$0xf]
        %v5804 = vld [vmem:[%s5798 + $0x14] sm:$0xf]
        %v5805 = vld [vmem:[%s5798 + $0x18] sm:$0xf]
        %v5806 = vld [vmem:[%s5798 + $0x1c] sm:$0xf]
        %v5807 = vrot.slane %v5709, 1
        %v5816 = vunpack.c.l.b16 %v5799
        %v5817 = vunpack.c.l.b16 %v5800
        %v5818 = vunpack.c.l.b16 %v5801
        %v5819 = vunpack.c.l.b16 %v5802
        %v5820 = vunpack.c.l.b16 %v5803
        %v5821 = vunpack.c.l.b16 %v5804
        %v5822 = vunpack.c.l.b16 %v5805
        %v5823 = vunpack.c.l.b16 %v5806
        %v5824 = vpack.c.b16 %v5817, %v5816
        %v5825 = vpack.c.b16 %v5819, %v5818
        %v5826 = vpack.c.b16 %v5821, %v5820
        %v5827 = vpack.c.b16 %v5823, %v5822
        %v5833 = vsel %vm5741, %v5807, 0
        %5835 = vmatpush.bf16.msra.mxu0 0
        %5836 = vmatpush.bf16.msra.mxu0 0
        %5837 = vmatpush.bf16.msra.mxu0 0
        %5838 = vmatpush.bf16.msra.mxu0 0
        %5839 = vmatpush.bf16.msra.mxu0 %v5827
        %5840 = vmatpush.bf16.msra.mxu0 %v5826
        %5841 = vmatpush.bf16.msra.mxu0 %v5825
        %5842 = vmatpush.bf16.msra.mxu0 %v5824
        %5843 = vmatmul.bf16.gmra.mxu0 %v5833
        %v5844 = vpop.f32.mrf.mxu0
        %v5845 = vadd.f32 0.0, %v5844
        %v5846 = vpop.f32.mrf.mxu0
        %5847 = vdwg.mxu0
        %v5848 = vadd.f32 %v5795, %v5845
        %v5849 = vld [vmem:[%s49] sm:$0x1]
        %v5851 = vperm.slane %v5849, 0
        %v5853 = vadd.f32 %v5848, %v5851
        %v5854 = vmax.f32 %v5853, 0.0
        %v5855 = vpack.c.bf16 %v5854, %v5854
        %v5857 = vsel %vm5397, %v5855, 0
        %5859 = vmatpush.bf16.msra.mxu0 0
        %5860 = vmatpush.bf16.msra.mxu0 0
        %5861 = vmatpush.bf16.msra.mxu0 0
        %5862 = vmatpush.bf16.msra.mxu0 0
        %5863 = vmatpush.bf16.msra.mxu0 0
        %5864 = vmatpush.bf16.msra.mxu0 0
        %5865 = vmatpush.bf16.msra.mxu0 0
        %5866 = vmatpush.bf16.msra.mxu0 %v5857
        %5867 = vmatmul.bf16.gmra.mxu0 %v5671
        %v5868 = vpop.f32.mrf.mxu0
        %v5869 = vadd.f32 0.0, %v5868
        %v5870 = vpop.f32.mrf.mxu0
        %5871 = vdwg.mxu0
        %v5872 = vpack.c.bf16 %v5869, %v5869
        %v5873 = vld [vmem:[#allocation16] sm:$0xf]
        %v5874 = vld [vmem:[#allocation16 + $0x4] sm:$0xf]
        %v5875 = vld [vmem:[#allocation16 + $0x8] sm:$0xf]
        %v5876 = vld [vmem:[#allocation16 + $0xc] sm:$0xf]
        %v5877 = vld [vmem:[#allocation16 + $0x10] sm:$0xf]
        %v5878 = vld [vmem:[#allocation16 + $0x14] sm:$0xf]
        %v5879 = vld [vmem:[#allocation16 + $0x18] sm:$0xf]
        %v5880 = vld [vmem:[#allocation16 + $0x1c] sm:$0xf]
        %s5881 = scalar_lea.vmem [#allocation16], 32
        %v5882 = vld [vmem:[%s5881] sm:$0xf]
        %v5883 = vld [vmem:[%s5881 + $0x4] sm:$0xf]
        %v5884 = vld [vmem:[%s5881 + $0x8] sm:$0xf]
        %v5885 = vld [vmem:[%s5881 + $0xc] sm:$0xf]
        %v5886 = vld [vmem:[%s5881 + $0x10] sm:$0xf]
        %v5887 = vld [vmem:[%s5881 + $0x14] sm:$0xf]
        %v5888 = vld [vmem:[%s5881 + $0x18] sm:$0xf]
        %v5889 = vld [vmem:[%s5881 + $0x1c] sm:$0xf]
        %v5891 = vunpack.c.l.b16 %v5872
        %v5892 = vpack.c.b16 %v5891, %v5891
        %v5894 = vshrl.u32 %v5892, 16
        %v5896 = vshll.u32 %v5892, 16
        %v5898 = vrot.slane %v5896, 1
        %v5899 = vor.u32 %v5894, %v5898
        %v5908 = vunpack.c.l.b16 %v5882
        %v5909 = vunpack.c.l.b16 %v5883
        %v5910 = vunpack.c.l.b16 %v5884
        %v5911 = vunpack.c.l.b16 %v5885
        %v5912 = vunpack.c.l.b16 %v5886
        %v5913 = vunpack.c.l.b16 %v5887
        %v5914 = vunpack.c.l.b16 %v5888
        %v5915 = vunpack.c.l.b16 %v5889
        %v5916 = vpack.c.b16 %v5909, %v5908
        %v5917 = vpack.c.b16 %v5911, %v5910
        %v5918 = vpack.c.b16 %v5913, %v5912
        %v5919 = vpack.c.b16 %v5915, %v5914
        %v5925 = vsel %vm5741, %v5899, 0
        %5927 = vmatpush.bf16.msra.mxu0 0
        %5928 = vmatpush.bf16.msra.mxu0 0
        %5929 = vmatpush.bf16.msra.mxu0 0
        %5930 = vmatpush.bf16.msra.mxu0 0
        %5931 = vmatpush.bf16.msra.mxu0 %v5919
        %5932 = vmatpush.bf16.msra.mxu0 %v5918
        %5933 = vmatpush.bf16.msra.mxu0 %v5917
        %5934 = vmatpush.bf16.msra.mxu0 %v5916
        %5935 = vmatmul.bf16.gmra.mxu0 %v5925
        %v5936 = vpop.f32.mrf.mxu0
        %v5937 = vadd.f32 0.0, %v5936
        %v5938 = vpop.f32.mrf.mxu0
        %5939 = vdwg.mxu0
        %v5948 = vunpack.c.l.b16 %v5873
        %v5949 = vunpack.c.l.b16 %v5874
        %v5950 = vunpack.c.l.b16 %v5875
        %v5951 = vunpack.c.l.b16 %v5876
        %v5952 = vunpack.c.l.b16 %v5877
        %v5953 = vunpack.c.l.b16 %v5878
        %v5954 = vunpack.c.l.b16 %v5879
        %v5955 = vunpack.c.l.b16 %v5880
        %v5956 = vpack.c.b16 %v5949, %v5948
        %v5957 = vpack.c.b16 %v5951, %v5950
        %v5958 = vpack.c.b16 %v5953, %v5952
        %v5959 = vpack.c.b16 %v5955, %v5954
        %v5965 = vsel %vm5741, %v5872, 0
        %5967 = vmatpush.bf16.msra.mxu0 0
        %5968 = vmatpush.bf16.msra.mxu0 0
        %5969 = vmatpush.bf16.msra.mxu0 0
        %5970 = vmatpush.bf16.msra.mxu0 0
        %5971 = vmatpush.bf16.msra.mxu0 %v5959
        %5972 = vmatpush.bf16.msra.mxu0 %v5958
        %5973 = vmatpush.bf16.msra.mxu0 %v5957
        %5974 = vmatpush.bf16.msra.mxu0 %v5956
        %5975 = vmatmul.bf16.gmra.mxu0 %v5965
        %v5976 = vpop.f32.mrf.mxu0
        %v5977 = vadd.f32 %v5937, %v5976
        %v5978 = vpop.f32.mrf.mxu0
        %5979 = vdwg.mxu0
        %s5980 = scalar_lea.vmem [#allocation16], 64
        %v5981 = vld [vmem:[%s5980] sm:$0xf]
        %v5982 = vld [vmem:[%s5980 + $0x4] sm:$0xf]
        %v5983 = vld [vmem:[%s5980 + $0x8] sm:$0xf]
        %v5984 = vld [vmem:[%s5980 + $0xc] sm:$0xf]
        %v5985 = vld [vmem:[%s5980 + $0x10] sm:$0xf]
        %v5986 = vld [vmem:[%s5980 + $0x14] sm:$0xf]
        %v5987 = vld [vmem:[%s5980 + $0x18] sm:$0xf]
        %v5988 = vld [vmem:[%s5980 + $0x1c] sm:$0xf]
        %v5989 = vrot.slane %v5892, 1
        %v5998 = vunpack.c.l.b16 %v5981
        %v5999 = vunpack.c.l.b16 %v5982
        %v6000 = vunpack.c.l.b16 %v5983
        %v6001 = vunpack.c.l.b16 %v5984
        %v6002 = vunpack.c.l.b16 %v5985
        %v6003 = vunpack.c.l.b16 %v5986
        %v6004 = vunpack.c.l.b16 %v5987
        %v6005 = vunpack.c.l.b16 %v5988
        %v6006 = vpack.c.b16 %v5999, %v5998
        %v6007 = vpack.c.b16 %v6001, %v6000
        %v6008 = vpack.c.b16 %v6003, %v6002
        %v6009 = vpack.c.b16 %v6005, %v6004
        %v6015 = vsel %vm5741, %v5989, 0
        %6017 = vmatpush.bf16.msra.mxu0 0
        %6018 = vmatpush.bf16.msra.mxu0 0
        %6019 = vmatpush.bf16.msra.mxu0 0
        %6020 = vmatpush.bf16.msra.mxu0 0
        %6021 = vmatpush.bf16.msra.mxu0 %v6009
        %6022 = vmatpush.bf16.msra.mxu0 %v6008
        %6023 = vmatpush.bf16.msra.mxu0 %v6007
        %6024 = vmatpush.bf16.msra.mxu0 %v6006
        %6025 = vmatmul.bf16.gmra.mxu0 %v6015
        %v6026 = vpop.f32.mrf.mxu0
        %v6027 = vadd.f32 0.0, %v6026
        %v6028 = vpop.f32.mrf.mxu0
        %6029 = vdwg.mxu0
        %v6030 = vadd.f32 %v5977, %v6027
        %v6031 = vld [vmem:[%s53] sm:$0x1]
        %v6033 = vperm.slane %v6031, 0
        %v6035 = vadd.f32 %v6030, %v6033
        %v6036 = vmax.f32 %v6035, 0.0
        %v6037 = vpack.c.bf16 %v6036, %v6036
        %v6038 = vld [vmem:[#allocation26] sm:$0xf]
        %v6039 = vld [vmem:[#allocation26 + $0x4] sm:$0xf]
        %v6040 = vld [vmem:[#allocation26 + $0x8] sm:$0xf]
        %v6041 = vld [vmem:[#allocation26 + $0xc] sm:$0xf]
        %v6042 = vld [vmem:[#allocation26 + $0x10] sm:$0xf]
        %v6043 = vld [vmem:[#allocation26 + $0x14] sm:$0xf]
        %v6044 = vld [vmem:[#allocation26 + $0x18] sm:$0xf]
        %v6045 = vld [vmem:[#allocation26 + $0x1c] sm:$0xf]
        %v6054 = vunpack.c.l.b16 %v6038
        %v6055 = vunpack.c.l.b16 %v6039
        %v6056 = vunpack.c.l.b16 %v6040
        %v6057 = vunpack.c.l.b16 %v6041
        %v6058 = vunpack.c.l.b16 %v6042
        %v6059 = vunpack.c.l.b16 %v6043
        %v6060 = vunpack.c.l.b16 %v6044
        %v6061 = vunpack.c.l.b16 %v6045
        %v6062 = vpack.c.b16 %v6055, %v6054
        %v6063 = vpack.c.b16 %v6057, %v6056
        %v6064 = vpack.c.b16 %v6059, %v6058
        %v6065 = vpack.c.b16 %v6061, %v6060
        %v6071 = vsel %vm5741, %v6037, 0
        %6073 = vmatpush.bf16.msra.mxu0 0
        %6074 = vmatpush.bf16.msra.mxu0 0
        %6075 = vmatpush.bf16.msra.mxu0 0
        %6076 = vmatpush.bf16.msra.mxu0 0
        %6077 = vmatpush.bf16.msra.mxu0 %v6065
        %6078 = vmatpush.bf16.msra.mxu0 %v6064
        %6079 = vmatpush.bf16.msra.mxu0 %v6063
        %6080 = vmatpush.bf16.msra.mxu0 %v6062
        %6081 = vmatmul.bf16.gmra.mxu0 %v6071
        %v6082 = vpop.f32.mrf.mxu0
        %v6083 = vadd.f32 0.0, %v6082
        %v6084 = vpop.f32.mrf.mxu0
        %6085 = vdwg.mxu0
        %v6086 = vpack.c.bf16 %v6083, %v6083
        %v6087 = vunpack.c.l.bf16 %v6037
        %v6088 = vunpack.c.l.bf16 %v6086
        %v6089 = vmax.f32 %v6087, %v6088
        %v6090 = vpack.c.bf16 %v6089, %v6089
        %v6091 = vunpack.c.l.bf16 %v6090
        %v6093 = vrot.slane %v6091, 1
        %v6095 = vmax.f32 %v6091, %v6093
        %v6096 = vpack.c.bf16 %v6095, %v6095
        %v6097 = vld [vmem:[#allocation32] sm:$0xf]
        %v6098 = vld [vmem:[#allocation32 + $0x4] sm:$0xf]
        %v6099 = vld [vmem:[#allocation32 + $0x8] sm:$0xf]
        %v6100 = vld [vmem:[#allocation32 + $0xc] sm:$0xf]
        %v6101 = vld [vmem:[#allocation32 + $0x10] sm:$0xf]
        %v6102 = vld [vmem:[#allocation32 + $0x14] sm:$0xf]
        %v6103 = vld [vmem:[#allocation32 + $0x18] sm:$0xf]
        %v6104 = vld [vmem:[#allocation32 + $0x1c] sm:$0xf]
        %v6105 = vld [vmem:[#allocation34] sm:$0x1]
        %v6107 = vunpack.c.l.b16 %v6096
        %v6108 = vpack.c.b16 %v6107, %v6107
        %v6110 = vshrl.u32 %v6108, 16
        %v6120 = vunpack.c.l.b16 %v6097
        %v6121 = vunpack.c.l.b16 %v6098
        %v6122 = vunpack.c.l.b16 %v6099
        %v6123 = vunpack.c.l.b16 %v6100
        %v6124 = vunpack.c.l.b16 %v6101
        %v6125 = vunpack.c.l.b16 %v6102
        %v6126 = vunpack.c.l.b16 %v6103
        %v6127 = vunpack.c.l.b16 %v6104
        %v6128 = vpack.c.b16 %v6121, %v6120
        %v6129 = vpack.c.b16 %v6123, %v6122
        %v6130 = vpack.c.b16 %v6125, %v6124
        %v6131 = vpack.c.b16 %v6127, %v6126
        %v6137 = vsel %vm5741, %v6110, 0
        %6139 = vmatpush.bf16.msra.mxu0 0
        %6140 = vmatpush.bf16.msra.mxu0 0
        %6141 = vmatpush.bf16.msra.mxu0 0
        %6142 = vmatpush.bf16.msra.mxu0 0
        %6143 = vmatpush.bf16.msra.mxu0 %v6131
        %6144 = vmatpush.bf16.msra.mxu0 %v6130
        %6145 = vmatpush.bf16.msra.mxu0 %v6129
        %6146 = vmatpush.bf16.msra.mxu0 %v6128
        %6147 = vmatmul.bf16.gmra.mxu0 %v6137
        %v6148 = vpop.f32.mrf.mxu0
        %v6149 = vadd.f32 %v6105, %v6148
        %v6150 = vpop.f32.mrf.mxu0
        %6151 = vdwg.mxu0
        %v6152 = vmax.f32 %v6149, 0.0
        %v6153 = vpack.c.bf16 %v6152, %v6152
        %v6154 = vld [vmem:[#allocation35] sm:$0xf]
        %v6155 = vld [vmem:[#allocation35 + $0x4] sm:$0xf]
        %v6156 = vld [vmem:[#allocation35 + $0x8] sm:$0xf]
        %v6157 = vld [vmem:[#allocation35 + $0xc] sm:$0xf]
        %v6158 = vld [vmem:[#allocation35 + $0x10] sm:$0xf]
        %v6159 = vld [vmem:[#allocation35 + $0x14] sm:$0xf]
        %v6160 = vld [vmem:[#allocation35 + $0x18] sm:$0xf]
        %v6161 = vld [vmem:[#allocation35 + $0x1c] sm:$0xf]
        %v6162 = vld [vmem:[#allocation37] sm:$0x1]
        %v6171 = vunpack.c.l.b16 %v6154
        %v6172 = vunpack.c.l.b16 %v6155
        %v6173 = vunpack.c.l.b16 %v6156
        %v6174 = vunpack.c.l.b16 %v6157
        %v6175 = vunpack.c.l.b16 %v6158
        %v6176 = vunpack.c.l.b16 %v6159
        %v6177 = vunpack.c.l.b16 %v6160
        %v6178 = vunpack.c.l.b16 %v6161
        %v6179 = vpack.c.b16 %v6172, %v6171
        %v6180 = vpack.c.b16 %v6174, %v6173
        %v6181 = vpack.c.b16 %v6176, %v6175
        %v6182 = vpack.c.b16 %v6178, %v6177
        %v6188 = vsel %vm5741, %v6153, 0
        %6190 = vmatpush.bf16.msra.mxu0 0
        %6191 = vmatpush.bf16.msra.mxu0 0
        %6192 = vmatpush.bf16.msra.mxu0 0
        %6193 = vmatpush.bf16.msra.mxu0 0
        %6194 = vmatpush.bf16.msra.mxu0 %v6182
        %6195 = vmatpush.bf16.msra.mxu0 %v6181
        %6196 = vmatpush.bf16.msra.mxu0 %v6180
        %6197 = vmatpush.bf16.msra.mxu0 %v6179
        %6198 = vmatmul.bf16.gmra.mxu0 %v6188
        %v6199 = vpop.f32.mrf.mxu0
        %v6200 = vadd.f32 %v6162, %v6199
        %v6201 = vpop.f32.mrf.mxu0
        %6202 = vdwg.mxu0
        %v6203 = vmax.f32 %v6200, 0.0
        %v6204 = vpack.c.bf16 %v6203, %v6203
        %v6205 = vld [vmem:[%s91] sm:$0xf]
        %v6206 = vld [vmem:[%s91 + $0x4] sm:$0xf]
        %v6207 = vld [vmem:[%s91 + $0x8] sm:$0xf]
        %v6208 = vld [vmem:[%s91 + $0xc] sm:$0xf]
        %v6209 = vld [vmem:[%s91 + $0x10] sm:$0xf]
        %v6210 = vld [vmem:[%s91 + $0x14] sm:$0xf]
        %v6211 = vld [vmem:[%s91 + $0x18] sm:$0xf]
        %v6212 = vld [vmem:[%s91 + $0x1c] sm:$0xf]
        %v6213 = vld [vmem:[#allocation38] sm:$0x1]
        %v6222 = vunpack.c.l.b16 %v6205
        %v6223 = vunpack.c.l.b16 %v6206
        %v6224 = vunpack.c.l.b16 %v6207
        %v6225 = vunpack.c.l.b16 %v6208
        %v6226 = vunpack.c.l.b16 %v6209
        %v6227 = vunpack.c.l.b16 %v6210
        %v6228 = vunpack.c.l.b16 %v6211
        %v6229 = vunpack.c.l.b16 %v6212
        %v6230 = vpack.c.b16 %v6223, %v6222
        %v6231 = vpack.c.b16 %v6225, %v6224
        %v6232 = vpack.c.b16 %v6227, %v6226
        %v6233 = vpack.c.b16 %v6229, %v6228
        %v6239 = vsel %vm5741, %v6204, 0
        %6241 = vmatpush.bf16.msra.mxu0 0
        %6242 = vmatpush.bf16.msra.mxu0 0
        %6243 = vmatpush.bf16.msra.mxu0 0
        %6244 = vmatpush.bf16.msra.mxu0 0
        %6245 = vmatpush.bf16.msra.mxu0 %v6233
        %6246 = vmatpush.bf16.msra.mxu0 %v6232
        %6247 = vmatpush.bf16.msra.mxu0 %v6231
        %6248 = vmatpush.bf16.msra.mxu0 %v6230
        %6249 = vmatmul.bf16.gmra.mxu0 %v6239
        %v6250 = vpop.f32.mrf.mxu0
        %v6251 = vadd.f32 %v6213, %v6250
        %v6252 = vpop.f32.mrf.mxu0
        %6253 = vdwg.mxu0
        %vm6254 = vcmask 73728
        %6255 = vst.msk [vmem:[%s1779] sm:$0x1] %vm6254, %v6251
        %s6256 = sand.u32 %s1122, 1
        %s6257 = scalar_lea.sflag [#allocation4], %s6256
        %s6258 = sand.u32 %s1122, 1
        %s6259 = scalar_lea.vmem [#allocation40], %s6258
        // Predicated region
        $region305: #{modified_vgg16_forward.1} parent=207 // pred_check
          %p6260 = pneg %p1132
        $region306: #{modified_vgg16_forward.1} parent=207 // pred_check_branch
          %6262 = sbr.rel (%p6260) target = $region308
        $region307: #{modified_vgg16_forward.1} parent=207 // pred_region
          %6264 = vsyncadd %s6257, 0
          %s6265 = scalar_lea.hbm %s95, %s122
          %s6267 = sshll.u32 %s6259, 4
          %s6268 = int_to_ptr.vmem [resolvable:$true] %s6267
          %s6269 = sshll.u32 %s6265, 4
          %s6270 = int_to_ptr.hbm [resolvable:$true] %s6269
          %6272 = dma.vmem_to_hbm [thread:$0]  %s6268, 16, %s6270, %s6257
        $region308: #{modified_vgg16_forward.1} parent=207 // pred_fallthru
          _
      $region208: #{modified_vgg16_forward.1} parent=5 // pred_fallthru
        _
      %p6273 = scmp.le.s32.totalorder 2, %s117
      // Predicated region
      $region309: #{modified_vgg16_forward.1} parent=5 // pred_check
        %p6274 = pneg %p6273
      $region310: #{modified_vgg16_forward.1} parent=5 // pred_check_branch
        %6276 = sbr.rel (%p6274) target = $region312
      $region311: #{modified_vgg16_forward.1} parent=5 // pred_region
        %s6277 = ssub.s32 %s117, 2
        // Predicated region
        $region313: #{modified_vgg16_forward.1} parent=311 // pred_check
          %p6278 = pneg %p1138
        $region314: #{modified_vgg16_forward.1} parent=311 // pred_check_branch
          %6280 = sbr.rel (%p6278) target = $region316
        $region315: #{modified_vgg16_forward.1} parent=311 // pred_region
          %s6281 = sand.u32 %s1123, 1
          %s6282 = scalar_lea.sflag [#allocation4], %s6281
          %s6283 = sand.u32 %s1123, 1
          %s6284 = scalar_lea.vmem [#allocation40], %s6283
          %6286 = dma.done %s6282, 16
        $region316: #{modified_vgg16_forward.1} parent=311 // pred_fallthru
          _
      $region312: #{modified_vgg16_forward.1} parent=5 // pred_fallthru
        _
    $region6: #{modified_vgg16_forward.1} parent=1 // loop_footer
      %s121 = sadd.s32 1, %s117
    $region7: #{modified_vgg16_forward.1} parent=1 // loop_footer_branch
      %116 = sbr.rel target = $region3
    $region8: #{modified_vgg16_forward.1} parent=1 // loop_exit
      _
    %6287 = vsyncpa [#allocation3], 1
    %s6288 = scalar_lea.sflag [#allocation3], 1
    %6289 = vsyncpa %s6288, 1
    %6290 = vsyncpa [#allocation6], 1
    %6291 = vsyncpa [#allocation9], 1
    %6292 = vsyncpa [#allocation12], 1
    %6293 = vsyncpa [#allocation15], 1
    %6294 = vsyncpa [#allocation18], 1
    %6295 = vsyncpa [#allocation21], 1
    %6296 = vsyncpa [#allocation24], 1
    %6297 = vsyncpa [#allocation27], 1
    %6298 = vsyncpa [#allocation30], 1
    %6299 = vsyncpa [#allocation33], 1
    %6300 = vsyncpa [#allocation36], 1
    %6301 = vsyncpa [#allocation39], 1
    %6302 = vsyncpa [#allocation4], 1
    %s6303 = scalar_lea.sflag [#allocation4], 1
    %6304 = vsyncpa %s6303, 1

</llo_original>
